<compile_context>
chip_gen: v6e
topology: v6e:2x2x1
jax: 0.10.0
libtpu: 0.0.40
codegen_flags: <defaults>
</compile_context>

<pallas_src>
import jax
import jax.numpy as jnp
from jax.experimental import pallas as pl
from jax.experimental.pallas import tpu as pltpu


# ---------------------------------------------------------------------------
# Fused kernel: per-sample LeNet forward (grid axis = batch)
# ---------------------------------------------------------------------------

def _lenet_kernel(x_ref,                      # (32, 32)  relu+conv1 input (pre-padded)
                  a1_ref, b1_ref,             # (5, 168, 32), (168, 1)
                  s28e_ref, s28o_ref,         # (28, 14) x2   pool1 column selectors
                  e1t_ref, o1t_ref,           # (84, 168) x2  pool1 row selectors
                  a2_ref, b2_ref,             # (5, 160, 84), (160, 1)
                  s10e_ref, s10o_ref,         # (10, 5) x2    pool2 column selectors
                  e2t_ref, o2t_ref,           # (80, 160) x2  pool2 row selectors
                  wf1_ref, bf1_ref,           # (5, 120, 80), (120, 1)
                  wf2_ref, bf2_ref,           # (84, 120), (84, 1)
                  wf3_ref, bf3_ref,           # (10, 84), (10, 1)
                  o_ref,                      # (10, 1)
                  p1_ref, p2_ref):            # VMEM scratch (84, 14), (80, 5)

    def mm(a, b):
        return jnp.dot(a, b, preferred_element_type=jnp.float32)

    # ---- input ReLU + conv1 (1->6, 5x5, pad=2) + bias + ReLU -------------
    # out1 rows = (co, oh) co-major (168), lanes = ow (28)
    out1 = b1_ref[...] + mm(a1_ref[0], jnp.maximum(x_ref[:, 0:28], 0.0))
    for kw in range(1, 5):
        out1 = out1 + mm(a1_ref[kw], jnp.maximum(x_ref[:, kw:kw + 28], 0.0))
    out1 = jnp.maximum(out1, 0.0)                                   # (168, 28)

    # ---- max-pool 2x2 -> (6, 14, 14) stored as (84, 14) ------------------
    pw = jnp.maximum(mm(out1, s28e_ref[...]), mm(out1, s28o_ref[...]))   # (168, 14)
    p1_ref[...] = jnp.maximum(mm(e1t_ref[...], pw), mm(o1t_ref[...], pw))  # (84, 14)

    # ---- conv2 (6->16, 5x5, valid) + bias + ReLU -------------------------
    # out2 rows = (co, oh) co-major (160), lanes = ow (10)
    out2 = b2_ref[...] + mm(a2_ref[0], p1_ref[:, 0:10])
    for kw in range(1, 5):
        out2 = out2 + mm(a2_ref[kw], p1_ref[:, kw:kw + 10])
    out2 = jnp.maximum(out2, 0.0)                                   # (160, 10)

    # ---- max-pool 2x2 -> (16, 5, 5) stored as (80, 5) --------------------
    pw2 = jnp.maximum(mm(out2, s10e_ref[...]), mm(out2, s10o_ref[...]))    # (160, 5)
    p2_ref[...] = jnp.maximum(mm(e2t_ref[...], pw2), mm(o2t_ref[...], pw2))  # (80, 5)

    # ---- fc1 (400 -> 120) + ReLU, consuming the (80, 5) layout directly --
    y1 = bf1_ref[...] + mm(wf1_ref[0], p2_ref[:, 0:1])
    for w in range(1, 5):
        y1 = y1 + mm(wf1_ref[w], p2_ref[:, w:w + 1])
    y1 = jnp.maximum(y1, 0.0)                                       # (120, 1)

    # ---- fc2 (+ReLU) and fc3 ---------------------------------------------
    y2 = jnp.maximum(bf2_ref[...] + mm(wf2_ref[...], y1), 0.0)      # (84, 1)
    o_ref[...] = bf3_ref[...] + mm(wf3_ref[...], y2)                # (10, 1)


# ---------------------------------------------------------------------------
# One-time weight preprocessing (plain JAX, outside the hot path)
# ---------------------------------------------------------------------------

def prepare_constants(params):
    w1, b1, w2, b2, wf1, bf1, wf2, bf2, wf3, bf3 = params
    f32 = jnp.float32
    i32 = jnp.eye(32, dtype=f32)
    i14 = jnp.eye(14, dtype=f32)
    i28 = jnp.eye(28, dtype=f32)
    i10 = jnp.eye(10, dtype=f32)

    # conv1: A1[kw] (168, 32) with A1[kw][(co*28+oh), h] = sum_kh w1[co,0,kh,kw]*[h==oh+kh]
    a1_list = []
    for kw in range(5):
        m = jnp.zeros((168, 32), f32)
        for kh in range(5):
            m = m + jnp.kron(w1[:, 0, kh, kw].reshape(6, 1), i32[kh:kh + 28, :])
        a1_list.append(m)
    a1 = jnp.stack(a1_list, axis=0)                       # (5, 168, 32)
    b1r = jnp.repeat(b1, 28).reshape(168, 1)

    # pool1 selectors
    s28e = i28[:, 0::2]                                   # (28, 14)
    s28o = i28[:, 1::2]
    e1t = jnp.kron(jnp.eye(6, dtype=f32), s28e.T)         # (84, 168)
    o1t = jnp.kron(jnp.eye(6, dtype=f32), s28o.T)

    # conv2: A2[kw] (160, 84) with A2[kw][(co*10+oh), (ci*14+h)] = sum_kh w2[co,ci,kh,kw]*[h==oh+kh]
    a2_list = []
    for kw in range(5):
        m = jnp.zeros((160, 84), f32)
        for kh in range(5):
            m = m + jnp.kron(w2[:, :, kh, kw], i14[kh:kh + 10, :])
        a2_list.append(m)
    a2 = jnp.stack(a2_list, axis=0)                       # (5, 160, 84)
    b2r = jnp.repeat(b2, 10).reshape(160, 1)

    # pool2 selectors
    s10e = i10[:, 0::2]                                   # (10, 5)
    s10o = i10[:, 1::2]
    e2t = jnp.kron(jnp.eye(16, dtype=f32), s10e.T)        # (80, 160)
    o2t = jnp.kron(jnp.eye(16, dtype=f32), s10o.T)

    # fc1 split by inner spatial w so it matches PyTorch view() (c, h, w) order:
    # wf1s[w][j, c*5+h] = wf1[j, c*25 + h*5 + w]
    wf1r = wf1.reshape(120, 16, 5, 5)
    wf1s = jnp.stack([wf1r[:, :, :, w].reshape(120, 80) for w in range(5)], axis=0)
    bf1c = bf1.reshape(120, 1)
    bf2c = bf2.reshape(84, 1)
    bf3c = bf3.reshape(10, 1)

    return (a1, b1r, s28e, s28o, e1t, o1t, a2, b2r, s10e, s10o, e2t, o2t,
            wf1s, bf1c, wf2, bf2c, wf3, bf3c)


# ---------------------------------------------------------------------------
# Forward wrapper: single fused pallas_call, grid over batch
# ---------------------------------------------------------------------------

def lenet_forward(x_nchw, consts):
    (a1, b1r, s28e, s28o, e1t, o1t, a2, b2r, s10e, s10o, e2t, o2t,
     wf1s, bf1c, wf2, bf2c, wf3, bf3c) = consts
    n = x_nchw.shape[0]

    # conv1 zero-padding (relu(0)=0, so pad-then-relu == relu-then-pad)
    xp = jnp.pad(x_nchw[:, 0, :, :], ((0, 0), (2, 2), (2, 2)))   # (N, 32, 32)

    const2d = lambda _n: (0, 0)
    const3d = lambda _n: (0, 0, 0)

    out = pl.pallas_call(
        _lenet_kernel,
        out_shape=jax.ShapeDtypeStruct((n, 10, 1), jnp.float32),
        grid=(n,),
        in_specs=[
            pl.BlockSpec((None, 32, 32), lambda i: (i, 0, 0)),   # padded input, per sample
            pl.BlockSpec((5, 168, 32), const3d),                 # a1
            pl.BlockSpec((168, 1), const2d),                     # b1r
            pl.BlockSpec((28, 14), const2d),                     # s28e
            pl.BlockSpec((28, 14), const2d),                     # s28o
            pl.BlockSpec((84, 168), const2d),                    # e1t
            pl.BlockSpec((84, 168), const2d),                    # o1t
            pl.BlockSpec((5, 160, 84), const3d),                 # a2
            pl.BlockSpec((160, 1), const2d),                     # b2r
            pl.BlockSpec((10, 5), const2d),                      # s10e
            pl.BlockSpec((10, 5), const2d),                      # s10o
            pl.BlockSpec((80, 160), const2d),                    # e2t
            pl.BlockSpec((80, 160), const2d),                    # o2t
            pl.BlockSpec((5, 120, 80), const3d),                 # wf1s
            pl.BlockSpec((120, 1), const2d),                     # bf1c
            pl.BlockSpec((84, 120), const2d),                    # wf2
            pl.BlockSpec((84, 1), const2d),                      # bf2c
            pl.BlockSpec((10, 84), const2d),                     # wf3
            pl.BlockSpec((10, 1), const2d),                      # bf3c
        ],
        out_specs=pl.BlockSpec((None, 10, 1), lambda i: (i, 0, 0)),
        scratch_shapes=[
            pltpu.VMEM((84, 14), jnp.float32),   # pooled conv1 activations
            pltpu.VMEM((80, 5), jnp.float32),    # pooled conv2 activations
        ],
        compiler_params=pltpu.CompilerParams(
            dimension_semantics=("parallel",)),
    )(xp, a1, b1r, s28e, s28o, e1t, o1t, a2, b2r, s10e, s10o, e2t, o2t,
      wf1s, bf1c, wf2, bf2c, wf3, bf3c)

    return out[:, :, 0]                                          # (N, 10)


# ---------------------------------------------------------------------------
# Pure-JAX reference (for a numerical sanity check)
# ---------------------------------------------------------------------------

def lenet_reference(x_nchw, params):
    w1, b1, w2, b2, wf1, bf1, wf2, bf2, wf3, bf3 = params
    hi = jax.lax.Precision.HIGHEST
    dn = ("NCHW", "OIHW", "NCHW")

    x = jnp.maximum(x_nchw, 0.0)
    out = jax.lax.conv_general_dilated(x, w1, (1, 1), ((2, 2), (2, 2)),
                                       dimension_numbers=dn, precision=hi)
    out = jnp.maximum(out + b1[None, :, None, None], 0.0)
    out = jax.lax.reduce_window(out, -jnp.inf, jax.lax.max,
                                (1, 1, 2, 2), (1, 1, 2, 2), "VALID")
    out = jax.lax.conv_general_dilated(out, w2, (1, 1), ((0, 0), (0, 0)),
                                       dimension_numbers=dn, precision=hi)
    out = jnp.maximum(out + b2[None, :, None, None], 0.0)
    out = jax.lax.reduce_window(out, -jnp.inf, jax.lax.max,
                                (1, 1, 2, 2), (1, 1, 2, 2), "VALID")
    flat = out.reshape(out.shape[0], -1)
    y = jnp.maximum(jnp.dot(flat, wf1.T, precision=hi) + bf1, 0.0)
    y = jnp.maximum(jnp.dot(y, wf2.T, precision=hi) + bf2, 0.0)
    return jnp.dot(y, wf3.T, precision=hi) + bf3


# ---------------------------------------------------------------------------
# Deterministic parameter init (PyTorch default U(-1/sqrt(fan_in), 1/sqrt(fan_in)))
# ---------------------------------------------------------------------------

def init_params(key):
    ks = jax.random.split(key, 10)

    def u(k, shape, fan_in):
        bound = 1.0 / (fan_in ** 0.5)
        return jax.random.uniform(k, shape, jnp.float32, -bound, bound)

    w1 = u(ks[0], (6, 1, 5, 5), 1 * 5 * 5)
    b1 = u(ks[1], (6,), 1 * 5 * 5)
    w2 = u(ks[2], (16, 6, 5, 5), 6 * 5 * 5)
    b2 = u(ks[3], (16,), 6 * 5 * 5)
    wf1 = u(ks[4], (120, 400), 400)
    bf1 = u(ks[5], (120,), 400)
    wf2 = u(ks[6], (84, 120), 120)
    bf2 = u(ks[7], (84,), 120)
    wf3 = u(ks[8], (10, 84), 84)
    bf3 = u(ks[9], (10,), 84)
    return (w1, b1, w2, b2, wf1, bf1, wf2, bf2, wf3, bf3)


if __name__ == "__main__":
    key = jax.random.PRNGKey(0)
    k_x, k_p = jax.random.split(key)

    # MNIST-shaped input (fc1 = 16*5*5 implies a 1x28x28 input), small batch.
    x = jax.random.normal(k_x, (2, 1, 28, 28), dtype=jnp.float32)
    params = init_params(k_p)
    consts = prepare_constants(params)

    out = jax.jit(lenet_forward)(x, consts)
    out = jax.block_until_ready(out)
    assert out.shape == (2, 10) and out.dtype == jnp.float32

    ref = jax.block_until_ready(jax.jit(lenet_reference)(x, params))
    max_err = float(jnp.max(jnp.abs(out - ref)))
    assert max_err < 2e-2, f"mismatch vs reference: {max_err}"

    print("KERNEL_OK")
</pallas_src>

<mosaic_0001>
module attributes {stable_mosaic.version = 11 : i64} {
  func.func @_lenet_kernel(%arg0: i32, %arg1: memref<1x32x32xf32, #tpu.memory_space<vmem>>, %arg2: memref<5x168x32xf32, #tpu.memory_space<vmem>>, %arg3: memref<168x1xf32, #tpu.memory_space<vmem>>, %arg4: memref<28x14xf32, #tpu.memory_space<vmem>>, %arg5: memref<28x14xf32, #tpu.memory_space<vmem>>, %arg6: memref<84x168xf32, #tpu.memory_space<vmem>>, %arg7: memref<84x168xf32, #tpu.memory_space<vmem>>, %arg8: memref<5x160x84xf32, #tpu.memory_space<vmem>>, %arg9: memref<160x1xf32, #tpu.memory_space<vmem>>, %arg10: memref<10x5xf32, #tpu.memory_space<vmem>>, %arg11: memref<10x5xf32, #tpu.memory_space<vmem>>, %arg12: memref<80x160xf32, #tpu.memory_space<vmem>>, %arg13: memref<80x160xf32, #tpu.memory_space<vmem>>, %arg14: memref<5x120x80xf32, #tpu.memory_space<vmem>>, %arg15: memref<120x1xf32, #tpu.memory_space<vmem>>, %arg16: memref<84x120xf32, #tpu.memory_space<vmem>>, %arg17: memref<84x1xf32, #tpu.memory_space<vmem>>, %arg18: memref<10x84xf32, #tpu.memory_space<vmem>>, %arg19: memref<10x1xf32, #tpu.memory_space<vmem>>, %arg20: memref<1x10x1xf32, #tpu.memory_space<vmem>>, %arg21: memref<84x14xf32, #tpu.memory_space<vmem>>, %arg22: memref<80x5xf32, #tpu.memory_space<vmem>>) attributes {dimension_semantics = [#tpu.dimension_semantics<parallel>], iteration_bounds = array<i64: 2>, scalar_prefetch = 0 : i64, scratch_operands = 2 : i64, tpu.core_type = #tpu.core_type<tc>, window_params = [{transform_indices = @transform_0, window_bounds = array<i64: 1, 32, 32>}, {pipeline_mode = #tpu.pipeline_mode<synchronous>, transform_indices = @transform_1, window_bounds = array<i64: 5, 168, 32>}, {pipeline_mode = #tpu.pipeline_mode<synchronous>, transform_indices = @transform_2, window_bounds = array<i64: 168, 1>}, {pipeline_mode = #tpu.pipeline_mode<synchronous>, transform_indices = @transform_3, window_bounds = array<i64: 28, 14>}, {pipeline_mode = #tpu.pipeline_mode<synchronous>, transform_indices = @transform_4, window_bounds = array<i64: 28, 14>}, {pipeline_mode = #tpu.pipeline_mode<synchronous>, transform_indices = @transform_5, window_bounds = array<i64: 84, 168>}, {pipeline_mode = #tpu.pipeline_mode<synchronous>, transform_indices = @transform_6, window_bounds = array<i64: 84, 168>}, {pipeline_mode = #tpu.pipeline_mode<synchronous>, transform_indices = @transform_7, window_bounds = array<i64: 5, 160, 84>}, {pipeline_mode = #tpu.pipeline_mode<synchronous>, transform_indices = @transform_8, window_bounds = array<i64: 160, 1>}, {pipeline_mode = #tpu.pipeline_mode<synchronous>, transform_indices = @transform_9, window_bounds = array<i64: 10, 5>}, {pipeline_mode = #tpu.pipeline_mode<synchronous>, transform_indices = @transform_10, window_bounds = array<i64: 10, 5>}, {pipeline_mode = #tpu.pipeline_mode<synchronous>, transform_indices = @transform_11, window_bounds = array<i64: 80, 160>}, {pipeline_mode = #tpu.pipeline_mode<synchronous>, transform_indices = @transform_12, window_bounds = array<i64: 80, 160>}, {pipeline_mode = #tpu.pipeline_mode<synchronous>, transform_indices = @transform_13, window_bounds = array<i64: 5, 120, 80>}, {pipeline_mode = #tpu.pipeline_mode<synchronous>, transform_indices = @transform_14, window_bounds = array<i64: 120, 1>}, {pipeline_mode = #tpu.pipeline_mode<synchronous>, transform_indices = @transform_15, window_bounds = array<i64: 84, 120>}, {pipeline_mode = #tpu.pipeline_mode<synchronous>, transform_indices = @transform_16, window_bounds = array<i64: 84, 1>}, {pipeline_mode = #tpu.pipeline_mode<synchronous>, transform_indices = @transform_17, window_bounds = array<i64: 10, 84>}, {pipeline_mode = #tpu.pipeline_mode<synchronous>, transform_indices = @transform_18, window_bounds = array<i64: 10, 1>}, {transform_indices = @transform_19, window_bounds = array<i64: 1, 10, 1>}]} {
    %c0 = arith.constant 0 : index
    %c0_0 = arith.constant 0 : index
    %0 = vector.load %arg3[%c0, %c0_0] : memref<168x1xf32, #tpu.memory_space<vmem>>, vector<168x1xf32>
    %c0_1 = arith.constant 0 : index
    %c0_2 = arith.constant 0 : index
    %c0_3 = arith.constant 0 : index
    %1 = vector.load %arg2[%c0_1, %c0_2, %c0_3] : memref<5x168x32xf32, #tpu.memory_space<vmem>>, vector<1x168x32xf32>
    %2 = vector.shape_cast %1 : vector<1x168x32xf32> to vector<168x32xf32>
    %c0_4 = arith.constant 0 : index
    %c0_5 = arith.constant 0 : index
    %c0_6 = arith.constant 0 : index
    %3 = vector.load %arg1[%c0_4, %c0_5, %c0_6] : memref<1x32x32xf32, #tpu.memory_space<vmem>>, vector<1x32x28xf32>
    %4 = vector.shape_cast %3 : vector<1x32x28xf32> to vector<32x28xf32>
    %cst = arith.constant 0.000000e+00 : f32
    %5 = vector.broadcast %cst : f32 to vector<32x28xf32>
    %6 = arith.maximumf %4, %5 : vector<32x28xf32>
    %cst_7 = arith.constant dense<0.000000e+00> : vector<168x28xf32>
    %7 = tpu.matmul %2, %6, %cst_7 {dimension_numbers = #tpu.dot_dimension_numbers<[1], [0], [0], [1], [0, 0, 1, 1], [], []>} : vector<168x32xf32>, vector<32x28xf32>, vector<168x28xf32> -> vector<168x28xf32>
    %8 = vector.broadcast %0 : vector<168x1xf32> to vector<168x28xf32>
    %9 = arith.addf %8, %7 : vector<168x28xf32>
    %c1 = arith.constant 1 : index
    %c0_8 = arith.constant 0 : index
    %c0_9 = arith.constant 0 : index
    %10 = vector.load %arg2[%c1, %c0_8, %c0_9] : memref<5x168x32xf32, #tpu.memory_space<vmem>>, vector<1x168x32xf32>
    %11 = vector.shape_cast %10 : vector<1x168x32xf32> to vector<168x32xf32>
    %c0_10 = arith.constant 0 : index
    %c0_11 = arith.constant 0 : index
    %c1_12 = arith.constant 1 : index
    %12 = vector.load %arg1[%c0_10, %c0_11, %c1_12] : memref<1x32x32xf32, #tpu.memory_space<vmem>>, vector<1x32x28xf32>
    %13 = vector.shape_cast %12 : vector<1x32x28xf32> to vector<32x28xf32>
    %cst_13 = arith.constant 0.000000e+00 : f32
    %14 = vector.broadcast %cst_13 : f32 to vector<32x28xf32>
    %15 = arith.maximumf %13, %14 : vector<32x28xf32>
    %cst_14 = arith.constant dense<0.000000e+00> : vector<168x28xf32>
    %16 = tpu.matmul %11, %15, %cst_14 {dimension_numbers = #tpu.dot_dimension_numbers<[1], [0], [0], [1], [0, 0, 1, 1], [], []>} : vector<168x32xf32>, vector<32x28xf32>, vector<168x28xf32> -> vector<168x28xf32>
    %17 = arith.addf %9, %16 : vector<168x28xf32>
    %c2 = arith.constant 2 : index
    %c0_15 = arith.constant 0 : index
    %c0_16 = arith.constant 0 : index
    %18 = vector.load %arg2[%c2, %c0_15, %c0_16] : memref<5x168x32xf32, #tpu.memory_space<vmem>>, vector<1x168x32xf32>
    %19 = vector.shape_cast %18 : vector<1x168x32xf32> to vector<168x32xf32>
    %c0_17 = arith.constant 0 : index
    %c0_18 = arith.constant 0 : index
    %c2_19 = arith.constant 2 : index
    %20 = vector.load %arg1[%c0_17, %c0_18, %c2_19] : memref<1x32x32xf32, #tpu.memory_space<vmem>>, vector<1x32x28xf32>
    %21 = vector.shape_cast %20 : vector<1x32x28xf32> to vector<32x28xf32>
    %cst_20 = arith.constant 0.000000e+00 : f32
    %22 = vector.broadcast %cst_20 : f32 to vector<32x28xf32>
    %23 = arith.maximumf %21, %22 : vector<32x28xf32>
    %cst_21 = arith.constant dense<0.000000e+00> : vector<168x28xf32>
    %24 = tpu.matmul %19, %23, %cst_21 {dimension_numbers = #tpu.dot_dimension_numbers<[1], [0], [0], [1], [0, 0, 1, 1], [], []>} : vector<168x32xf32>, vector<32x28xf32>, vector<168x28xf32> -> vector<168x28xf32>
    %25 = arith.addf %17, %24 : vector<168x28xf32>
    %c3 = arith.constant 3 : index
    %c0_22 = arith.constant 0 : index
    %c0_23 = arith.constant 0 : index
    %26 = vector.load %arg2[%c3, %c0_22, %c0_23] : memref<5x168x32xf32, #tpu.memory_space<vmem>>, vector<1x168x32xf32>
    %27 = vector.shape_cast %26 : vector<1x168x32xf32> to vector<168x32xf32>
    %c0_24 = arith.constant 0 : index
    %c0_25 = arith.constant 0 : index
    %c3_26 = arith.constant 3 : index
    %28 = vector.load %arg1[%c0_24, %c0_25, %c3_26] : memref<1x32x32xf32, #tpu.memory_space<vmem>>, vector<1x32x28xf32>
    %29 = vector.shape_cast %28 : vector<1x32x28xf32> to vector<32x28xf32>
    %cst_27 = arith.constant 0.000000e+00 : f32
    %30 = vector.broadcast %cst_27 : f32 to vector<32x28xf32>
    %31 = arith.maximumf %29, %30 : vector<32x28xf32>
    %cst_28 = arith.constant dense<0.000000e+00> : vector<168x28xf32>
    %32 = tpu.matmul %27, %31, %cst_28 {dimension_numbers = #tpu.dot_dimension_numbers<[1], [0], [0], [1], [0, 0, 1, 1], [], []>} : vector<168x32xf32>, vector<32x28xf32>, vector<168x28xf32> -> vector<168x28xf32>
    %33 = arith.addf %25, %32 : vector<168x28xf32>
    %c4 = arith.constant 4 : index
    %c0_29 = arith.constant 0 : index
    %c0_30 = arith.constant 0 : index
    %34 = vector.load %arg2[%c4, %c0_29, %c0_30] : memref<5x168x32xf32, #tpu.memory_space<vmem>>, vector<1x168x32xf32>
    %35 = vector.shape_cast %34 : vector<1x168x32xf32> to vector<168x32xf32>
    %c0_31 = arith.constant 0 : index
    %c0_32 = arith.constant 0 : index
    %c4_33 = arith.constant 4 : index
    %36 = vector.load %arg1[%c0_31, %c0_32, %c4_33] : memref<1x32x32xf32, #tpu.memory_space<vmem>>, vector<1x32x28xf32>
    %37 = vector.shape_cast %36 : vector<1x32x28xf32> to vector<32x28xf32>
    %cst_34 = arith.constant 0.000000e+00 : f32
    %38 = vector.broadcast %cst_34 : f32 to vector<32x28xf32>
    %39 = arith.maximumf %37, %38 : vector<32x28xf32>
    %cst_35 = arith.constant dense<0.000000e+00> : vector<168x28xf32>
    %40 = tpu.matmul %35, %39, %cst_35 {dimension_numbers = #tpu.dot_dimension_numbers<[1], [0], [0], [1], [0, 0, 1, 1], [], []>} : vector<168x32xf32>, vector<32x28xf32>, vector<168x28xf32> -> vector<168x28xf32>
    %41 = arith.addf %33, %40 : vector<168x28xf32>
    %cst_36 = arith.constant 0.000000e+00 : f32
    %42 = vector.broadcast %cst_36 : f32 to vector<168x28xf32>
    %43 = arith.maximumf %41, %42 : vector<168x28xf32>
    %c0_37 = arith.constant 0 : index
    %c0_38 = arith.constant 0 : index
    %44 = vector.load %arg4[%c0_37, %c0_38] : memref<28x14xf32, #tpu.memory_space<vmem>>, vector<28x14xf32>
    %cst_39 = arith.constant dense<0.000000e+00> : vector<168x14xf32>
    %45 = tpu.matmul %43, %44, %cst_39 {dimension_numbers = #tpu.dot_dimension_numbers<[1], [0], [0], [1], [0, 0, 1, 1], [], []>} : vector<168x28xf32>, vector<28x14xf32>, vector<168x14xf32> -> vector<168x14xf32>
    %c0_40 = arith.constant 0 : index
    %c0_41 = arith.constant 0 : index
    %46 = vector.load %arg5[%c0_40, %c0_41] : memref<28x14xf32, #tpu.memory_space<vmem>>, vector<28x14xf32>
    %cst_42 = arith.constant dense<0.000000e+00> : vector<168x14xf32>
    %47 = tpu.matmul %43, %46, %cst_42 {dimension_numbers = #tpu.dot_dimension_numbers<[1], [0], [0], [1], [0, 0, 1, 1], [], []>} : vector<168x28xf32>, vector<28x14xf32>, vector<168x14xf32> -> vector<168x14xf32>
    %48 = arith.maximumf %45, %47 : vector<168x14xf32>
    %c0_43 = arith.constant 0 : index
    %c0_44 = arith.constant 0 : index
    %49 = vector.load %arg6[%c0_43, %c0_44] : memref<84x168xf32, #tpu.memory_space<vmem>>, vector<84x168xf32>
    %cst_45 = arith.constant dense<0.000000e+00> : vector<84x14xf32>
    %50 = tpu.matmul %49, %48, %cst_45 {dimension_numbers = #tpu.dot_dimension_numbers<[1], [0], [0], [1], [0, 0, 1, 1], [], []>} : vector<84x168xf32>, vector<168x14xf32>, vector<84x14xf32> -> vector<84x14xf32>
    %c0_46 = arith.constant 0 : index
    %c0_47 = arith.constant 0 : index
    %51 = vector.load %arg7[%c0_46, %c0_47] : memref<84x168xf32, #tpu.memory_space<vmem>>, vector<84x168xf32>
    %cst_48 = arith.constant dense<0.000000e+00> : vector<84x14xf32>
    %52 = tpu.matmul %51, %48, %cst_48 {dimension_numbers = #tpu.dot_dimension_numbers<[1], [0], [0], [1], [0, 0, 1, 1], [], []>} : vector<84x168xf32>, vector<168x14xf32>, vector<84x14xf32> -> vector<84x14xf32>
    %53 = arith.maximumf %50, %52 : vector<84x14xf32>
    %c0_49 = arith.constant 0 : index
    %c0_50 = arith.constant 0 : index
    %54 = vector.load %arg21[%c0_49, %c0_50] : memref<84x14xf32, #tpu.memory_space<vmem>>, vector<84x14xf32>
    tpu.vector_store %arg21[%c0_49, %c0_50], %53 {strides = array<i32>} : memref<84x14xf32, #tpu.memory_space<vmem>>, vector<84x14xf32>,
    %c0_51 = arith.constant 0 : index
    %c0_52 = arith.constant 0 : index
    %55 = vector.load %arg9[%c0_51, %c0_52] : memref<160x1xf32, #tpu.memory_space<vmem>>, vector<160x1xf32>
    %c0_53 = arith.constant 0 : index
    %c0_54 = arith.constant 0 : index
    %c0_55 = arith.constant 0 : index
    %56 = vector.load %arg8[%c0_53, %c0_54, %c0_55] : memref<5x160x84xf32, #tpu.memory_space<vmem>>, vector<1x160x84xf32>
    %57 = vector.shape_cast %56 : vector<1x160x84xf32> to vector<160x84xf32>
    %c0_56 = arith.constant 0 : index
    %c0_57 = arith.constant 0 : index
    %58 = vector.load %arg21[%c0_56, %c0_57] : memref<84x14xf32, #tpu.memory_space<vmem>>, vector<84x10xf32>
    %cst_58 = arith.constant dense<0.000000e+00> : vector<160x10xf32>
    %59 = tpu.matmul %57, %58, %cst_58 {dimension_numbers = #tpu.dot_dimension_numbers<[1], [0], [0], [1], [0, 0, 1, 1], [], []>} : vector<160x84xf32>, vector<84x10xf32>, vector<160x10xf32> -> vector<160x10xf32>
    %60 = vector.broadcast %55 : vector<160x1xf32> to vector<160x10xf32>
    %61 = arith.addf %60, %59 : vector<160x10xf32>
    %c1_59 = arith.constant 1 : index
    %c0_60 = arith.constant 0 : index
    %c0_61 = arith.constant 0 : index
    %62 = vector.load %arg8[%c1_59, %c0_60, %c0_61] : memref<5x160x84xf32, #tpu.memory_space<vmem>>, vector<1x160x84xf32>
    %63 = vector.shape_cast %62 : vector<1x160x84xf32> to vector<160x84xf32>
    %c0_62 = arith.constant 0 : index
    %c1_63 = arith.constant 1 : index
    %64 = vector.load %arg21[%c0_62, %c1_63] : memref<84x14xf32, #tpu.memory_space<vmem>>, vector<84x10xf32>
    %cst_64 = arith.constant dense<0.000000e+00> : vector<160x10xf32>
    %65 = tpu.matmul %63, %64, %cst_64 {dimension_numbers = #tpu.dot_dimension_numbers<[1], [0], [0], [1], [0, 0, 1, 1], [], []>} : vector<160x84xf32>, vector<84x10xf32>, vector<160x10xf32> -> vector<160x10xf32>
    %66 = arith.addf %61, %65 : vector<160x10xf32>
    %c2_65 = arith.constant 2 : index
    %c0_66 = arith.constant 0 : index
    %c0_67 = arith.constant 0 : index
    %67 = vector.load %arg8[%c2_65, %c0_66, %c0_67] : memref<5x160x84xf32, #tpu.memory_space<vmem>>, vector<1x160x84xf32>
    %68 = vector.shape_cast %67 : vector<1x160x84xf32> to vector<160x84xf32>
    %c0_68 = arith.constant 0 : index
    %c2_69 = arith.constant 2 : index
    %69 = vector.load %arg21[%c0_68, %c2_69] : memref<84x14xf32, #tpu.memory_space<vmem>>, vector<84x10xf32>
    %cst_70 = arith.constant dense<0.000000e+00> : vector<160x10xf32>
    %70 = tpu.matmul %68, %69, %cst_70 {dimension_numbers = #tpu.dot_dimension_numbers<[1], [0], [0], [1], [0, 0, 1, 1], [], []>} : vector<160x84xf32>, vector<84x10xf32>, vector<160x10xf32> -> vector<160x10xf32>
    %71 = arith.addf %66, %70 : vector<160x10xf32>
    %c3_71 = arith.constant 3 : index
    %c0_72 = arith.constant 0 : index
    %c0_73 = arith.constant 0 : index
    %72 = vector.load %arg8[%c3_71, %c0_72, %c0_73] : memref<5x160x84xf32, #tpu.memory_space<vmem>>, vector<1x160x84xf32>
    %73 = vector.shape_cast %72 : vector<1x160x84xf32> to vector<160x84xf32>
    %c0_74 = arith.constant 0 : index
    %c3_75 = arith.constant 3 : index
    %74 = vector.load %arg21[%c0_74, %c3_75] : memref<84x14xf32, #tpu.memory_space<vmem>>, vector<84x10xf32>
    %cst_76 = arith.constant dense<0.000000e+00> : vector<160x10xf32>
    %75 = tpu.matmul %73, %74, %cst_76 {dimension_numbers = #tpu.dot_dimension_numbers<[1], [0], [0], [1], [0, 0, 1, 1], [], []>} : vector<160x84xf32>, vector<84x10xf32>, vector<160x10xf32> -> vector<160x10xf32>
    %76 = arith.addf %71, %75 : vector<160x10xf32>
    %c4_77 = arith.constant 4 : index
    %c0_78 = arith.constant 0 : index
    %c0_79 = arith.constant 0 : index
    %77 = vector.load %arg8[%c4_77, %c0_78, %c0_79] : memref<5x160x84xf32, #tpu.memory_space<vmem>>, vector<1x160x84xf32>
    %78 = vector.shape_cast %77 : vector<1x160x84xf32> to vector<160x84xf32>
    %c0_80 = arith.constant 0 : index
    %c4_81 = arith.constant 4 : index
    %79 = vector.load %arg21[%c0_80, %c4_81] : memref<84x14xf32, #tpu.memory_space<vmem>>, vector<84x10xf32>
    %cst_82 = arith.constant dense<0.000000e+00> : vector<160x10xf32>
    %80 = tpu.matmul %78, %79, %cst_82 {dimension_numbers = #tpu.dot_dimension_numbers<[1], [0], [0], [1], [0, 0, 1, 1], [], []>} : vector<160x84xf32>, vector<84x10xf32>, vector<160x10xf32> -> vector<160x10xf32>
    %81 = arith.addf %76, %80 : vector<160x10xf32>
    %cst_83 = arith.constant 0.000000e+00 : f32
    %82 = vector.broadcast %cst_83 : f32 to vector<160x10xf32>
    %83 = arith.maximumf %81, %82 : vector<160x10xf32>
    %c0_84 = arith.constant 0 : index
    %c0_85 = arith.constant 0 : index
    %84 = vector.load %arg10[%c0_84, %c0_85] : memref<10x5xf32, #tpu.memory_space<vmem>>, vector<10x5xf32>
    %cst_86 = arith.constant dense<0.000000e+00> : vector<160x5xf32>
    %85 = tpu.matmul %83, %84, %cst_86 {dimension_numbers = #tpu.dot_dimension_numbers<[1], [0], [0], [1], [0, 0, 1, 1], [], []>} : vector<160x10xf32>, vector<10x5xf32>, vector<160x5xf32> -> vector<160x5xf32>
    %c0_87 = arith.constant 0 : index
    %c0_88 = arith.constant 0 : index
    %86 = vector.load %arg11[%c0_87, %c0_88] : memref<10x5xf32, #tpu.memory_space<vmem>>, vector<10x5xf32>
    %cst_89 = arith.constant dense<0.000000e+00> : vector<160x5xf32>
    %87 = tpu.matmul %83, %86, %cst_89 {dimension_numbers = #tpu.dot_dimension_numbers<[1], [0], [0], [1], [0, 0, 1, 1], [], []>} : vector<160x10xf32>, vector<10x5xf32>, vector<160x5xf32> -> vector<160x5xf32>
    %88 = arith.maximumf %85, %87 : vector<160x5xf32>
    %c0_90 = arith.constant 0 : index
    %c0_91 = arith.constant 0 : index
    %89 = vector.load %arg12[%c0_90, %c0_91] : memref<80x160xf32, #tpu.memory_space<vmem>>, vector<80x160xf32>
    %cst_92 = arith.constant dense<0.000000e+00> : vector<80x5xf32>
    %90 = tpu.matmul %89, %88, %cst_92 {dimension_numbers = #tpu.dot_dimension_numbers<[1], [0], [0], [1], [0, 0, 1, 1], [], []>} : vector<80x160xf32>, vector<160x5xf32>, vector<80x5xf32> -> vector<80x5xf32>
    %c0_93 = arith.constant 0 : index
    %c0_94 = arith.constant 0 : index
    %91 = vector.load %arg13[%c0_93, %c0_94] : memref<80x160xf32, #tpu.memory_space<vmem>>, vector<80x160xf32>
    %cst_95 = arith.constant dense<0.000000e+00> : vector<80x5xf32>
    %92 = tpu.matmul %91, %88, %cst_95 {dimension_numbers = #tpu.dot_dimension_numbers<[1], [0], [0], [1], [0, 0, 1, 1], [], []>} : vector<80x160xf32>, vector<160x5xf32>, vector<80x5xf32> -> vector<80x5xf32>
    %93 = arith.maximumf %90, %92 : vector<80x5xf32>
    %c0_96 = arith.constant 0 : index
    %c0_97 = arith.constant 0 : index
    %94 = vector.load %arg22[%c0_96, %c0_97] : memref<80x5xf32, #tpu.memory_space<vmem>>, vector<80x5xf32>
    tpu.vector_store %arg22[%c0_96, %c0_97], %93 {strides = array<i32>} : memref<80x5xf32, #tpu.memory_space<vmem>>, vector<80x5xf32>,
    %c0_98 = arith.constant 0 : index
    %c0_99 = arith.constant 0 : index
    %95 = vector.load %arg15[%c0_98, %c0_99] : memref<120x1xf32, #tpu.memory_space<vmem>>, vector<120x1xf32>
    %c0_100 = arith.constant 0 : index
    %c0_101 = arith.constant 0 : index
    %c0_102 = arith.constant 0 : index
    %96 = vector.load %arg14[%c0_100, %c0_101, %c0_102] : memref<5x120x80xf32, #tpu.memory_space<vmem>>, vector<1x120x80xf32>
    %97 = vector.shape_cast %96 : vector<1x120x80xf32> to vector<120x80xf32>
    %c0_103 = arith.constant 0 : index
    %c0_104 = arith.constant 0 : index
    %98 = vector.load %arg22[%c0_103, %c0_104] : memref<80x5xf32, #tpu.memory_space<vmem>>, vector<80x1xf32>
    %cst_105 = arith.constant dense<0.000000e+00> : vector<120x1xf32>
    %99 = tpu.matmul %97, %98, %cst_105 {dimension_numbers = #tpu.dot_dimension_numbers<[1], [0], [0], [1], [0, 0, 1, 1], [], []>} : vector<120x80xf32>, vector<80x1xf32>, vector<120x1xf32> -> vector<120x1xf32>
    %100 = arith.addf %95, %99 : vector<120x1xf32>
    %c1_106 = arith.constant 1 : index
    %c0_107 = arith.constant 0 : index
    %c0_108 = arith.constant 0 : index
    %101 = vector.load %arg14[%c1_106, %c0_107, %c0_108] : memref<5x120x80xf32, #tpu.memory_space<vmem>>, vector<1x120x80xf32>
    %102 = vector.shape_cast %101 : vector<1x120x80xf32> to vector<120x80xf32>
    %c0_109 = arith.constant 0 : index
    %c1_110 = arith.constant 1 : index
    %103 = vector.load %arg22[%c0_109, %c1_110] : memref<80x5xf32, #tpu.memory_space<vmem>>, vector<80x1xf32>
    %cst_111 = arith.constant dense<0.000000e+00> : vector<120x1xf32>
    %104 = tpu.matmul %102, %103, %cst_111 {dimension_numbers = #tpu.dot_dimension_numbers<[1], [0], [0], [1], [0, 0, 1, 1], [], []>} : vector<120x80xf32>, vector<80x1xf32>, vector<120x1xf32> -> vector<120x1xf32>
    %105 = arith.addf %100, %104 : vector<120x1xf32>
    %c2_112 = arith.constant 2 : index
    %c0_113 = arith.constant 0 : index
    %c0_114 = arith.constant 0 : index
    %106 = vector.load %arg14[%c2_112, %c0_113, %c0_114] : memref<5x120x80xf32, #tpu.memory_space<vmem>>, vector<1x120x80xf32>
    %107 = vector.shape_cast %106 : vector<1x120x80xf32> to vector<120x80xf32>
    %c0_115 = arith.constant 0 : index
    %c2_116 = arith.constant 2 : index
    %108 = vector.load %arg22[%c0_115, %c2_116] : memref<80x5xf32, #tpu.memory_space<vmem>>, vector<80x1xf32>
    %cst_117 = arith.constant dense<0.000000e+00> : vector<120x1xf32>
    %109 = tpu.matmul %107, %108, %cst_117 {dimension_numbers = #tpu.dot_dimension_numbers<[1], [0], [0], [1], [0, 0, 1, 1], [], []>} : vector<120x80xf32>, vector<80x1xf32>, vector<120x1xf32> -> vector<120x1xf32>
    %110 = arith.addf %105, %109 : vector<120x1xf32>
    %c3_118 = arith.constant 3 : index
    %c0_119 = arith.constant 0 : index
    %c0_120 = arith.constant 0 : index
    %111 = vector.load %arg14[%c3_118, %c0_119, %c0_120] : memref<5x120x80xf32, #tpu.memory_space<vmem>>, vector<1x120x80xf32>
    %112 = vector.shape_cast %111 : vector<1x120x80xf32> to vector<120x80xf32>
    %c0_121 = arith.constant 0 : index
    %c3_122 = arith.constant 3 : index
    %113 = vector.load %arg22[%c0_121, %c3_122] : memref<80x5xf32, #tpu.memory_space<vmem>>, vector<80x1xf32>
    %cst_123 = arith.constant dense<0.000000e+00> : vector<120x1xf32>
    %114 = tpu.matmul %112, %113, %cst_123 {dimension_numbers = #tpu.dot_dimension_numbers<[1], [0], [0], [1], [0, 0, 1, 1], [], []>} : vector<120x80xf32>, vector<80x1xf32>, vector<120x1xf32> -> vector<120x1xf32>
    %115 = arith.addf %110, %114 : vector<120x1xf32>
    %c4_124 = arith.constant 4 : index
    %c0_125 = arith.constant 0 : index
    %c0_126 = arith.constant 0 : index
    %116 = vector.load %arg14[%c4_124, %c0_125, %c0_126] : memref<5x120x80xf32, #tpu.memory_space<vmem>>, vector<1x120x80xf32>
    %117 = vector.shape_cast %116 : vector<1x120x80xf32> to vector<120x80xf32>
    %c0_127 = arith.constant 0 : index
    %c4_128 = arith.constant 4 : index
    %118 = vector.load %arg22[%c0_127, %c4_128] : memref<80x5xf32, #tpu.memory_space<vmem>>, vector<80x1xf32>
    %cst_129 = arith.constant dense<0.000000e+00> : vector<120x1xf32>
    %119 = tpu.matmul %117, %118, %cst_129 {dimension_numbers = #tpu.dot_dimension_numbers<[1], [0], [0], [1], [0, 0, 1, 1], [], []>} : vector<120x80xf32>, vector<80x1xf32>, vector<120x1xf32> -> vector<120x1xf32>
    %120 = arith.addf %115, %119 : vector<120x1xf32>
    %cst_130 = arith.constant 0.000000e+00 : f32
    %121 = vector.broadcast %cst_130 : f32 to vector<120x1xf32>
    %122 = arith.maximumf %120, %121 : vector<120x1xf32>
    %c0_131 = arith.constant 0 : index
    %c0_132 = arith.constant 0 : index
    %123 = vector.load %arg17[%c0_131, %c0_132] : memref<84x1xf32, #tpu.memory_space<vmem>>, vector<84x1xf32>
    %c0_133 = arith.constant 0 : index
    %c0_134 = arith.constant 0 : index
    %124 = vector.load %arg16[%c0_133, %c0_134] : memref<84x120xf32, #tpu.memory_space<vmem>>, vector<84x120xf32>
    %cst_135 = arith.constant dense<0.000000e+00> : vector<84x1xf32>
    %125 = tpu.matmul %124, %122, %cst_135 {dimension_numbers = #tpu.dot_dimension_numbers<[1], [0], [0], [1], [0, 0, 1, 1], [], []>} : vector<84x120xf32>, vector<120x1xf32>, vector<84x1xf32> -> vector<84x1xf32>
    %126 = arith.addf %123, %125 : vector<84x1xf32>
    %cst_136 = arith.constant 0.000000e+00 : f32
    %127 = vector.broadcast %cst_136 : f32 to vector<84x1xf32>
    %128 = arith.maximumf %126, %127 : vector<84x1xf32>
    %c0_137 = arith.constant 0 : index
    %c0_138 = arith.constant 0 : index
    %129 = vector.load %arg19[%c0_137, %c0_138] : memref<10x1xf32, #tpu.memory_space<vmem>>, vector<10x1xf32>
    %c0_139 = arith.constant 0 : index
    %c0_140 = arith.constant 0 : index
    %130 = vector.load %arg18[%c0_139, %c0_140] : memref<10x84xf32, #tpu.memory_space<vmem>>, vector<10x84xf32>
    %cst_141 = arith.constant dense<0.000000e+00> : vector<10x1xf32>
    %131 = tpu.matmul %130, %128, %cst_141 {dimension_numbers = #tpu.dot_dimension_numbers<[1], [0], [0], [1], [0, 0, 1, 1], [], []>} : vector<10x84xf32>, vector<84x1xf32>, vector<10x1xf32> -> vector<10x1xf32>
    %132 = arith.addf %129, %131 : vector<10x1xf32>
    %c0_142 = arith.constant 0 : index
    %c0_143 = arith.constant 0 : index
    %c0_144 = arith.constant 0 : index
    %133 = vector.load %arg20[%c0_142, %c0_143, %c0_144] : memref<1x10x1xf32, #tpu.memory_space<vmem>>, vector<1x10x1xf32>
    %134 = vector.shape_cast %133 : vector<1x10x1xf32> to vector<10x1xf32>
    %135 = vector.shape_cast %132 : vector<10x1xf32> to vector<1x10x1xf32>
    tpu.vector_store %arg20[%c0_142, %c0_143, %c0_144], %135 {strides = array<i32>} : memref<1x10x1xf32, #tpu.memory_space<vmem>>, vector<1x10x1xf32>,
    return
  }
  func.func @transform_0(%arg0: i32) -> (i32, i32, i32) {
    %c0_i32 = arith.constant 0 : i32
    %c0_i32_0 = arith.constant 0 : i32
    %c0_i32_1 = arith.constant 0 : i32
    return %arg0, %c0_i32, %c0_i32_0 : i32, i32, i32
  }
  func.func @transform_1(%arg0: i32) -> (i32, i32, i32) {
    %c0_i32 = arith.constant 0 : i32
    %c0_i32_0 = arith.constant 0 : i32
    %c0_i32_1 = arith.constant 0 : i32
    %c0_i32_2 = arith.constant 0 : i32
    return %c0_i32, %c0_i32_0, %c0_i32_1 : i32, i32, i32
  }
  func.func @transform_2(%arg0: i32) -> (i32, i32) {
    %c0_i32 = arith.constant 0 : i32
    %c0_i32_0 = arith.constant 0 : i32
    %c0_i32_1 = arith.constant 0 : i32
    return %c0_i32, %c0_i32_0 : i32, i32
  }
  func.func @transform_3(%arg0: i32) -> (i32, i32) {
    %c0_i32 = arith.constant 0 : i32
    %c0_i32_0 = arith.constant 0 : i32
    %c0_i32_1 = arith.constant 0 : i32
    return %c0_i32, %c0_i32_0 : i32, i32
  }
  func.func @transform_4(%arg0: i32) -> (i32, i32) {
    %c0_i32 = arith.constant 0 : i32
    %c0_i32_0 = arith.constant 0 : i32
    %c0_i32_1 = arith.constant 0 : i32
    return %c0_i32, %c0_i32_0 : i32, i32
  }
  func.func @transform_5(%arg0: i32) -> (i32, i32) {
    %c0_i32 = arith.constant 0 : i32
    %c0_i32_0 = arith.constant 0 : i32
    %c0_i32_1 = arith.constant 0 : i32
    return %c0_i32, %c0_i32_0 : i32, i32
  }
  func.func @transform_6(%arg0: i32) -> (i32, i32) {
    %c0_i32 = arith.constant 0 : i32
    %c0_i32_0 = arith.constant 0 : i32
    %c0_i32_1 = arith.constant 0 : i32
    return %c0_i32, %c0_i32_0 : i32, i32
  }
  func.func @transform_7(%arg0: i32) -> (i32, i32, i32) {
    %c0_i32 = arith.constant 0 : i32
    %c0_i32_0 = arith.constant 0 : i32
    %c0_i32_1 = arith.constant 0 : i32
    %c0_i32_2 = arith.constant 0 : i32
    return %c0_i32, %c0_i32_0, %c0_i32_1 : i32, i32, i32
  }
  func.func @transform_8(%arg0: i32) -> (i32, i32) {
    %c0_i32 = arith.constant 0 : i32
    %c0_i32_0 = arith.constant 0 : i32
    %c0_i32_1 = arith.constant 0 : i32
    return %c0_i32, %c0_i32_0 : i32, i32
  }
  func.func @transform_9(%arg0: i32) -> (i32, i32) {
    %c0_i32 = arith.constant 0 : i32
    %c0_i32_0 = arith.constant 0 : i32
    %c0_i32_1 = arith.constant 0 : i32
    return %c0_i32, %c0_i32_0 : i32, i32
  }
  func.func @transform_10(%arg0: i32) -> (i32, i32) {
    %c0_i32 = arith.constant 0 : i32
    %c0_i32_0 = arith.constant 0 : i32
    %c0_i32_1 = arith.constant 0 : i32
    return %c0_i32, %c0_i32_0 : i32, i32
  }
  func.func @transform_11(%arg0: i32) -> (i32, i32) {
    %c0_i32 = arith.constant 0 : i32
    %c0_i32_0 = arith.constant 0 : i32
    %c0_i32_1 = arith.constant 0 : i32
    return %c0_i32, %c0_i32_0 : i32, i32
  }
  func.func @transform_12(%arg0: i32) -> (i32, i32) {
    %c0_i32 = arith.constant 0 : i32
    %c0_i32_0 = arith.constant 0 : i32
    %c0_i32_1 = arith.constant 0 : i32
    return %c0_i32, %c0_i32_0 : i32, i32
  }
  func.func @transform_13(%arg0: i32) -> (i32, i32, i32) {
    %c0_i32 = arith.constant 0 : i32
    %c0_i32_0 = arith.constant 0 : i32
    %c0_i32_1 = arith.constant 0 : i32
    %c0_i32_2 = arith.constant 0 : i32
    return %c0_i32, %c0_i32_0, %c0_i32_1 : i32, i32, i32
  }
  func.func @transform_14(%arg0: i32) -> (i32, i32) {
    %c0_i32 = arith.constant 0 : i32
    %c0_i32_0 = arith.constant 0 : i32
    %c0_i32_1 = arith.constant 0 : i32
    return %c0_i32, %c0_i32_0 : i32, i32
  }
  func.func @transform_15(%arg0: i32) -> (i32, i32) {
    %c0_i32 = arith.constant 0 : i32
    %c0_i32_0 = arith.constant 0 : i32
    %c0_i32_1 = arith.constant 0 : i32
    return %c0_i32, %c0_i32_0 : i32, i32
  }
  func.func @transform_16(%arg0: i32) -> (i32, i32) {
    %c0_i32 = arith.constant 0 : i32
    %c0_i32_0 = arith.constant 0 : i32
    %c0_i32_1 = arith.constant 0 : i32
    return %c0_i32, %c0_i32_0 : i32, i32
  }
  func.func @transform_17(%arg0: i32) -> (i32, i32) {
    %c0_i32 = arith.constant 0 : i32
    %c0_i32_0 = arith.constant 0 : i32
    %c0_i32_1 = arith.constant 0 : i32
    return %c0_i32, %c0_i32_0 : i32, i32
  }
  func.func @transform_18(%arg0: i32) -> (i32, i32) {
    %c0_i32 = arith.constant 0 : i32
    %c0_i32_0 = arith.constant 0 : i32
    %c0_i32_1 = arith.constant 0 : i32
    return %c0_i32, %c0_i32_0 : i32, i32
  }
  func.func @transform_19(%arg0: i32) -> (i32, i32, i32) {
    %c0_i32 = arith.constant 0 : i32
    %c0_i32_0 = arith.constant 0 : i32
    %c0_i32_1 = arith.constant 0 : i32
    return %arg0, %c0_i32, %c0_i32_0 : i32, i32, i32
  }
}

</mosaic_0001>

<llo_original>
// kernel: lenet_forward.1
$region0: #{lenet_forward.1}
  #allocation0 [shape = 'u32[]', space=smem, size = 0x4, offset = 0x4, fixed_abs, tag = 'smem constant byte address 0x4 - core index']
  #allocation1 [shape = 'u32[144,128]{1,0:T(1,128)}', space=vmem, size = 0x12000, scoped, tag = 'internal scratch']
  #allocation2 [shape = 'f32[84,14]{1,0:T(8,128)}', space=vmem, size = 0xb000, scoped, tag = 'scratch operand']
  #allocation3 [shape = 'f32[80,5]{1,0:T(8,128)}', space=vmem, size = 0xa000, scoped, tag = 'scratch operand']
  %s0 = inlined_call_operand.vmem [shape: f32[2,32,32], index: 0, kind: input, shape index: {}]
  %s1 = inlined_call_operand.vmem [shape: f32[5,168,32], index: 1, kind: input, shape index: {}]
  %s2 = inlined_call_operand.vmem [shape: f32[168,1], index: 2, kind: input, shape index: {}]
  %s3 = inlined_call_operand.vmem [shape: f32[28,14], index: 3, kind: input, shape index: {}]
  %s4 = inlined_call_operand.vmem [shape: f32[28,14], index: 4, kind: input, shape index: {}]
  %s5 = inlined_call_operand.vmem [shape: f32[84,168], index: 5, kind: input, shape index: {}]
  %s6 = inlined_call_operand.vmem [shape: f32[84,168], index: 6, kind: input, shape index: {}]
  %s7 = inlined_call_operand.vmem [shape: f32[5,160,84], index: 7, kind: input, shape index: {}]
  %s8 = inlined_call_operand.vmem [shape: f32[160,1], index: 8, kind: input, shape index: {}]
  %s9 = inlined_call_operand.vmem [shape: f32[10,5], index: 9, kind: input, shape index: {}]
  %s10 = inlined_call_operand.vmem [shape: f32[10,5], index: 10, kind: input, shape index: {}]
  %s11 = inlined_call_operand.vmem [shape: f32[80,160], index: 11, kind: input, shape index: {}]
  %s12 = inlined_call_operand.vmem [shape: f32[80,160], index: 12, kind: input, shape index: {}]
  %s13 = inlined_call_operand.vmem [shape: f32[5,120,80], index: 13, kind: input, shape index: {}]
  %s14 = inlined_call_operand.vmem [shape: f32[120,1], index: 14, kind: input, shape index: {}]
  %s15 = inlined_call_operand.vmem [shape: f32[84,120], index: 15, kind: input, shape index: {}]
  %s16 = inlined_call_operand.vmem [shape: f32[84,1], index: 16, kind: input, shape index: {}]
  %s17 = inlined_call_operand.vmem [shape: f32[10,84], index: 17, kind: input, shape index: {}]
  %s18 = inlined_call_operand.vmem [shape: f32[10,1], index: 18, kind: input, shape index: {}]
  %s19 = inlined_call_operand.vmem [shape: f32[2,10,1], index: 19, kind: output, shape index: {}]
  %s20 = sld [smem:[#allocation0]]
  $region109: #{lenet_forward.1} parent=0
    _
  %s22 = ssub.s32 1, %s20
  %s23 = scalar_select 0, %s22, %s20
  loop: start=0, step=1, limit=4
  $region2: #{lenet_forward.1} parent=0 // loop_pre_header
    _
  $region3: #{lenet_forward.1} parent=0 // loop_header
    %s25 = sphi 0, %s29
    %p26 = scmp.ge.s32.totalorder %s25, 4
    %s35 = sphi 0, %s37
    %s38 = sphi 0, %s35
    %s39 = sphi 0, %s38
    %s55 = sphi 0, %s39
    %s59 = sphi 0, %s59
    %s61 = sphi 0, %s59
    %s62 = sphi 0, %s61
    %s76 = sphi 0, %s62
    %s80 = sphi 0, %s80
    %s82 = sphi 0, %s80
    %s83 = sphi 0, %s82
    %s97 = sphi 0, %s83
    %s101 = sphi 0, %s101
    %s103 = sphi 0, %s101
    %s104 = sphi 0, %s103
    %s118 = sphi 0, %s104
    %s122 = sphi 0, %s122
    %s124 = sphi 0, %s122
    %s125 = sphi 0, %s124
    %s139 = sphi 0, %s125
    %s143 = sphi 0, %s143
    %s145 = sphi 0, %s143
    %s146 = sphi 0, %s145
    %s160 = sphi 0, %s146
    %s164 = sphi 0, %s164
    %s166 = sphi 0, %s164
    %s167 = sphi 0, %s166
    %s181 = sphi 0, %s167
    %s185 = sphi 0, %s185
    %s187 = sphi 0, %s185
    %s188 = sphi 0, %s187
    %s202 = sphi 0, %s188
    %s206 = sphi 0, %s206
    %s208 = sphi 0, %s206
    %s209 = sphi 0, %s208
    %s223 = sphi 0, %s209
    %s227 = sphi 0, %s227
    %s229 = sphi 0, %s227
    %s230 = sphi 0, %s229
    %s244 = sphi 0, %s230
    %s248 = sphi 0, %s248
    %s250 = sphi 0, %s248
    %s251 = sphi 0, %s250
    %s265 = sphi 0, %s251
    %s269 = sphi 0, %s269
    %s271 = sphi 0, %s269
    %s272 = sphi 0, %s271
    %s286 = sphi 0, %s272
    %s290 = sphi 0, %s290
    %s292 = sphi 0, %s290
    %s293 = sphi 0, %s292
    %s307 = sphi 0, %s293
    %s311 = sphi 0, %s311
    %s313 = sphi 0, %s311
    %s314 = sphi 0, %s313
    %s328 = sphi 0, %s314
    %s332 = sphi 0, %s332
    %s334 = sphi 0, %s332
    %s335 = sphi 0, %s334
    %s349 = sphi 0, %s335
    %s353 = sphi 0, %s353
    %s355 = sphi 0, %s353
    %s356 = sphi 0, %s355
    %s370 = sphi 0, %s356
    %s374 = sphi 0, %s374
    %s376 = sphi 0, %s374
    %s377 = sphi 0, %s376
    %s391 = sphi 0, %s377
    %s395 = sphi 0, %s395
    %s397 = sphi 0, %s395
    %s398 = sphi 0, %s397
    %s412 = sphi 0, %s398
    %s416 = sphi 0, %s416
    %s418 = sphi 0, %s416
    %s419 = sphi 0, %s418
    %s433 = sphi 0, %s419
    %s439 = sphi 0, %s441
    %s442 = sphi 0, %s439
    %s443 = sphi 0, %s442
    %s459 = sphi 0, %s443
  $region4: #{lenet_forward.1} parent=0 // loop_header_branch
    %28 = sbr.rel (%p26) target = $region8
  $region5: #{lenet_forward.1} parent=0 // loop_body
    %s30 = ssub.s32 %s25, 1
    %s31 = ssub.s32 %s25, 2
    %s32 = sadd.s32 %s25, 1
    %s33 = ssub.s32 %s25, %s32
    %p34 = scmp.eq.s32.totalorder %s33, 0
    %s36 = sadd.s32 %s35, 1
    %s37 = scalar_select %p34, %s35, %s36
    %p40 = pneg %p34
    %p41 = scmp.eq.s32.totalorder %s25, 1
    %p42 = por %p40, %p41
    %p43 = scmp.ne.s32.totalorder %s35, %s38
    %p44 = scmp.eq.s32.totalorder %s25, 0
    %p45 = por %p43, %p44
    %p46 = scmp.ne.s32.totalorder %s35, %s38
    %p47 = scmp.eq.s32.totalorder %s30, 1
    %p48 = por %p46, %p47
    %p49 = scmp.ne.s32.totalorder %s38, %s39
    %p50 = scmp.eq.s32.totalorder %s30, 0
    %p51 = por %p49, %p50
    %p52 = scmp.ne.s32.totalorder %s38, %s39
    %p53 = scmp.eq.s32.totalorder %s31, 1
    %p54 = por %p52, %p53
    %p56 = scmp.ne.s32.totalorder %s39, %s55
    %p57 = scmp.eq.s32.totalorder %s31, 0
    %p58 = por %p56, %p57
    %s60 = sadd.s32 %s59, 1
    %p63 = scmp.eq.s32.totalorder %s25, 1
    %p64 = scmp.ne.s32.totalorder %s59, %s61
    %p65 = scmp.eq.s32.totalorder %s25, 0
    %p66 = por %p64, %p65
    %p67 = scmp.ne.s32.totalorder %s59, %s61
    %p68 = scmp.eq.s32.totalorder %s30, 1
    %p69 = por %p67, %p68
    %p70 = scmp.ne.s32.totalorder %s61, %s62
    %p71 = scmp.eq.s32.totalorder %s30, 0
    %p72 = por %p70, %p71
    %p73 = scmp.ne.s32.totalorder %s61, %s62
    %p74 = scmp.eq.s32.totalorder %s31, 1
    %p75 = por %p73, %p74
    %p77 = scmp.ne.s32.totalorder %s62, %s76
    %p78 = scmp.eq.s32.totalorder %s31, 0
    %p79 = por %p77, %p78
    %s81 = sadd.s32 %s80, 1
    %p84 = scmp.eq.s32.totalorder %s25, 1
    %p85 = scmp.ne.s32.totalorder %s80, %s82
    %p86 = scmp.eq.s32.totalorder %s25, 0
    %p87 = por %p85, %p86
    %p88 = scmp.ne.s32.totalorder %s80, %s82
    %p89 = scmp.eq.s32.totalorder %s30, 1
    %p90 = por %p88, %p89
    %p91 = scmp.ne.s32.totalorder %s82, %s83
    %p92 = scmp.eq.s32.totalorder %s30, 0
    %p93 = por %p91, %p92
    %p94 = scmp.ne.s32.totalorder %s82, %s83
    %p95 = scmp.eq.s32.totalorder %s31, 1
    %p96 = por %p94, %p95
    %p98 = scmp.ne.s32.totalorder %s83, %s97
    %p99 = scmp.eq.s32.totalorder %s31, 0
    %p100 = por %p98, %p99
    %s102 = sadd.s32 %s101, 1
    %p105 = scmp.eq.s32.totalorder %s25, 1
    %p106 = scmp.ne.s32.totalorder %s101, %s103
    %p107 = scmp.eq.s32.totalorder %s25, 0
    %p108 = por %p106, %p107
    %p109 = scmp.ne.s32.totalorder %s101, %s103
    %p110 = scmp.eq.s32.totalorder %s30, 1
    %p111 = por %p109, %p110
    %p112 = scmp.ne.s32.totalorder %s103, %s104
    %p113 = scmp.eq.s32.totalorder %s30, 0
    %p114 = por %p112, %p113
    %p115 = scmp.ne.s32.totalorder %s103, %s104
    %p116 = scmp.eq.s32.totalorder %s31, 1
    %p117 = por %p115, %p116
    %p119 = scmp.ne.s32.totalorder %s104, %s118
    %p120 = scmp.eq.s32.totalorder %s31, 0
    %p121 = por %p119, %p120
    %s123 = sadd.s32 %s122, 1
    %p126 = scmp.eq.s32.totalorder %s25, 1
    %p127 = scmp.ne.s32.totalorder %s122, %s124
    %p128 = scmp.eq.s32.totalorder %s25, 0
    %p129 = por %p127, %p128
    %p130 = scmp.ne.s32.totalorder %s122, %s124
    %p131 = scmp.eq.s32.totalorder %s30, 1
    %p132 = por %p130, %p131
    %p133 = scmp.ne.s32.totalorder %s124, %s125
    %p134 = scmp.eq.s32.totalorder %s30, 0
    %p135 = por %p133, %p134
    %p136 = scmp.ne.s32.totalorder %s124, %s125
    %p137 = scmp.eq.s32.totalorder %s31, 1
    %p138 = por %p136, %p137
    %p140 = scmp.ne.s32.totalorder %s125, %s139
    %p141 = scmp.eq.s32.totalorder %s31, 0
    %p142 = por %p140, %p141
    %s144 = sadd.s32 %s143, 1
    %p147 = scmp.eq.s32.totalorder %s25, 1
    %p148 = scmp.ne.s32.totalorder %s143, %s145
    %p149 = scmp.eq.s32.totalorder %s25, 0
    %p150 = por %p148, %p149
    %p151 = scmp.ne.s32.totalorder %s143, %s145
    %p152 = scmp.eq.s32.totalorder %s30, 1
    %p153 = por %p151, %p152
    %p154 = scmp.ne.s32.totalorder %s145, %s146
    %p155 = scmp.eq.s32.totalorder %s30, 0
    %p156 = por %p154, %p155
    %p157 = scmp.ne.s32.totalorder %s145, %s146
    %p158 = scmp.eq.s32.totalorder %s31, 1
    %p159 = por %p157, %p158
    %p161 = scmp.ne.s32.totalorder %s146, %s160
    %p162 = scmp.eq.s32.totalorder %s31, 0
    %p163 = por %p161, %p162
    %s165 = sadd.s32 %s164, 1
    %p168 = scmp.eq.s32.totalorder %s25, 1
    %p169 = scmp.ne.s32.totalorder %s164, %s166
    %p170 = scmp.eq.s32.totalorder %s25, 0
    %p171 = por %p169, %p170
    %p172 = scmp.ne.s32.totalorder %s164, %s166
    %p173 = scmp.eq.s32.totalorder %s30, 1
    %p174 = por %p172, %p173
    %p175 = scmp.ne.s32.totalorder %s166, %s167
    %p176 = scmp.eq.s32.totalorder %s30, 0
    %p177 = por %p175, %p176
    %p178 = scmp.ne.s32.totalorder %s166, %s167
    %p179 = scmp.eq.s32.totalorder %s31, 1
    %p180 = por %p178, %p179
    %p182 = scmp.ne.s32.totalorder %s167, %s181
    %p183 = scmp.eq.s32.totalorder %s31, 0
    %p184 = por %p182, %p183
    %s186 = sadd.s32 %s185, 1
    %p189 = scmp.eq.s32.totalorder %s25, 1
    %p190 = scmp.ne.s32.totalorder %s185, %s187
    %p191 = scmp.eq.s32.totalorder %s25, 0
    %p192 = por %p190, %p191
    %p193 = scmp.ne.s32.totalorder %s185, %s187
    %p194 = scmp.eq.s32.totalorder %s30, 1
    %p195 = por %p193, %p194
    %p196 = scmp.ne.s32.totalorder %s187, %s188
    %p197 = scmp.eq.s32.totalorder %s30, 0
    %p198 = por %p196, %p197
    %p199 = scmp.ne.s32.totalorder %s187, %s188
    %p200 = scmp.eq.s32.totalorder %s31, 1
    %p201 = por %p199, %p200
    %p203 = scmp.ne.s32.totalorder %s188, %s202
    %p204 = scmp.eq.s32.totalorder %s31, 0
    %p205 = por %p203, %p204
    %s207 = sadd.s32 %s206, 1
    %p210 = scmp.eq.s32.totalorder %s25, 1
    %p211 = scmp.ne.s32.totalorder %s206, %s208
    %p212 = scmp.eq.s32.totalorder %s25, 0
    %p213 = por %p211, %p212
    %p214 = scmp.ne.s32.totalorder %s206, %s208
    %p215 = scmp.eq.s32.totalorder %s30, 1
    %p216 = por %p214, %p215
    %p217 = scmp.ne.s32.totalorder %s208, %s209
    %p218 = scmp.eq.s32.totalorder %s30, 0
    %p219 = por %p217, %p218
    %p220 = scmp.ne.s32.totalorder %s208, %s209
    %p221 = scmp.eq.s32.totalorder %s31, 1
    %p222 = por %p220, %p221
    %p224 = scmp.ne.s32.totalorder %s209, %s223
    %p225 = scmp.eq.s32.totalorder %s31, 0
    %p226 = por %p224, %p225
    %s228 = sadd.s32 %s227, 1
    %p231 = scmp.eq.s32.totalorder %s25, 1
    %p232 = scmp.ne.s32.totalorder %s227, %s229
    %p233 = scmp.eq.s32.totalorder %s25, 0
    %p234 = por %p232, %p233
    %p235 = scmp.ne.s32.totalorder %s227, %s229
    %p236 = scmp.eq.s32.totalorder %s30, 1
    %p237 = por %p235, %p236
    %p238 = scmp.ne.s32.totalorder %s229, %s230
    %p239 = scmp.eq.s32.totalorder %s30, 0
    %p240 = por %p238, %p239
    %p241 = scmp.ne.s32.totalorder %s229, %s230
    %p242 = scmp.eq.s32.totalorder %s31, 1
    %p243 = por %p241, %p242
    %p245 = scmp.ne.s32.totalorder %s230, %s244
    %p246 = scmp.eq.s32.totalorder %s31, 0
    %p247 = por %p245, %p246
    %s249 = sadd.s32 %s248, 1
    %p252 = scmp.eq.s32.totalorder %s25, 1
    %p253 = scmp.ne.s32.totalorder %s248, %s250
    %p254 = scmp.eq.s32.totalorder %s25, 0
    %p255 = por %p253, %p254
    %p256 = scmp.ne.s32.totalorder %s248, %s250
    %p257 = scmp.eq.s32.totalorder %s30, 1
    %p258 = por %p256, %p257
    %p259 = scmp.ne.s32.totalorder %s250, %s251
    %p260 = scmp.eq.s32.totalorder %s30, 0
    %p261 = por %p259, %p260
    %p262 = scmp.ne.s32.totalorder %s250, %s251
    %p263 = scmp.eq.s32.totalorder %s31, 1
    %p264 = por %p262, %p263
    %p266 = scmp.ne.s32.totalorder %s251, %s265
    %p267 = scmp.eq.s32.totalorder %s31, 0
    %p268 = por %p266, %p267
    %s270 = sadd.s32 %s269, 1
    %p273 = scmp.eq.s32.totalorder %s25, 1
    %p274 = scmp.ne.s32.totalorder %s269, %s271
    %p275 = scmp.eq.s32.totalorder %s25, 0
    %p276 = por %p274, %p275
    %p277 = scmp.ne.s32.totalorder %s269, %s271
    %p278 = scmp.eq.s32.totalorder %s30, 1
    %p279 = por %p277, %p278
    %p280 = scmp.ne.s32.totalorder %s271, %s272
    %p281 = scmp.eq.s32.totalorder %s30, 0
    %p282 = por %p280, %p281
    %p283 = scmp.ne.s32.totalorder %s271, %s272
    %p284 = scmp.eq.s32.totalorder %s31, 1
    %p285 = por %p283, %p284
    %p287 = scmp.ne.s32.totalorder %s272, %s286
    %p288 = scmp.eq.s32.totalorder %s31, 0
    %p289 = por %p287, %p288
    %s291 = sadd.s32 %s290, 1
    %p294 = scmp.eq.s32.totalorder %s25, 1
    %p295 = scmp.ne.s32.totalorder %s290, %s292
    %p296 = scmp.eq.s32.totalorder %s25, 0
    %p297 = por %p295, %p296
    %p298 = scmp.ne.s32.totalorder %s290, %s292
    %p299 = scmp.eq.s32.totalorder %s30, 1
    %p300 = por %p298, %p299
    %p301 = scmp.ne.s32.totalorder %s292, %s293
    %p302 = scmp.eq.s32.totalorder %s30, 0
    %p303 = por %p301, %p302
    %p304 = scmp.ne.s32.totalorder %s292, %s293
    %p305 = scmp.eq.s32.totalorder %s31, 1
    %p306 = por %p304, %p305
    %p308 = scmp.ne.s32.totalorder %s293, %s307
    %p309 = scmp.eq.s32.totalorder %s31, 0
    %p310 = por %p308, %p309
    %s312 = sadd.s32 %s311, 1
    %p315 = scmp.eq.s32.totalorder %s25, 1
    %p316 = scmp.ne.s32.totalorder %s311, %s313
    %p317 = scmp.eq.s32.totalorder %s25, 0
    %p318 = por %p316, %p317
    %p319 = scmp.ne.s32.totalorder %s311, %s313
    %p320 = scmp.eq.s32.totalorder %s30, 1
    %p321 = por %p319, %p320
    %p322 = scmp.ne.s32.totalorder %s313, %s314
    %p323 = scmp.eq.s32.totalorder %s30, 0
    %p324 = por %p322, %p323
    %p325 = scmp.ne.s32.totalorder %s313, %s314
    %p326 = scmp.eq.s32.totalorder %s31, 1
    %p327 = por %p325, %p326
    %p329 = scmp.ne.s32.totalorder %s314, %s328
    %p330 = scmp.eq.s32.totalorder %s31, 0
    %p331 = por %p329, %p330
    %s333 = sadd.s32 %s332, 1
    %p336 = scmp.eq.s32.totalorder %s25, 1
    %p337 = scmp.ne.s32.totalorder %s332, %s334
    %p338 = scmp.eq.s32.totalorder %s25, 0
    %p339 = por %p337, %p338
    %p340 = scmp.ne.s32.totalorder %s332, %s334
    %p341 = scmp.eq.s32.totalorder %s30, 1
    %p342 = por %p340, %p341
    %p343 = scmp.ne.s32.totalorder %s334, %s335
    %p344 = scmp.eq.s32.totalorder %s30, 0
    %p345 = por %p343, %p344
    %p346 = scmp.ne.s32.totalorder %s334, %s335
    %p347 = scmp.eq.s32.totalorder %s31, 1
    %p348 = por %p346, %p347
    %p350 = scmp.ne.s32.totalorder %s335, %s349
    %p351 = scmp.eq.s32.totalorder %s31, 0
    %p352 = por %p350, %p351
    %s354 = sadd.s32 %s353, 1
    %p357 = scmp.eq.s32.totalorder %s25, 1
    %p358 = scmp.ne.s32.totalorder %s353, %s355
    %p359 = scmp.eq.s32.totalorder %s25, 0
    %p360 = por %p358, %p359
    %p361 = scmp.ne.s32.totalorder %s353, %s355
    %p362 = scmp.eq.s32.totalorder %s30, 1
    %p363 = por %p361, %p362
    %p364 = scmp.ne.s32.totalorder %s355, %s356
    %p365 = scmp.eq.s32.totalorder %s30, 0
    %p366 = por %p364, %p365
    %p367 = scmp.ne.s32.totalorder %s355, %s356
    %p368 = scmp.eq.s32.totalorder %s31, 1
    %p369 = por %p367, %p368
    %p371 = scmp.ne.s32.totalorder %s356, %s370
    %p372 = scmp.eq.s32.totalorder %s31, 0
    %p373 = por %p371, %p372
    %s375 = sadd.s32 %s374, 1
    %p378 = scmp.eq.s32.totalorder %s25, 1
    %p379 = scmp.ne.s32.totalorder %s374, %s376
    %p380 = scmp.eq.s32.totalorder %s25, 0
    %p381 = por %p379, %p380
    %p382 = scmp.ne.s32.totalorder %s374, %s376
    %p383 = scmp.eq.s32.totalorder %s30, 1
    %p384 = por %p382, %p383
    %p385 = scmp.ne.s32.totalorder %s376, %s377
    %p386 = scmp.eq.s32.totalorder %s30, 0
    %p387 = por %p385, %p386
    %p388 = scmp.ne.s32.totalorder %s376, %s377
    %p389 = scmp.eq.s32.totalorder %s31, 1
    %p390 = por %p388, %p389
    %p392 = scmp.ne.s32.totalorder %s377, %s391
    %p393 = scmp.eq.s32.totalorder %s31, 0
    %p394 = por %p392, %p393
    %s396 = sadd.s32 %s395, 1
    %p399 = scmp.eq.s32.totalorder %s25, 1
    %p400 = scmp.ne.s32.totalorder %s395, %s397
    %p401 = scmp.eq.s32.totalorder %s25, 0
    %p402 = por %p400, %p401
    %p403 = scmp.ne.s32.totalorder %s395, %s397
    %p404 = scmp.eq.s32.totalorder %s30, 1
    %p405 = por %p403, %p404
    %p406 = scmp.ne.s32.totalorder %s397, %s398
    %p407 = scmp.eq.s32.totalorder %s30, 0
    %p408 = por %p406, %p407
    %p409 = scmp.ne.s32.totalorder %s397, %s398
    %p410 = scmp.eq.s32.totalorder %s31, 1
    %p411 = por %p409, %p410
    %p413 = scmp.ne.s32.totalorder %s398, %s412
    %p414 = scmp.eq.s32.totalorder %s31, 0
    %p415 = por %p413, %p414
    %s417 = sadd.s32 %s416, 1
    %p420 = scmp.eq.s32.totalorder %s25, 1
    %p421 = scmp.ne.s32.totalorder %s416, %s418
    %p422 = scmp.eq.s32.totalorder %s25, 0
    %p423 = por %p421, %p422
    %p424 = scmp.ne.s32.totalorder %s416, %s418
    %p425 = scmp.eq.s32.totalorder %s30, 1
    %p426 = por %p424, %p425
    %p427 = scmp.ne.s32.totalorder %s418, %s419
    %p428 = scmp.eq.s32.totalorder %s30, 0
    %p429 = por %p427, %p428
    %p430 = scmp.ne.s32.totalorder %s418, %s419
    %p431 = scmp.eq.s32.totalorder %s31, 1
    %p432 = por %p430, %p431
    %p434 = scmp.ne.s32.totalorder %s419, %s433
    %p435 = scmp.eq.s32.totalorder %s31, 0
    %p436 = por %p434, %p435
    %s437 = ssub.s32 %s25, %s32
    %p438 = scmp.eq.s32.totalorder %s437, 0
    %s440 = sadd.s32 %s439, 1
    %s441 = scalar_select %p438, %s439, %s440
    %p444 = pneg %p438
    %p445 = scmp.eq.s32.totalorder %s25, 1
    %p446 = por %p444, %p445
    %p447 = scmp.ne.s32.totalorder %s439, %s442
    %p448 = scmp.eq.s32.totalorder %s25, 0
    %p449 = por %p447, %p448
    %p450 = scmp.ne.s32.totalorder %s439, %s442
    %p451 = scmp.eq.s32.totalorder %s30, 1
    %p452 = por %p450, %p451
    %p453 = scmp.ne.s32.totalorder %s442, %s443
    %p454 = scmp.eq.s32.totalorder %s30, 0
    %p455 = por %p453, %p454
    %p456 = scmp.ne.s32.totalorder %s442, %s443
    %p457 = scmp.eq.s32.totalorder %s31, 1
    %p458 = por %p456, %p457
    %p460 = scmp.ne.s32.totalorder %s443, %s459
    %p461 = scmp.eq.s32.totalorder %s31, 0
    %p462 = por %p460, %p461
    %p463 = scmp.le.s32.totalorder 1, %s25
    %p464 = scmp.lt.s32.totalorder %s25, 3
    %p465 = pnand %p463, %p464
    %p466 = pneg %p465
    // Predicated region
    $region9: #{lenet_forward.1} parent=5 // pred_check
      _
    $region10: #{lenet_forward.1} parent=5 // pred_check_branch
      %468 = sbr.rel (%p465) target = $region12
    $region11: #{lenet_forward.1} parent=5 // pred_region
      %s469 = ssub.s32 %s25, 1
      // Predicated region
      $region13: #{lenet_forward.1} parent=11 // pred_check
        %p470 = pneg %p72
      $region14: #{lenet_forward.1} parent=11 // pred_check_branch
        %472 = sbr.rel (%p470) target = $region16
      $region15: #{lenet_forward.1} parent=11 // pred_region
        _
      $region16: #{lenet_forward.1} parent=11 // pred_fallthru
        _
      // Predicated region
      $region17: #{lenet_forward.1} parent=11 // pred_check
        %p473 = pneg %p93
      $region18: #{lenet_forward.1} parent=11 // pred_check_branch
        %475 = sbr.rel (%p473) target = $region20
      $region19: #{lenet_forward.1} parent=11 // pred_region
        _
      $region20: #{lenet_forward.1} parent=11 // pred_fallthru
        _
      // Predicated region
      $region21: #{lenet_forward.1} parent=11 // pred_check
        %p476 = pneg %p114
      $region22: #{lenet_forward.1} parent=11 // pred_check_branch
        %478 = sbr.rel (%p476) target = $region24
      $region23: #{lenet_forward.1} parent=11 // pred_region
        _
      $region24: #{lenet_forward.1} parent=11 // pred_fallthru
        _
      // Predicated region
      $region25: #{lenet_forward.1} parent=11 // pred_check
        %p479 = pneg %p135
      $region26: #{lenet_forward.1} parent=11 // pred_check_branch
        %481 = sbr.rel (%p479) target = $region28
      $region27: #{lenet_forward.1} parent=11 // pred_region
        _
      $region28: #{lenet_forward.1} parent=11 // pred_fallthru
        _
      // Predicated region
      $region29: #{lenet_forward.1} parent=11 // pred_check
        %p482 = pneg %p156
      $region30: #{lenet_forward.1} parent=11 // pred_check_branch
        %484 = sbr.rel (%p482) target = $region32
      $region31: #{lenet_forward.1} parent=11 // pred_region
        _
      $region32: #{lenet_forward.1} parent=11 // pred_fallthru
        _
      // Predicated region
      $region33: #{lenet_forward.1} parent=11 // pred_check
        %p485 = pneg %p177
      $region34: #{lenet_forward.1} parent=11 // pred_check_branch
        %487 = sbr.rel (%p485) target = $region36
      $region35: #{lenet_forward.1} parent=11 // pred_region
        _
      $region36: #{lenet_forward.1} parent=11 // pred_fallthru
        _
      // Predicated region
      $region37: #{lenet_forward.1} parent=11 // pred_check
        %p488 = pneg %p198
      $region38: #{lenet_forward.1} parent=11 // pred_check_branch
        %490 = sbr.rel (%p488) target = $region40
      $region39: #{lenet_forward.1} parent=11 // pred_region
        _
      $region40: #{lenet_forward.1} parent=11 // pred_fallthru
        _
      // Predicated region
      $region41: #{lenet_forward.1} parent=11 // pred_check
        %p491 = pneg %p219
      $region42: #{lenet_forward.1} parent=11 // pred_check_branch
        %493 = sbr.rel (%p491) target = $region44
      $region43: #{lenet_forward.1} parent=11 // pred_region
        _
      $region44: #{lenet_forward.1} parent=11 // pred_fallthru
        _
      // Predicated region
      $region45: #{lenet_forward.1} parent=11 // pred_check
        %p494 = pneg %p240
      $region46: #{lenet_forward.1} parent=11 // pred_check_branch
        %496 = sbr.rel (%p494) target = $region48
      $region47: #{lenet_forward.1} parent=11 // pred_region
        _
      $region48: #{lenet_forward.1} parent=11 // pred_fallthru
        _
      // Predicated region
      $region49: #{lenet_forward.1} parent=11 // pred_check
        %p497 = pneg %p261
      $region50: #{lenet_forward.1} parent=11 // pred_check_branch
        %499 = sbr.rel (%p497) target = $region52
      $region51: #{lenet_forward.1} parent=11 // pred_region
        _
      $region52: #{lenet_forward.1} parent=11 // pred_fallthru
        _
      // Predicated region
      $region53: #{lenet_forward.1} parent=11 // pred_check
        %p500 = pneg %p282
      $region54: #{lenet_forward.1} parent=11 // pred_check_branch
        %502 = sbr.rel (%p500) target = $region56
      $region55: #{lenet_forward.1} parent=11 // pred_region
        _
      $region56: #{lenet_forward.1} parent=11 // pred_fallthru
        _
      // Predicated region
      $region57: #{lenet_forward.1} parent=11 // pred_check
        %p503 = pneg %p303
      $region58: #{lenet_forward.1} parent=11 // pred_check_branch
        %505 = sbr.rel (%p503) target = $region60
      $region59: #{lenet_forward.1} parent=11 // pred_region
        _
      $region60: #{lenet_forward.1} parent=11 // pred_fallthru
        _
      // Predicated region
      $region61: #{lenet_forward.1} parent=11 // pred_check
        %p506 = pneg %p324
      $region62: #{lenet_forward.1} parent=11 // pred_check_branch
        %508 = sbr.rel (%p506) target = $region64
      $region63: #{lenet_forward.1} parent=11 // pred_region
        _
      $region64: #{lenet_forward.1} parent=11 // pred_fallthru
        _
      // Predicated region
      $region65: #{lenet_forward.1} parent=11 // pred_check
        %p509 = pneg %p345
      $region66: #{lenet_forward.1} parent=11 // pred_check_branch
        %511 = sbr.rel (%p509) target = $region68
      $region67: #{lenet_forward.1} parent=11 // pred_region
        _
      $region68: #{lenet_forward.1} parent=11 // pred_fallthru
        _
      // Predicated region
      $region69: #{lenet_forward.1} parent=11 // pred_check
        %p512 = pneg %p366
      $region70: #{lenet_forward.1} parent=11 // pred_check_branch
        %514 = sbr.rel (%p512) target = $region72
      $region71: #{lenet_forward.1} parent=11 // pred_region
        _
      $region72: #{lenet_forward.1} parent=11 // pred_fallthru
        _
      // Predicated region
      $region73: #{lenet_forward.1} parent=11 // pred_check
        %p515 = pneg %p387
      $region74: #{lenet_forward.1} parent=11 // pred_check_branch
        %517 = sbr.rel (%p515) target = $region76
      $region75: #{lenet_forward.1} parent=11 // pred_region
        _
      $region76: #{lenet_forward.1} parent=11 // pred_fallthru
        _
      // Predicated region
      $region77: #{lenet_forward.1} parent=11 // pred_check
        %p518 = pneg %p408
      $region78: #{lenet_forward.1} parent=11 // pred_check_branch
        %520 = sbr.rel (%p518) target = $region80
      $region79: #{lenet_forward.1} parent=11 // pred_region
        _
      $region80: #{lenet_forward.1} parent=11 // pred_fallthru
        _
      // Predicated region
      $region81: #{lenet_forward.1} parent=11 // pred_check
        %p521 = pneg %p429
      $region82: #{lenet_forward.1} parent=11 // pred_check_branch
        %523 = sbr.rel (%p521) target = $region84
      $region83: #{lenet_forward.1} parent=11 // pred_region
        _
      $region84: #{lenet_forward.1} parent=11 // pred_fallthru
        _
    $region12: #{lenet_forward.1} parent=5 // pred_fallthru
      _
    %p524 = scmp.lt.s32.totalorder %s25, 2
    // Predicated region
    $region85: #{lenet_forward.1} parent=5 // pred_check
      %p525 = pneg %p524
    $region86: #{lenet_forward.1} parent=5 // pred_check_branch
      %527 = sbr.rel (%p525) target = $region88
    $region87: #{lenet_forward.1} parent=5 // pred_region
      // Predicated region
      $region89: #{lenet_forward.1} parent=87 // pred_check
        %p528 = pneg %p45
      $region90: #{lenet_forward.1} parent=87 // pred_check_branch
        %530 = sbr.rel (%p528) target = $region92
      $region91: #{lenet_forward.1} parent=87 // pred_region
        %p531 = scmp.lt.s32.totalorder %s25, 1
        %s532 = scalar_select %p531, %s25, 1
        %s533 = smul.addr %s532, 4
        %s534 = smul.addr %s533, 8
        %s535 = scalar_lea.vmem %s0, %s534
      $region92: #{lenet_forward.1} parent=87 // pred_fallthru
        _
    $region88: #{lenet_forward.1} parent=5 // pred_fallthru
      _
    %p536 = scmp.le.s32.totalorder 1, %s25
    %p537 = scmp.lt.s32.totalorder %s25, 3
    %p538 = pnand %p536, %p537
    %p539 = pneg %p538
    // Predicated region
    $region93: #{lenet_forward.1} parent=5 // pred_check
      _
    $region94: #{lenet_forward.1} parent=5 // pred_check_branch
      %541 = sbr.rel (%p538) target = $region96
    $region95: #{lenet_forward.1} parent=5 // pred_region
      %s542 = ssub.s32 %s25, 1
      %p543 = scmp.lt.s32.totalorder %s30, 1
      %s544 = scalar_select %p543, %s30, 1
      %s545 = smul.addr %s544, 4
      %s546 = smul.addr %s545, 8
      %s547 = scalar_lea.vmem %s0, %s546
      %p548 = pneg %p51
      %p549 = pneg %p48
      %p550 = pneg %p72
      %p551 = pneg %p69
      %p552 = pneg %p93
      %p553 = pneg %p90
      %p554 = pneg %p114
      %p555 = pneg %p111
      %p556 = pneg %p135
      %p557 = pneg %p132
      %p558 = pneg %p156
      %p559 = pneg %p153
      %p560 = pneg %p177
      %p561 = pneg %p174
      %p562 = pneg %p198
      %p563 = pneg %p195
      %p564 = pneg %p219
      %p565 = pneg %p216
      %p566 = pneg %p240
      %p567 = pneg %p237
      %p568 = pneg %p261
      %p569 = pneg %p258
      %p570 = pneg %p282
      %p571 = pneg %p279
      %p572 = pneg %p303
      %p573 = pneg %p300
      %p574 = pneg %p324
      %p575 = pneg %p321
      %p576 = pneg %p345
      %p577 = pneg %p342
      %p578 = pneg %p366
      %p579 = pneg %p363
      %p580 = pneg %p387
      %p581 = pneg %p384
      %p582 = pneg %p408
      %p583 = pneg %p405
      %p584 = pneg %p429
      %p585 = pneg %p426
      %p586 = pneg %p455
      %p587 = pneg %p452
      %p588 = scmp.lt.s32.totalorder %s30, 1
      %s589 = scalar_select %p588, %s30, 1
      %s590 = smul.addr %s589, 2
      %s591 = smul.addr %s590, 8
      %s592 = scalar_lea.vmem %s19, %s591
      %p593 = scmp.lt.s32.totalorder %s30, 1
      %s594 = scalar_select %p593, %s30, 1
      %s595 = smul.addr %s594, 4
      %s596 = smul.addr %s595, 8
      %s597 = scalar_lea.vmem %s0, %s596
      %p598 = scmp.lt.s32.totalorder %s30, 1
      %s599 = scalar_select %p598, %s30, 1
      %s600 = smul.addr %s599, 2
      %s601 = smul.addr %s600, 8
      %s602 = scalar_lea.vmem %s19, %s601
      %v603 = vld [vmem:[%s2] sm:$0xff]
      %v604 = vld [vmem:[%s2 + $0x8] sm:$0xff]
      %v605 = vld [vmem:[%s2 + $0x10] sm:$0xff]
      %v606 = vld [vmem:[%s2 + $0x18] sm:$0xff]
      %v607 = vld [vmem:[%s2 + $0x20] sm:$0xff]
      %v608 = vld [vmem:[%s2 + $0x28] sm:$0xff]
      %v609 = vld [vmem:[%s2 + $0x30] sm:$0xff]
      %v610 = vld [vmem:[%s2 + $0x38] sm:$0xff]
      %v611 = vld [vmem:[%s2 + $0x40] sm:$0xff]
      %v612 = vld [vmem:[%s2 + $0x48] sm:$0xff]
      %v613 = vld [vmem:[%s2 + $0x50] sm:$0xff]
      %v614 = vld [vmem:[%s2 + $0x58] sm:$0xff]
      %v615 = vld [vmem:[%s2 + $0x60] sm:$0xff]
      %v616 = vld [vmem:[%s2 + $0x68] sm:$0xff]
      %v617 = vld [vmem:[%s2 + $0x70] sm:$0xff]
      %v618 = vld [vmem:[%s2 + $0x78] sm:$0xff]
      %v619 = vld [vmem:[%s2 + $0x80] sm:$0xff]
      %v620 = vld [vmem:[%s2 + $0x88] sm:$0xff]
      %v621 = vld [vmem:[%s2 + $0x90] sm:$0xff]
      %v622 = vld [vmem:[%s2 + $0x98] sm:$0xff]
      %v623 = vld [vmem:[%s2 + $0xa0] sm:$0xff]
      %v624 = vld [vmem:[%s1] sm:$0xff]
      %v625 = vld [vmem:[%s1 + $0x8] sm:$0xff]
      %v626 = vld [vmem:[%s1 + $0x10] sm:$0xff]
      %v627 = vld [vmem:[%s1 + $0x18] sm:$0xff]
      %v628 = vld [vmem:[%s1 + $0x20] sm:$0xff]
      %v629 = vld [vmem:[%s1 + $0x28] sm:$0xff]
      %v630 = vld [vmem:[%s1 + $0x30] sm:$0xff]
      %v631 = vld [vmem:[%s1 + $0x38] sm:$0xff]
      %v632 = vld [vmem:[%s1 + $0x40] sm:$0xff]
      %v633 = vld [vmem:[%s1 + $0x48] sm:$0xff]
      %v634 = vld [vmem:[%s1 + $0x50] sm:$0xff]
      %v635 = vld [vmem:[%s1 + $0x58] sm:$0xff]
      %v636 = vld [vmem:[%s1 + $0x60] sm:$0xff]
      %v637 = vld [vmem:[%s1 + $0x68] sm:$0xff]
      %v638 = vld [vmem:[%s1 + $0x70] sm:$0xff]
      %v639 = vld [vmem:[%s1 + $0x78] sm:$0xff]
      %v640 = vld [vmem:[%s1 + $0x80] sm:$0xff]
      %v641 = vld [vmem:[%s1 + $0x88] sm:$0xff]
      %v642 = vld [vmem:[%s1 + $0x90] sm:$0xff]
      %v643 = vld [vmem:[%s1 + $0x98] sm:$0xff]
      %v644 = vld [vmem:[%s1 + $0xa0] sm:$0xff]
      %v645 = vld [vmem:[%s597] sm:$0xff]
      %v646 = vld [vmem:[%s597 + $0x8] sm:$0xff]
      %v647 = vld [vmem:[%s597 + $0x10] sm:$0xff]
      %v648 = vld [vmem:[%s597 + $0x18] sm:$0xff]
      %v649 = vmax.f32 %v645, 0.0
      %v650 = vmax.f32 %v646, 0.0
      %v651 = vmax.f32 %v647, 0.0
      %v652 = vmax.f32 %v648, 0.0
      %vm653 = vcmask 261120
      %v655 = vsel %vm653, %v624, 0
      %v658 = vsel %vm653, %v625, 0
      %v661 = vsel %vm653, %v626, 0
      %v664 = vsel %vm653, %v627, 0
      %v667 = vsel %vm653, %v628, 0
      %v670 = vsel %vm653, %v629, 0
      %v673 = vsel %vm653, %v630, 0
      %v676 = vsel %vm653, %v631, 0
      %v679 = vsel %vm653, %v632, 0
      %v682 = vsel %vm653, %v633, 0
      %v685 = vsel %vm653, %v634, 0
      %v688 = vsel %vm653, %v635, 0
      %v691 = vsel %vm653, %v636, 0
      %v694 = vsel %vm653, %v637, 0
      %v697 = vsel %vm653, %v638, 0
      %v700 = vsel %vm653, %v639, 0
      %v703 = vsel %vm653, %v640, 0
      %v706 = vsel %vm653, %v641, 0
      %v709 = vsel %vm653, %v642, 0
      %v712 = vsel %vm653, %v643, 0
      %v715 = vsel %vm653, %v644, 0
      %717 = vmatprep.subr.mxu0 0.0
      %718 = vmatpush1.msra.mxu0 0.0
      %719 = vmatprep.subr.mxu0 0.0
      %720 = vmatpush1.msra.mxu0 0.0
      %721 = vmatprep.subr.mxu0 0.0
      %722 = vmatpush1.msra.mxu0 0.0
      %723 = vmatprep.subr.mxu0 0.0
      %724 = vmatpush1.msra.mxu0 0.0
      %725 = vmatprep.subr.mxu0 0.0
      %726 = vmatpush1.msra.mxu0 0.0
      %727 = vmatprep.subr.mxu0 0.0
      %728 = vmatpush1.msra.mxu0 0.0
      %729 = vmatprep.subr.mxu0 0.0
      %730 = vmatpush1.msra.mxu0 0.0
      %731 = vmatprep.subr.mxu0 0.0
      %732 = vmatpush1.msra.mxu0 0.0
      %733 = vmatprep.subr.mxu0 0.0
      %734 = vmatpush1.msra.mxu0 0.0
      %735 = vmatprep.subr.mxu0 0.0
      %736 = vmatpush1.msra.mxu0 0.0
      %737 = vmatprep.subr.mxu0 0.0
      %738 = vmatpush1.msra.mxu0 0.0
      %739 = vmatprep.subr.mxu0 0.0
      %740 = vmatpush1.msra.mxu0 0.0
      %741 = vmatprep.subr.mxu0 0.0
      %742 = vmatpush1.msra.mxu0 %v652
      %743 = vmatprep.subr.mxu0 0.0
      %744 = vmatpush1.msra.mxu0 %v651
      %745 = vmatprep.subr.mxu0 0.0
      %746 = vmatpush1.msra.mxu0 %v650
      %747 = vmatprep.subr.mxu0 0.0
      %748 = vmatpush1.msra.mxu0 %v649
      %749 = vmatprep.subr.mxu0 0.0
      %750 = vmatpush2.msra.mxu0 0.0
      %751 = vmatprep.subr.mxu0 0.0
      %752 = vmatpush2.msra.mxu0 0.0
      %753 = vmatprep.subr.mxu0 0.0
      %754 = vmatpush2.msra.mxu0 0.0
      %755 = vmatprep.subr.mxu0 0.0
      %756 = vmatpush2.msra.mxu0 0.0
      %757 = vmatprep.subr.mxu0 0.0
      %758 = vmatpush2.msra.mxu0 0.0
      %759 = vmatprep.subr.mxu0 0.0
      %760 = vmatpush2.msra.mxu0 0.0
      %761 = vmatprep.subr.mxu0 0.0
      %762 = vmatpush2.msra.mxu0 0.0
      %763 = vmatprep.subr.mxu0 0.0
      %764 = vmatpush2.msra.mxu0 0.0
      %765 = vmatprep.subr.mxu0 0.0
      %766 = vmatpush2.msra.mxu0 0.0
      %767 = vmatprep.subr.mxu0 0.0
      %768 = vmatpush2.msra.mxu0 0.0
      %769 = vmatprep.subr.mxu0 0.0
      %770 = vmatpush2.msra.mxu0 0.0
      %771 = vmatprep.subr.mxu0 0.0
      %772 = vmatpush2.msra.mxu0 0.0
      %773 = vmatprep.subr.mxu0 0.0
      %774 = vmatpush2.msra.mxu0 0.0
      %775 = vmatprep.subr.mxu0 0.0
      %776 = vmatpush2.msra.mxu0 0.0
      %777 = vmatprep.subr.mxu0 0.0
      %778 = vmatpush2.msra.mxu0 0.0
      %779 = vmatprep.subr.mxu0 0.0
      %780 = vmatpush2.msra.mxu0 0.0
      %781 = vmatprep.mubr.f32.mxu0 0.0
      %782 = vmatmul.mubr.f32.gmra.mxu0 %v655
      %v783 = vpop.f32.mrf.mxu0
      %v784 = vadd.f32 0.0, %v783
      %v785 = vpop.f32.mrf.mxu0
      %786 = vmatprep.mubr.f32.mxu0 0.0
      %787 = vmatmul.mubr.f32.gmra.mxu0 %v658
      %v788 = vpop.f32.mrf.mxu0
      %v789 = vadd.f32 0.0, %v788
      %v790 = vpop.f32.mrf.mxu0
      %791 = vmatprep.mubr.f32.mxu0 0.0
      %792 = vmatmul.mubr.f32.gmra.mxu0 %v661
      %v793 = vpop.f32.mrf.mxu0
      %v794 = vadd.f32 0.0, %v793
      %v795 = vpop.f32.mrf.mxu0
      %796 = vmatprep.mubr.f32.mxu0 0.0
      %797 = vmatmul.mubr.f32.gmra.mxu0 %v664
      %v798 = vpop.f32.mrf.mxu0
      %v799 = vadd.f32 0.0, %v798
      %v800 = vpop.f32.mrf.mxu0
      %801 = vmatprep.mubr.f32.mxu0 0.0
      %802 = vmatmul.mubr.f32.gmra.mxu0 %v667
      %v803 = vpop.f32.mrf.mxu0
      %v804 = vadd.f32 0.0, %v803
      %v805 = vpop.f32.mrf.mxu0
      %806 = vmatprep.mubr.f32.mxu0 0.0
      %807 = vmatmul.mubr.f32.gmra.mxu0 %v670
      %v808 = vpop.f32.mrf.mxu0
      %v809 = vadd.f32 0.0, %v808
      %v810 = vpop.f32.mrf.mxu0
      %811 = vmatprep.mubr.f32.mxu0 0.0
      %812 = vmatmul.mubr.f32.gmra.mxu0 %v673
      %v813 = vpop.f32.mrf.mxu0
      %v814 = vadd.f32 0.0, %v813
      %v815 = vpop.f32.mrf.mxu0
      %816 = vmatprep.mubr.f32.mxu0 0.0
      %817 = vmatmul.mubr.f32.gmra.mxu0 %v676
      %v818 = vpop.f32.mrf.mxu0
      %v819 = vadd.f32 0.0, %v818
      %v820 = vpop.f32.mrf.mxu0
      %821 = vmatprep.mubr.f32.mxu0 0.0
      %822 = vmatmul.mubr.f32.gmra.mxu0 %v679
      %v823 = vpop.f32.mrf.mxu0
      %v824 = vadd.f32 0.0, %v823
      %v825 = vpop.f32.mrf.mxu0
      %826 = vmatprep.mubr.f32.mxu0 0.0
      %827 = vmatmul.mubr.f32.gmra.mxu0 %v682
      %v828 = vpop.f32.mrf.mxu0
      %v829 = vadd.f32 0.0, %v828
      %v830 = vpop.f32.mrf.mxu0
      %831 = vmatprep.mubr.f32.mxu0 0.0
      %832 = vmatmul.mubr.f32.gmra.mxu0 %v685
      %v833 = vpop.f32.mrf.mxu0
      %v834 = vadd.f32 0.0, %v833
      %v835 = vpop.f32.mrf.mxu0
      %836 = vmatprep.mubr.f32.mxu0 0.0
      %837 = vmatmul.mubr.f32.gmra.mxu0 %v688
      %v838 = vpop.f32.mrf.mxu0
      %v839 = vadd.f32 0.0, %v838
      %v840 = vpop.f32.mrf.mxu0
      %841 = vmatprep.mubr.f32.mxu0 0.0
      %842 = vmatmul.mubr.f32.gmra.mxu0 %v691
      %v843 = vpop.f32.mrf.mxu0
      %v844 = vadd.f32 0.0, %v843
      %v845 = vpop.f32.mrf.mxu0
      %846 = vmatprep.mubr.f32.mxu0 0.0
      %847 = vmatmul.mubr.f32.gmra.mxu0 %v694
      %v848 = vpop.f32.mrf.mxu0
      %v849 = vadd.f32 0.0, %v848
      %v850 = vpop.f32.mrf.mxu0
      %851 = vmatprep.mubr.f32.mxu0 0.0
      %852 = vmatmul.mubr.f32.gmra.mxu0 %v697
      %v853 = vpop.f32.mrf.mxu0
      %v854 = vadd.f32 0.0, %v853
      %v855 = vpop.f32.mrf.mxu0
      %856 = vmatprep.mubr.f32.mxu0 0.0
      %857 = vmatmul.mubr.f32.gmra.mxu0 %v700
      %v858 = vpop.f32.mrf.mxu0
      %v859 = vadd.f32 0.0, %v858
      %v860 = vpop.f32.mrf.mxu0
      %861 = vmatprep.mubr.f32.mxu0 0.0
      %862 = vmatmul.mubr.f32.gmra.mxu0 %v703
      %v863 = vpop.f32.mrf.mxu0
      %v864 = vadd.f32 0.0, %v863
      %v865 = vpop.f32.mrf.mxu0
      %866 = vmatprep.mubr.f32.mxu0 0.0
      %867 = vmatmul.mubr.f32.gmra.mxu0 %v706
      %v868 = vpop.f32.mrf.mxu0
      %v869 = vadd.f32 0.0, %v868
      %v870 = vpop.f32.mrf.mxu0
      %871 = vmatprep.mubr.f32.mxu0 0.0
      %872 = vmatmul.mubr.f32.gmra.mxu0 %v709
      %v873 = vpop.f32.mrf.mxu0
      %v874 = vadd.f32 0.0, %v873
      %v875 = vpop.f32.mrf.mxu0
      %876 = vmatprep.mubr.f32.mxu0 0.0
      %877 = vmatmul.mubr.f32.gmra.mxu0 %v712
      %v878 = vpop.f32.mrf.mxu0
      %v879 = vadd.f32 0.0, %v878
      %v880 = vpop.f32.mrf.mxu0
      %881 = vmatprep.mubr.f32.mxu0 0.0
      %882 = vmatmul.mubr.f32.gmra.mxu0 %v715
      %v883 = vpop.f32.mrf.mxu0
      %v884 = vadd.f32 0.0, %v883
      %v885 = vpop.f32.mrf.mxu0
      %886 = vdwg.mxu0
      %888 = vset.pattern.permute.xlu0 0
      %889 = vperm.xlu0 %888, %v603
      %v890 = vpop.permute.xlu0 %889
      %893 = vset.pattern.permute.xlu0 0
      %894 = vperm.xlu0 %893, %v604
      %v895 = vpop.permute.xlu0 %894
      %898 = vset.pattern.permute.xlu0 0
      %899 = vperm.xlu0 %898, %v605
      %v900 = vpop.permute.xlu0 %899
      %903 = vset.pattern.permute.xlu0 0
      %904 = vperm.xlu0 %903, %v606
      %v905 = vpop.permute.xlu0 %904
      %908 = vset.pattern.permute.xlu0 0
      %909 = vperm.xlu0 %908, %v607
      %v910 = vpop.permute.xlu0 %909
      %913 = vset.pattern.permute.xlu0 0
      %914 = vperm.xlu0 %913, %v608
      %v915 = vpop.permute.xlu0 %914
      %918 = vset.pattern.permute.xlu0 0
      %919 = vperm.xlu0 %918, %v609
      %v920 = vpop.permute.xlu0 %919
      %923 = vset.pattern.permute.xlu0 0
      %924 = vperm.xlu0 %923, %v610
      %v925 = vpop.permute.xlu0 %924
      %928 = vset.pattern.permute.xlu0 0
      %929 = vperm.xlu0 %928, %v611
      %v930 = vpop.permute.xlu0 %929
      %933 = vset.pattern.permute.xlu0 0
      %934 = vperm.xlu0 %933, %v612
      %v935 = vpop.permute.xlu0 %934
      %938 = vset.pattern.permute.xlu0 0
      %939 = vperm.xlu0 %938, %v613
      %v940 = vpop.permute.xlu0 %939
      %943 = vset.pattern.permute.xlu0 0
      %944 = vperm.xlu0 %943, %v614
      %v945 = vpop.permute.xlu0 %944
      %948 = vset.pattern.permute.xlu0 0
      %949 = vperm.xlu0 %948, %v615
      %v950 = vpop.permute.xlu0 %949
      %953 = vset.pattern.permute.xlu0 0
      %954 = vperm.xlu0 %953, %v616
      %v955 = vpop.permute.xlu0 %954
      %958 = vset.pattern.permute.xlu0 0
      %959 = vperm.xlu0 %958, %v617
      %v960 = vpop.permute.xlu0 %959
      %963 = vset.pattern.permute.xlu0 0
      %964 = vperm.xlu0 %963, %v618
      %v965 = vpop.permute.xlu0 %964
      %968 = vset.pattern.permute.xlu0 0
      %969 = vperm.xlu0 %968, %v619
      %v970 = vpop.permute.xlu0 %969
      %973 = vset.pattern.permute.xlu0 0
      %974 = vperm.xlu0 %973, %v620
      %v975 = vpop.permute.xlu0 %974
      %978 = vset.pattern.permute.xlu0 0
      %979 = vperm.xlu0 %978, %v621
      %v980 = vpop.permute.xlu0 %979
      %983 = vset.pattern.permute.xlu0 0
      %984 = vperm.xlu0 %983, %v622
      %v985 = vpop.permute.xlu0 %984
      %988 = vset.pattern.permute.xlu0 0
      %989 = vperm.xlu0 %988, %v623
      %v990 = vpop.permute.xlu0 %989
      %v992 = vadd.f32 %v890, %v784
      %v993 = vadd.f32 %v895, %v789
      %v994 = vadd.f32 %v900, %v794
      %v995 = vadd.f32 %v905, %v799
      %v996 = vadd.f32 %v910, %v804
      %v997 = vadd.f32 %v915, %v809
      %v998 = vadd.f32 %v920, %v814
      %v999 = vadd.f32 %v925, %v819
      %v1000 = vadd.f32 %v930, %v824
      %v1001 = vadd.f32 %v935, %v829
      %v1002 = vadd.f32 %v940, %v834
      %v1003 = vadd.f32 %v945, %v839
      %v1004 = vadd.f32 %v950, %v844
      %v1005 = vadd.f32 %v955, %v849
      %v1006 = vadd.f32 %v960, %v854
      %v1007 = vadd.f32 %v965, %v859
      %v1008 = vadd.f32 %v970, %v864
      %v1009 = vadd.f32 %v975, %v869
      %v1010 = vadd.f32 %v980, %v874
      %v1011 = vadd.f32 %v985, %v879
      %v1012 = vadd.f32 %v990, %v884
      %s1013 = scalar_lea.vmem %s1, 168
      %v1014 = vld [vmem:[%s1013] sm:$0xff]
      %v1015 = vld [vmem:[%s1013 + $0x8] sm:$0xff]
      %v1016 = vld [vmem:[%s1013 + $0x10] sm:$0xff]
      %v1017 = vld [vmem:[%s1013 + $0x18] sm:$0xff]
      %v1018 = vld [vmem:[%s1013 + $0x20] sm:$0xff]
      %v1019 = vld [vmem:[%s1013 + $0x28] sm:$0xff]
      %v1020 = vld [vmem:[%s1013 + $0x30] sm:$0xff]
      %v1021 = vld [vmem:[%s1013 + $0x38] sm:$0xff]
      %v1022 = vld [vmem:[%s1013 + $0x40] sm:$0xff]
      %v1023 = vld [vmem:[%s1013 + $0x48] sm:$0xff]
      %v1024 = vld [vmem:[%s1013 + $0x50] sm:$0xff]
      %v1025 = vld [vmem:[%s1013 + $0x58] sm:$0xff]
      %v1026 = vld [vmem:[%s1013 + $0x60] sm:$0xff]
      %v1027 = vld [vmem:[%s1013 + $0x68] sm:$0xff]
      %v1028 = vld [vmem:[%s1013 + $0x70] sm:$0xff]
      %v1029 = vld [vmem:[%s1013 + $0x78] sm:$0xff]
      %v1030 = vld [vmem:[%s1013 + $0x80] sm:$0xff]
      %v1031 = vld [vmem:[%s1013 + $0x88] sm:$0xff]
      %v1032 = vld [vmem:[%s1013 + $0x90] sm:$0xff]
      %v1033 = vld [vmem:[%s1013 + $0x98] sm:$0xff]
      %v1034 = vld [vmem:[%s1013 + $0xa0] sm:$0xff]
      %1039 = vrot.lane.b32.xlu0 %v649, 127
      %v1040 = vpop.permute.xlu0 %1039
      %1041 = vrot.lane.b32.xlu0 %v650, 127
      %v1042 = vpop.permute.xlu0 %1041
      %1043 = vrot.lane.b32.xlu0 %v651, 127
      %v1044 = vpop.permute.xlu0 %1043
      %1045 = vrot.lane.b32.xlu0 %v652, 127
      %v1046 = vpop.permute.xlu0 %1045
      %v1052 = vsel %vm653, %v1014, 0
      %v1055 = vsel %vm653, %v1015, 0
      %v1058 = vsel %vm653, %v1016, 0
      %v1061 = vsel %vm653, %v1017, 0
      %v1064 = vsel %vm653, %v1018, 0
      %v1067 = vsel %vm653, %v1019, 0
      %v1070 = vsel %vm653, %v1020, 0
      %v1073 = vsel %vm653, %v1021, 0
      %v1076 = vsel %vm653, %v1022, 0
      %v1079 = vsel %vm653, %v1023, 0
      %v1082 = vsel %vm653, %v1024, 0
      %v1085 = vsel %vm653, %v1025, 0
      %v1088 = vsel %vm653, %v1026, 0
      %v1091 = vsel %vm653, %v1027, 0
      %v1094 = vsel %vm653, %v1028, 0
      %v1097 = vsel %vm653, %v1029, 0
      %v1100 = vsel %vm653, %v1030, 0
      %v1103 = vsel %vm653, %v1031, 0
      %v1106 = vsel %vm653, %v1032, 0
      %v1109 = vsel %vm653, %v1033, 0
      %v1112 = vsel %vm653, %v1034, 0
      %1114 = vmatprep.subr.mxu0 0.0
      %1115 = vmatpush1.msra.mxu0 0.0
      %1116 = vmatprep.subr.mxu0 0.0
      %1117 = vmatpush1.msra.mxu0 0.0
      %1118 = vmatprep.subr.mxu0 0.0
      %1119 = vmatpush1.msra.mxu0 0.0
      %1120 = vmatprep.subr.mxu0 0.0
      %1121 = vmatpush1.msra.mxu0 0.0
      %1122 = vmatprep.subr.mxu0 0.0
      %1123 = vmatpush1.msra.mxu0 0.0
      %1124 = vmatprep.subr.mxu0 0.0
      %1125 = vmatpush1.msra.mxu0 0.0
      %1126 = vmatprep.subr.mxu0 0.0
      %1127 = vmatpush1.msra.mxu0 0.0
      %1128 = vmatprep.subr.mxu0 0.0
      %1129 = vmatpush1.msra.mxu0 0.0
      %1130 = vmatprep.subr.mxu0 0.0
      %1131 = vmatpush1.msra.mxu0 0.0
      %1132 = vmatprep.subr.mxu0 0.0
      %1133 = vmatpush1.msra.mxu0 0.0
      %1134 = vmatprep.subr.mxu0 0.0
      %1135 = vmatpush1.msra.mxu0 0.0
      %1136 = vmatprep.subr.mxu0 0.0
      %1137 = vmatpush1.msra.mxu0 0.0
      %1138 = vmatprep.subr.mxu0 0.0
      %1139 = vmatpush1.msra.mxu0 %v1046
      %1140 = vmatprep.subr.mxu0 0.0
      %1141 = vmatpush1.msra.mxu0 %v1044
      %1142 = vmatprep.subr.mxu0 0.0
      %1143 = vmatpush1.msra.mxu0 %v1042
      %1144 = vmatprep.subr.mxu0 0.0
      %1145 = vmatpush1.msra.mxu0 %v1040
      %1146 = vmatprep.subr.mxu0 0.0
      %1147 = vmatpush2.msra.mxu0 0.0
      %1148 = vmatprep.subr.mxu0 0.0
      %1149 = vmatpush2.msra.mxu0 0.0
      %1150 = vmatprep.subr.mxu0 0.0
      %1151 = vmatpush2.msra.mxu0 0.0
      %1152 = vmatprep.subr.mxu0 0.0
      %1153 = vmatpush2.msra.mxu0 0.0
      %1154 = vmatprep.subr.mxu0 0.0
      %1155 = vmatpush2.msra.mxu0 0.0
      %1156 = vmatprep.subr.mxu0 0.0
      %1157 = vmatpush2.msra.mxu0 0.0
      %1158 = vmatprep.subr.mxu0 0.0
      %1159 = vmatpush2.msra.mxu0 0.0
      %1160 = vmatprep.subr.mxu0 0.0
      %1161 = vmatpush2.msra.mxu0 0.0
      %1162 = vmatprep.subr.mxu0 0.0
      %1163 = vmatpush2.msra.mxu0 0.0
      %1164 = vmatprep.subr.mxu0 0.0
      %1165 = vmatpush2.msra.mxu0 0.0
      %1166 = vmatprep.subr.mxu0 0.0
      %1167 = vmatpush2.msra.mxu0 0.0
      %1168 = vmatprep.subr.mxu0 0.0
      %1169 = vmatpush2.msra.mxu0 0.0
      %1170 = vmatprep.subr.mxu0 0.0
      %1171 = vmatpush2.msra.mxu0 0.0
      %1172 = vmatprep.subr.mxu0 0.0
      %1173 = vmatpush2.msra.mxu0 0.0
      %1174 = vmatprep.subr.mxu0 0.0
      %1175 = vmatpush2.msra.mxu0 0.0
      %1176 = vmatprep.subr.mxu0 0.0
      %1177 = vmatpush2.msra.mxu0 0.0
      %1178 = vmatprep.mubr.f32.mxu0 0.0
      %1179 = vmatmul.mubr.f32.gmra.mxu0 %v1052
      %v1180 = vpop.f32.mrf.mxu0
      %v1181 = vadd.f32 0.0, %v1180
      %v1182 = vpop.f32.mrf.mxu0
      %1183 = vmatprep.mubr.f32.mxu0 0.0
      %1184 = vmatmul.mubr.f32.gmra.mxu0 %v1055
      %v1185 = vpop.f32.mrf.mxu0
      %v1186 = vadd.f32 0.0, %v1185
      %v1187 = vpop.f32.mrf.mxu0
      %1188 = vmatprep.mubr.f32.mxu0 0.0
      %1189 = vmatmul.mubr.f32.gmra.mxu0 %v1058
      %v1190 = vpop.f32.mrf.mxu0
      %v1191 = vadd.f32 0.0, %v1190
      %v1192 = vpop.f32.mrf.mxu0
      %1193 = vmatprep.mubr.f32.mxu0 0.0
      %1194 = vmatmul.mubr.f32.gmra.mxu0 %v1061
      %v1195 = vpop.f32.mrf.mxu0
      %v1196 = vadd.f32 0.0, %v1195
      %v1197 = vpop.f32.mrf.mxu0
      %1198 = vmatprep.mubr.f32.mxu0 0.0
      %1199 = vmatmul.mubr.f32.gmra.mxu0 %v1064
      %v1200 = vpop.f32.mrf.mxu0
      %v1201 = vadd.f32 0.0, %v1200
      %v1202 = vpop.f32.mrf.mxu0
      %1203 = vmatprep.mubr.f32.mxu0 0.0
      %1204 = vmatmul.mubr.f32.gmra.mxu0 %v1067
      %v1205 = vpop.f32.mrf.mxu0
      %v1206 = vadd.f32 0.0, %v1205
      %v1207 = vpop.f32.mrf.mxu0
      %1208 = vmatprep.mubr.f32.mxu0 0.0
      %1209 = vmatmul.mubr.f32.gmra.mxu0 %v1070
      %v1210 = vpop.f32.mrf.mxu0
      %v1211 = vadd.f32 0.0, %v1210
      %v1212 = vpop.f32.mrf.mxu0
      %1213 = vmatprep.mubr.f32.mxu0 0.0
      %1214 = vmatmul.mubr.f32.gmra.mxu0 %v1073
      %v1215 = vpop.f32.mrf.mxu0
      %v1216 = vadd.f32 0.0, %v1215
      %v1217 = vpop.f32.mrf.mxu0
      %1218 = vmatprep.mubr.f32.mxu0 0.0
      %1219 = vmatmul.mubr.f32.gmra.mxu0 %v1076
      %v1220 = vpop.f32.mrf.mxu0
      %v1221 = vadd.f32 0.0, %v1220
      %v1222 = vpop.f32.mrf.mxu0
      %1223 = vmatprep.mubr.f32.mxu0 0.0
      %1224 = vmatmul.mubr.f32.gmra.mxu0 %v1079
      %v1225 = vpop.f32.mrf.mxu0
      %v1226 = vadd.f32 0.0, %v1225
      %v1227 = vpop.f32.mrf.mxu0
      %1228 = vmatprep.mubr.f32.mxu0 0.0
      %1229 = vmatmul.mubr.f32.gmra.mxu0 %v1082
      %v1230 = vpop.f32.mrf.mxu0
      %v1231 = vadd.f32 0.0, %v1230
      %v1232 = vpop.f32.mrf.mxu0
      %1233 = vmatprep.mubr.f32.mxu0 0.0
      %1234 = vmatmul.mubr.f32.gmra.mxu0 %v1085
      %v1235 = vpop.f32.mrf.mxu0
      %v1236 = vadd.f32 0.0, %v1235
      %v1237 = vpop.f32.mrf.mxu0
      %1238 = vmatprep.mubr.f32.mxu0 0.0
      %1239 = vmatmul.mubr.f32.gmra.mxu0 %v1088
      %v1240 = vpop.f32.mrf.mxu0
      %v1241 = vadd.f32 0.0, %v1240
      %v1242 = vpop.f32.mrf.mxu0
      %1243 = vmatprep.mubr.f32.mxu0 0.0
      %1244 = vmatmul.mubr.f32.gmra.mxu0 %v1091
      %v1245 = vpop.f32.mrf.mxu0
      %v1246 = vadd.f32 0.0, %v1245
      %v1247 = vpop.f32.mrf.mxu0
      %1248 = vmatprep.mubr.f32.mxu0 0.0
      %1249 = vmatmul.mubr.f32.gmra.mxu0 %v1094
      %v1250 = vpop.f32.mrf.mxu0
      %v1251 = vadd.f32 0.0, %v1250
      %v1252 = vpop.f32.mrf.mxu0
      %1253 = vmatprep.mubr.f32.mxu0 0.0
      %1254 = vmatmul.mubr.f32.gmra.mxu0 %v1097
      %v1255 = vpop.f32.mrf.mxu0
      %v1256 = vadd.f32 0.0, %v1255
      %v1257 = vpop.f32.mrf.mxu0
      %1258 = vmatprep.mubr.f32.mxu0 0.0
      %1259 = vmatmul.mubr.f32.gmra.mxu0 %v1100
      %v1260 = vpop.f32.mrf.mxu0
      %v1261 = vadd.f32 0.0, %v1260
      %v1262 = vpop.f32.mrf.mxu0
      %1263 = vmatprep.mubr.f32.mxu0 0.0
      %1264 = vmatmul.mubr.f32.gmra.mxu0 %v1103
      %v1265 = vpop.f32.mrf.mxu0
      %v1266 = vadd.f32 0.0, %v1265
      %v1267 = vpop.f32.mrf.mxu0
      %1268 = vmatprep.mubr.f32.mxu0 0.0
      %1269 = vmatmul.mubr.f32.gmra.mxu0 %v1106
      %v1270 = vpop.f32.mrf.mxu0
      %v1271 = vadd.f32 0.0, %v1270
      %v1272 = vpop.f32.mrf.mxu0
      %1273 = vmatprep.mubr.f32.mxu0 0.0
      %1274 = vmatmul.mubr.f32.gmra.mxu0 %v1109
      %v1275 = vpop.f32.mrf.mxu0
      %v1276 = vadd.f32 0.0, %v1275
      %v1277 = vpop.f32.mrf.mxu0
      %1278 = vmatprep.mubr.f32.mxu0 0.0
      %1279 = vmatmul.mubr.f32.gmra.mxu0 %v1112
      %v1280 = vpop.f32.mrf.mxu0
      %v1281 = vadd.f32 0.0, %v1280
      %v1282 = vpop.f32.mrf.mxu0
      %1283 = vdwg.mxu0
      %v1284 = vadd.f32 %v992, %v1181
      %v1285 = vadd.f32 %v993, %v1186
      %v1286 = vadd.f32 %v994, %v1191
      %v1287 = vadd.f32 %v995, %v1196
      %v1288 = vadd.f32 %v996, %v1201
      %v1289 = vadd.f32 %v997, %v1206
      %v1290 = vadd.f32 %v998, %v1211
      %v1291 = vadd.f32 %v999, %v1216
      %v1292 = vadd.f32 %v1000, %v1221
      %v1293 = vadd.f32 %v1001, %v1226
      %v1294 = vadd.f32 %v1002, %v1231
      %v1295 = vadd.f32 %v1003, %v1236
      %v1296 = vadd.f32 %v1004, %v1241
      %v1297 = vadd.f32 %v1005, %v1246
      %v1298 = vadd.f32 %v1006, %v1251
      %v1299 = vadd.f32 %v1007, %v1256
      %v1300 = vadd.f32 %v1008, %v1261
      %v1301 = vadd.f32 %v1009, %v1266
      %v1302 = vadd.f32 %v1010, %v1271
      %v1303 = vadd.f32 %v1011, %v1276
      %v1304 = vadd.f32 %v1012, %v1281
      %s1305 = scalar_lea.vmem %s1, 336
      %v1306 = vld [vmem:[%s1305] sm:$0xff]
      %v1307 = vld [vmem:[%s1305 + $0x8] sm:$0xff]
      %v1308 = vld [vmem:[%s1305 + $0x10] sm:$0xff]
      %v1309 = vld [vmem:[%s1305 + $0x18] sm:$0xff]
      %v1310 = vld [vmem:[%s1305 + $0x20] sm:$0xff]
      %v1311 = vld [vmem:[%s1305 + $0x28] sm:$0xff]
      %v1312 = vld [vmem:[%s1305 + $0x30] sm:$0xff]
      %v1313 = vld [vmem:[%s1305 + $0x38] sm:$0xff]
      %v1314 = vld [vmem:[%s1305 + $0x40] sm:$0xff]
      %v1315 = vld [vmem:[%s1305 + $0x48] sm:$0xff]
      %v1316 = vld [vmem:[%s1305 + $0x50] sm:$0xff]
      %v1317 = vld [vmem:[%s1305 + $0x58] sm:$0xff]
      %v1318 = vld [vmem:[%s1305 + $0x60] sm:$0xff]
      %v1319 = vld [vmem:[%s1305 + $0x68] sm:$0xff]
      %v1320 = vld [vmem:[%s1305 + $0x70] sm:$0xff]
      %v1321 = vld [vmem:[%s1305 + $0x78] sm:$0xff]
      %v1322 = vld [vmem:[%s1305 + $0x80] sm:$0xff]
      %v1323 = vld [vmem:[%s1305 + $0x88] sm:$0xff]
      %v1324 = vld [vmem:[%s1305 + $0x90] sm:$0xff]
      %v1325 = vld [vmem:[%s1305 + $0x98] sm:$0xff]
      %v1326 = vld [vmem:[%s1305 + $0xa0] sm:$0xff]
      %1327 = vrot.lane.b32.xlu0 %v649, 126
      %v1328 = vpop.permute.xlu0 %1327
      %1329 = vrot.lane.b32.xlu0 %v650, 126
      %v1330 = vpop.permute.xlu0 %1329
      %1331 = vrot.lane.b32.xlu0 %v651, 126
      %v1332 = vpop.permute.xlu0 %1331
      %1333 = vrot.lane.b32.xlu0 %v652, 126
      %v1334 = vpop.permute.xlu0 %1333
      %v1340 = vsel %vm653, %v1306, 0
      %v1343 = vsel %vm653, %v1307, 0
      %v1346 = vsel %vm653, %v1308, 0
      %v1349 = vsel %vm653, %v1309, 0
      %v1352 = vsel %vm653, %v1310, 0
      %v1355 = vsel %vm653, %v1311, 0
      %v1358 = vsel %vm653, %v1312, 0
      %v1361 = vsel %vm653, %v1313, 0
      %v1364 = vsel %vm653, %v1314, 0
      %v1367 = vsel %vm653, %v1315, 0
      %v1370 = vsel %vm653, %v1316, 0
      %v1373 = vsel %vm653, %v1317, 0
      %v1376 = vsel %vm653, %v1318, 0
      %v1379 = vsel %vm653, %v1319, 0
      %v1382 = vsel %vm653, %v1320, 0
      %v1385 = vsel %vm653, %v1321, 0
      %v1388 = vsel %vm653, %v1322, 0
      %v1391 = vsel %vm653, %v1323, 0
      %v1394 = vsel %vm653, %v1324, 0
      %v1397 = vsel %vm653, %v1325, 0
      %v1400 = vsel %vm653, %v1326, 0
      %1402 = vmatprep.subr.mxu0 0.0
      %1403 = vmatpush1.msra.mxu0 0.0
      %1404 = vmatprep.subr.mxu0 0.0
      %1405 = vmatpush1.msra.mxu0 0.0
      %1406 = vmatprep.subr.mxu0 0.0
      %1407 = vmatpush1.msra.mxu0 0.0
      %1408 = vmatprep.subr.mxu0 0.0
      %1409 = vmatpush1.msra.mxu0 0.0
      %1410 = vmatprep.subr.mxu0 0.0
      %1411 = vmatpush1.msra.mxu0 0.0
      %1412 = vmatprep.subr.mxu0 0.0
      %1413 = vmatpush1.msra.mxu0 0.0
      %1414 = vmatprep.subr.mxu0 0.0
      %1415 = vmatpush1.msra.mxu0 0.0
      %1416 = vmatprep.subr.mxu0 0.0
      %1417 = vmatpush1.msra.mxu0 0.0
      %1418 = vmatprep.subr.mxu0 0.0
      %1419 = vmatpush1.msra.mxu0 0.0
      %1420 = vmatprep.subr.mxu0 0.0
      %1421 = vmatpush1.msra.mxu0 0.0
      %1422 = vmatprep.subr.mxu0 0.0
      %1423 = vmatpush1.msra.mxu0 0.0
      %1424 = vmatprep.subr.mxu0 0.0
      %1425 = vmatpush1.msra.mxu0 0.0
      %1426 = vmatprep.subr.mxu0 0.0
      %1427 = vmatpush1.msra.mxu0 %v1334
      %1428 = vmatprep.subr.mxu0 0.0
      %1429 = vmatpush1.msra.mxu0 %v1332
      %1430 = vmatprep.subr.mxu0 0.0
      %1431 = vmatpush1.msra.mxu0 %v1330
      %1432 = vmatprep.subr.mxu0 0.0
      %1433 = vmatpush1.msra.mxu0 %v1328
      %1434 = vmatprep.subr.mxu0 0.0
      %1435 = vmatpush2.msra.mxu0 0.0
      %1436 = vmatprep.subr.mxu0 0.0
      %1437 = vmatpush2.msra.mxu0 0.0
      %1438 = vmatprep.subr.mxu0 0.0
      %1439 = vmatpush2.msra.mxu0 0.0
      %1440 = vmatprep.subr.mxu0 0.0
      %1441 = vmatpush2.msra.mxu0 0.0
      %1442 = vmatprep.subr.mxu0 0.0
      %1443 = vmatpush2.msra.mxu0 0.0
      %1444 = vmatprep.subr.mxu0 0.0
      %1445 = vmatpush2.msra.mxu0 0.0
      %1446 = vmatprep.subr.mxu0 0.0
      %1447 = vmatpush2.msra.mxu0 0.0
      %1448 = vmatprep.subr.mxu0 0.0
      %1449 = vmatpush2.msra.mxu0 0.0
      %1450 = vmatprep.subr.mxu0 0.0
      %1451 = vmatpush2.msra.mxu0 0.0
      %1452 = vmatprep.subr.mxu0 0.0
      %1453 = vmatpush2.msra.mxu0 0.0
      %1454 = vmatprep.subr.mxu0 0.0
      %1455 = vmatpush2.msra.mxu0 0.0
      %1456 = vmatprep.subr.mxu0 0.0
      %1457 = vmatpush2.msra.mxu0 0.0
      %1458 = vmatprep.subr.mxu0 0.0
      %1459 = vmatpush2.msra.mxu0 0.0
      %1460 = vmatprep.subr.mxu0 0.0
      %1461 = vmatpush2.msra.mxu0 0.0
      %1462 = vmatprep.subr.mxu0 0.0
      %1463 = vmatpush2.msra.mxu0 0.0
      %1464 = vmatprep.subr.mxu0 0.0
      %1465 = vmatpush2.msra.mxu0 0.0
      %1466 = vmatprep.mubr.f32.mxu0 0.0
      %1467 = vmatmul.mubr.f32.gmra.mxu0 %v1340
      %v1468 = vpop.f32.mrf.mxu0
      %v1469 = vadd.f32 0.0, %v1468
      %v1470 = vpop.f32.mrf.mxu0
      %1471 = vmatprep.mubr.f32.mxu0 0.0
      %1472 = vmatmul.mubr.f32.gmra.mxu0 %v1343
      %v1473 = vpop.f32.mrf.mxu0
      %v1474 = vadd.f32 0.0, %v1473
      %v1475 = vpop.f32.mrf.mxu0
      %1476 = vmatprep.mubr.f32.mxu0 0.0
      %1477 = vmatmul.mubr.f32.gmra.mxu0 %v1346
      %v1478 = vpop.f32.mrf.mxu0
      %v1479 = vadd.f32 0.0, %v1478
      %v1480 = vpop.f32.mrf.mxu0
      %1481 = vmatprep.mubr.f32.mxu0 0.0
      %1482 = vmatmul.mubr.f32.gmra.mxu0 %v1349
      %v1483 = vpop.f32.mrf.mxu0
      %v1484 = vadd.f32 0.0, %v1483
      %v1485 = vpop.f32.mrf.mxu0
      %1486 = vmatprep.mubr.f32.mxu0 0.0
      %1487 = vmatmul.mubr.f32.gmra.mxu0 %v1352
      %v1488 = vpop.f32.mrf.mxu0
      %v1489 = vadd.f32 0.0, %v1488
      %v1490 = vpop.f32.mrf.mxu0
      %1491 = vmatprep.mubr.f32.mxu0 0.0
      %1492 = vmatmul.mubr.f32.gmra.mxu0 %v1355
      %v1493 = vpop.f32.mrf.mxu0
      %v1494 = vadd.f32 0.0, %v1493
      %v1495 = vpop.f32.mrf.mxu0
      %1496 = vmatprep.mubr.f32.mxu0 0.0
      %1497 = vmatmul.mubr.f32.gmra.mxu0 %v1358
      %v1498 = vpop.f32.mrf.mxu0
      %v1499 = vadd.f32 0.0, %v1498
      %v1500 = vpop.f32.mrf.mxu0
      %1501 = vmatprep.mubr.f32.mxu0 0.0
      %1502 = vmatmul.mubr.f32.gmra.mxu0 %v1361
      %v1503 = vpop.f32.mrf.mxu0
      %v1504 = vadd.f32 0.0, %v1503
      %v1505 = vpop.f32.mrf.mxu0
      %1506 = vmatprep.mubr.f32.mxu0 0.0
      %1507 = vmatmul.mubr.f32.gmra.mxu0 %v1364
      %v1508 = vpop.f32.mrf.mxu0
      %v1509 = vadd.f32 0.0, %v1508
      %v1510 = vpop.f32.mrf.mxu0
      %1511 = vmatprep.mubr.f32.mxu0 0.0
      %1512 = vmatmul.mubr.f32.gmra.mxu0 %v1367
      %v1513 = vpop.f32.mrf.mxu0
      %v1514 = vadd.f32 0.0, %v1513
      %v1515 = vpop.f32.mrf.mxu0
      %1516 = vmatprep.mubr.f32.mxu0 0.0
      %1517 = vmatmul.mubr.f32.gmra.mxu0 %v1370
      %v1518 = vpop.f32.mrf.mxu0
      %v1519 = vadd.f32 0.0, %v1518
      %v1520 = vpop.f32.mrf.mxu0
      %1521 = vmatprep.mubr.f32.mxu0 0.0
      %1522 = vmatmul.mubr.f32.gmra.mxu0 %v1373
      %v1523 = vpop.f32.mrf.mxu0
      %v1524 = vadd.f32 0.0, %v1523
      %v1525 = vpop.f32.mrf.mxu0
      %1526 = vmatprep.mubr.f32.mxu0 0.0
      %1527 = vmatmul.mubr.f32.gmra.mxu0 %v1376
      %v1528 = vpop.f32.mrf.mxu0
      %v1529 = vadd.f32 0.0, %v1528
      %v1530 = vpop.f32.mrf.mxu0
      %1531 = vmatprep.mubr.f32.mxu0 0.0
      %1532 = vmatmul.mubr.f32.gmra.mxu0 %v1379
      %v1533 = vpop.f32.mrf.mxu0
      %v1534 = vadd.f32 0.0, %v1533
      %v1535 = vpop.f32.mrf.mxu0
      %1536 = vmatprep.mubr.f32.mxu0 0.0
      %1537 = vmatmul.mubr.f32.gmra.mxu0 %v1382
      %v1538 = vpop.f32.mrf.mxu0
      %v1539 = vadd.f32 0.0, %v1538
      %v1540 = vpop.f32.mrf.mxu0
      %1541 = vmatprep.mubr.f32.mxu0 0.0
      %1542 = vmatmul.mubr.f32.gmra.mxu0 %v1385
      %v1543 = vpop.f32.mrf.mxu0
      %v1544 = vadd.f32 0.0, %v1543
      %v1545 = vpop.f32.mrf.mxu0
      %1546 = vmatprep.mubr.f32.mxu0 0.0
      %1547 = vmatmul.mubr.f32.gmra.mxu0 %v1388
      %v1548 = vpop.f32.mrf.mxu0
      %v1549 = vadd.f32 0.0, %v1548
      %v1550 = vpop.f32.mrf.mxu0
      %1551 = vmatprep.mubr.f32.mxu0 0.0
      %1552 = vmatmul.mubr.f32.gmra.mxu0 %v1391
      %v1553 = vpop.f32.mrf.mxu0
      %v1554 = vadd.f32 0.0, %v1553
      %v1555 = vpop.f32.mrf.mxu0
      %1556 = vmatprep.mubr.f32.mxu0 0.0
      %1557 = vmatmul.mubr.f32.gmra.mxu0 %v1394
      %v1558 = vpop.f32.mrf.mxu0
      %v1559 = vadd.f32 0.0, %v1558
      %v1560 = vpop.f32.mrf.mxu0
      %1561 = vmatprep.mubr.f32.mxu0 0.0
      %1562 = vmatmul.mubr.f32.gmra.mxu0 %v1397
      %v1563 = vpop.f32.mrf.mxu0
      %v1564 = vadd.f32 0.0, %v1563
      %v1565 = vpop.f32.mrf.mxu0
      %1566 = vmatprep.mubr.f32.mxu0 0.0
      %1567 = vmatmul.mubr.f32.gmra.mxu0 %v1400
      %v1568 = vpop.f32.mrf.mxu0
      %v1569 = vadd.f32 0.0, %v1568
      %v1570 = vpop.f32.mrf.mxu0
      %1571 = vdwg.mxu0
      %v1572 = vadd.f32 %v1284, %v1469
      %v1573 = vadd.f32 %v1285, %v1474
      %v1574 = vadd.f32 %v1286, %v1479
      %v1575 = vadd.f32 %v1287, %v1484
      %v1576 = vadd.f32 %v1288, %v1489
      %v1577 = vadd.f32 %v1289, %v1494
      %v1578 = vadd.f32 %v1290, %v1499
      %v1579 = vadd.f32 %v1291, %v1504
      %v1580 = vadd.f32 %v1292, %v1509
      %v1581 = vadd.f32 %v1293, %v1514
      %v1582 = vadd.f32 %v1294, %v1519
      %v1583 = vadd.f32 %v1295, %v1524
      %v1584 = vadd.f32 %v1296, %v1529
      %v1585 = vadd.f32 %v1297, %v1534
      %v1586 = vadd.f32 %v1298, %v1539
      %v1587 = vadd.f32 %v1299, %v1544
      %v1588 = vadd.f32 %v1300, %v1549
      %v1589 = vadd.f32 %v1301, %v1554
      %v1590 = vadd.f32 %v1302, %v1559
      %v1591 = vadd.f32 %v1303, %v1564
      %v1592 = vadd.f32 %v1304, %v1569
      %s1593 = scalar_lea.vmem %s1, 504
      %v1594 = vld [vmem:[%s1593] sm:$0xff]
      %v1595 = vld [vmem:[%s1593 + $0x8] sm:$0xff]
      %v1596 = vld [vmem:[%s1593 + $0x10] sm:$0xff]
      %v1597 = vld [vmem:[%s1593 + $0x18] sm:$0xff]
      %v1598 = vld [vmem:[%s1593 + $0x20] sm:$0xff]
      %v1599 = vld [vmem:[%s1593 + $0x28] sm:$0xff]
      %v1600 = vld [vmem:[%s1593 + $0x30] sm:$0xff]
      %v1601 = vld [vmem:[%s1593 + $0x38] sm:$0xff]
      %v1602 = vld [vmem:[%s1593 + $0x40] sm:$0xff]
      %v1603 = vld [vmem:[%s1593 + $0x48] sm:$0xff]
      %v1604 = vld [vmem:[%s1593 + $0x50] sm:$0xff]
      %v1605 = vld [vmem:[%s1593 + $0x58] sm:$0xff]
      %v1606 = vld [vmem:[%s1593 + $0x60] sm:$0xff]
      %v1607 = vld [vmem:[%s1593 + $0x68] sm:$0xff]
      %v1608 = vld [vmem:[%s1593 + $0x70] sm:$0xff]
      %v1609 = vld [vmem:[%s1593 + $0x78] sm:$0xff]
      %v1610 = vld [vmem:[%s1593 + $0x80] sm:$0xff]
      %v1611 = vld [vmem:[%s1593 + $0x88] sm:$0xff]
      %v1612 = vld [vmem:[%s1593 + $0x90] sm:$0xff]
      %v1613 = vld [vmem:[%s1593 + $0x98] sm:$0xff]
      %v1614 = vld [vmem:[%s1593 + $0xa0] sm:$0xff]
      %1615 = vrot.lane.b32.xlu0 %v649, 125
      %v1616 = vpop.permute.xlu0 %1615
      %1617 = vrot.lane.b32.xlu0 %v650, 125
      %v1618 = vpop.permute.xlu0 %1617
      %1619 = vrot.lane.b32.xlu0 %v651, 125
      %v1620 = vpop.permute.xlu0 %1619
      %1621 = vrot.lane.b32.xlu0 %v652, 125
      %v1622 = vpop.permute.xlu0 %1621
      %v1628 = vsel %vm653, %v1594, 0
      %v1631 = vsel %vm653, %v1595, 0
      %v1634 = vsel %vm653, %v1596, 0
      %v1637 = vsel %vm653, %v1597, 0
      %v1640 = vsel %vm653, %v1598, 0
      %v1643 = vsel %vm653, %v1599, 0
      %v1646 = vsel %vm653, %v1600, 0
      %v1649 = vsel %vm653, %v1601, 0
      %v1652 = vsel %vm653, %v1602, 0
      %v1655 = vsel %vm653, %v1603, 0
      %v1658 = vsel %vm653, %v1604, 0
      %v1661 = vsel %vm653, %v1605, 0
      %v1664 = vsel %vm653, %v1606, 0
      %v1667 = vsel %vm653, %v1607, 0
      %v1670 = vsel %vm653, %v1608, 0
      %v1673 = vsel %vm653, %v1609, 0
      %v1676 = vsel %vm653, %v1610, 0
      %v1679 = vsel %vm653, %v1611, 0
      %v1682 = vsel %vm653, %v1612, 0
      %v1685 = vsel %vm653, %v1613, 0
      %v1688 = vsel %vm653, %v1614, 0
      %1690 = vmatprep.subr.mxu0 0.0
      %1691 = vmatpush1.msra.mxu0 0.0
      %1692 = vmatprep.subr.mxu0 0.0
      %1693 = vmatpush1.msra.mxu0 0.0
      %1694 = vmatprep.subr.mxu0 0.0
      %1695 = vmatpush1.msra.mxu0 0.0
      %1696 = vmatprep.subr.mxu0 0.0
      %1697 = vmatpush1.msra.mxu0 0.0
      %1698 = vmatprep.subr.mxu0 0.0
      %1699 = vmatpush1.msra.mxu0 0.0
      %1700 = vmatprep.subr.mxu0 0.0
      %1701 = vmatpush1.msra.mxu0 0.0
      %1702 = vmatprep.subr.mxu0 0.0
      %1703 = vmatpush1.msra.mxu0 0.0
      %1704 = vmatprep.subr.mxu0 0.0
      %1705 = vmatpush1.msra.mxu0 0.0
      %1706 = vmatprep.subr.mxu0 0.0
      %1707 = vmatpush1.msra.mxu0 0.0
      %1708 = vmatprep.subr.mxu0 0.0
      %1709 = vmatpush1.msra.mxu0 0.0
      %1710 = vmatprep.subr.mxu0 0.0
      %1711 = vmatpush1.msra.mxu0 0.0
      %1712 = vmatprep.subr.mxu0 0.0
      %1713 = vmatpush1.msra.mxu0 0.0
      %1714 = vmatprep.subr.mxu0 0.0
      %1715 = vmatpush1.msra.mxu0 %v1622
      %1716 = vmatprep.subr.mxu0 0.0
      %1717 = vmatpush1.msra.mxu0 %v1620
      %1718 = vmatprep.subr.mxu0 0.0
      %1719 = vmatpush1.msra.mxu0 %v1618
      %1720 = vmatprep.subr.mxu0 0.0
      %1721 = vmatpush1.msra.mxu0 %v1616
      %1722 = vmatprep.subr.mxu0 0.0
      %1723 = vmatpush2.msra.mxu0 0.0
      %1724 = vmatprep.subr.mxu0 0.0
      %1725 = vmatpush2.msra.mxu0 0.0
      %1726 = vmatprep.subr.mxu0 0.0
      %1727 = vmatpush2.msra.mxu0 0.0
      %1728 = vmatprep.subr.mxu0 0.0
      %1729 = vmatpush2.msra.mxu0 0.0
      %1730 = vmatprep.subr.mxu0 0.0
      %1731 = vmatpush2.msra.mxu0 0.0
      %1732 = vmatprep.subr.mxu0 0.0
      %1733 = vmatpush2.msra.mxu0 0.0
      %1734 = vmatprep.subr.mxu0 0.0
      %1735 = vmatpush2.msra.mxu0 0.0
      %1736 = vmatprep.subr.mxu0 0.0
      %1737 = vmatpush2.msra.mxu0 0.0
      %1738 = vmatprep.subr.mxu0 0.0
      %1739 = vmatpush2.msra.mxu0 0.0
      %1740 = vmatprep.subr.mxu0 0.0
      %1741 = vmatpush2.msra.mxu0 0.0
      %1742 = vmatprep.subr.mxu0 0.0
      %1743 = vmatpush2.msra.mxu0 0.0
      %1744 = vmatprep.subr.mxu0 0.0
      %1745 = vmatpush2.msra.mxu0 0.0
      %1746 = vmatprep.subr.mxu0 0.0
      %1747 = vmatpush2.msra.mxu0 0.0
      %1748 = vmatprep.subr.mxu0 0.0
      %1749 = vmatpush2.msra.mxu0 0.0
      %1750 = vmatprep.subr.mxu0 0.0
      %1751 = vmatpush2.msra.mxu0 0.0
      %1752 = vmatprep.subr.mxu0 0.0
      %1753 = vmatpush2.msra.mxu0 0.0
      %1754 = vmatprep.mubr.f32.mxu0 0.0
      %1755 = vmatmul.mubr.f32.gmra.mxu0 %v1628
      %v1756 = vpop.f32.mrf.mxu0
      %v1757 = vadd.f32 0.0, %v1756
      %v1758 = vpop.f32.mrf.mxu0
      %1759 = vmatprep.mubr.f32.mxu0 0.0
      %1760 = vmatmul.mubr.f32.gmra.mxu0 %v1631
      %v1761 = vpop.f32.mrf.mxu0
      %v1762 = vadd.f32 0.0, %v1761
      %v1763 = vpop.f32.mrf.mxu0
      %1764 = vmatprep.mubr.f32.mxu0 0.0
      %1765 = vmatmul.mubr.f32.gmra.mxu0 %v1634
      %v1766 = vpop.f32.mrf.mxu0
      %v1767 = vadd.f32 0.0, %v1766
      %v1768 = vpop.f32.mrf.mxu0
      %1769 = vmatprep.mubr.f32.mxu0 0.0
      %1770 = vmatmul.mubr.f32.gmra.mxu0 %v1637
      %v1771 = vpop.f32.mrf.mxu0
      %v1772 = vadd.f32 0.0, %v1771
      %v1773 = vpop.f32.mrf.mxu0
      %1774 = vmatprep.mubr.f32.mxu0 0.0
      %1775 = vmatmul.mubr.f32.gmra.mxu0 %v1640
      %v1776 = vpop.f32.mrf.mxu0
      %v1777 = vadd.f32 0.0, %v1776
      %v1778 = vpop.f32.mrf.mxu0
      %1779 = vmatprep.mubr.f32.mxu0 0.0
      %1780 = vmatmul.mubr.f32.gmra.mxu0 %v1643
      %v1781 = vpop.f32.mrf.mxu0
      %v1782 = vadd.f32 0.0, %v1781
      %v1783 = vpop.f32.mrf.mxu0
      %1784 = vmatprep.mubr.f32.mxu0 0.0
      %1785 = vmatmul.mubr.f32.gmra.mxu0 %v1646
      %v1786 = vpop.f32.mrf.mxu0
      %v1787 = vadd.f32 0.0, %v1786
      %v1788 = vpop.f32.mrf.mxu0
      %1789 = vmatprep.mubr.f32.mxu0 0.0
      %1790 = vmatmul.mubr.f32.gmra.mxu0 %v1649
      %v1791 = vpop.f32.mrf.mxu0
      %v1792 = vadd.f32 0.0, %v1791
      %v1793 = vpop.f32.mrf.mxu0
      %1794 = vmatprep.mubr.f32.mxu0 0.0
      %1795 = vmatmul.mubr.f32.gmra.mxu0 %v1652
      %v1796 = vpop.f32.mrf.mxu0
      %v1797 = vadd.f32 0.0, %v1796
      %v1798 = vpop.f32.mrf.mxu0
      %1799 = vmatprep.mubr.f32.mxu0 0.0
      %1800 = vmatmul.mubr.f32.gmra.mxu0 %v1655
      %v1801 = vpop.f32.mrf.mxu0
      %v1802 = vadd.f32 0.0, %v1801
      %v1803 = vpop.f32.mrf.mxu0
      %1804 = vmatprep.mubr.f32.mxu0 0.0
      %1805 = vmatmul.mubr.f32.gmra.mxu0 %v1658
      %v1806 = vpop.f32.mrf.mxu0
      %v1807 = vadd.f32 0.0, %v1806
      %v1808 = vpop.f32.mrf.mxu0
      %1809 = vmatprep.mubr.f32.mxu0 0.0
      %1810 = vmatmul.mubr.f32.gmra.mxu0 %v1661
      %v1811 = vpop.f32.mrf.mxu0
      %v1812 = vadd.f32 0.0, %v1811
      %v1813 = vpop.f32.mrf.mxu0
      %1814 = vmatprep.mubr.f32.mxu0 0.0
      %1815 = vmatmul.mubr.f32.gmra.mxu0 %v1664
      %v1816 = vpop.f32.mrf.mxu0
      %v1817 = vadd.f32 0.0, %v1816
      %v1818 = vpop.f32.mrf.mxu0
      %1819 = vmatprep.mubr.f32.mxu0 0.0
      %1820 = vmatmul.mubr.f32.gmra.mxu0 %v1667
      %v1821 = vpop.f32.mrf.mxu0
      %v1822 = vadd.f32 0.0, %v1821
      %v1823 = vpop.f32.mrf.mxu0
      %1824 = vmatprep.mubr.f32.mxu0 0.0
      %1825 = vmatmul.mubr.f32.gmra.mxu0 %v1670
      %v1826 = vpop.f32.mrf.mxu0
      %v1827 = vadd.f32 0.0, %v1826
      %v1828 = vpop.f32.mrf.mxu0
      %1829 = vmatprep.mubr.f32.mxu0 0.0
      %1830 = vmatmul.mubr.f32.gmra.mxu0 %v1673
      %v1831 = vpop.f32.mrf.mxu0
      %v1832 = vadd.f32 0.0, %v1831
      %v1833 = vpop.f32.mrf.mxu0
      %1834 = vmatprep.mubr.f32.mxu0 0.0
      %1835 = vmatmul.mubr.f32.gmra.mxu0 %v1676
      %v1836 = vpop.f32.mrf.mxu0
      %v1837 = vadd.f32 0.0, %v1836
      %v1838 = vpop.f32.mrf.mxu0
      %1839 = vmatprep.mubr.f32.mxu0 0.0
      %1840 = vmatmul.mubr.f32.gmra.mxu0 %v1679
      %v1841 = vpop.f32.mrf.mxu0
      %v1842 = vadd.f32 0.0, %v1841
      %v1843 = vpop.f32.mrf.mxu0
      %1844 = vmatprep.mubr.f32.mxu0 0.0
      %1845 = vmatmul.mubr.f32.gmra.mxu0 %v1682
      %v1846 = vpop.f32.mrf.mxu0
      %v1847 = vadd.f32 0.0, %v1846
      %v1848 = vpop.f32.mrf.mxu0
      %1849 = vmatprep.mubr.f32.mxu0 0.0
      %1850 = vmatmul.mubr.f32.gmra.mxu0 %v1685
      %v1851 = vpop.f32.mrf.mxu0
      %v1852 = vadd.f32 0.0, %v1851
      %v1853 = vpop.f32.mrf.mxu0
      %1854 = vmatprep.mubr.f32.mxu0 0.0
      %1855 = vmatmul.mubr.f32.gmra.mxu0 %v1688
      %v1856 = vpop.f32.mrf.mxu0
      %v1857 = vadd.f32 0.0, %v1856
      %v1858 = vpop.f32.mrf.mxu0
      %1859 = vdwg.mxu0
      %v1860 = vadd.f32 %v1572, %v1757
      %v1861 = vadd.f32 %v1573, %v1762
      %v1862 = vadd.f32 %v1574, %v1767
      %v1863 = vadd.f32 %v1575, %v1772
      %v1864 = vadd.f32 %v1576, %v1777
      %v1865 = vadd.f32 %v1577, %v1782
      %v1866 = vadd.f32 %v1578, %v1787
      %v1867 = vadd.f32 %v1579, %v1792
      %v1868 = vadd.f32 %v1580, %v1797
      %v1869 = vadd.f32 %v1581, %v1802
      %v1870 = vadd.f32 %v1582, %v1807
      %v1871 = vadd.f32 %v1583, %v1812
      %v1872 = vadd.f32 %v1584, %v1817
      %v1873 = vadd.f32 %v1585, %v1822
      %v1874 = vadd.f32 %v1586, %v1827
      %v1875 = vadd.f32 %v1587, %v1832
      %v1876 = vadd.f32 %v1588, %v1837
      %v1877 = vadd.f32 %v1589, %v1842
      %v1878 = vadd.f32 %v1590, %v1847
      %v1879 = vadd.f32 %v1591, %v1852
      %v1880 = vadd.f32 %v1592, %v1857
      %s1881 = scalar_lea.vmem %s1, 672
      %v1882 = vld [vmem:[%s1881] sm:$0xff]
      %v1883 = vld [vmem:[%s1881 + $0x8] sm:$0xff]
      %v1884 = vld [vmem:[%s1881 + $0x10] sm:$0xff]
      %v1885 = vld [vmem:[%s1881 + $0x18] sm:$0xff]
      %v1886 = vld [vmem:[%s1881 + $0x20] sm:$0xff]
      %v1887 = vld [vmem:[%s1881 + $0x28] sm:$0xff]
      %v1888 = vld [vmem:[%s1881 + $0x30] sm:$0xff]
      %v1889 = vld [vmem:[%s1881 + $0x38] sm:$0xff]
      %v1890 = vld [vmem:[%s1881 + $0x40] sm:$0xff]
      %v1891 = vld [vmem:[%s1881 + $0x48] sm:$0xff]
      %v1892 = vld [vmem:[%s1881 + $0x50] sm:$0xff]
      %v1893 = vld [vmem:[%s1881 + $0x58] sm:$0xff]
      %v1894 = vld [vmem:[%s1881 + $0x60] sm:$0xff]
      %v1895 = vld [vmem:[%s1881 + $0x68] sm:$0xff]
      %v1896 = vld [vmem:[%s1881 + $0x70] sm:$0xff]
      %v1897 = vld [vmem:[%s1881 + $0x78] sm:$0xff]
      %v1898 = vld [vmem:[%s1881 + $0x80] sm:$0xff]
      %v1899 = vld [vmem:[%s1881 + $0x88] sm:$0xff]
      %v1900 = vld [vmem:[%s1881 + $0x90] sm:$0xff]
      %v1901 = vld [vmem:[%s1881 + $0x98] sm:$0xff]
      %v1902 = vld [vmem:[%s1881 + $0xa0] sm:$0xff]
      %1903 = vrot.lane.b32.xlu0 %v649, 124
      %v1904 = vpop.permute.xlu0 %1903
      %1905 = vrot.lane.b32.xlu0 %v650, 124
      %v1906 = vpop.permute.xlu0 %1905
      %1907 = vrot.lane.b32.xlu0 %v651, 124
      %v1908 = vpop.permute.xlu0 %1907
      %1909 = vrot.lane.b32.xlu0 %v652, 124
      %v1910 = vpop.permute.xlu0 %1909
      %v1916 = vsel %vm653, %v1882, 0
      %v1919 = vsel %vm653, %v1883, 0
      %v1922 = vsel %vm653, %v1884, 0
      %v1925 = vsel %vm653, %v1885, 0
      %v1928 = vsel %vm653, %v1886, 0
      %v1931 = vsel %vm653, %v1887, 0
      %v1934 = vsel %vm653, %v1888, 0
      %v1937 = vsel %vm653, %v1889, 0
      %v1940 = vsel %vm653, %v1890, 0
      %v1943 = vsel %vm653, %v1891, 0
      %v1946 = vsel %vm653, %v1892, 0
      %v1949 = vsel %vm653, %v1893, 0
      %v1952 = vsel %vm653, %v1894, 0
      %v1955 = vsel %vm653, %v1895, 0
      %v1958 = vsel %vm653, %v1896, 0
      %v1961 = vsel %vm653, %v1897, 0
      %v1964 = vsel %vm653, %v1898, 0
      %v1967 = vsel %vm653, %v1899, 0
      %v1970 = vsel %vm653, %v1900, 0
      %v1973 = vsel %vm653, %v1901, 0
      %v1976 = vsel %vm653, %v1902, 0
      %1978 = vmatprep.subr.mxu0 0.0
      %1979 = vmatpush1.msra.mxu0 0.0
      %1980 = vmatprep.subr.mxu0 0.0
      %1981 = vmatpush1.msra.mxu0 0.0
      %1982 = vmatprep.subr.mxu0 0.0
      %1983 = vmatpush1.msra.mxu0 0.0
      %1984 = vmatprep.subr.mxu0 0.0
      %1985 = vmatpush1.msra.mxu0 0.0
      %1986 = vmatprep.subr.mxu0 0.0
      %1987 = vmatpush1.msra.mxu0 0.0
      %1988 = vmatprep.subr.mxu0 0.0
      %1989 = vmatpush1.msra.mxu0 0.0
      %1990 = vmatprep.subr.mxu0 0.0
      %1991 = vmatpush1.msra.mxu0 0.0
      %1992 = vmatprep.subr.mxu0 0.0
      %1993 = vmatpush1.msra.mxu0 0.0
      %1994 = vmatprep.subr.mxu0 0.0
      %1995 = vmatpush1.msra.mxu0 0.0
      %1996 = vmatprep.subr.mxu0 0.0
      %1997 = vmatpush1.msra.mxu0 0.0
      %1998 = vmatprep.subr.mxu0 0.0
      %1999 = vmatpush1.msra.mxu0 0.0
      %2000 = vmatprep.subr.mxu0 0.0
      %2001 = vmatpush1.msra.mxu0 0.0
      %2002 = vmatprep.subr.mxu0 0.0
      %2003 = vmatpush1.msra.mxu0 %v1910
      %2004 = vmatprep.subr.mxu0 0.0
      %2005 = vmatpush1.msra.mxu0 %v1908
      %2006 = vmatprep.subr.mxu0 0.0
      %2007 = vmatpush1.msra.mxu0 %v1906
      %2008 = vmatprep.subr.mxu0 0.0
      %2009 = vmatpush1.msra.mxu0 %v1904
      %2010 = vmatprep.subr.mxu0 0.0
      %2011 = vmatpush2.msra.mxu0 0.0
      %2012 = vmatprep.subr.mxu0 0.0
      %2013 = vmatpush2.msra.mxu0 0.0
      %2014 = vmatprep.subr.mxu0 0.0
      %2015 = vmatpush2.msra.mxu0 0.0
      %2016 = vmatprep.subr.mxu0 0.0
      %2017 = vmatpush2.msra.mxu0 0.0
      %2018 = vmatprep.subr.mxu0 0.0
      %2019 = vmatpush2.msra.mxu0 0.0
      %2020 = vmatprep.subr.mxu0 0.0
      %2021 = vmatpush2.msra.mxu0 0.0
      %2022 = vmatprep.subr.mxu0 0.0
      %2023 = vmatpush2.msra.mxu0 0.0
      %2024 = vmatprep.subr.mxu0 0.0
      %2025 = vmatpush2.msra.mxu0 0.0
      %2026 = vmatprep.subr.mxu0 0.0
      %2027 = vmatpush2.msra.mxu0 0.0
      %2028 = vmatprep.subr.mxu0 0.0
      %2029 = vmatpush2.msra.mxu0 0.0
      %2030 = vmatprep.subr.mxu0 0.0
      %2031 = vmatpush2.msra.mxu0 0.0
      %2032 = vmatprep.subr.mxu0 0.0
      %2033 = vmatpush2.msra.mxu0 0.0
      %2034 = vmatprep.subr.mxu0 0.0
      %2035 = vmatpush2.msra.mxu0 0.0
      %2036 = vmatprep.subr.mxu0 0.0
      %2037 = vmatpush2.msra.mxu0 0.0
      %2038 = vmatprep.subr.mxu0 0.0
      %2039 = vmatpush2.msra.mxu0 0.0
      %2040 = vmatprep.subr.mxu0 0.0
      %2041 = vmatpush2.msra.mxu0 0.0
      %2042 = vmatprep.mubr.f32.mxu0 0.0
      %2043 = vmatmul.mubr.f32.gmra.mxu0 %v1916
      %v2044 = vpop.f32.mrf.mxu0
      %v2045 = vadd.f32 0.0, %v2044
      %v2046 = vpop.f32.mrf.mxu0
      %2047 = vmatprep.mubr.f32.mxu0 0.0
      %2048 = vmatmul.mubr.f32.gmra.mxu0 %v1919
      %v2049 = vpop.f32.mrf.mxu0
      %v2050 = vadd.f32 0.0, %v2049
      %v2051 = vpop.f32.mrf.mxu0
      %2052 = vmatprep.mubr.f32.mxu0 0.0
      %2053 = vmatmul.mubr.f32.gmra.mxu0 %v1922
      %v2054 = vpop.f32.mrf.mxu0
      %v2055 = vadd.f32 0.0, %v2054
      %v2056 = vpop.f32.mrf.mxu0
      %2057 = vmatprep.mubr.f32.mxu0 0.0
      %2058 = vmatmul.mubr.f32.gmra.mxu0 %v1925
      %v2059 = vpop.f32.mrf.mxu0
      %v2060 = vadd.f32 0.0, %v2059
      %v2061 = vpop.f32.mrf.mxu0
      %2062 = vmatprep.mubr.f32.mxu0 0.0
      %2063 = vmatmul.mubr.f32.gmra.mxu0 %v1928
      %v2064 = vpop.f32.mrf.mxu0
      %v2065 = vadd.f32 0.0, %v2064
      %v2066 = vpop.f32.mrf.mxu0
      %2067 = vmatprep.mubr.f32.mxu0 0.0
      %2068 = vmatmul.mubr.f32.gmra.mxu0 %v1931
      %v2069 = vpop.f32.mrf.mxu0
      %v2070 = vadd.f32 0.0, %v2069
      %v2071 = vpop.f32.mrf.mxu0
      %2072 = vmatprep.mubr.f32.mxu0 0.0
      %2073 = vmatmul.mubr.f32.gmra.mxu0 %v1934
      %v2074 = vpop.f32.mrf.mxu0
      %v2075 = vadd.f32 0.0, %v2074
      %v2076 = vpop.f32.mrf.mxu0
      %2077 = vmatprep.mubr.f32.mxu0 0.0
      %2078 = vmatmul.mubr.f32.gmra.mxu0 %v1937
      %v2079 = vpop.f32.mrf.mxu0
      %v2080 = vadd.f32 0.0, %v2079
      %v2081 = vpop.f32.mrf.mxu0
      %2082 = vmatprep.mubr.f32.mxu0 0.0
      %2083 = vmatmul.mubr.f32.gmra.mxu0 %v1940
      %v2084 = vpop.f32.mrf.mxu0
      %v2085 = vadd.f32 0.0, %v2084
      %v2086 = vpop.f32.mrf.mxu0
      %2087 = vmatprep.mubr.f32.mxu0 0.0
      %2088 = vmatmul.mubr.f32.gmra.mxu0 %v1943
      %v2089 = vpop.f32.mrf.mxu0
      %v2090 = vadd.f32 0.0, %v2089
      %v2091 = vpop.f32.mrf.mxu0
      %2092 = vmatprep.mubr.f32.mxu0 0.0
      %2093 = vmatmul.mubr.f32.gmra.mxu0 %v1946
      %v2094 = vpop.f32.mrf.mxu0
      %v2095 = vadd.f32 0.0, %v2094
      %v2096 = vpop.f32.mrf.mxu0
      %2097 = vmatprep.mubr.f32.mxu0 0.0
      %2098 = vmatmul.mubr.f32.gmra.mxu0 %v1949
      %v2099 = vpop.f32.mrf.mxu0
      %v2100 = vadd.f32 0.0, %v2099
      %v2101 = vpop.f32.mrf.mxu0
      %2102 = vmatprep.mubr.f32.mxu0 0.0
      %2103 = vmatmul.mubr.f32.gmra.mxu0 %v1952
      %v2104 = vpop.f32.mrf.mxu0
      %v2105 = vadd.f32 0.0, %v2104
      %v2106 = vpop.f32.mrf.mxu0
      %2107 = vmatprep.mubr.f32.mxu0 0.0
      %2108 = vmatmul.mubr.f32.gmra.mxu0 %v1955
      %v2109 = vpop.f32.mrf.mxu0
      %v2110 = vadd.f32 0.0, %v2109
      %v2111 = vpop.f32.mrf.mxu0
      %2112 = vmatprep.mubr.f32.mxu0 0.0
      %2113 = vmatmul.mubr.f32.gmra.mxu0 %v1958
      %v2114 = vpop.f32.mrf.mxu0
      %v2115 = vadd.f32 0.0, %v2114
      %v2116 = vpop.f32.mrf.mxu0
      %2117 = vmatprep.mubr.f32.mxu0 0.0
      %2118 = vmatmul.mubr.f32.gmra.mxu0 %v1961
      %v2119 = vpop.f32.mrf.mxu0
      %v2120 = vadd.f32 0.0, %v2119
      %v2121 = vpop.f32.mrf.mxu0
      %2122 = vmatprep.mubr.f32.mxu0 0.0
      %2123 = vmatmul.mubr.f32.gmra.mxu0 %v1964
      %v2124 = vpop.f32.mrf.mxu0
      %v2125 = vadd.f32 0.0, %v2124
      %v2126 = vpop.f32.mrf.mxu0
      %2127 = vmatprep.mubr.f32.mxu0 0.0
      %2128 = vmatmul.mubr.f32.gmra.mxu0 %v1967
      %v2129 = vpop.f32.mrf.mxu0
      %v2130 = vadd.f32 0.0, %v2129
      %v2131 = vpop.f32.mrf.mxu0
      %2132 = vmatprep.mubr.f32.mxu0 0.0
      %2133 = vmatmul.mubr.f32.gmra.mxu0 %v1970
      %v2134 = vpop.f32.mrf.mxu0
      %v2135 = vadd.f32 0.0, %v2134
      %v2136 = vpop.f32.mrf.mxu0
      %2137 = vmatprep.mubr.f32.mxu0 0.0
      %2138 = vmatmul.mubr.f32.gmra.mxu0 %v1973
      %v2139 = vpop.f32.mrf.mxu0
      %v2140 = vadd.f32 0.0, %v2139
      %v2141 = vpop.f32.mrf.mxu0
      %2142 = vmatprep.mubr.f32.mxu0 0.0
      %2143 = vmatmul.mubr.f32.gmra.mxu0 %v1976
      %v2144 = vpop.f32.mrf.mxu0
      %v2145 = vadd.f32 0.0, %v2144
      %v2146 = vpop.f32.mrf.mxu0
      %2147 = vdwg.mxu0
      %v2148 = vadd.f32 %v1860, %v2045
      %v2149 = vadd.f32 %v1861, %v2050
      %v2150 = vadd.f32 %v1862, %v2055
      %v2151 = vadd.f32 %v1863, %v2060
      %v2152 = vadd.f32 %v1864, %v2065
      %v2153 = vadd.f32 %v1865, %v2070
      %v2154 = vadd.f32 %v1866, %v2075
      %v2155 = vadd.f32 %v1867, %v2080
      %v2156 = vadd.f32 %v1868, %v2085
      %v2157 = vadd.f32 %v1869, %v2090
      %v2158 = vadd.f32 %v1870, %v2095
      %v2159 = vadd.f32 %v1871, %v2100
      %v2160 = vadd.f32 %v1872, %v2105
      %v2161 = vadd.f32 %v1873, %v2110
      %v2162 = vadd.f32 %v1874, %v2115
      %v2163 = vadd.f32 %v1875, %v2120
      %v2164 = vadd.f32 %v1876, %v2125
      %v2165 = vadd.f32 %v1877, %v2130
      %v2166 = vadd.f32 %v1878, %v2135
      %v2167 = vadd.f32 %v1879, %v2140
      %v2168 = vadd.f32 %v1880, %v2145
      %v2169 = vmax.f32 %v2148, 0.0
      %v2170 = vmax.f32 %v2149, 0.0
      %v2171 = vmax.f32 %v2150, 0.0
      %v2172 = vmax.f32 %v2151, 0.0
      %v2173 = vmax.f32 %v2152, 0.0
      %v2174 = vmax.f32 %v2153, 0.0
      %v2175 = vmax.f32 %v2154, 0.0
      %v2176 = vmax.f32 %v2155, 0.0
      %v2177 = vmax.f32 %v2156, 0.0
      %v2178 = vmax.f32 %v2157, 0.0
      %v2179 = vmax.f32 %v2158, 0.0
      %v2180 = vmax.f32 %v2159, 0.0
      %v2181 = vmax.f32 %v2160, 0.0
      %v2182 = vmax.f32 %v2161, 0.0
      %v2183 = vmax.f32 %v2162, 0.0
      %v2184 = vmax.f32 %v2163, 0.0
      %v2185 = vmax.f32 %v2164, 0.0
      %v2186 = vmax.f32 %v2165, 0.0
      %v2187 = vmax.f32 %v2166, 0.0
      %v2188 = vmax.f32 %v2167, 0.0
      %v2189 = vmax.f32 %v2168, 0.0
      %v2190 = vld [vmem:[%s3] sm:$0xff]
      %v2191 = vld [vmem:[%s3 + $0x8] sm:$0xff]
      %v2192 = vld [vmem:[%s3 + $0x10] sm:$0xff]
      %v2193 = vld [vmem:[%s3 + $0x18] sm:$0xf]
      %vm2194 = vcmask 228352
      %v2196 = vsel %vm2194, %v2169, 0
      %v2199 = vsel %vm2194, %v2170, 0
      %v2202 = vsel %vm2194, %v2171, 0
      %v2205 = vsel %vm2194, %v2172, 0
      %v2208 = vsel %vm2194, %v2173, 0
      %v2211 = vsel %vm2194, %v2174, 0
      %v2214 = vsel %vm2194, %v2175, 0
      %v2217 = vsel %vm2194, %v2176, 0
      %v2220 = vsel %vm2194, %v2177, 0
      %v2223 = vsel %vm2194, %v2178, 0
      %v2226 = vsel %vm2194, %v2179, 0
      %v2229 = vsel %vm2194, %v2180, 0
      %v2232 = vsel %vm2194, %v2181, 0
      %v2235 = vsel %vm2194, %v2182, 0
      %v2238 = vsel %vm2194, %v2183, 0
      %v2241 = vsel %vm2194, %v2184, 0
      %v2244 = vsel %vm2194, %v2185, 0
      %v2247 = vsel %vm2194, %v2186, 0
      %v2250 = vsel %vm2194, %v2187, 0
      %v2253 = vsel %vm2194, %v2188, 0
      %v2256 = vsel %vm2194, %v2189, 0
      %vm2258 = vcmask 1043456
      %v2260 = vsel %vm2258, %v2193, 0
      %2262 = vmatprep.subr.mxu0 0.0
      %2263 = vmatpush1.msra.mxu0 0.0
      %2264 = vmatprep.subr.mxu0 0.0
      %2265 = vmatpush1.msra.mxu0 0.0
      %2266 = vmatprep.subr.mxu0 0.0
      %2267 = vmatpush1.msra.mxu0 0.0
      %2268 = vmatprep.subr.mxu0 0.0
      %2269 = vmatpush1.msra.mxu0 0.0
      %2270 = vmatprep.subr.mxu0 0.0
      %2271 = vmatpush1.msra.mxu0 0.0
      %2272 = vmatprep.subr.mxu0 0.0
      %2273 = vmatpush1.msra.mxu0 0.0
      %2274 = vmatprep.subr.mxu0 0.0
      %2275 = vmatpush1.msra.mxu0 0.0
      %2276 = vmatprep.subr.mxu0 0.0
      %2277 = vmatpush1.msra.mxu0 0.0
      %2278 = vmatprep.subr.mxu0 0.0
      %2279 = vmatpush1.msra.mxu0 0.0
      %2280 = vmatprep.subr.mxu0 0.0
      %2281 = vmatpush1.msra.mxu0 0.0
      %2282 = vmatprep.subr.mxu0 0.0
      %2283 = vmatpush1.msra.mxu0 0.0
      %2284 = vmatprep.subr.mxu0 0.0
      %2285 = vmatpush1.msra.mxu0 0.0
      %2286 = vmatprep.subr.mxu0 0.0
      %2287 = vmatpush1.msra.mxu0 %v2260
      %2288 = vmatprep.subr.mxu0 0.0
      %2289 = vmatpush1.msra.mxu0 %v2192
      %2290 = vmatprep.subr.mxu0 0.0
      %2291 = vmatpush1.msra.mxu0 %v2191
      %2292 = vmatprep.subr.mxu0 0.0
      %2293 = vmatpush1.msra.mxu0 %v2190
      %2294 = vmatprep.subr.mxu0 0.0
      %2295 = vmatpush2.msra.mxu0 0.0
      %2296 = vmatprep.subr.mxu0 0.0
      %2297 = vmatpush2.msra.mxu0 0.0
      %2298 = vmatprep.subr.mxu0 0.0
      %2299 = vmatpush2.msra.mxu0 0.0
      %2300 = vmatprep.subr.mxu0 0.0
      %2301 = vmatpush2.msra.mxu0 0.0
      %2302 = vmatprep.subr.mxu0 0.0
      %2303 = vmatpush2.msra.mxu0 0.0
      %2304 = vmatprep.subr.mxu0 0.0
      %2305 = vmatpush2.msra.mxu0 0.0
      %2306 = vmatprep.subr.mxu0 0.0
      %2307 = vmatpush2.msra.mxu0 0.0
      %2308 = vmatprep.subr.mxu0 0.0
      %2309 = vmatpush2.msra.mxu0 0.0
      %2310 = vmatprep.subr.mxu0 0.0
      %2311 = vmatpush2.msra.mxu0 0.0
      %2312 = vmatprep.subr.mxu0 0.0
      %2313 = vmatpush2.msra.mxu0 0.0
      %2314 = vmatprep.subr.mxu0 0.0
      %2315 = vmatpush2.msra.mxu0 0.0
      %2316 = vmatprep.subr.mxu0 0.0
      %2317 = vmatpush2.msra.mxu0 0.0
      %2318 = vmatprep.subr.mxu0 0.0
      %2319 = vmatpush2.msra.mxu0 0.0
      %2320 = vmatprep.subr.mxu0 0.0
      %2321 = vmatpush2.msra.mxu0 0.0
      %2322 = vmatprep.subr.mxu0 0.0
      %2323 = vmatpush2.msra.mxu0 0.0
      %2324 = vmatprep.subr.mxu0 0.0
      %2325 = vmatpush2.msra.mxu0 0.0
      %2326 = vmatprep.mubr.f32.mxu0 0.0
      %2327 = vmatmul.mubr.f32.gmra.mxu0 %v2196
      %v2328 = vpop.f32.mrf.mxu0
      %v2329 = vadd.f32 0.0, %v2328
      %v2330 = vpop.f32.mrf.mxu0
      %2331 = vmatprep.mubr.f32.mxu0 0.0
      %2332 = vmatmul.mubr.f32.gmra.mxu0 %v2199
      %v2333 = vpop.f32.mrf.mxu0
      %v2334 = vadd.f32 0.0, %v2333
      %v2335 = vpop.f32.mrf.mxu0
      %2336 = vmatprep.mubr.f32.mxu0 0.0
      %2337 = vmatmul.mubr.f32.gmra.mxu0 %v2202
      %v2338 = vpop.f32.mrf.mxu0
      %v2339 = vadd.f32 0.0, %v2338
      %v2340 = vpop.f32.mrf.mxu0
      %2341 = vmatprep.mubr.f32.mxu0 0.0
      %2342 = vmatmul.mubr.f32.gmra.mxu0 %v2205
      %v2343 = vpop.f32.mrf.mxu0
      %v2344 = vadd.f32 0.0, %v2343
      %v2345 = vpop.f32.mrf.mxu0
      %2346 = vmatprep.mubr.f32.mxu0 0.0
      %2347 = vmatmul.mubr.f32.gmra.mxu0 %v2208
      %v2348 = vpop.f32.mrf.mxu0
      %v2349 = vadd.f32 0.0, %v2348
      %v2350 = vpop.f32.mrf.mxu0
      %2351 = vmatprep.mubr.f32.mxu0 0.0
      %2352 = vmatmul.mubr.f32.gmra.mxu0 %v2211
      %v2353 = vpop.f32.mrf.mxu0
      %v2354 = vadd.f32 0.0, %v2353
      %v2355 = vpop.f32.mrf.mxu0
      %2356 = vmatprep.mubr.f32.mxu0 0.0
      %2357 = vmatmul.mubr.f32.gmra.mxu0 %v2214
      %v2358 = vpop.f32.mrf.mxu0
      %v2359 = vadd.f32 0.0, %v2358
      %v2360 = vpop.f32.mrf.mxu0
      %2361 = vmatprep.mubr.f32.mxu0 0.0
      %2362 = vmatmul.mubr.f32.gmra.mxu0 %v2217
      %v2363 = vpop.f32.mrf.mxu0
      %v2364 = vadd.f32 0.0, %v2363
      %v2365 = vpop.f32.mrf.mxu0
      %2366 = vmatprep.mubr.f32.mxu0 0.0
      %2367 = vmatmul.mubr.f32.gmra.mxu0 %v2220
      %v2368 = vpop.f32.mrf.mxu0
      %v2369 = vadd.f32 0.0, %v2368
      %v2370 = vpop.f32.mrf.mxu0
      %2371 = vmatprep.mubr.f32.mxu0 0.0
      %2372 = vmatmul.mubr.f32.gmra.mxu0 %v2223
      %v2373 = vpop.f32.mrf.mxu0
      %v2374 = vadd.f32 0.0, %v2373
      %v2375 = vpop.f32.mrf.mxu0
      %2376 = vmatprep.mubr.f32.mxu0 0.0
      %2377 = vmatmul.mubr.f32.gmra.mxu0 %v2226
      %v2378 = vpop.f32.mrf.mxu0
      %v2379 = vadd.f32 0.0, %v2378
      %v2380 = vpop.f32.mrf.mxu0
      %2381 = vmatprep.mubr.f32.mxu0 0.0
      %2382 = vmatmul.mubr.f32.gmra.mxu0 %v2229
      %v2383 = vpop.f32.mrf.mxu0
      %v2384 = vadd.f32 0.0, %v2383
      %v2385 = vpop.f32.mrf.mxu0
      %2386 = vmatprep.mubr.f32.mxu0 0.0
      %2387 = vmatmul.mubr.f32.gmra.mxu0 %v2232
      %v2388 = vpop.f32.mrf.mxu0
      %v2389 = vadd.f32 0.0, %v2388
      %v2390 = vpop.f32.mrf.mxu0
      %2391 = vmatprep.mubr.f32.mxu0 0.0
      %2392 = vmatmul.mubr.f32.gmra.mxu0 %v2235
      %v2393 = vpop.f32.mrf.mxu0
      %v2394 = vadd.f32 0.0, %v2393
      %v2395 = vpop.f32.mrf.mxu0
      %2396 = vmatprep.mubr.f32.mxu0 0.0
      %2397 = vmatmul.mubr.f32.gmra.mxu0 %v2238
      %v2398 = vpop.f32.mrf.mxu0
      %v2399 = vadd.f32 0.0, %v2398
      %v2400 = vpop.f32.mrf.mxu0
      %2401 = vmatprep.mubr.f32.mxu0 0.0
      %2402 = vmatmul.mubr.f32.gmra.mxu0 %v2241
      %v2403 = vpop.f32.mrf.mxu0
      %v2404 = vadd.f32 0.0, %v2403
      %v2405 = vpop.f32.mrf.mxu0
      %2406 = vmatprep.mubr.f32.mxu0 0.0
      %2407 = vmatmul.mubr.f32.gmra.mxu0 %v2244
      %v2408 = vpop.f32.mrf.mxu0
      %v2409 = vadd.f32 0.0, %v2408
      %v2410 = vpop.f32.mrf.mxu0
      %2411 = vmatprep.mubr.f32.mxu0 0.0
      %2412 = vmatmul.mubr.f32.gmra.mxu0 %v2247
      %v2413 = vpop.f32.mrf.mxu0
      %v2414 = vadd.f32 0.0, %v2413
      %v2415 = vpop.f32.mrf.mxu0
      %2416 = vmatprep.mubr.f32.mxu0 0.0
      %2417 = vmatmul.mubr.f32.gmra.mxu0 %v2250
      %v2418 = vpop.f32.mrf.mxu0
      %v2419 = vadd.f32 0.0, %v2418
      %v2420 = vpop.f32.mrf.mxu0
      %2421 = vmatprep.mubr.f32.mxu0 0.0
      %2422 = vmatmul.mubr.f32.gmra.mxu0 %v2253
      %v2423 = vpop.f32.mrf.mxu0
      %v2424 = vadd.f32 0.0, %v2423
      %v2425 = vpop.f32.mrf.mxu0
      %2426 = vmatprep.mubr.f32.mxu0 0.0
      %2427 = vmatmul.mubr.f32.gmra.mxu0 %v2256
      %v2428 = vpop.f32.mrf.mxu0
      %v2429 = vadd.f32 0.0, %v2428
      %v2430 = vpop.f32.mrf.mxu0
      %2431 = vdwg.mxu0
      %v2432 = vld [vmem:[%s4] sm:$0xff]
      %v2433 = vld [vmem:[%s4 + $0x8] sm:$0xff]
      %v2434 = vld [vmem:[%s4 + $0x10] sm:$0xff]
      %v2435 = vld [vmem:[%s4 + $0x18] sm:$0xf]
      %v2437 = vsel %vm2258, %v2435, 0
      %2439 = vmatprep.subr.mxu0 0.0
      %2440 = vmatpush1.msra.mxu0 0.0
      %2441 = vmatprep.subr.mxu0 0.0
      %2442 = vmatpush1.msra.mxu0 0.0
      %2443 = vmatprep.subr.mxu0 0.0
      %2444 = vmatpush1.msra.mxu0 0.0
      %2445 = vmatprep.subr.mxu0 0.0
      %2446 = vmatpush1.msra.mxu0 0.0
      %2447 = vmatprep.subr.mxu0 0.0
      %2448 = vmatpush1.msra.mxu0 0.0
      %2449 = vmatprep.subr.mxu0 0.0
      %2450 = vmatpush1.msra.mxu0 0.0
      %2451 = vmatprep.subr.mxu0 0.0
      %2452 = vmatpush1.msra.mxu0 0.0
      %2453 = vmatprep.subr.mxu0 0.0
      %2454 = vmatpush1.msra.mxu0 0.0
      %2455 = vmatprep.subr.mxu0 0.0
      %2456 = vmatpush1.msra.mxu0 0.0
      %2457 = vmatprep.subr.mxu0 0.0
      %2458 = vmatpush1.msra.mxu0 0.0
      %2459 = vmatprep.subr.mxu0 0.0
      %2460 = vmatpush1.msra.mxu0 0.0
      %2461 = vmatprep.subr.mxu0 0.0
      %2462 = vmatpush1.msra.mxu0 0.0
      %2463 = vmatprep.subr.mxu0 0.0
      %2464 = vmatpush1.msra.mxu0 %v2437
      %2465 = vmatprep.subr.mxu0 0.0
      %2466 = vmatpush1.msra.mxu0 %v2434
      %2467 = vmatprep.subr.mxu0 0.0
      %2468 = vmatpush1.msra.mxu0 %v2433
      %2469 = vmatprep.subr.mxu0 0.0
      %2470 = vmatpush1.msra.mxu0 %v2432
      %2471 = vmatprep.subr.mxu0 0.0
      %2472 = vmatpush2.msra.mxu0 0.0
      %2473 = vmatprep.subr.mxu0 0.0
      %2474 = vmatpush2.msra.mxu0 0.0
      %2475 = vmatprep.subr.mxu0 0.0
      %2476 = vmatpush2.msra.mxu0 0.0
      %2477 = vmatprep.subr.mxu0 0.0
      %2478 = vmatpush2.msra.mxu0 0.0
      %2479 = vmatprep.subr.mxu0 0.0
      %2480 = vmatpush2.msra.mxu0 0.0
      %2481 = vmatprep.subr.mxu0 0.0
      %2482 = vmatpush2.msra.mxu0 0.0
      %2483 = vmatprep.subr.mxu0 0.0
      %2484 = vmatpush2.msra.mxu0 0.0
      %2485 = vmatprep.subr.mxu0 0.0
      %2486 = vmatpush2.msra.mxu0 0.0
      %2487 = vmatprep.subr.mxu0 0.0
      %2488 = vmatpush2.msra.mxu0 0.0
      %2489 = vmatprep.subr.mxu0 0.0
      %2490 = vmatpush2.msra.mxu0 0.0
      %2491 = vmatprep.subr.mxu0 0.0
      %2492 = vmatpush2.msra.mxu0 0.0
      %2493 = vmatprep.subr.mxu0 0.0
      %2494 = vmatpush2.msra.mxu0 0.0
      %2495 = vmatprep.subr.mxu0 0.0
      %2496 = vmatpush2.msra.mxu0 0.0
      %2497 = vmatprep.subr.mxu0 0.0
      %2498 = vmatpush2.msra.mxu0 0.0
      %2499 = vmatprep.subr.mxu0 0.0
      %2500 = vmatpush2.msra.mxu0 0.0
      %2501 = vmatprep.subr.mxu0 0.0
      %2502 = vmatpush2.msra.mxu0 0.0
      %2503 = vmatprep.mubr.f32.mxu0 0.0
      %2504 = vmatmul.mubr.f32.gmra.mxu0 %v2196
      %v2505 = vpop.f32.mrf.mxu0
      %v2506 = vadd.f32 0.0, %v2505
      %v2507 = vpop.f32.mrf.mxu0
      %2508 = vmatprep.mubr.f32.mxu0 0.0
      %2509 = vmatmul.mubr.f32.gmra.mxu0 %v2199
      %v2510 = vpop.f32.mrf.mxu0
      %v2511 = vadd.f32 0.0, %v2510
      %v2512 = vpop.f32.mrf.mxu0
      %2513 = vmatprep.mubr.f32.mxu0 0.0
      %2514 = vmatmul.mubr.f32.gmra.mxu0 %v2202
      %v2515 = vpop.f32.mrf.mxu0
      %v2516 = vadd.f32 0.0, %v2515
      %v2517 = vpop.f32.mrf.mxu0
      %2518 = vmatprep.mubr.f32.mxu0 0.0
      %2519 = vmatmul.mubr.f32.gmra.mxu0 %v2205
      %v2520 = vpop.f32.mrf.mxu0
      %v2521 = vadd.f32 0.0, %v2520
      %v2522 = vpop.f32.mrf.mxu0
      %2523 = vmatprep.mubr.f32.mxu0 0.0
      %2524 = vmatmul.mubr.f32.gmra.mxu0 %v2208
      %v2525 = vpop.f32.mrf.mxu0
      %v2526 = vadd.f32 0.0, %v2525
      %v2527 = vpop.f32.mrf.mxu0
      %2528 = vmatprep.mubr.f32.mxu0 0.0
      %2529 = vmatmul.mubr.f32.gmra.mxu0 %v2211
      %v2530 = vpop.f32.mrf.mxu0
      %v2531 = vadd.f32 0.0, %v2530
      %v2532 = vpop.f32.mrf.mxu0
      %2533 = vmatprep.mubr.f32.mxu0 0.0
      %2534 = vmatmul.mubr.f32.gmra.mxu0 %v2214
      %v2535 = vpop.f32.mrf.mxu0
      %v2536 = vadd.f32 0.0, %v2535
      %v2537 = vpop.f32.mrf.mxu0
      %2538 = vmatprep.mubr.f32.mxu0 0.0
      %2539 = vmatmul.mubr.f32.gmra.mxu0 %v2217
      %v2540 = vpop.f32.mrf.mxu0
      %v2541 = vadd.f32 0.0, %v2540
      %v2542 = vpop.f32.mrf.mxu0
      %2543 = vmatprep.mubr.f32.mxu0 0.0
      %2544 = vmatmul.mubr.f32.gmra.mxu0 %v2220
      %v2545 = vpop.f32.mrf.mxu0
      %v2546 = vadd.f32 0.0, %v2545
      %v2547 = vpop.f32.mrf.mxu0
      %2548 = vmatprep.mubr.f32.mxu0 0.0
      %2549 = vmatmul.mubr.f32.gmra.mxu0 %v2223
      %v2550 = vpop.f32.mrf.mxu0
      %v2551 = vadd.f32 0.0, %v2550
      %v2552 = vpop.f32.mrf.mxu0
      %2553 = vmatprep.mubr.f32.mxu0 0.0
      %2554 = vmatmul.mubr.f32.gmra.mxu0 %v2226
      %v2555 = vpop.f32.mrf.mxu0
      %v2556 = vadd.f32 0.0, %v2555
      %v2557 = vpop.f32.mrf.mxu0
      %2558 = vmatprep.mubr.f32.mxu0 0.0
      %2559 = vmatmul.mubr.f32.gmra.mxu0 %v2229
      %v2560 = vpop.f32.mrf.mxu0
      %v2561 = vadd.f32 0.0, %v2560
      %v2562 = vpop.f32.mrf.mxu0
      %2563 = vmatprep.mubr.f32.mxu0 0.0
      %2564 = vmatmul.mubr.f32.gmra.mxu0 %v2232
      %v2565 = vpop.f32.mrf.mxu0
      %v2566 = vadd.f32 0.0, %v2565
      %v2567 = vpop.f32.mrf.mxu0
      %2568 = vmatprep.mubr.f32.mxu0 0.0
      %2569 = vmatmul.mubr.f32.gmra.mxu0 %v2235
      %v2570 = vpop.f32.mrf.mxu0
      %v2571 = vadd.f32 0.0, %v2570
      %v2572 = vpop.f32.mrf.mxu0
      %2573 = vmatprep.mubr.f32.mxu0 0.0
      %2574 = vmatmul.mubr.f32.gmra.mxu0 %v2238
      %v2575 = vpop.f32.mrf.mxu0
      %v2576 = vadd.f32 0.0, %v2575
      %v2577 = vpop.f32.mrf.mxu0
      %2578 = vmatprep.mubr.f32.mxu0 0.0
      %2579 = vmatmul.mubr.f32.gmra.mxu0 %v2241
      %v2580 = vpop.f32.mrf.mxu0
      %v2581 = vadd.f32 0.0, %v2580
      %v2582 = vpop.f32.mrf.mxu0
      %2583 = vmatprep.mubr.f32.mxu0 0.0
      %2584 = vmatmul.mubr.f32.gmra.mxu0 %v2244
      %v2585 = vpop.f32.mrf.mxu0
      %v2586 = vadd.f32 0.0, %v2585
      %v2587 = vpop.f32.mrf.mxu0
      %2588 = vmatprep.mubr.f32.mxu0 0.0
      %2589 = vmatmul.mubr.f32.gmra.mxu0 %v2247
      %v2590 = vpop.f32.mrf.mxu0
      %v2591 = vadd.f32 0.0, %v2590
      %v2592 = vpop.f32.mrf.mxu0
      %2593 = vmatprep.mubr.f32.mxu0 0.0
      %2594 = vmatmul.mubr.f32.gmra.mxu0 %v2250
      %v2595 = vpop.f32.mrf.mxu0
      %v2596 = vadd.f32 0.0, %v2595
      %v2597 = vpop.f32.mrf.mxu0
      %2598 = vmatprep.mubr.f32.mxu0 0.0
      %2599 = vmatmul.mubr.f32.gmra.mxu0 %v2253
      %v2600 = vpop.f32.mrf.mxu0
      %v2601 = vadd.f32 0.0, %v2600
      %v2602 = vpop.f32.mrf.mxu0
      %2603 = vmatprep.mubr.f32.mxu0 0.0
      %2604 = vmatmul.mubr.f32.gmra.mxu0 %v2256
      %v2605 = vpop.f32.mrf.mxu0
      %v2606 = vadd.f32 0.0, %v2605
      %v2607 = vpop.f32.mrf.mxu0
      %2608 = vdwg.mxu0
      %v2609 = vmax.f32 %v2329, %v2506
      %v2610 = vmax.f32 %v2334, %v2511
      %v2611 = vmax.f32 %v2339, %v2516
      %v2612 = vmax.f32 %v2344, %v2521
      %v2613 = vmax.f32 %v2349, %v2526
      %v2614 = vmax.f32 %v2354, %v2531
      %v2615 = vmax.f32 %v2359, %v2536
      %v2616 = vmax.f32 %v2364, %v2541
      %v2617 = vmax.f32 %v2369, %v2546
      %v2618 = vmax.f32 %v2374, %v2551
      %v2619 = vmax.f32 %v2379, %v2556
      %v2620 = vmax.f32 %v2384, %v2561
      %v2621 = vmax.f32 %v2389, %v2566
      %v2622 = vmax.f32 %v2394, %v2571
      %v2623 = vmax.f32 %v2399, %v2576
      %v2624 = vmax.f32 %v2404, %v2581
      %v2625 = vmax.f32 %v2409, %v2586
      %v2626 = vmax.f32 %v2414, %v2591
      %v2627 = vmax.f32 %v2419, %v2596
      %v2628 = vmax.f32 %v2424, %v2601
      %v2629 = vmax.f32 %v2429, %v2606
      %v2630 = vld [vmem:[%s5] sm:$0xff]
      %v2631 = vld [vmem:[%s5 + $0x8] sm:$0xff]
      %v2632 = vld [vmem:[%s5 + $0x10] sm:$0xff]
      %v2633 = vld [vmem:[%s5 + $0x18] sm:$0xff]
      %v2634 = vld [vmem:[%s5 + $0x20] sm:$0xff]
      %v2635 = vld [vmem:[%s5 + $0x28] sm:$0xff]
      %v2636 = vld [vmem:[%s5 + $0x30] sm:$0xff]
      %v2637 = vld [vmem:[%s5 + $0x38] sm:$0xff]
      %v2638 = vld [vmem:[%s5 + $0x40] sm:$0xff]
      %v2639 = vld [vmem:[%s5 + $0x48] sm:$0xff]
      %v2640 = vld [vmem:[%s5 + $0x50] sm:$0xff]
      %v2641 = vld [vmem:[%s5 + $0x58] sm:$0xff]
      %v2642 = vld [vmem:[%s5 + $0x60] sm:$0xff]
      %v2643 = vld [vmem:[%s5 + $0x68] sm:$0xff]
      %v2644 = vld [vmem:[%s5 + $0x70] sm:$0xff]
      %v2645 = vld [vmem:[%s5 + $0x78] sm:$0xff]
      %v2646 = vld [vmem:[%s5 + $0x80] sm:$0xff]
      %v2647 = vld [vmem:[%s5 + $0x88] sm:$0xff]
      %v2648 = vld [vmem:[%s5 + $0x90] sm:$0xff]
      %v2649 = vld [vmem:[%s5 + $0x98] sm:$0xff]
      %v2650 = vld [vmem:[%s5 + $0xa0] sm:$0xf]
      %v2651 = vld [vmem:[%s5 + $0xa8] sm:$0xf]
      %vm2652 = vcmask 326656
      %v2654 = vsel %vm2652, %v2631, 0
      %v2657 = vsel %vm2652, %v2633, 0
      %v2660 = vsel %vm2652, %v2635, 0
      %v2663 = vsel %vm2652, %v2637, 0
      %v2666 = vsel %vm2652, %v2639, 0
      %v2669 = vsel %vm2652, %v2641, 0
      %v2672 = vsel %vm2652, %v2643, 0
      %v2675 = vsel %vm2652, %v2645, 0
      %v2678 = vsel %vm2652, %v2647, 0
      %v2681 = vsel %vm2652, %v2649, 0
      %v2684 = vsel %vm2652, %v2651, 0
      %2686 = vmatprep.subr.mxu0 0.0
      %2687 = vmatpush1.msra.mxu0 %v2624
      %2688 = vmatprep.subr.mxu0 0.0
      %2689 = vmatpush1.msra.mxu0 %v2623
      %2690 = vmatprep.subr.mxu0 0.0
      %2691 = vmatpush1.msra.mxu0 %v2622
      %2692 = vmatprep.subr.mxu0 0.0
      %2693 = vmatpush1.msra.mxu0 %v2621
      %2694 = vmatprep.subr.mxu0 0.0
      %2695 = vmatpush1.msra.mxu0 %v2620
      %2696 = vmatprep.subr.mxu0 0.0
      %2697 = vmatpush1.msra.mxu0 %v2619
      %2698 = vmatprep.subr.mxu0 0.0
      %2699 = vmatpush1.msra.mxu0 %v2618
      %2700 = vmatprep.subr.mxu0 0.0
      %2701 = vmatpush1.msra.mxu0 %v2617
      %2702 = vmatprep.subr.mxu0 0.0
      %2703 = vmatpush1.msra.mxu0 %v2616
      %2704 = vmatprep.subr.mxu0 0.0
      %2705 = vmatpush1.msra.mxu0 %v2615
      %2706 = vmatprep.subr.mxu0 0.0
      %2707 = vmatpush1.msra.mxu0 %v2614
      %2708 = vmatprep.subr.mxu0 0.0
      %2709 = vmatpush1.msra.mxu0 %v2613
      %2710 = vmatprep.subr.mxu0 0.0
      %2711 = vmatpush1.msra.mxu0 %v2612
      %2712 = vmatprep.subr.mxu0 0.0
      %2713 = vmatpush1.msra.mxu0 %v2611
      %2714 = vmatprep.subr.mxu0 0.0
      %2715 = vmatpush1.msra.mxu0 %v2610
      %2716 = vmatprep.subr.mxu0 0.0
      %2717 = vmatpush1.msra.mxu0 %v2609
      %2718 = vmatprep.subr.mxu0 0.0
      %2719 = vmatpush2.msra.mxu0 0.0
      %2720 = vmatprep.subr.mxu0 0.0
      %2721 = vmatpush2.msra.mxu0 0.0
      %2722 = vmatprep.subr.mxu0 0.0
      %2723 = vmatpush2.msra.mxu0 0.0
      %2724 = vmatprep.subr.mxu0 0.0
      %2725 = vmatpush2.msra.mxu0 0.0
      %2726 = vmatprep.subr.mxu0 0.0
      %2727 = vmatpush2.msra.mxu0 0.0
      %2728 = vmatprep.subr.mxu0 0.0
      %2729 = vmatpush2.msra.mxu0 0.0
      %2730 = vmatprep.subr.mxu0 0.0
      %2731 = vmatpush2.msra.mxu0 0.0
      %2732 = vmatprep.subr.mxu0 0.0
      %2733 = vmatpush2.msra.mxu0 0.0
      %2734 = vmatprep.subr.mxu0 0.0
      %2735 = vmatpush2.msra.mxu0 0.0
      %2736 = vmatprep.subr.mxu0 0.0
      %2737 = vmatpush2.msra.mxu0 0.0
      %2738 = vmatprep.subr.mxu0 0.0
      %2739 = vmatpush2.msra.mxu0 0.0
      %2740 = vmatprep.subr.mxu0 0.0
      %2741 = vmatpush2.msra.mxu0 %v2629
      %2742 = vmatprep.subr.mxu0 0.0
      %2743 = vmatpush2.msra.mxu0 %v2628
      %2744 = vmatprep.subr.mxu0 0.0
      %2745 = vmatpush2.msra.mxu0 %v2627
      %2746 = vmatprep.subr.mxu0 0.0
      %2747 = vmatpush2.msra.mxu0 %v2626
      %2748 = vmatprep.subr.mxu0 0.0
      %2749 = vmatpush2.msra.mxu0 %v2625
      %2750 = vmatprep.mubr.f32.mxu0 %v2654
      %2751 = vmatmul.mubr.f32.gmra.mxu0 %v2630
      %v2752 = vpop.f32.mrf.mxu0
      %v2753 = vadd.f32 0.0, %v2752
      %v2754 = vpop.f32.mrf.mxu0
      %2755 = vmatprep.mubr.f32.mxu0 %v2657
      %2756 = vmatmul.mubr.f32.gmra.mxu0 %v2632
      %v2757 = vpop.f32.mrf.mxu0
      %v2758 = vadd.f32 0.0, %v2757
      %v2759 = vpop.f32.mrf.mxu0
      %2760 = vmatprep.mubr.f32.mxu0 %v2660
      %2761 = vmatmul.mubr.f32.gmra.mxu0 %v2634
      %v2762 = vpop.f32.mrf.mxu0
      %v2763 = vadd.f32 0.0, %v2762
      %v2764 = vpop.f32.mrf.mxu0
      %2765 = vmatprep.mubr.f32.mxu0 %v2663
      %2766 = vmatmul.mubr.f32.gmra.mxu0 %v2636
      %v2767 = vpop.f32.mrf.mxu0
      %v2768 = vadd.f32 0.0, %v2767
      %v2769 = vpop.f32.mrf.mxu0
      %2770 = vmatprep.mubr.f32.mxu0 %v2666
      %2771 = vmatmul.mubr.f32.gmra.mxu0 %v2638
      %v2772 = vpop.f32.mrf.mxu0
      %v2773 = vadd.f32 0.0, %v2772
      %v2774 = vpop.f32.mrf.mxu0
      %2775 = vmatprep.mubr.f32.mxu0 %v2669
      %2776 = vmatmul.mubr.f32.gmra.mxu0 %v2640
      %v2777 = vpop.f32.mrf.mxu0
      %v2778 = vadd.f32 0.0, %v2777
      %v2779 = vpop.f32.mrf.mxu0
      %2780 = vmatprep.mubr.f32.mxu0 %v2672
      %2781 = vmatmul.mubr.f32.gmra.mxu0 %v2642
      %v2782 = vpop.f32.mrf.mxu0
      %v2783 = vadd.f32 0.0, %v2782
      %v2784 = vpop.f32.mrf.mxu0
      %2785 = vmatprep.mubr.f32.mxu0 %v2675
      %2786 = vmatmul.mubr.f32.gmra.mxu0 %v2644
      %v2787 = vpop.f32.mrf.mxu0
      %v2788 = vadd.f32 0.0, %v2787
      %v2789 = vpop.f32.mrf.mxu0
      %2790 = vmatprep.mubr.f32.mxu0 %v2678
      %2791 = vmatmul.mubr.f32.gmra.mxu0 %v2646
      %v2792 = vpop.f32.mrf.mxu0
      %v2793 = vadd.f32 0.0, %v2792
      %v2794 = vpop.f32.mrf.mxu0
      %2795 = vmatprep.mubr.f32.mxu0 %v2681
      %2796 = vmatmul.mubr.f32.gmra.mxu0 %v2648
      %v2797 = vpop.f32.mrf.mxu0
      %v2798 = vadd.f32 0.0, %v2797
      %v2799 = vpop.f32.mrf.mxu0
      %2800 = vmatprep.mubr.f32.mxu0 %v2684
      %2801 = vmatmul.mubr.f32.gmra.mxu0 %v2650
      %v2802 = vpop.f32.mrf.mxu0
      %v2803 = vadd.f32 0.0, %v2802
      %v2804 = vpop.f32.mrf.mxu0
      %2805 = vdwg.mxu0
      %v2806 = vld [vmem:[%s6] sm:$0xff]
      %v2807 = vld [vmem:[%s6 + $0x8] sm:$0xff]
      %v2808 = vld [vmem:[%s6 + $0x10] sm:$0xff]
      %v2809 = vld [vmem:[%s6 + $0x18] sm:$0xff]
      %v2810 = vld [vmem:[%s6 + $0x20] sm:$0xff]
      %v2811 = vld [vmem:[%s6 + $0x28] sm:$0xff]
      %v2812 = vld [vmem:[%s6 + $0x30] sm:$0xff]
      %v2813 = vld [vmem:[%s6 + $0x38] sm:$0xff]
      %v2814 = vld [vmem:[%s6 + $0x40] sm:$0xff]
      %v2815 = vld [vmem:[%s6 + $0x48] sm:$0xff]
      %v2816 = vld [vmem:[%s6 + $0x50] sm:$0xff]
      %v2817 = vld [vmem:[%s6 + $0x58] sm:$0xff]
      %v2818 = vld [vmem:[%s6 + $0x60] sm:$0xff]
      %v2819 = vld [vmem:[%s6 + $0x68] sm:$0xff]
      %v2820 = vld [vmem:[%s6 + $0x70] sm:$0xff]
      %v2821 = vld [vmem:[%s6 + $0x78] sm:$0xff]
      %v2822 = vld [vmem:[%s6 + $0x80] sm:$0xff]
      %v2823 = vld [vmem:[%s6 + $0x88] sm:$0xff]
      %v2824 = vld [vmem:[%s6 + $0x90] sm:$0xff]
      %v2825 = vld [vmem:[%s6 + $0x98] sm:$0xff]
      %v2826 = vld [vmem:[%s6 + $0xa0] sm:$0xf]
      %v2827 = vld [vmem:[%s6 + $0xa8] sm:$0xf]
      %v2829 = vsel %vm2652, %v2807, 0
      %v2832 = vsel %vm2652, %v2809, 0
      %v2835 = vsel %vm2652, %v2811, 0
      %v2838 = vsel %vm2652, %v2813, 0
      %v2841 = vsel %vm2652, %v2815, 0
      %v2844 = vsel %vm2652, %v2817, 0
      %v2847 = vsel %vm2652, %v2819, 0
      %v2850 = vsel %vm2652, %v2821, 0
      %v2853 = vsel %vm2652, %v2823, 0
      %v2856 = vsel %vm2652, %v2825, 0
      %v2859 = vsel %vm2652, %v2827, 0
      %2861 = vmatprep.subr.mxu0 0.0
      %2862 = vmatpush1.msra.mxu0 %v2624
      %2863 = vmatprep.subr.mxu0 0.0
      %2864 = vmatpush1.msra.mxu0 %v2623
      %2865 = vmatprep.subr.mxu0 0.0
      %2866 = vmatpush1.msra.mxu0 %v2622
      %2867 = vmatprep.subr.mxu0 0.0
      %2868 = vmatpush1.msra.mxu0 %v2621
      %2869 = vmatprep.subr.mxu0 0.0
      %2870 = vmatpush1.msra.mxu0 %v2620
      %2871 = vmatprep.subr.mxu0 0.0
      %2872 = vmatpush1.msra.mxu0 %v2619
      %2873 = vmatprep.subr.mxu0 0.0
      %2874 = vmatpush1.msra.mxu0 %v2618
      %2875 = vmatprep.subr.mxu0 0.0
      %2876 = vmatpush1.msra.mxu0 %v2617
      %2877 = vmatprep.subr.mxu0 0.0
      %2878 = vmatpush1.msra.mxu0 %v2616
      %2879 = vmatprep.subr.mxu0 0.0
      %2880 = vmatpush1.msra.mxu0 %v2615
      %2881 = vmatprep.subr.mxu0 0.0
      %2882 = vmatpush1.msra.mxu0 %v2614
      %2883 = vmatprep.subr.mxu0 0.0
      %2884 = vmatpush1.msra.mxu0 %v2613
      %2885 = vmatprep.subr.mxu0 0.0
      %2886 = vmatpush1.msra.mxu0 %v2612
      %2887 = vmatprep.subr.mxu0 0.0
      %2888 = vmatpush1.msra.mxu0 %v2611
      %2889 = vmatprep.subr.mxu0 0.0
      %2890 = vmatpush1.msra.mxu0 %v2610
      %2891 = vmatprep.subr.mxu0 0.0
      %2892 = vmatpush1.msra.mxu0 %v2609
      %2893 = vmatprep.subr.mxu0 0.0
      %2894 = vmatpush2.msra.mxu0 0.0
      %2895 = vmatprep.subr.mxu0 0.0
      %2896 = vmatpush2.msra.mxu0 0.0
      %2897 = vmatprep.subr.mxu0 0.0
      %2898 = vmatpush2.msra.mxu0 0.0
      %2899 = vmatprep.subr.mxu0 0.0
      %2900 = vmatpush2.msra.mxu0 0.0
      %2901 = vmatprep.subr.mxu0 0.0
      %2902 = vmatpush2.msra.mxu0 0.0
      %2903 = vmatprep.subr.mxu0 0.0
      %2904 = vmatpush2.msra.mxu0 0.0
      %2905 = vmatprep.subr.mxu0 0.0
      %2906 = vmatpush2.msra.mxu0 0.0
      %2907 = vmatprep.subr.mxu0 0.0
      %2908 = vmatpush2.msra.mxu0 0.0
      %2909 = vmatprep.subr.mxu0 0.0
      %2910 = vmatpush2.msra.mxu0 0.0
      %2911 = vmatprep.subr.mxu0 0.0
      %2912 = vmatpush2.msra.mxu0 0.0
      %2913 = vmatprep.subr.mxu0 0.0
      %2914 = vmatpush2.msra.mxu0 0.0
      %2915 = vmatprep.subr.mxu0 0.0
      %2916 = vmatpush2.msra.mxu0 %v2629
      %2917 = vmatprep.subr.mxu0 0.0
      %2918 = vmatpush2.msra.mxu0 %v2628
      %2919 = vmatprep.subr.mxu0 0.0
      %2920 = vmatpush2.msra.mxu0 %v2627
      %2921 = vmatprep.subr.mxu0 0.0
      %2922 = vmatpush2.msra.mxu0 %v2626
      %2923 = vmatprep.subr.mxu0 0.0
      %2924 = vmatpush2.msra.mxu0 %v2625
      %2925 = vmatprep.mubr.f32.mxu0 %v2829
      %2926 = vmatmul.mubr.f32.gmra.mxu0 %v2806
      %v2927 = vpop.f32.mrf.mxu0
      %v2928 = vadd.f32 0.0, %v2927
      %v2929 = vpop.f32.mrf.mxu0
      %2930 = vmatprep.mubr.f32.mxu0 %v2832
      %2931 = vmatmul.mubr.f32.gmra.mxu0 %v2808
      %v2932 = vpop.f32.mrf.mxu0
      %v2933 = vadd.f32 0.0, %v2932
      %v2934 = vpop.f32.mrf.mxu0
      %2935 = vmatprep.mubr.f32.mxu0 %v2835
      %2936 = vmatmul.mubr.f32.gmra.mxu0 %v2810
      %v2937 = vpop.f32.mrf.mxu0
      %v2938 = vadd.f32 0.0, %v2937
      %v2939 = vpop.f32.mrf.mxu0
      %2940 = vmatprep.mubr.f32.mxu0 %v2838
      %2941 = vmatmul.mubr.f32.gmra.mxu0 %v2812
      %v2942 = vpop.f32.mrf.mxu0
      %v2943 = vadd.f32 0.0, %v2942
      %v2944 = vpop.f32.mrf.mxu0
      %2945 = vmatprep.mubr.f32.mxu0 %v2841
      %2946 = vmatmul.mubr.f32.gmra.mxu0 %v2814
      %v2947 = vpop.f32.mrf.mxu0
      %v2948 = vadd.f32 0.0, %v2947
      %v2949 = vpop.f32.mrf.mxu0
      %2950 = vmatprep.mubr.f32.mxu0 %v2844
      %2951 = vmatmul.mubr.f32.gmra.mxu0 %v2816
      %v2952 = vpop.f32.mrf.mxu0
      %v2953 = vadd.f32 0.0, %v2952
      %v2954 = vpop.f32.mrf.mxu0
      %2955 = vmatprep.mubr.f32.mxu0 %v2847
      %2956 = vmatmul.mubr.f32.gmra.mxu0 %v2818
      %v2957 = vpop.f32.mrf.mxu0
      %v2958 = vadd.f32 0.0, %v2957
      %v2959 = vpop.f32.mrf.mxu0
      %2960 = vmatprep.mubr.f32.mxu0 %v2850
      %2961 = vmatmul.mubr.f32.gmra.mxu0 %v2820
      %v2962 = vpop.f32.mrf.mxu0
      %v2963 = vadd.f32 0.0, %v2962
      %v2964 = vpop.f32.mrf.mxu0
      %2965 = vmatprep.mubr.f32.mxu0 %v2853
      %2966 = vmatmul.mubr.f32.gmra.mxu0 %v2822
      %v2967 = vpop.f32.mrf.mxu0
      %v2968 = vadd.f32 0.0, %v2967
      %v2969 = vpop.f32.mrf.mxu0
      %2970 = vmatprep.mubr.f32.mxu0 %v2856
      %2971 = vmatmul.mubr.f32.gmra.mxu0 %v2824
      %v2972 = vpop.f32.mrf.mxu0
      %v2973 = vadd.f32 0.0, %v2972
      %v2974 = vpop.f32.mrf.mxu0
      %2975 = vmatprep.mubr.f32.mxu0 %v2859
      %2976 = vmatmul.mubr.f32.gmra.mxu0 %v2826
      %v2977 = vpop.f32.mrf.mxu0
      %v2978 = vadd.f32 0.0, %v2977
      %v2979 = vpop.f32.mrf.mxu0
      %2980 = vdwg.mxu0
      %v2981 = vmax.f32 %v2753, %v2928
      %v2982 = vmax.f32 %v2758, %v2933
      %v2983 = vmax.f32 %v2763, %v2938
      %v2984 = vmax.f32 %v2768, %v2943
      %v2985 = vmax.f32 %v2773, %v2948
      %v2986 = vmax.f32 %v2778, %v2953
      %v2987 = vmax.f32 %v2783, %v2958
      %v2988 = vmax.f32 %v2788, %v2963
      %v2989 = vmax.f32 %v2793, %v2968
      %v2990 = vmax.f32 %v2798, %v2973
      %v2991 = vmax.f32 %v2803, %v2978
      %vm2992 = vcmask 113664
      %2993 = vst.msk [vmem:[#allocation2] sm:$0xff] %vm2992, %v2981
      %2994 = vst.msk [vmem:[#allocation2 + $0x8] sm:$0xff] %vm2992, %v2982
      %2995 = vst.msk [vmem:[#allocation2 + $0x10] sm:$0xff] %vm2992, %v2983
      %2996 = vst.msk [vmem:[#allocation2 + $0x18] sm:$0xff] %vm2992, %v2984
      %2997 = vst.msk [vmem:[#allocation2 + $0x20] sm:$0xff] %vm2992, %v2985
      %2998 = vst.msk [vmem:[#allocation2 + $0x28] sm:$0xff] %vm2992, %v2986
      %2999 = vst.msk [vmem:[#allocation2 + $0x30] sm:$0xff] %vm2992, %v2987
      %3000 = vst.msk [vmem:[#allocation2 + $0x38] sm:$0xff] %vm2992, %v2988
      %3001 = vst.msk [vmem:[#allocation2 + $0x40] sm:$0xff] %vm2992, %v2989
      %3002 = vst.msk [vmem:[#allocation2 + $0x48] sm:$0xff] %vm2992, %v2990
      %vm3003 = vcmask 109568
      %3004 = vst.msk [vmem:[#allocation2 + $0x50] sm:$0xf] %vm3003, %v2991
      %v3005 = vld [vmem:[%s8] sm:$0xff]
      %v3006 = vld [vmem:[%s8 + $0x8] sm:$0xff]
      %v3007 = vld [vmem:[%s8 + $0x10] sm:$0xff]
      %v3008 = vld [vmem:[%s8 + $0x18] sm:$0xff]
      %v3009 = vld [vmem:[%s8 + $0x20] sm:$0xff]
      %v3010 = vld [vmem:[%s8 + $0x28] sm:$0xff]
      %v3011 = vld [vmem:[%s8 + $0x30] sm:$0xff]
      %v3012 = vld [vmem:[%s8 + $0x38] sm:$0xff]
      %v3013 = vld [vmem:[%s8 + $0x40] sm:$0xff]
      %v3014 = vld [vmem:[%s8 + $0x48] sm:$0xff]
      %v3015 = vld [vmem:[%s8 + $0x50] sm:$0xff]
      %v3016 = vld [vmem:[%s8 + $0x58] sm:$0xff]
      %v3017 = vld [vmem:[%s8 + $0x60] sm:$0xff]
      %v3018 = vld [vmem:[%s8 + $0x68] sm:$0xff]
      %v3019 = vld [vmem:[%s8 + $0x70] sm:$0xff]
      %v3020 = vld [vmem:[%s8 + $0x78] sm:$0xff]
      %v3021 = vld [vmem:[%s8 + $0x80] sm:$0xff]
      %v3022 = vld [vmem:[%s8 + $0x88] sm:$0xff]
      %v3023 = vld [vmem:[%s8 + $0x90] sm:$0xff]
      %v3024 = vld [vmem:[%s8 + $0x98] sm:$0xff]
      %v3025 = vld [vmem:[%s7] sm:$0xff]
      %v3026 = vld [vmem:[%s7 + $0x8] sm:$0xff]
      %v3027 = vld [vmem:[%s7 + $0x10] sm:$0xff]
      %v3028 = vld [vmem:[%s7 + $0x18] sm:$0xff]
      %v3029 = vld [vmem:[%s7 + $0x20] sm:$0xff]
      %v3030 = vld [vmem:[%s7 + $0x28] sm:$0xff]
      %v3031 = vld [vmem:[%s7 + $0x30] sm:$0xff]
      %v3032 = vld [vmem:[%s7 + $0x38] sm:$0xff]
      %v3033 = vld [vmem:[%s7 + $0x40] sm:$0xff]
      %v3034 = vld [vmem:[%s7 + $0x48] sm:$0xff]
      %v3035 = vld [vmem:[%s7 + $0x50] sm:$0xff]
      %v3036 = vld [vmem:[%s7 + $0x58] sm:$0xff]
      %v3037 = vld [vmem:[%s7 + $0x60] sm:$0xff]
      %v3038 = vld [vmem:[%s7 + $0x68] sm:$0xff]
      %v3039 = vld [vmem:[%s7 + $0x70] sm:$0xff]
      %v3040 = vld [vmem:[%s7 + $0x78] sm:$0xff]
      %v3041 = vld [vmem:[%s7 + $0x80] sm:$0xff]
      %v3042 = vld [vmem:[%s7 + $0x88] sm:$0xff]
      %v3043 = vld [vmem:[%s7 + $0x90] sm:$0xff]
      %v3044 = vld [vmem:[%s7 + $0x98] sm:$0xff]
      %v3045 = vld [vmem:[#allocation2] sm:$0xff]
      %v3046 = vld [vmem:[#allocation2 + $0x8] sm:$0xff]
      %v3047 = vld [vmem:[#allocation2 + $0x10] sm:$0xff]
      %v3048 = vld [vmem:[#allocation2 + $0x18] sm:$0xff]
      %v3049 = vld [vmem:[#allocation2 + $0x20] sm:$0xff]
      %v3050 = vld [vmem:[#allocation2 + $0x28] sm:$0xff]
      %v3051 = vld [vmem:[#allocation2 + $0x30] sm:$0xff]
      %v3052 = vld [vmem:[#allocation2 + $0x38] sm:$0xff]
      %v3053 = vld [vmem:[#allocation2 + $0x40] sm:$0xff]
      %v3054 = vld [vmem:[#allocation2 + $0x48] sm:$0xff]
      %v3055 = vld [vmem:[#allocation2 + $0x50] sm:$0xf]
      %vm3056 = vcmask 687104
      %v3058 = vsel %vm3056, %v3025, 0
      %v3061 = vsel %vm3056, %v3026, 0
      %v3064 = vsel %vm3056, %v3027, 0
      %v3067 = vsel %vm3056, %v3028, 0
      %v3070 = vsel %vm3056, %v3029, 0
      %v3073 = vsel %vm3056, %v3030, 0
      %v3076 = vsel %vm3056, %v3031, 0
      %v3079 = vsel %vm3056, %v3032, 0
      %v3082 = vsel %vm3056, %v3033, 0
      %v3085 = vsel %vm3056, %v3034, 0
      %v3088 = vsel %vm3056, %v3035, 0
      %v3091 = vsel %vm3056, %v3036, 0
      %v3094 = vsel %vm3056, %v3037, 0
      %v3097 = vsel %vm3056, %v3038, 0
      %v3100 = vsel %vm3056, %v3039, 0
      %v3103 = vsel %vm3056, %v3040, 0
      %v3106 = vsel %vm3056, %v3041, 0
      %v3109 = vsel %vm3056, %v3042, 0
      %v3112 = vsel %vm3056, %v3043, 0
      %v3115 = vsel %vm3056, %v3044, 0
      %v3118 = vsel %vm2258, %v3055, 0
      %3120 = vmatprep.subr.mxu0 0.0
      %3121 = vmatpush1.msra.mxu0 0.0
      %3122 = vmatprep.subr.mxu0 0.0
      %3123 = vmatpush1.msra.mxu0 0.0
      %3124 = vmatprep.subr.mxu0 0.0
      %3125 = vmatpush1.msra.mxu0 0.0
      %3126 = vmatprep.subr.mxu0 0.0
      %3127 = vmatpush1.msra.mxu0 0.0
      %3128 = vmatprep.subr.mxu0 0.0
      %3129 = vmatpush1.msra.mxu0 0.0
      %3130 = vmatprep.subr.mxu0 0.0
      %3131 = vmatpush1.msra.mxu0 %v3118
      %3132 = vmatprep.subr.mxu0 0.0
      %3133 = vmatpush1.msra.mxu0 %v3054
      %3134 = vmatprep.subr.mxu0 0.0
      %3135 = vmatpush1.msra.mxu0 %v3053
      %3136 = vmatprep.subr.mxu0 0.0
      %3137 = vmatpush1.msra.mxu0 %v3052
      %3138 = vmatprep.subr.mxu0 0.0
      %3139 = vmatpush1.msra.mxu0 %v3051
      %3140 = vmatprep.subr.mxu0 0.0
      %3141 = vmatpush1.msra.mxu0 %v3050
      %3142 = vmatprep.subr.mxu0 0.0
      %3143 = vmatpush1.msra.mxu0 %v3049
      %3144 = vmatprep.subr.mxu0 0.0
      %3145 = vmatpush1.msra.mxu0 %v3048
      %3146 = vmatprep.subr.mxu0 0.0
      %3147 = vmatpush1.msra.mxu0 %v3047
      %3148 = vmatprep.subr.mxu0 0.0
      %3149 = vmatpush1.msra.mxu0 %v3046
      %3150 = vmatprep.subr.mxu0 0.0
      %3151 = vmatpush1.msra.mxu0 %v3045
      %3152 = vmatprep.subr.mxu0 0.0
      %3153 = vmatpush2.msra.mxu0 0.0
      %3154 = vmatprep.subr.mxu0 0.0
      %3155 = vmatpush2.msra.mxu0 0.0
      %3156 = vmatprep.subr.mxu0 0.0
      %3157 = vmatpush2.msra.mxu0 0.0
      %3158 = vmatprep.subr.mxu0 0.0
      %3159 = vmatpush2.msra.mxu0 0.0
      %3160 = vmatprep.subr.mxu0 0.0
      %3161 = vmatpush2.msra.mxu0 0.0
      %3162 = vmatprep.subr.mxu0 0.0
      %3163 = vmatpush2.msra.mxu0 0.0
      %3164 = vmatprep.subr.mxu0 0.0
      %3165 = vmatpush2.msra.mxu0 0.0
      %3166 = vmatprep.subr.mxu0 0.0
      %3167 = vmatpush2.msra.mxu0 0.0
      %3168 = vmatprep.subr.mxu0 0.0
      %3169 = vmatpush2.msra.mxu0 0.0
      %3170 = vmatprep.subr.mxu0 0.0
      %3171 = vmatpush2.msra.mxu0 0.0
      %3172 = vmatprep.subr.mxu0 0.0
      %3173 = vmatpush2.msra.mxu0 0.0
      %3174 = vmatprep.subr.mxu0 0.0
      %3175 = vmatpush2.msra.mxu0 0.0
      %3176 = vmatprep.subr.mxu0 0.0
      %3177 = vmatpush2.msra.mxu0 0.0
      %3178 = vmatprep.subr.mxu0 0.0
      %3179 = vmatpush2.msra.mxu0 0.0
      %3180 = vmatprep.subr.mxu0 0.0
      %3181 = vmatpush2.msra.mxu0 0.0
      %3182 = vmatprep.subr.mxu0 0.0
      %3183 = vmatpush2.msra.mxu0 0.0
      %3184 = vmatprep.mubr.f32.mxu0 0.0
      %3185 = vmatmul.mubr.f32.gmra.mxu0 %v3058
      %v3186 = vpop.f32.mrf.mxu0
      %v3187 = vadd.f32 0.0, %v3186
      %v3188 = vpop.f32.mrf.mxu0
      %3189 = vmatprep.mubr.f32.mxu0 0.0
      %3190 = vmatmul.mubr.f32.gmra.mxu0 %v3061
      %v3191 = vpop.f32.mrf.mxu0
      %v3192 = vadd.f32 0.0, %v3191
      %v3193 = vpop.f32.mrf.mxu0
      %3194 = vmatprep.mubr.f32.mxu0 0.0
      %3195 = vmatmul.mubr.f32.gmra.mxu0 %v3064
      %v3196 = vpop.f32.mrf.mxu0
      %v3197 = vadd.f32 0.0, %v3196
      %v3198 = vpop.f32.mrf.mxu0
      %3199 = vmatprep.mubr.f32.mxu0 0.0
      %3200 = vmatmul.mubr.f32.gmra.mxu0 %v3067
      %v3201 = vpop.f32.mrf.mxu0
      %v3202 = vadd.f32 0.0, %v3201
      %v3203 = vpop.f32.mrf.mxu0
      %3204 = vmatprep.mubr.f32.mxu0 0.0
      %3205 = vmatmul.mubr.f32.gmra.mxu0 %v3070
      %v3206 = vpop.f32.mrf.mxu0
      %v3207 = vadd.f32 0.0, %v3206
      %v3208 = vpop.f32.mrf.mxu0
      %3209 = vmatprep.mubr.f32.mxu0 0.0
      %3210 = vmatmul.mubr.f32.gmra.mxu0 %v3073
      %v3211 = vpop.f32.mrf.mxu0
      %v3212 = vadd.f32 0.0, %v3211
      %v3213 = vpop.f32.mrf.mxu0
      %3214 = vmatprep.mubr.f32.mxu0 0.0
      %3215 = vmatmul.mubr.f32.gmra.mxu0 %v3076
      %v3216 = vpop.f32.mrf.mxu0
      %v3217 = vadd.f32 0.0, %v3216
      %v3218 = vpop.f32.mrf.mxu0
      %3219 = vmatprep.mubr.f32.mxu0 0.0
      %3220 = vmatmul.mubr.f32.gmra.mxu0 %v3079
      %v3221 = vpop.f32.mrf.mxu0
      %v3222 = vadd.f32 0.0, %v3221
      %v3223 = vpop.f32.mrf.mxu0
      %3224 = vmatprep.mubr.f32.mxu0 0.0
      %3225 = vmatmul.mubr.f32.gmra.mxu0 %v3082
      %v3226 = vpop.f32.mrf.mxu0
      %v3227 = vadd.f32 0.0, %v3226
      %v3228 = vpop.f32.mrf.mxu0
      %3229 = vmatprep.mubr.f32.mxu0 0.0
      %3230 = vmatmul.mubr.f32.gmra.mxu0 %v3085
      %v3231 = vpop.f32.mrf.mxu0
      %v3232 = vadd.f32 0.0, %v3231
      %v3233 = vpop.f32.mrf.mxu0
      %3234 = vmatprep.mubr.f32.mxu0 0.0
      %3235 = vmatmul.mubr.f32.gmra.mxu0 %v3088
      %v3236 = vpop.f32.mrf.mxu0
      %v3237 = vadd.f32 0.0, %v3236
      %v3238 = vpop.f32.mrf.mxu0
      %3239 = vmatprep.mubr.f32.mxu0 0.0
      %3240 = vmatmul.mubr.f32.gmra.mxu0 %v3091
      %v3241 = vpop.f32.mrf.mxu0
      %v3242 = vadd.f32 0.0, %v3241
      %v3243 = vpop.f32.mrf.mxu0
      %3244 = vmatprep.mubr.f32.mxu0 0.0
      %3245 = vmatmul.mubr.f32.gmra.mxu0 %v3094
      %v3246 = vpop.f32.mrf.mxu0
      %v3247 = vadd.f32 0.0, %v3246
      %v3248 = vpop.f32.mrf.mxu0
      %3249 = vmatprep.mubr.f32.mxu0 0.0
      %3250 = vmatmul.mubr.f32.gmra.mxu0 %v3097
      %v3251 = vpop.f32.mrf.mxu0
      %v3252 = vadd.f32 0.0, %v3251
      %v3253 = vpop.f32.mrf.mxu0
      %3254 = vmatprep.mubr.f32.mxu0 0.0
      %3255 = vmatmul.mubr.f32.gmra.mxu0 %v3100
      %v3256 = vpop.f32.mrf.mxu0
      %v3257 = vadd.f32 0.0, %v3256
      %v3258 = vpop.f32.mrf.mxu0
      %3259 = vmatprep.mubr.f32.mxu0 0.0
      %3260 = vmatmul.mubr.f32.gmra.mxu0 %v3103
      %v3261 = vpop.f32.mrf.mxu0
      %v3262 = vadd.f32 0.0, %v3261
      %v3263 = vpop.f32.mrf.mxu0
      %3264 = vmatprep.mubr.f32.mxu0 0.0
      %3265 = vmatmul.mubr.f32.gmra.mxu0 %v3106
      %v3266 = vpop.f32.mrf.mxu0
      %v3267 = vadd.f32 0.0, %v3266
      %v3268 = vpop.f32.mrf.mxu0
      %3269 = vmatprep.mubr.f32.mxu0 0.0
      %3270 = vmatmul.mubr.f32.gmra.mxu0 %v3109
      %v3271 = vpop.f32.mrf.mxu0
      %v3272 = vadd.f32 0.0, %v3271
      %v3273 = vpop.f32.mrf.mxu0
      %3274 = vmatprep.mubr.f32.mxu0 0.0
      %3275 = vmatmul.mubr.f32.gmra.mxu0 %v3112
      %v3276 = vpop.f32.mrf.mxu0
      %v3277 = vadd.f32 0.0, %v3276
      %v3278 = vpop.f32.mrf.mxu0
      %3279 = vmatprep.mubr.f32.mxu0 0.0
      %3280 = vmatmul.mubr.f32.gmra.mxu0 %v3115
      %v3281 = vpop.f32.mrf.mxu0
      %v3282 = vadd.f32 0.0, %v3281
      %v3283 = vpop.f32.mrf.mxu0
      %3284 = vdwg.mxu0
      %3286 = vset.pattern.permute.xlu0 0
      %3287 = vperm.xlu0 %3286, %v3005
      %v3288 = vpop.permute.xlu0 %3287
      %3291 = vset.pattern.permute.xlu0 0
      %3292 = vperm.xlu0 %3291, %v3006
      %v3293 = vpop.permute.xlu0 %3292
      %3296 = vset.pattern.permute.xlu0 0
      %3297 = vperm.xlu0 %3296, %v3007
      %v3298 = vpop.permute.xlu0 %3297
      %3301 = vset.pattern.permute.xlu0 0
      %3302 = vperm.xlu0 %3301, %v3008
      %v3303 = vpop.permute.xlu0 %3302
      %3306 = vset.pattern.permute.xlu0 0
      %3307 = vperm.xlu0 %3306, %v3009
      %v3308 = vpop.permute.xlu0 %3307
      %3311 = vset.pattern.permute.xlu0 0
      %3312 = vperm.xlu0 %3311, %v3010
      %v3313 = vpop.permute.xlu0 %3312
      %3316 = vset.pattern.permute.xlu0 0
      %3317 = vperm.xlu0 %3316, %v3011
      %v3318 = vpop.permute.xlu0 %3317
      %3321 = vset.pattern.permute.xlu0 0
      %3322 = vperm.xlu0 %3321, %v3012
      %v3323 = vpop.permute.xlu0 %3322
      %3326 = vset.pattern.permute.xlu0 0
      %3327 = vperm.xlu0 %3326, %v3013
      %v3328 = vpop.permute.xlu0 %3327
      %3331 = vset.pattern.permute.xlu0 0
      %3332 = vperm.xlu0 %3331, %v3014
      %v3333 = vpop.permute.xlu0 %3332
      %3336 = vset.pattern.permute.xlu0 0
      %3337 = vperm.xlu0 %3336, %v3015
      %v3338 = vpop.permute.xlu0 %3337
      %3341 = vset.pattern.permute.xlu0 0
      %3342 = vperm.xlu0 %3341, %v3016
      %v3343 = vpop.permute.xlu0 %3342
      %3346 = vset.pattern.permute.xlu0 0
      %3347 = vperm.xlu0 %3346, %v3017
      %v3348 = vpop.permute.xlu0 %3347
      %3351 = vset.pattern.permute.xlu0 0
      %3352 = vperm.xlu0 %3351, %v3018
      %v3353 = vpop.permute.xlu0 %3352
      %3356 = vset.pattern.permute.xlu0 0
      %3357 = vperm.xlu0 %3356, %v3019
      %v3358 = vpop.permute.xlu0 %3357
      %3361 = vset.pattern.permute.xlu0 0
      %3362 = vperm.xlu0 %3361, %v3020
      %v3363 = vpop.permute.xlu0 %3362
      %3366 = vset.pattern.permute.xlu0 0
      %3367 = vperm.xlu0 %3366, %v3021
      %v3368 = vpop.permute.xlu0 %3367
      %3371 = vset.pattern.permute.xlu0 0
      %3372 = vperm.xlu0 %3371, %v3022
      %v3373 = vpop.permute.xlu0 %3372
      %3376 = vset.pattern.permute.xlu0 0
      %3377 = vperm.xlu0 %3376, %v3023
      %v3378 = vpop.permute.xlu0 %3377
      %3381 = vset.pattern.permute.xlu0 0
      %3382 = vperm.xlu0 %3381, %v3024
      %v3383 = vpop.permute.xlu0 %3382
      %v3385 = vadd.f32 %v3288, %v3187
      %v3386 = vadd.f32 %v3293, %v3192
      %v3387 = vadd.f32 %v3298, %v3197
      %v3388 = vadd.f32 %v3303, %v3202
      %v3389 = vadd.f32 %v3308, %v3207
      %v3390 = vadd.f32 %v3313, %v3212
      %v3391 = vadd.f32 %v3318, %v3217
      %v3392 = vadd.f32 %v3323, %v3222
      %v3393 = vadd.f32 %v3328, %v3227
      %v3394 = vadd.f32 %v3333, %v3232
      %v3395 = vadd.f32 %v3338, %v3237
      %v3396 = vadd.f32 %v3343, %v3242
      %v3397 = vadd.f32 %v3348, %v3247
      %v3398 = vadd.f32 %v3353, %v3252
      %v3399 = vadd.f32 %v3358, %v3257
      %v3400 = vadd.f32 %v3363, %v3262
      %v3401 = vadd.f32 %v3368, %v3267
      %v3402 = vadd.f32 %v3373, %v3272
      %v3403 = vadd.f32 %v3378, %v3277
      %v3404 = vadd.f32 %v3383, %v3282
      %s3405 = scalar_lea.vmem %s7, 160
      %v3406 = vld [vmem:[%s3405] sm:$0xff]
      %v3407 = vld [vmem:[%s3405 + $0x8] sm:$0xff]
      %v3408 = vld [vmem:[%s3405 + $0x10] sm:$0xff]
      %v3409 = vld [vmem:[%s3405 + $0x18] sm:$0xff]
      %v3410 = vld [vmem:[%s3405 + $0x20] sm:$0xff]
      %v3411 = vld [vmem:[%s3405 + $0x28] sm:$0xff]
      %v3412 = vld [vmem:[%s3405 + $0x30] sm:$0xff]
      %v3413 = vld [vmem:[%s3405 + $0x38] sm:$0xff]
      %v3414 = vld [vmem:[%s3405 + $0x40] sm:$0xff]
      %v3415 = vld [vmem:[%s3405 + $0x48] sm:$0xff]
      %v3416 = vld [vmem:[%s3405 + $0x50] sm:$0xff]
      %v3417 = vld [vmem:[%s3405 + $0x58] sm:$0xff]
      %v3418 = vld [vmem:[%s3405 + $0x60] sm:$0xff]
      %v3419 = vld [vmem:[%s3405 + $0x68] sm:$0xff]
      %v3420 = vld [vmem:[%s3405 + $0x70] sm:$0xff]
      %v3421 = vld [vmem:[%s3405 + $0x78] sm:$0xff]
      %v3422 = vld [vmem:[%s3405 + $0x80] sm:$0xff]
      %v3423 = vld [vmem:[%s3405 + $0x88] sm:$0xff]
      %v3424 = vld [vmem:[%s3405 + $0x90] sm:$0xff]
      %v3425 = vld [vmem:[%s3405 + $0x98] sm:$0xff]
      %3436 = vrot.lane.b32.xlu0 %v3045, 127
      %v3437 = vpop.permute.xlu0 %3436
      %3438 = vrot.lane.b32.xlu0 %v3046, 127
      %v3439 = vpop.permute.xlu0 %3438
      %3440 = vrot.lane.b32.xlu0 %v3047, 127
      %v3441 = vpop.permute.xlu0 %3440
      %3442 = vrot.lane.b32.xlu0 %v3048, 127
      %v3443 = vpop.permute.xlu0 %3442
      %3444 = vrot.lane.b32.xlu0 %v3049, 127
      %v3445 = vpop.permute.xlu0 %3444
      %3446 = vrot.lane.b32.xlu0 %v3050, 127
      %v3447 = vpop.permute.xlu0 %3446
      %3448 = vrot.lane.b32.xlu0 %v3051, 127
      %v3449 = vpop.permute.xlu0 %3448
      %3450 = vrot.lane.b32.xlu0 %v3052, 127
      %v3451 = vpop.permute.xlu0 %3450
      %3452 = vrot.lane.b32.xlu0 %v3053, 127
      %v3453 = vpop.permute.xlu0 %3452
      %3454 = vrot.lane.b32.xlu0 %v3054, 127
      %v3455 = vpop.permute.xlu0 %3454
      %3456 = vrot.lane.b32.xlu0 %v3055, 127
      %v3457 = vpop.permute.xlu0 %3456
      %v3469 = vsel %vm3056, %v3406, 0
      %v3472 = vsel %vm3056, %v3407, 0
      %v3475 = vsel %vm3056, %v3408, 0
      %v3478 = vsel %vm3056, %v3409, 0
      %v3481 = vsel %vm3056, %v3410, 0
      %v3484 = vsel %vm3056, %v3411, 0
      %v3487 = vsel %vm3056, %v3412, 0
      %v3490 = vsel %vm3056, %v3413, 0
      %v3493 = vsel %vm3056, %v3414, 0
      %v3496 = vsel %vm3056, %v3415, 0
      %v3499 = vsel %vm3056, %v3416, 0
      %v3502 = vsel %vm3056, %v3417, 0
      %v3505 = vsel %vm3056, %v3418, 0
      %v3508 = vsel %vm3056, %v3419, 0
      %v3511 = vsel %vm3056, %v3420, 0
      %v3514 = vsel %vm3056, %v3421, 0
      %v3517 = vsel %vm3056, %v3422, 0
      %v3520 = vsel %vm3056, %v3423, 0
      %v3523 = vsel %vm3056, %v3424, 0
      %v3526 = vsel %vm3056, %v3425, 0
      %v3528 = vsel %vm2258, %v3457, 0
      %3530 = vmatprep.subr.mxu0 0.0
      %3531 = vmatpush1.msra.mxu0 0.0
      %3532 = vmatprep.subr.mxu0 0.0
      %3533 = vmatpush1.msra.mxu0 0.0
      %3534 = vmatprep.subr.mxu0 0.0
      %3535 = vmatpush1.msra.mxu0 0.0
      %3536 = vmatprep.subr.mxu0 0.0
      %3537 = vmatpush1.msra.mxu0 0.0
      %3538 = vmatprep.subr.mxu0 0.0
      %3539 = vmatpush1.msra.mxu0 0.0
      %3540 = vmatprep.subr.mxu0 0.0
      %3541 = vmatpush1.msra.mxu0 %v3528
      %3542 = vmatprep.subr.mxu0 0.0
      %3543 = vmatpush1.msra.mxu0 %v3455
      %3544 = vmatprep.subr.mxu0 0.0
      %3545 = vmatpush1.msra.mxu0 %v3453
      %3546 = vmatprep.subr.mxu0 0.0
      %3547 = vmatpush1.msra.mxu0 %v3451
      %3548 = vmatprep.subr.mxu0 0.0
      %3549 = vmatpush1.msra.mxu0 %v3449
      %3550 = vmatprep.subr.mxu0 0.0
      %3551 = vmatpush1.msra.mxu0 %v3447
      %3552 = vmatprep.subr.mxu0 0.0
      %3553 = vmatpush1.msra.mxu0 %v3445
      %3554 = vmatprep.subr.mxu0 0.0
      %3555 = vmatpush1.msra.mxu0 %v3443
      %3556 = vmatprep.subr.mxu0 0.0
      %3557 = vmatpush1.msra.mxu0 %v3441
      %3558 = vmatprep.subr.mxu0 0.0
      %3559 = vmatpush1.msra.mxu0 %v3439
      %3560 = vmatprep.subr.mxu0 0.0
      %3561 = vmatpush1.msra.mxu0 %v3437
      %3562 = vmatprep.subr.mxu0 0.0
      %3563 = vmatpush2.msra.mxu0 0.0
      %3564 = vmatprep.subr.mxu0 0.0
      %3565 = vmatpush2.msra.mxu0 0.0
      %3566 = vmatprep.subr.mxu0 0.0
      %3567 = vmatpush2.msra.mxu0 0.0
      %3568 = vmatprep.subr.mxu0 0.0
      %3569 = vmatpush2.msra.mxu0 0.0
      %3570 = vmatprep.subr.mxu0 0.0
      %3571 = vmatpush2.msra.mxu0 0.0
      %3572 = vmatprep.subr.mxu0 0.0
      %3573 = vmatpush2.msra.mxu0 0.0
      %3574 = vmatprep.subr.mxu0 0.0
      %3575 = vmatpush2.msra.mxu0 0.0
      %3576 = vmatprep.subr.mxu0 0.0
      %3577 = vmatpush2.msra.mxu0 0.0
      %3578 = vmatprep.subr.mxu0 0.0
      %3579 = vmatpush2.msra.mxu0 0.0
      %3580 = vmatprep.subr.mxu0 0.0
      %3581 = vmatpush2.msra.mxu0 0.0
      %3582 = vmatprep.subr.mxu0 0.0
      %3583 = vmatpush2.msra.mxu0 0.0
      %3584 = vmatprep.subr.mxu0 0.0
      %3585 = vmatpush2.msra.mxu0 0.0
      %3586 = vmatprep.subr.mxu0 0.0
      %3587 = vmatpush2.msra.mxu0 0.0
      %3588 = vmatprep.subr.mxu0 0.0
      %3589 = vmatpush2.msra.mxu0 0.0
      %3590 = vmatprep.subr.mxu0 0.0
      %3591 = vmatpush2.msra.mxu0 0.0
      %3592 = vmatprep.subr.mxu0 0.0
      %3593 = vmatpush2.msra.mxu0 0.0
      %3594 = vmatprep.mubr.f32.mxu0 0.0
      %3595 = vmatmul.mubr.f32.gmra.mxu0 %v3469
      %v3596 = vpop.f32.mrf.mxu0
      %v3597 = vadd.f32 0.0, %v3596
      %v3598 = vpop.f32.mrf.mxu0
      %3599 = vmatprep.mubr.f32.mxu0 0.0
      %3600 = vmatmul.mubr.f32.gmra.mxu0 %v3472
      %v3601 = vpop.f32.mrf.mxu0
      %v3602 = vadd.f32 0.0, %v3601
      %v3603 = vpop.f32.mrf.mxu0
      %3604 = vmatprep.mubr.f32.mxu0 0.0
      %3605 = vmatmul.mubr.f32.gmra.mxu0 %v3475
      %v3606 = vpop.f32.mrf.mxu0
      %v3607 = vadd.f32 0.0, %v3606
      %v3608 = vpop.f32.mrf.mxu0
      %3609 = vmatprep.mubr.f32.mxu0 0.0
      %3610 = vmatmul.mubr.f32.gmra.mxu0 %v3478
      %v3611 = vpop.f32.mrf.mxu0
      %v3612 = vadd.f32 0.0, %v3611
      %v3613 = vpop.f32.mrf.mxu0
      %3614 = vmatprep.mubr.f32.mxu0 0.0
      %3615 = vmatmul.mubr.f32.gmra.mxu0 %v3481
      %v3616 = vpop.f32.mrf.mxu0
      %v3617 = vadd.f32 0.0, %v3616
      %v3618 = vpop.f32.mrf.mxu0
      %3619 = vmatprep.mubr.f32.mxu0 0.0
      %3620 = vmatmul.mubr.f32.gmra.mxu0 %v3484
      %v3621 = vpop.f32.mrf.mxu0
      %v3622 = vadd.f32 0.0, %v3621
      %v3623 = vpop.f32.mrf.mxu0
      %3624 = vmatprep.mubr.f32.mxu0 0.0
      %3625 = vmatmul.mubr.f32.gmra.mxu0 %v3487
      %v3626 = vpop.f32.mrf.mxu0
      %v3627 = vadd.f32 0.0, %v3626
      %v3628 = vpop.f32.mrf.mxu0
      %3629 = vmatprep.mubr.f32.mxu0 0.0
      %3630 = vmatmul.mubr.f32.gmra.mxu0 %v3490
      %v3631 = vpop.f32.mrf.mxu0
      %v3632 = vadd.f32 0.0, %v3631
      %v3633 = vpop.f32.mrf.mxu0
      %3634 = vmatprep.mubr.f32.mxu0 0.0
      %3635 = vmatmul.mubr.f32.gmra.mxu0 %v3493
      %v3636 = vpop.f32.mrf.mxu0
      %v3637 = vadd.f32 0.0, %v3636
      %v3638 = vpop.f32.mrf.mxu0
      %3639 = vmatprep.mubr.f32.mxu0 0.0
      %3640 = vmatmul.mubr.f32.gmra.mxu0 %v3496
      %v3641 = vpop.f32.mrf.mxu0
      %v3642 = vadd.f32 0.0, %v3641
      %v3643 = vpop.f32.mrf.mxu0
      %3644 = vmatprep.mubr.f32.mxu0 0.0
      %3645 = vmatmul.mubr.f32.gmra.mxu0 %v3499
      %v3646 = vpop.f32.mrf.mxu0
      %v3647 = vadd.f32 0.0, %v3646
      %v3648 = vpop.f32.mrf.mxu0
      %3649 = vmatprep.mubr.f32.mxu0 0.0
      %3650 = vmatmul.mubr.f32.gmra.mxu0 %v3502
      %v3651 = vpop.f32.mrf.mxu0
      %v3652 = vadd.f32 0.0, %v3651
      %v3653 = vpop.f32.mrf.mxu0
      %3654 = vmatprep.mubr.f32.mxu0 0.0
      %3655 = vmatmul.mubr.f32.gmra.mxu0 %v3505
      %v3656 = vpop.f32.mrf.mxu0
      %v3657 = vadd.f32 0.0, %v3656
      %v3658 = vpop.f32.mrf.mxu0
      %3659 = vmatprep.mubr.f32.mxu0 0.0
      %3660 = vmatmul.mubr.f32.gmra.mxu0 %v3508
      %v3661 = vpop.f32.mrf.mxu0
      %v3662 = vadd.f32 0.0, %v3661
      %v3663 = vpop.f32.mrf.mxu0
      %3664 = vmatprep.mubr.f32.mxu0 0.0
      %3665 = vmatmul.mubr.f32.gmra.mxu0 %v3511
      %v3666 = vpop.f32.mrf.mxu0
      %v3667 = vadd.f32 0.0, %v3666
      %v3668 = vpop.f32.mrf.mxu0
      %3669 = vmatprep.mubr.f32.mxu0 0.0
      %3670 = vmatmul.mubr.f32.gmra.mxu0 %v3514
      %v3671 = vpop.f32.mrf.mxu0
      %v3672 = vadd.f32 0.0, %v3671
      %v3673 = vpop.f32.mrf.mxu0
      %3674 = vmatprep.mubr.f32.mxu0 0.0
      %3675 = vmatmul.mubr.f32.gmra.mxu0 %v3517
      %v3676 = vpop.f32.mrf.mxu0
      %v3677 = vadd.f32 0.0, %v3676
      %v3678 = vpop.f32.mrf.mxu0
      %3679 = vmatprep.mubr.f32.mxu0 0.0
      %3680 = vmatmul.mubr.f32.gmra.mxu0 %v3520
      %v3681 = vpop.f32.mrf.mxu0
      %v3682 = vadd.f32 0.0, %v3681
      %v3683 = vpop.f32.mrf.mxu0
      %3684 = vmatprep.mubr.f32.mxu0 0.0
      %3685 = vmatmul.mubr.f32.gmra.mxu0 %v3523
      %v3686 = vpop.f32.mrf.mxu0
      %v3687 = vadd.f32 0.0, %v3686
      %v3688 = vpop.f32.mrf.mxu0
      %3689 = vmatprep.mubr.f32.mxu0 0.0
      %3690 = vmatmul.mubr.f32.gmra.mxu0 %v3526
      %v3691 = vpop.f32.mrf.mxu0
      %v3692 = vadd.f32 0.0, %v3691
      %v3693 = vpop.f32.mrf.mxu0
      %3694 = vdwg.mxu0
      %v3695 = vadd.f32 %v3385, %v3597
      %v3696 = vadd.f32 %v3386, %v3602
      %v3697 = vadd.f32 %v3387, %v3607
      %v3698 = vadd.f32 %v3388, %v3612
      %v3699 = vadd.f32 %v3389, %v3617
      %v3700 = vadd.f32 %v3390, %v3622
      %v3701 = vadd.f32 %v3391, %v3627
      %v3702 = vadd.f32 %v3392, %v3632
      %v3703 = vadd.f32 %v3393, %v3637
      %v3704 = vadd.f32 %v3394, %v3642
      %v3705 = vadd.f32 %v3395, %v3647
      %v3706 = vadd.f32 %v3396, %v3652
      %v3707 = vadd.f32 %v3397, %v3657
      %v3708 = vadd.f32 %v3398, %v3662
      %v3709 = vadd.f32 %v3399, %v3667
      %v3710 = vadd.f32 %v3400, %v3672
      %v3711 = vadd.f32 %v3401, %v3677
      %v3712 = vadd.f32 %v3402, %v3682
      %v3713 = vadd.f32 %v3403, %v3687
      %v3714 = vadd.f32 %v3404, %v3692
      %s3715 = scalar_lea.vmem %s7, 320
      %v3716 = vld [vmem:[%s3715] sm:$0xff]
      %v3717 = vld [vmem:[%s3715 + $0x8] sm:$0xff]
      %v3718 = vld [vmem:[%s3715 + $0x10] sm:$0xff]
      %v3719 = vld [vmem:[%s3715 + $0x18] sm:$0xff]
      %v3720 = vld [vmem:[%s3715 + $0x20] sm:$0xff]
      %v3721 = vld [vmem:[%s3715 + $0x28] sm:$0xff]
      %v3722 = vld [vmem:[%s3715 + $0x30] sm:$0xff]
      %v3723 = vld [vmem:[%s3715 + $0x38] sm:$0xff]
      %v3724 = vld [vmem:[%s3715 + $0x40] sm:$0xff]
      %v3725 = vld [vmem:[%s3715 + $0x48] sm:$0xff]
      %v3726 = vld [vmem:[%s3715 + $0x50] sm:$0xff]
      %v3727 = vld [vmem:[%s3715 + $0x58] sm:$0xff]
      %v3728 = vld [vmem:[%s3715 + $0x60] sm:$0xff]
      %v3729 = vld [vmem:[%s3715 + $0x68] sm:$0xff]
      %v3730 = vld [vmem:[%s3715 + $0x70] sm:$0xff]
      %v3731 = vld [vmem:[%s3715 + $0x78] sm:$0xff]
      %v3732 = vld [vmem:[%s3715 + $0x80] sm:$0xff]
      %v3733 = vld [vmem:[%s3715 + $0x88] sm:$0xff]
      %v3734 = vld [vmem:[%s3715 + $0x90] sm:$0xff]
      %v3735 = vld [vmem:[%s3715 + $0x98] sm:$0xff]
      %3736 = vrot.lane.b32.xlu0 %v3045, 126
      %v3737 = vpop.permute.xlu0 %3736
      %3738 = vrot.lane.b32.xlu0 %v3046, 126
      %v3739 = vpop.permute.xlu0 %3738
      %3740 = vrot.lane.b32.xlu0 %v3047, 126
      %v3741 = vpop.permute.xlu0 %3740
      %3742 = vrot.lane.b32.xlu0 %v3048, 126
      %v3743 = vpop.permute.xlu0 %3742
      %3744 = vrot.lane.b32.xlu0 %v3049, 126
      %v3745 = vpop.permute.xlu0 %3744
      %3746 = vrot.lane.b32.xlu0 %v3050, 126
      %v3747 = vpop.permute.xlu0 %3746
      %3748 = vrot.lane.b32.xlu0 %v3051, 126
      %v3749 = vpop.permute.xlu0 %3748
      %3750 = vrot.lane.b32.xlu0 %v3052, 126
      %v3751 = vpop.permute.xlu0 %3750
      %3752 = vrot.lane.b32.xlu0 %v3053, 126
      %v3753 = vpop.permute.xlu0 %3752
      %3754 = vrot.lane.b32.xlu0 %v3054, 126
      %v3755 = vpop.permute.xlu0 %3754
      %3756 = vrot.lane.b32.xlu0 %v3055, 126
      %v3757 = vpop.permute.xlu0 %3756
      %v3769 = vsel %vm3056, %v3716, 0
      %v3772 = vsel %vm3056, %v3717, 0
      %v3775 = vsel %vm3056, %v3718, 0
      %v3778 = vsel %vm3056, %v3719, 0
      %v3781 = vsel %vm3056, %v3720, 0
      %v3784 = vsel %vm3056, %v3721, 0
      %v3787 = vsel %vm3056, %v3722, 0
      %v3790 = vsel %vm3056, %v3723, 0
      %v3793 = vsel %vm3056, %v3724, 0
      %v3796 = vsel %vm3056, %v3725, 0
      %v3799 = vsel %vm3056, %v3726, 0
      %v3802 = vsel %vm3056, %v3727, 0
      %v3805 = vsel %vm3056, %v3728, 0
      %v3808 = vsel %vm3056, %v3729, 0
      %v3811 = vsel %vm3056, %v3730, 0
      %v3814 = vsel %vm3056, %v3731, 0
      %v3817 = vsel %vm3056, %v3732, 0
      %v3820 = vsel %vm3056, %v3733, 0
      %v3823 = vsel %vm3056, %v3734, 0
      %v3826 = vsel %vm3056, %v3735, 0
      %v3828 = vsel %vm2258, %v3757, 0
      %3830 = vmatprep.subr.mxu0 0.0
      %3831 = vmatpush1.msra.mxu0 0.0
      %3832 = vmatprep.subr.mxu0 0.0
      %3833 = vmatpush1.msra.mxu0 0.0
      %3834 = vmatprep.subr.mxu0 0.0
      %3835 = vmatpush1.msra.mxu0 0.0
      %3836 = vmatprep.subr.mxu0 0.0
      %3837 = vmatpush1.msra.mxu0 0.0
      %3838 = vmatprep.subr.mxu0 0.0
      %3839 = vmatpush1.msra.mxu0 0.0
      %3840 = vmatprep.subr.mxu0 0.0
      %3841 = vmatpush1.msra.mxu0 %v3828
      %3842 = vmatprep.subr.mxu0 0.0
      %3843 = vmatpush1.msra.mxu0 %v3755
      %3844 = vmatprep.subr.mxu0 0.0
      %3845 = vmatpush1.msra.mxu0 %v3753
      %3846 = vmatprep.subr.mxu0 0.0
      %3847 = vmatpush1.msra.mxu0 %v3751
      %3848 = vmatprep.subr.mxu0 0.0
      %3849 = vmatpush1.msra.mxu0 %v3749
      %3850 = vmatprep.subr.mxu0 0.0
      %3851 = vmatpush1.msra.mxu0 %v3747
      %3852 = vmatprep.subr.mxu0 0.0
      %3853 = vmatpush1.msra.mxu0 %v3745
      %3854 = vmatprep.subr.mxu0 0.0
      %3855 = vmatpush1.msra.mxu0 %v3743
      %3856 = vmatprep.subr.mxu0 0.0
      %3857 = vmatpush1.msra.mxu0 %v3741
      %3858 = vmatprep.subr.mxu0 0.0
      %3859 = vmatpush1.msra.mxu0 %v3739
      %3860 = vmatprep.subr.mxu0 0.0
      %3861 = vmatpush1.msra.mxu0 %v3737
      %3862 = vmatprep.subr.mxu0 0.0
      %3863 = vmatpush2.msra.mxu0 0.0
      %3864 = vmatprep.subr.mxu0 0.0
      %3865 = vmatpush2.msra.mxu0 0.0
      %3866 = vmatprep.subr.mxu0 0.0
      %3867 = vmatpush2.msra.mxu0 0.0
      %3868 = vmatprep.subr.mxu0 0.0
      %3869 = vmatpush2.msra.mxu0 0.0
      %3870 = vmatprep.subr.mxu0 0.0
      %3871 = vmatpush2.msra.mxu0 0.0
      %3872 = vmatprep.subr.mxu0 0.0
      %3873 = vmatpush2.msra.mxu0 0.0
      %3874 = vmatprep.subr.mxu0 0.0
      %3875 = vmatpush2.msra.mxu0 0.0
      %3876 = vmatprep.subr.mxu0 0.0
      %3877 = vmatpush2.msra.mxu0 0.0
      %3878 = vmatprep.subr.mxu0 0.0
      %3879 = vmatpush2.msra.mxu0 0.0
      %3880 = vmatprep.subr.mxu0 0.0
      %3881 = vmatpush2.msra.mxu0 0.0
      %3882 = vmatprep.subr.mxu0 0.0
      %3883 = vmatpush2.msra.mxu0 0.0
      %3884 = vmatprep.subr.mxu0 0.0
      %3885 = vmatpush2.msra.mxu0 0.0
      %3886 = vmatprep.subr.mxu0 0.0
      %3887 = vmatpush2.msra.mxu0 0.0
      %3888 = vmatprep.subr.mxu0 0.0
      %3889 = vmatpush2.msra.mxu0 0.0
      %3890 = vmatprep.subr.mxu0 0.0
      %3891 = vmatpush2.msra.mxu0 0.0
      %3892 = vmatprep.subr.mxu0 0.0
      %3893 = vmatpush2.msra.mxu0 0.0
      %3894 = vmatprep.mubr.f32.mxu0 0.0
      %3895 = vmatmul.mubr.f32.gmra.mxu0 %v3769
      %v3896 = vpop.f32.mrf.mxu0
      %v3897 = vadd.f32 0.0, %v3896
      %v3898 = vpop.f32.mrf.mxu0
      %3899 = vmatprep.mubr.f32.mxu0 0.0
      %3900 = vmatmul.mubr.f32.gmra.mxu0 %v3772
      %v3901 = vpop.f32.mrf.mxu0
      %v3902 = vadd.f32 0.0, %v3901
      %v3903 = vpop.f32.mrf.mxu0
      %3904 = vmatprep.mubr.f32.mxu0 0.0
      %3905 = vmatmul.mubr.f32.gmra.mxu0 %v3775
      %v3906 = vpop.f32.mrf.mxu0
      %v3907 = vadd.f32 0.0, %v3906
      %v3908 = vpop.f32.mrf.mxu0
      %3909 = vmatprep.mubr.f32.mxu0 0.0
      %3910 = vmatmul.mubr.f32.gmra.mxu0 %v3778
      %v3911 = vpop.f32.mrf.mxu0
      %v3912 = vadd.f32 0.0, %v3911
      %v3913 = vpop.f32.mrf.mxu0
      %3914 = vmatprep.mubr.f32.mxu0 0.0
      %3915 = vmatmul.mubr.f32.gmra.mxu0 %v3781
      %v3916 = vpop.f32.mrf.mxu0
      %v3917 = vadd.f32 0.0, %v3916
      %v3918 = vpop.f32.mrf.mxu0
      %3919 = vmatprep.mubr.f32.mxu0 0.0
      %3920 = vmatmul.mubr.f32.gmra.mxu0 %v3784
      %v3921 = vpop.f32.mrf.mxu0
      %v3922 = vadd.f32 0.0, %v3921
      %v3923 = vpop.f32.mrf.mxu0
      %3924 = vmatprep.mubr.f32.mxu0 0.0
      %3925 = vmatmul.mubr.f32.gmra.mxu0 %v3787
      %v3926 = vpop.f32.mrf.mxu0
      %v3927 = vadd.f32 0.0, %v3926
      %v3928 = vpop.f32.mrf.mxu0
      %3929 = vmatprep.mubr.f32.mxu0 0.0
      %3930 = vmatmul.mubr.f32.gmra.mxu0 %v3790
      %v3931 = vpop.f32.mrf.mxu0
      %v3932 = vadd.f32 0.0, %v3931
      %v3933 = vpop.f32.mrf.mxu0
      %3934 = vmatprep.mubr.f32.mxu0 0.0
      %3935 = vmatmul.mubr.f32.gmra.mxu0 %v3793
      %v3936 = vpop.f32.mrf.mxu0
      %v3937 = vadd.f32 0.0, %v3936
      %v3938 = vpop.f32.mrf.mxu0
      %3939 = vmatprep.mubr.f32.mxu0 0.0
      %3940 = vmatmul.mubr.f32.gmra.mxu0 %v3796
      %v3941 = vpop.f32.mrf.mxu0
      %v3942 = vadd.f32 0.0, %v3941
      %v3943 = vpop.f32.mrf.mxu0
      %3944 = vmatprep.mubr.f32.mxu0 0.0
      %3945 = vmatmul.mubr.f32.gmra.mxu0 %v3799
      %v3946 = vpop.f32.mrf.mxu0
      %v3947 = vadd.f32 0.0, %v3946
      %v3948 = vpop.f32.mrf.mxu0
      %3949 = vmatprep.mubr.f32.mxu0 0.0
      %3950 = vmatmul.mubr.f32.gmra.mxu0 %v3802
      %v3951 = vpop.f32.mrf.mxu0
      %v3952 = vadd.f32 0.0, %v3951
      %v3953 = vpop.f32.mrf.mxu0
      %3954 = vmatprep.mubr.f32.mxu0 0.0
      %3955 = vmatmul.mubr.f32.gmra.mxu0 %v3805
      %v3956 = vpop.f32.mrf.mxu0
      %v3957 = vadd.f32 0.0, %v3956
      %v3958 = vpop.f32.mrf.mxu0
      %3959 = vmatprep.mubr.f32.mxu0 0.0
      %3960 = vmatmul.mubr.f32.gmra.mxu0 %v3808
      %v3961 = vpop.f32.mrf.mxu0
      %v3962 = vadd.f32 0.0, %v3961
      %v3963 = vpop.f32.mrf.mxu0
      %3964 = vmatprep.mubr.f32.mxu0 0.0
      %3965 = vmatmul.mubr.f32.gmra.mxu0 %v3811
      %v3966 = vpop.f32.mrf.mxu0
      %v3967 = vadd.f32 0.0, %v3966
      %v3968 = vpop.f32.mrf.mxu0
      %3969 = vmatprep.mubr.f32.mxu0 0.0
      %3970 = vmatmul.mubr.f32.gmra.mxu0 %v3814
      %v3971 = vpop.f32.mrf.mxu0
      %v3972 = vadd.f32 0.0, %v3971
      %v3973 = vpop.f32.mrf.mxu0
      %3974 = vmatprep.mubr.f32.mxu0 0.0
      %3975 = vmatmul.mubr.f32.gmra.mxu0 %v3817
      %v3976 = vpop.f32.mrf.mxu0
      %v3977 = vadd.f32 0.0, %v3976
      %v3978 = vpop.f32.mrf.mxu0
      %3979 = vmatprep.mubr.f32.mxu0 0.0
      %3980 = vmatmul.mubr.f32.gmra.mxu0 %v3820
      %v3981 = vpop.f32.mrf.mxu0
      %v3982 = vadd.f32 0.0, %v3981
      %v3983 = vpop.f32.mrf.mxu0
      %3984 = vmatprep.mubr.f32.mxu0 0.0
      %3985 = vmatmul.mubr.f32.gmra.mxu0 %v3823
      %v3986 = vpop.f32.mrf.mxu0
      %v3987 = vadd.f32 0.0, %v3986
      %v3988 = vpop.f32.mrf.mxu0
      %3989 = vmatprep.mubr.f32.mxu0 0.0
      %3990 = vmatmul.mubr.f32.gmra.mxu0 %v3826
      %v3991 = vpop.f32.mrf.mxu0
      %v3992 = vadd.f32 0.0, %v3991
      %v3993 = vpop.f32.mrf.mxu0
      %3994 = vdwg.mxu0
      %v3995 = vadd.f32 %v3695, %v3897
      %v3996 = vadd.f32 %v3696, %v3902
      %v3997 = vadd.f32 %v3697, %v3907
      %v3998 = vadd.f32 %v3698, %v3912
      %v3999 = vadd.f32 %v3699, %v3917
      %v4000 = vadd.f32 %v3700, %v3922
      %v4001 = vadd.f32 %v3701, %v3927
      %v4002 = vadd.f32 %v3702, %v3932
      %v4003 = vadd.f32 %v3703, %v3937
      %v4004 = vadd.f32 %v3704, %v3942
      %v4005 = vadd.f32 %v3705, %v3947
      %v4006 = vadd.f32 %v3706, %v3952
      %v4007 = vadd.f32 %v3707, %v3957
      %v4008 = vadd.f32 %v3708, %v3962
      %v4009 = vadd.f32 %v3709, %v3967
      %v4010 = vadd.f32 %v3710, %v3972
      %v4011 = vadd.f32 %v3711, %v3977
      %v4012 = vadd.f32 %v3712, %v3982
      %v4013 = vadd.f32 %v3713, %v3987
      %v4014 = vadd.f32 %v3714, %v3992
      %s4015 = scalar_lea.vmem %s7, 480
      %v4016 = vld [vmem:[%s4015] sm:$0xff]
      %v4017 = vld [vmem:[%s4015 + $0x8] sm:$0xff]
      %v4018 = vld [vmem:[%s4015 + $0x10] sm:$0xff]
      %v4019 = vld [vmem:[%s4015 + $0x18] sm:$0xff]
      %v4020 = vld [vmem:[%s4015 + $0x20] sm:$0xff]
      %v4021 = vld [vmem:[%s4015 + $0x28] sm:$0xff]
      %v4022 = vld [vmem:[%s4015 + $0x30] sm:$0xff]
      %v4023 = vld [vmem:[%s4015 + $0x38] sm:$0xff]
      %v4024 = vld [vmem:[%s4015 + $0x40] sm:$0xff]
      %v4025 = vld [vmem:[%s4015 + $0x48] sm:$0xff]
      %v4026 = vld [vmem:[%s4015 + $0x50] sm:$0xff]
      %v4027 = vld [vmem:[%s4015 + $0x58] sm:$0xff]
      %v4028 = vld [vmem:[%s4015 + $0x60] sm:$0xff]
      %v4029 = vld [vmem:[%s4015 + $0x68] sm:$0xff]
      %v4030 = vld [vmem:[%s4015 + $0x70] sm:$0xff]
      %v4031 = vld [vmem:[%s4015 + $0x78] sm:$0xff]
      %v4032 = vld [vmem:[%s4015 + $0x80] sm:$0xff]
      %v4033 = vld [vmem:[%s4015 + $0x88] sm:$0xff]
      %v4034 = vld [vmem:[%s4015 + $0x90] sm:$0xff]
      %v4035 = vld [vmem:[%s4015 + $0x98] sm:$0xff]
      %4036 = vrot.lane.b32.xlu0 %v3045, 125
      %v4037 = vpop.permute.xlu0 %4036
      %4038 = vrot.lane.b32.xlu0 %v3046, 125
      %v4039 = vpop.permute.xlu0 %4038
      %4040 = vrot.lane.b32.xlu0 %v3047, 125
      %v4041 = vpop.permute.xlu0 %4040
      %4042 = vrot.lane.b32.xlu0 %v3048, 125
      %v4043 = vpop.permute.xlu0 %4042
      %4044 = vrot.lane.b32.xlu0 %v3049, 125
      %v4045 = vpop.permute.xlu0 %4044
      %4046 = vrot.lane.b32.xlu0 %v3050, 125
      %v4047 = vpop.permute.xlu0 %4046
      %4048 = vrot.lane.b32.xlu0 %v3051, 125
      %v4049 = vpop.permute.xlu0 %4048
      %4050 = vrot.lane.b32.xlu0 %v3052, 125
      %v4051 = vpop.permute.xlu0 %4050
      %4052 = vrot.lane.b32.xlu0 %v3053, 125
      %v4053 = vpop.permute.xlu0 %4052
      %4054 = vrot.lane.b32.xlu0 %v3054, 125
      %v4055 = vpop.permute.xlu0 %4054
      %4056 = vrot.lane.b32.xlu0 %v3055, 125
      %v4057 = vpop.permute.xlu0 %4056
      %v4069 = vsel %vm3056, %v4016, 0
      %v4072 = vsel %vm3056, %v4017, 0
      %v4075 = vsel %vm3056, %v4018, 0
      %v4078 = vsel %vm3056, %v4019, 0
      %v4081 = vsel %vm3056, %v4020, 0
      %v4084 = vsel %vm3056, %v4021, 0
      %v4087 = vsel %vm3056, %v4022, 0
      %v4090 = vsel %vm3056, %v4023, 0
      %v4093 = vsel %vm3056, %v4024, 0
      %v4096 = vsel %vm3056, %v4025, 0
      %v4099 = vsel %vm3056, %v4026, 0
      %v4102 = vsel %vm3056, %v4027, 0
      %v4105 = vsel %vm3056, %v4028, 0
      %v4108 = vsel %vm3056, %v4029, 0
      %v4111 = vsel %vm3056, %v4030, 0
      %v4114 = vsel %vm3056, %v4031, 0
      %v4117 = vsel %vm3056, %v4032, 0
      %v4120 = vsel %vm3056, %v4033, 0
      %v4123 = vsel %vm3056, %v4034, 0
      %v4126 = vsel %vm3056, %v4035, 0
      %v4128 = vsel %vm2258, %v4057, 0
      %4130 = vmatprep.subr.mxu0 0.0
      %4131 = vmatpush1.msra.mxu0 0.0
      %4132 = vmatprep.subr.mxu0 0.0
      %4133 = vmatpush1.msra.mxu0 0.0
      %4134 = vmatprep.subr.mxu0 0.0
      %4135 = vmatpush1.msra.mxu0 0.0
      %4136 = vmatprep.subr.mxu0 0.0
      %4137 = vmatpush1.msra.mxu0 0.0
      %4138 = vmatprep.subr.mxu0 0.0
      %4139 = vmatpush1.msra.mxu0 0.0
      %4140 = vmatprep.subr.mxu0 0.0
      %4141 = vmatpush1.msra.mxu0 %v4128
      %4142 = vmatprep.subr.mxu0 0.0
      %4143 = vmatpush1.msra.mxu0 %v4055
      %4144 = vmatprep.subr.mxu0 0.0
      %4145 = vmatpush1.msra.mxu0 %v4053
      %4146 = vmatprep.subr.mxu0 0.0
      %4147 = vmatpush1.msra.mxu0 %v4051
      %4148 = vmatprep.subr.mxu0 0.0
      %4149 = vmatpush1.msra.mxu0 %v4049
      %4150 = vmatprep.subr.mxu0 0.0
      %4151 = vmatpush1.msra.mxu0 %v4047
      %4152 = vmatprep.subr.mxu0 0.0
      %4153 = vmatpush1.msra.mxu0 %v4045
      %4154 = vmatprep.subr.mxu0 0.0
      %4155 = vmatpush1.msra.mxu0 %v4043
      %4156 = vmatprep.subr.mxu0 0.0
      %4157 = vmatpush1.msra.mxu0 %v4041
      %4158 = vmatprep.subr.mxu0 0.0
      %4159 = vmatpush1.msra.mxu0 %v4039
      %4160 = vmatprep.subr.mxu0 0.0
      %4161 = vmatpush1.msra.mxu0 %v4037
      %4162 = vmatprep.subr.mxu0 0.0
      %4163 = vmatpush2.msra.mxu0 0.0
      %4164 = vmatprep.subr.mxu0 0.0
      %4165 = vmatpush2.msra.mxu0 0.0
      %4166 = vmatprep.subr.mxu0 0.0
      %4167 = vmatpush2.msra.mxu0 0.0
      %4168 = vmatprep.subr.mxu0 0.0
      %4169 = vmatpush2.msra.mxu0 0.0
      %4170 = vmatprep.subr.mxu0 0.0
      %4171 = vmatpush2.msra.mxu0 0.0
      %4172 = vmatprep.subr.mxu0 0.0
      %4173 = vmatpush2.msra.mxu0 0.0
      %4174 = vmatprep.subr.mxu0 0.0
      %4175 = vmatpush2.msra.mxu0 0.0
      %4176 = vmatprep.subr.mxu0 0.0
      %4177 = vmatpush2.msra.mxu0 0.0
      %4178 = vmatprep.subr.mxu0 0.0
      %4179 = vmatpush2.msra.mxu0 0.0
      %4180 = vmatprep.subr.mxu0 0.0
      %4181 = vmatpush2.msra.mxu0 0.0
      %4182 = vmatprep.subr.mxu0 0.0
      %4183 = vmatpush2.msra.mxu0 0.0
      %4184 = vmatprep.subr.mxu0 0.0
      %4185 = vmatpush2.msra.mxu0 0.0
      %4186 = vmatprep.subr.mxu0 0.0
      %4187 = vmatpush2.msra.mxu0 0.0
      %4188 = vmatprep.subr.mxu0 0.0
      %4189 = vmatpush2.msra.mxu0 0.0
      %4190 = vmatprep.subr.mxu0 0.0
      %4191 = vmatpush2.msra.mxu0 0.0
      %4192 = vmatprep.subr.mxu0 0.0
      %4193 = vmatpush2.msra.mxu0 0.0
      %4194 = vmatprep.mubr.f32.mxu0 0.0
      %4195 = vmatmul.mubr.f32.gmra.mxu0 %v4069
      %v4196 = vpop.f32.mrf.mxu0
      %v4197 = vadd.f32 0.0, %v4196
      %v4198 = vpop.f32.mrf.mxu0
      %4199 = vmatprep.mubr.f32.mxu0 0.0
      %4200 = vmatmul.mubr.f32.gmra.mxu0 %v4072
      %v4201 = vpop.f32.mrf.mxu0
      %v4202 = vadd.f32 0.0, %v4201
      %v4203 = vpop.f32.mrf.mxu0
      %4204 = vmatprep.mubr.f32.mxu0 0.0
      %4205 = vmatmul.mubr.f32.gmra.mxu0 %v4075
      %v4206 = vpop.f32.mrf.mxu0
      %v4207 = vadd.f32 0.0, %v4206
      %v4208 = vpop.f32.mrf.mxu0
      %4209 = vmatprep.mubr.f32.mxu0 0.0
      %4210 = vmatmul.mubr.f32.gmra.mxu0 %v4078
      %v4211 = vpop.f32.mrf.mxu0
      %v4212 = vadd.f32 0.0, %v4211
      %v4213 = vpop.f32.mrf.mxu0
      %4214 = vmatprep.mubr.f32.mxu0 0.0
      %4215 = vmatmul.mubr.f32.gmra.mxu0 %v4081
      %v4216 = vpop.f32.mrf.mxu0
      %v4217 = vadd.f32 0.0, %v4216
      %v4218 = vpop.f32.mrf.mxu0
      %4219 = vmatprep.mubr.f32.mxu0 0.0
      %4220 = vmatmul.mubr.f32.gmra.mxu0 %v4084
      %v4221 = vpop.f32.mrf.mxu0
      %v4222 = vadd.f32 0.0, %v4221
      %v4223 = vpop.f32.mrf.mxu0
      %4224 = vmatprep.mubr.f32.mxu0 0.0
      %4225 = vmatmul.mubr.f32.gmra.mxu0 %v4087
      %v4226 = vpop.f32.mrf.mxu0
      %v4227 = vadd.f32 0.0, %v4226
      %v4228 = vpop.f32.mrf.mxu0
      %4229 = vmatprep.mubr.f32.mxu0 0.0
      %4230 = vmatmul.mubr.f32.gmra.mxu0 %v4090
      %v4231 = vpop.f32.mrf.mxu0
      %v4232 = vadd.f32 0.0, %v4231
      %v4233 = vpop.f32.mrf.mxu0
      %4234 = vmatprep.mubr.f32.mxu0 0.0
      %4235 = vmatmul.mubr.f32.gmra.mxu0 %v4093
      %v4236 = vpop.f32.mrf.mxu0
      %v4237 = vadd.f32 0.0, %v4236
      %v4238 = vpop.f32.mrf.mxu0
      %4239 = vmatprep.mubr.f32.mxu0 0.0
      %4240 = vmatmul.mubr.f32.gmra.mxu0 %v4096
      %v4241 = vpop.f32.mrf.mxu0
      %v4242 = vadd.f32 0.0, %v4241
      %v4243 = vpop.f32.mrf.mxu0
      %4244 = vmatprep.mubr.f32.mxu0 0.0
      %4245 = vmatmul.mubr.f32.gmra.mxu0 %v4099
      %v4246 = vpop.f32.mrf.mxu0
      %v4247 = vadd.f32 0.0, %v4246
      %v4248 = vpop.f32.mrf.mxu0
      %4249 = vmatprep.mubr.f32.mxu0 0.0
      %4250 = vmatmul.mubr.f32.gmra.mxu0 %v4102
      %v4251 = vpop.f32.mrf.mxu0
      %v4252 = vadd.f32 0.0, %v4251
      %v4253 = vpop.f32.mrf.mxu0
      %4254 = vmatprep.mubr.f32.mxu0 0.0
      %4255 = vmatmul.mubr.f32.gmra.mxu0 %v4105
      %v4256 = vpop.f32.mrf.mxu0
      %v4257 = vadd.f32 0.0, %v4256
      %v4258 = vpop.f32.mrf.mxu0
      %4259 = vmatprep.mubr.f32.mxu0 0.0
      %4260 = vmatmul.mubr.f32.gmra.mxu0 %v4108
      %v4261 = vpop.f32.mrf.mxu0
      %v4262 = vadd.f32 0.0, %v4261
      %v4263 = vpop.f32.mrf.mxu0
      %4264 = vmatprep.mubr.f32.mxu0 0.0
      %4265 = vmatmul.mubr.f32.gmra.mxu0 %v4111
      %v4266 = vpop.f32.mrf.mxu0
      %v4267 = vadd.f32 0.0, %v4266
      %v4268 = vpop.f32.mrf.mxu0
      %4269 = vmatprep.mubr.f32.mxu0 0.0
      %4270 = vmatmul.mubr.f32.gmra.mxu0 %v4114
      %v4271 = vpop.f32.mrf.mxu0
      %v4272 = vadd.f32 0.0, %v4271
      %v4273 = vpop.f32.mrf.mxu0
      %4274 = vmatprep.mubr.f32.mxu0 0.0
      %4275 = vmatmul.mubr.f32.gmra.mxu0 %v4117
      %v4276 = vpop.f32.mrf.mxu0
      %v4277 = vadd.f32 0.0, %v4276
      %v4278 = vpop.f32.mrf.mxu0
      %4279 = vmatprep.mubr.f32.mxu0 0.0
      %4280 = vmatmul.mubr.f32.gmra.mxu0 %v4120
      %v4281 = vpop.f32.mrf.mxu0
      %v4282 = vadd.f32 0.0, %v4281
      %v4283 = vpop.f32.mrf.mxu0
      %4284 = vmatprep.mubr.f32.mxu0 0.0
      %4285 = vmatmul.mubr.f32.gmra.mxu0 %v4123
      %v4286 = vpop.f32.mrf.mxu0
      %v4287 = vadd.f32 0.0, %v4286
      %v4288 = vpop.f32.mrf.mxu0
      %4289 = vmatprep.mubr.f32.mxu0 0.0
      %4290 = vmatmul.mubr.f32.gmra.mxu0 %v4126
      %v4291 = vpop.f32.mrf.mxu0
      %v4292 = vadd.f32 0.0, %v4291
      %v4293 = vpop.f32.mrf.mxu0
      %4294 = vdwg.mxu0
      %v4295 = vadd.f32 %v3995, %v4197
      %v4296 = vadd.f32 %v3996, %v4202
      %v4297 = vadd.f32 %v3997, %v4207
      %v4298 = vadd.f32 %v3998, %v4212
      %v4299 = vadd.f32 %v3999, %v4217
      %v4300 = vadd.f32 %v4000, %v4222
      %v4301 = vadd.f32 %v4001, %v4227
      %v4302 = vadd.f32 %v4002, %v4232
      %v4303 = vadd.f32 %v4003, %v4237
      %v4304 = vadd.f32 %v4004, %v4242
      %v4305 = vadd.f32 %v4005, %v4247
      %v4306 = vadd.f32 %v4006, %v4252
      %v4307 = vadd.f32 %v4007, %v4257
      %v4308 = vadd.f32 %v4008, %v4262
      %v4309 = vadd.f32 %v4009, %v4267
      %v4310 = vadd.f32 %v4010, %v4272
      %v4311 = vadd.f32 %v4011, %v4277
      %v4312 = vadd.f32 %v4012, %v4282
      %v4313 = vadd.f32 %v4013, %v4287
      %v4314 = vadd.f32 %v4014, %v4292
      %s4315 = scalar_lea.vmem %s7, 640
      %v4316 = vld [vmem:[%s4315] sm:$0xff]
      %v4317 = vld [vmem:[%s4315 + $0x8] sm:$0xff]
      %v4318 = vld [vmem:[%s4315 + $0x10] sm:$0xff]
      %v4319 = vld [vmem:[%s4315 + $0x18] sm:$0xff]
      %v4320 = vld [vmem:[%s4315 + $0x20] sm:$0xff]
      %v4321 = vld [vmem:[%s4315 + $0x28] sm:$0xff]
      %v4322 = vld [vmem:[%s4315 + $0x30] sm:$0xff]
      %v4323 = vld [vmem:[%s4315 + $0x38] sm:$0xff]
      %v4324 = vld [vmem:[%s4315 + $0x40] sm:$0xff]
      %v4325 = vld [vmem:[%s4315 + $0x48] sm:$0xff]
      %v4326 = vld [vmem:[%s4315 + $0x50] sm:$0xff]
      %v4327 = vld [vmem:[%s4315 + $0x58] sm:$0xff]
      %v4328 = vld [vmem:[%s4315 + $0x60] sm:$0xff]
      %v4329 = vld [vmem:[%s4315 + $0x68] sm:$0xff]
      %v4330 = vld [vmem:[%s4315 + $0x70] sm:$0xff]
      %v4331 = vld [vmem:[%s4315 + $0x78] sm:$0xff]
      %v4332 = vld [vmem:[%s4315 + $0x80] sm:$0xff]
      %v4333 = vld [vmem:[%s4315 + $0x88] sm:$0xff]
      %v4334 = vld [vmem:[%s4315 + $0x90] sm:$0xff]
      %v4335 = vld [vmem:[%s4315 + $0x98] sm:$0xff]
      %4336 = vrot.lane.b32.xlu0 %v3045, 124
      %v4337 = vpop.permute.xlu0 %4336
      %4338 = vrot.lane.b32.xlu0 %v3046, 124
      %v4339 = vpop.permute.xlu0 %4338
      %4340 = vrot.lane.b32.xlu0 %v3047, 124
      %v4341 = vpop.permute.xlu0 %4340
      %4342 = vrot.lane.b32.xlu0 %v3048, 124
      %v4343 = vpop.permute.xlu0 %4342
      %4344 = vrot.lane.b32.xlu0 %v3049, 124
      %v4345 = vpop.permute.xlu0 %4344
      %4346 = vrot.lane.b32.xlu0 %v3050, 124
      %v4347 = vpop.permute.xlu0 %4346
      %4348 = vrot.lane.b32.xlu0 %v3051, 124
      %v4349 = vpop.permute.xlu0 %4348
      %4350 = vrot.lane.b32.xlu0 %v3052, 124
      %v4351 = vpop.permute.xlu0 %4350
      %4352 = vrot.lane.b32.xlu0 %v3053, 124
      %v4353 = vpop.permute.xlu0 %4352
      %4354 = vrot.lane.b32.xlu0 %v3054, 124
      %v4355 = vpop.permute.xlu0 %4354
      %4356 = vrot.lane.b32.xlu0 %v3055, 124
      %v4357 = vpop.permute.xlu0 %4356
      %v4369 = vsel %vm3056, %v4316, 0
      %v4372 = vsel %vm3056, %v4317, 0
      %v4375 = vsel %vm3056, %v4318, 0
      %v4378 = vsel %vm3056, %v4319, 0
      %v4381 = vsel %vm3056, %v4320, 0
      %v4384 = vsel %vm3056, %v4321, 0
      %v4387 = vsel %vm3056, %v4322, 0
      %v4390 = vsel %vm3056, %v4323, 0
      %v4393 = vsel %vm3056, %v4324, 0
      %v4396 = vsel %vm3056, %v4325, 0
      %v4399 = vsel %vm3056, %v4326, 0
      %v4402 = vsel %vm3056, %v4327, 0
      %v4405 = vsel %vm3056, %v4328, 0
      %v4408 = vsel %vm3056, %v4329, 0
      %v4411 = vsel %vm3056, %v4330, 0
      %v4414 = vsel %vm3056, %v4331, 0
      %v4417 = vsel %vm3056, %v4332, 0
      %v4420 = vsel %vm3056, %v4333, 0
      %v4423 = vsel %vm3056, %v4334, 0
      %v4426 = vsel %vm3056, %v4335, 0
      %v4428 = vsel %vm2258, %v4357, 0
      %4430 = vmatprep.subr.mxu0 0.0
      %4431 = vmatpush1.msra.mxu0 0.0
      %4432 = vmatprep.subr.mxu0 0.0
      %4433 = vmatpush1.msra.mxu0 0.0
      %4434 = vmatprep.subr.mxu0 0.0
      %4435 = vmatpush1.msra.mxu0 0.0
      %4436 = vmatprep.subr.mxu0 0.0
      %4437 = vmatpush1.msra.mxu0 0.0
      %4438 = vmatprep.subr.mxu0 0.0
      %4439 = vmatpush1.msra.mxu0 0.0
      %4440 = vmatprep.subr.mxu0 0.0
      %4441 = vmatpush1.msra.mxu0 %v4428
      %4442 = vmatprep.subr.mxu0 0.0
      %4443 = vmatpush1.msra.mxu0 %v4355
      %4444 = vmatprep.subr.mxu0 0.0
      %4445 = vmatpush1.msra.mxu0 %v4353
      %4446 = vmatprep.subr.mxu0 0.0
      %4447 = vmatpush1.msra.mxu0 %v4351
      %4448 = vmatprep.subr.mxu0 0.0
      %4449 = vmatpush1.msra.mxu0 %v4349
      %4450 = vmatprep.subr.mxu0 0.0
      %4451 = vmatpush1.msra.mxu0 %v4347
      %4452 = vmatprep.subr.mxu0 0.0
      %4453 = vmatpush1.msra.mxu0 %v4345
      %4454 = vmatprep.subr.mxu0 0.0
      %4455 = vmatpush1.msra.mxu0 %v4343
      %4456 = vmatprep.subr.mxu0 0.0
      %4457 = vmatpush1.msra.mxu0 %v4341
      %4458 = vmatprep.subr.mxu0 0.0
      %4459 = vmatpush1.msra.mxu0 %v4339
      %4460 = vmatprep.subr.mxu0 0.0
      %4461 = vmatpush1.msra.mxu0 %v4337
      %4462 = vmatprep.subr.mxu0 0.0
      %4463 = vmatpush2.msra.mxu0 0.0
      %4464 = vmatprep.subr.mxu0 0.0
      %4465 = vmatpush2.msra.mxu0 0.0
      %4466 = vmatprep.subr.mxu0 0.0
      %4467 = vmatpush2.msra.mxu0 0.0
      %4468 = vmatprep.subr.mxu0 0.0
      %4469 = vmatpush2.msra.mxu0 0.0
      %4470 = vmatprep.subr.mxu0 0.0
      %4471 = vmatpush2.msra.mxu0 0.0
      %4472 = vmatprep.subr.mxu0 0.0
      %4473 = vmatpush2.msra.mxu0 0.0
      %4474 = vmatprep.subr.mxu0 0.0
      %4475 = vmatpush2.msra.mxu0 0.0
      %4476 = vmatprep.subr.mxu0 0.0
      %4477 = vmatpush2.msra.mxu0 0.0
      %4478 = vmatprep.subr.mxu0 0.0
      %4479 = vmatpush2.msra.mxu0 0.0
      %4480 = vmatprep.subr.mxu0 0.0
      %4481 = vmatpush2.msra.mxu0 0.0
      %4482 = vmatprep.subr.mxu0 0.0
      %4483 = vmatpush2.msra.mxu0 0.0
      %4484 = vmatprep.subr.mxu0 0.0
      %4485 = vmatpush2.msra.mxu0 0.0
      %4486 = vmatprep.subr.mxu0 0.0
      %4487 = vmatpush2.msra.mxu0 0.0
      %4488 = vmatprep.subr.mxu0 0.0
      %4489 = vmatpush2.msra.mxu0 0.0
      %4490 = vmatprep.subr.mxu0 0.0
      %4491 = vmatpush2.msra.mxu0 0.0
      %4492 = vmatprep.subr.mxu0 0.0
      %4493 = vmatpush2.msra.mxu0 0.0
      %4494 = vmatprep.mubr.f32.mxu0 0.0
      %4495 = vmatmul.mubr.f32.gmra.mxu0 %v4369
      %v4496 = vpop.f32.mrf.mxu0
      %v4497 = vadd.f32 0.0, %v4496
      %v4498 = vpop.f32.mrf.mxu0
      %4499 = vmatprep.mubr.f32.mxu0 0.0
      %4500 = vmatmul.mubr.f32.gmra.mxu0 %v4372
      %v4501 = vpop.f32.mrf.mxu0
      %v4502 = vadd.f32 0.0, %v4501
      %v4503 = vpop.f32.mrf.mxu0
      %4504 = vmatprep.mubr.f32.mxu0 0.0
      %4505 = vmatmul.mubr.f32.gmra.mxu0 %v4375
      %v4506 = vpop.f32.mrf.mxu0
      %v4507 = vadd.f32 0.0, %v4506
      %v4508 = vpop.f32.mrf.mxu0
      %4509 = vmatprep.mubr.f32.mxu0 0.0
      %4510 = vmatmul.mubr.f32.gmra.mxu0 %v4378
      %v4511 = vpop.f32.mrf.mxu0
      %v4512 = vadd.f32 0.0, %v4511
      %v4513 = vpop.f32.mrf.mxu0
      %4514 = vmatprep.mubr.f32.mxu0 0.0
      %4515 = vmatmul.mubr.f32.gmra.mxu0 %v4381
      %v4516 = vpop.f32.mrf.mxu0
      %v4517 = vadd.f32 0.0, %v4516
      %v4518 = vpop.f32.mrf.mxu0
      %4519 = vmatprep.mubr.f32.mxu0 0.0
      %4520 = vmatmul.mubr.f32.gmra.mxu0 %v4384
      %v4521 = vpop.f32.mrf.mxu0
      %v4522 = vadd.f32 0.0, %v4521
      %v4523 = vpop.f32.mrf.mxu0
      %4524 = vmatprep.mubr.f32.mxu0 0.0
      %4525 = vmatmul.mubr.f32.gmra.mxu0 %v4387
      %v4526 = vpop.f32.mrf.mxu0
      %v4527 = vadd.f32 0.0, %v4526
      %v4528 = vpop.f32.mrf.mxu0
      %4529 = vmatprep.mubr.f32.mxu0 0.0
      %4530 = vmatmul.mubr.f32.gmra.mxu0 %v4390
      %v4531 = vpop.f32.mrf.mxu0
      %v4532 = vadd.f32 0.0, %v4531
      %v4533 = vpop.f32.mrf.mxu0
      %4534 = vmatprep.mubr.f32.mxu0 0.0
      %4535 = vmatmul.mubr.f32.gmra.mxu0 %v4393
      %v4536 = vpop.f32.mrf.mxu0
      %v4537 = vadd.f32 0.0, %v4536
      %v4538 = vpop.f32.mrf.mxu0
      %4539 = vmatprep.mubr.f32.mxu0 0.0
      %4540 = vmatmul.mubr.f32.gmra.mxu0 %v4396
      %v4541 = vpop.f32.mrf.mxu0
      %v4542 = vadd.f32 0.0, %v4541
      %v4543 = vpop.f32.mrf.mxu0
      %4544 = vmatprep.mubr.f32.mxu0 0.0
      %4545 = vmatmul.mubr.f32.gmra.mxu0 %v4399
      %v4546 = vpop.f32.mrf.mxu0
      %v4547 = vadd.f32 0.0, %v4546
      %v4548 = vpop.f32.mrf.mxu0
      %4549 = vmatprep.mubr.f32.mxu0 0.0
      %4550 = vmatmul.mubr.f32.gmra.mxu0 %v4402
      %v4551 = vpop.f32.mrf.mxu0
      %v4552 = vadd.f32 0.0, %v4551
      %v4553 = vpop.f32.mrf.mxu0
      %4554 = vmatprep.mubr.f32.mxu0 0.0
      %4555 = vmatmul.mubr.f32.gmra.mxu0 %v4405
      %v4556 = vpop.f32.mrf.mxu0
      %v4557 = vadd.f32 0.0, %v4556
      %v4558 = vpop.f32.mrf.mxu0
      %4559 = vmatprep.mubr.f32.mxu0 0.0
      %4560 = vmatmul.mubr.f32.gmra.mxu0 %v4408
      %v4561 = vpop.f32.mrf.mxu0
      %v4562 = vadd.f32 0.0, %v4561
      %v4563 = vpop.f32.mrf.mxu0
      %4564 = vmatprep.mubr.f32.mxu0 0.0
      %4565 = vmatmul.mubr.f32.gmra.mxu0 %v4411
      %v4566 = vpop.f32.mrf.mxu0
      %v4567 = vadd.f32 0.0, %v4566
      %v4568 = vpop.f32.mrf.mxu0
      %4569 = vmatprep.mubr.f32.mxu0 0.0
      %4570 = vmatmul.mubr.f32.gmra.mxu0 %v4414
      %v4571 = vpop.f32.mrf.mxu0
      %v4572 = vadd.f32 0.0, %v4571
      %v4573 = vpop.f32.mrf.mxu0
      %4574 = vmatprep.mubr.f32.mxu0 0.0
      %4575 = vmatmul.mubr.f32.gmra.mxu0 %v4417
      %v4576 = vpop.f32.mrf.mxu0
      %v4577 = vadd.f32 0.0, %v4576
      %v4578 = vpop.f32.mrf.mxu0
      %4579 = vmatprep.mubr.f32.mxu0 0.0
      %4580 = vmatmul.mubr.f32.gmra.mxu0 %v4420
      %v4581 = vpop.f32.mrf.mxu0
      %v4582 = vadd.f32 0.0, %v4581
      %v4583 = vpop.f32.mrf.mxu0
      %4584 = vmatprep.mubr.f32.mxu0 0.0
      %4585 = vmatmul.mubr.f32.gmra.mxu0 %v4423
      %v4586 = vpop.f32.mrf.mxu0
      %v4587 = vadd.f32 0.0, %v4586
      %v4588 = vpop.f32.mrf.mxu0
      %4589 = vmatprep.mubr.f32.mxu0 0.0
      %4590 = vmatmul.mubr.f32.gmra.mxu0 %v4426
      %v4591 = vpop.f32.mrf.mxu0
      %v4592 = vadd.f32 0.0, %v4591
      %v4593 = vpop.f32.mrf.mxu0
      %4594 = vdwg.mxu0
      %v4595 = vadd.f32 %v4295, %v4497
      %v4596 = vadd.f32 %v4296, %v4502
      %v4597 = vadd.f32 %v4297, %v4507
      %v4598 = vadd.f32 %v4298, %v4512
      %v4599 = vadd.f32 %v4299, %v4517
      %v4600 = vadd.f32 %v4300, %v4522
      %v4601 = vadd.f32 %v4301, %v4527
      %v4602 = vadd.f32 %v4302, %v4532
      %v4603 = vadd.f32 %v4303, %v4537
      %v4604 = vadd.f32 %v4304, %v4542
      %v4605 = vadd.f32 %v4305, %v4547
      %v4606 = vadd.f32 %v4306, %v4552
      %v4607 = vadd.f32 %v4307, %v4557
      %v4608 = vadd.f32 %v4308, %v4562
      %v4609 = vadd.f32 %v4309, %v4567
      %v4610 = vadd.f32 %v4310, %v4572
      %v4611 = vadd.f32 %v4311, %v4577
      %v4612 = vadd.f32 %v4312, %v4582
      %v4613 = vadd.f32 %v4313, %v4587
      %v4614 = vadd.f32 %v4314, %v4592
      %v4615 = vmax.f32 %v4595, 0.0
      %v4616 = vmax.f32 %v4596, 0.0
      %v4617 = vmax.f32 %v4597, 0.0
      %v4618 = vmax.f32 %v4598, 0.0
      %v4619 = vmax.f32 %v4599, 0.0
      %v4620 = vmax.f32 %v4600, 0.0
      %v4621 = vmax.f32 %v4601, 0.0
      %v4622 = vmax.f32 %v4602, 0.0
      %v4623 = vmax.f32 %v4603, 0.0
      %v4624 = vmax.f32 %v4604, 0.0
      %v4625 = vmax.f32 %v4605, 0.0
      %v4626 = vmax.f32 %v4606, 0.0
      %v4627 = vmax.f32 %v4607, 0.0
      %v4628 = vmax.f32 %v4608, 0.0
      %v4629 = vmax.f32 %v4609, 0.0
      %v4630 = vmax.f32 %v4610, 0.0
      %v4631 = vmax.f32 %v4611, 0.0
      %v4632 = vmax.f32 %v4612, 0.0
      %v4633 = vmax.f32 %v4613, 0.0
      %v4634 = vmax.f32 %v4614, 0.0
      %v4635 = vld [vmem:[%s9] sm:$0xff]
      %v4636 = vld [vmem:[%s9 + $0x8] sm:$0x3]
      %vm4637 = vcmask 80896
      %v4639 = vsel %vm4637, %v4615, 0
      %v4642 = vsel %vm4637, %v4616, 0
      %v4645 = vsel %vm4637, %v4617, 0
      %v4648 = vsel %vm4637, %v4618, 0
      %v4651 = vsel %vm4637, %v4619, 0
      %v4654 = vsel %vm4637, %v4620, 0
      %v4657 = vsel %vm4637, %v4621, 0
      %v4660 = vsel %vm4637, %v4622, 0
      %v4663 = vsel %vm4637, %v4623, 0
      %v4666 = vsel %vm4637, %v4624, 0
      %v4669 = vsel %vm4637, %v4625, 0
      %v4672 = vsel %vm4637, %v4626, 0
      %v4675 = vsel %vm4637, %v4627, 0
      %v4678 = vsel %vm4637, %v4628, 0
      %v4681 = vsel %vm4637, %v4629, 0
      %v4684 = vsel %vm4637, %v4630, 0
      %v4687 = vsel %vm4637, %v4631, 0
      %v4690 = vsel %vm4637, %v4632, 0
      %v4693 = vsel %vm4637, %v4633, 0
      %v4696 = vsel %vm4637, %v4634, 0
      %vm4698 = vcmask 1041408
      %v4700 = vsel %vm4698, %v4636, 0
      %4702 = vmatprep.subr.mxu0 0.0
      %4703 = vmatpush1.msra.mxu0 0.0
      %4704 = vmatprep.subr.mxu0 0.0
      %4705 = vmatpush1.msra.mxu0 0.0
      %4706 = vmatprep.subr.mxu0 0.0
      %4707 = vmatpush1.msra.mxu0 0.0
      %4708 = vmatprep.subr.mxu0 0.0
      %4709 = vmatpush1.msra.mxu0 0.0
      %4710 = vmatprep.subr.mxu0 0.0
      %4711 = vmatpush1.msra.mxu0 0.0
      %4712 = vmatprep.subr.mxu0 0.0
      %4713 = vmatpush1.msra.mxu0 0.0
      %4714 = vmatprep.subr.mxu0 0.0
      %4715 = vmatpush1.msra.mxu0 0.0
      %4716 = vmatprep.subr.mxu0 0.0
      %4717 = vmatpush1.msra.mxu0 0.0
      %4718 = vmatprep.subr.mxu0 0.0
      %4719 = vmatpush1.msra.mxu0 0.0
      %4720 = vmatprep.subr.mxu0 0.0
      %4721 = vmatpush1.msra.mxu0 0.0
      %4722 = vmatprep.subr.mxu0 0.0
      %4723 = vmatpush1.msra.mxu0 0.0
      %4724 = vmatprep.subr.mxu0 0.0
      %4725 = vmatpush1.msra.mxu0 0.0
      %4726 = vmatprep.subr.mxu0 0.0
      %4727 = vmatpush1.msra.mxu0 0.0
      %4728 = vmatprep.subr.mxu0 0.0
      %4729 = vmatpush1.msra.mxu0 0.0
      %4730 = vmatprep.subr.mxu0 0.0
      %4731 = vmatpush1.msra.mxu0 %v4700
      %4732 = vmatprep.subr.mxu0 0.0
      %4733 = vmatpush1.msra.mxu0 %v4635
      %4734 = vmatprep.subr.mxu0 0.0
      %4735 = vmatpush2.msra.mxu0 0.0
      %4736 = vmatprep.subr.mxu0 0.0
      %4737 = vmatpush2.msra.mxu0 0.0
      %4738 = vmatprep.subr.mxu0 0.0
      %4739 = vmatpush2.msra.mxu0 0.0
      %4740 = vmatprep.subr.mxu0 0.0
      %4741 = vmatpush2.msra.mxu0 0.0
      %4742 = vmatprep.subr.mxu0 0.0
      %4743 = vmatpush2.msra.mxu0 0.0
      %4744 = vmatprep.subr.mxu0 0.0
      %4745 = vmatpush2.msra.mxu0 0.0
      %4746 = vmatprep.subr.mxu0 0.0
      %4747 = vmatpush2.msra.mxu0 0.0
      %4748 = vmatprep.subr.mxu0 0.0
      %4749 = vmatpush2.msra.mxu0 0.0
      %4750 = vmatprep.subr.mxu0 0.0
      %4751 = vmatpush2.msra.mxu0 0.0
      %4752 = vmatprep.subr.mxu0 0.0
      %4753 = vmatpush2.msra.mxu0 0.0
      %4754 = vmatprep.subr.mxu0 0.0
      %4755 = vmatpush2.msra.mxu0 0.0
      %4756 = vmatprep.subr.mxu0 0.0
      %4757 = vmatpush2.msra.mxu0 0.0
      %4758 = vmatprep.subr.mxu0 0.0
      %4759 = vmatpush2.msra.mxu0 0.0
      %4760 = vmatprep.subr.mxu0 0.0
      %4761 = vmatpush2.msra.mxu0 0.0
      %4762 = vmatprep.subr.mxu0 0.0
      %4763 = vmatpush2.msra.mxu0 0.0
      %4764 = vmatprep.subr.mxu0 0.0
      %4765 = vmatpush2.msra.mxu0 0.0
      %4766 = vmatprep.mubr.f32.mxu0 0.0
      %4767 = vmatmul.mubr.f32.gmra.mxu0 %v4639
      %v4768 = vpop.f32.mrf.mxu0
      %v4769 = vadd.f32 0.0, %v4768
      %v4770 = vpop.f32.mrf.mxu0
      %4771 = vmatprep.mubr.f32.mxu0 0.0
      %4772 = vmatmul.mubr.f32.gmra.mxu0 %v4642
      %v4773 = vpop.f32.mrf.mxu0
      %v4774 = vadd.f32 0.0, %v4773
      %v4775 = vpop.f32.mrf.mxu0
      %4776 = vmatprep.mubr.f32.mxu0 0.0
      %4777 = vmatmul.mubr.f32.gmra.mxu0 %v4645
      %v4778 = vpop.f32.mrf.mxu0
      %v4779 = vadd.f32 0.0, %v4778
      %v4780 = vpop.f32.mrf.mxu0
      %4781 = vmatprep.mubr.f32.mxu0 0.0
      %4782 = vmatmul.mubr.f32.gmra.mxu0 %v4648
      %v4783 = vpop.f32.mrf.mxu0
      %v4784 = vadd.f32 0.0, %v4783
      %v4785 = vpop.f32.mrf.mxu0
      %4786 = vmatprep.mubr.f32.mxu0 0.0
      %4787 = vmatmul.mubr.f32.gmra.mxu0 %v4651
      %v4788 = vpop.f32.mrf.mxu0
      %v4789 = vadd.f32 0.0, %v4788
      %v4790 = vpop.f32.mrf.mxu0
      %4791 = vmatprep.mubr.f32.mxu0 0.0
      %4792 = vmatmul.mubr.f32.gmra.mxu0 %v4654
      %v4793 = vpop.f32.mrf.mxu0
      %v4794 = vadd.f32 0.0, %v4793
      %v4795 = vpop.f32.mrf.mxu0
      %4796 = vmatprep.mubr.f32.mxu0 0.0
      %4797 = vmatmul.mubr.f32.gmra.mxu0 %v4657
      %v4798 = vpop.f32.mrf.mxu0
      %v4799 = vadd.f32 0.0, %v4798
      %v4800 = vpop.f32.mrf.mxu0
      %4801 = vmatprep.mubr.f32.mxu0 0.0
      %4802 = vmatmul.mubr.f32.gmra.mxu0 %v4660
      %v4803 = vpop.f32.mrf.mxu0
      %v4804 = vadd.f32 0.0, %v4803
      %v4805 = vpop.f32.mrf.mxu0
      %4806 = vmatprep.mubr.f32.mxu0 0.0
      %4807 = vmatmul.mubr.f32.gmra.mxu0 %v4663
      %v4808 = vpop.f32.mrf.mxu0
      %v4809 = vadd.f32 0.0, %v4808
      %v4810 = vpop.f32.mrf.mxu0
      %4811 = vmatprep.mubr.f32.mxu0 0.0
      %4812 = vmatmul.mubr.f32.gmra.mxu0 %v4666
      %v4813 = vpop.f32.mrf.mxu0
      %v4814 = vadd.f32 0.0, %v4813
      %v4815 = vpop.f32.mrf.mxu0
      %4816 = vmatprep.mubr.f32.mxu0 0.0
      %4817 = vmatmul.mubr.f32.gmra.mxu0 %v4669
      %v4818 = vpop.f32.mrf.mxu0
      %v4819 = vadd.f32 0.0, %v4818
      %v4820 = vpop.f32.mrf.mxu0
      %4821 = vmatprep.mubr.f32.mxu0 0.0
      %4822 = vmatmul.mubr.f32.gmra.mxu0 %v4672
      %v4823 = vpop.f32.mrf.mxu0
      %v4824 = vadd.f32 0.0, %v4823
      %v4825 = vpop.f32.mrf.mxu0
      %4826 = vmatprep.mubr.f32.mxu0 0.0
      %4827 = vmatmul.mubr.f32.gmra.mxu0 %v4675
      %v4828 = vpop.f32.mrf.mxu0
      %v4829 = vadd.f32 0.0, %v4828
      %v4830 = vpop.f32.mrf.mxu0
      %4831 = vmatprep.mubr.f32.mxu0 0.0
      %4832 = vmatmul.mubr.f32.gmra.mxu0 %v4678
      %v4833 = vpop.f32.mrf.mxu0
      %v4834 = vadd.f32 0.0, %v4833
      %v4835 = vpop.f32.mrf.mxu0
      %4836 = vmatprep.mubr.f32.mxu0 0.0
      %4837 = vmatmul.mubr.f32.gmra.mxu0 %v4681
      %v4838 = vpop.f32.mrf.mxu0
      %v4839 = vadd.f32 0.0, %v4838
      %v4840 = vpop.f32.mrf.mxu0
      %4841 = vmatprep.mubr.f32.mxu0 0.0
      %4842 = vmatmul.mubr.f32.gmra.mxu0 %v4684
      %v4843 = vpop.f32.mrf.mxu0
      %v4844 = vadd.f32 0.0, %v4843
      %v4845 = vpop.f32.mrf.mxu0
      %4846 = vmatprep.mubr.f32.mxu0 0.0
      %4847 = vmatmul.mubr.f32.gmra.mxu0 %v4687
      %v4848 = vpop.f32.mrf.mxu0
      %v4849 = vadd.f32 0.0, %v4848
      %v4850 = vpop.f32.mrf.mxu0
      %4851 = vmatprep.mubr.f32.mxu0 0.0
      %4852 = vmatmul.mubr.f32.gmra.mxu0 %v4690
      %v4853 = vpop.f32.mrf.mxu0
      %v4854 = vadd.f32 0.0, %v4853
      %v4855 = vpop.f32.mrf.mxu0
      %4856 = vmatprep.mubr.f32.mxu0 0.0
      %4857 = vmatmul.mubr.f32.gmra.mxu0 %v4693
      %v4858 = vpop.f32.mrf.mxu0
      %v4859 = vadd.f32 0.0, %v4858
      %v4860 = vpop.f32.mrf.mxu0
      %4861 = vmatprep.mubr.f32.mxu0 0.0
      %4862 = vmatmul.mubr.f32.gmra.mxu0 %v4696
      %v4863 = vpop.f32.mrf.mxu0
      %v4864 = vadd.f32 0.0, %v4863
      %v4865 = vpop.f32.mrf.mxu0
      %4866 = vdwg.mxu0
      %v4867 = vld [vmem:[%s10] sm:$0xff]
      %v4868 = vld [vmem:[%s10 + $0x8] sm:$0x3]
      %v4870 = vsel %vm4698, %v4868, 0
      %4872 = vmatprep.subr.mxu0 0.0
      %4873 = vmatpush1.msra.mxu0 0.0
      %4874 = vmatprep.subr.mxu0 0.0
      %4875 = vmatpush1.msra.mxu0 0.0
      %4876 = vmatprep.subr.mxu0 0.0
      %4877 = vmatpush1.msra.mxu0 0.0
      %4878 = vmatprep.subr.mxu0 0.0
      %4879 = vmatpush1.msra.mxu0 0.0
      %4880 = vmatprep.subr.mxu0 0.0
      %4881 = vmatpush1.msra.mxu0 0.0
      %4882 = vmatprep.subr.mxu0 0.0
      %4883 = vmatpush1.msra.mxu0 0.0
      %4884 = vmatprep.subr.mxu0 0.0
      %4885 = vmatpush1.msra.mxu0 0.0
      %4886 = vmatprep.subr.mxu0 0.0
      %4887 = vmatpush1.msra.mxu0 0.0
      %4888 = vmatprep.subr.mxu0 0.0
      %4889 = vmatpush1.msra.mxu0 0.0
      %4890 = vmatprep.subr.mxu0 0.0
      %4891 = vmatpush1.msra.mxu0 0.0
      %4892 = vmatprep.subr.mxu0 0.0
      %4893 = vmatpush1.msra.mxu0 0.0
      %4894 = vmatprep.subr.mxu0 0.0
      %4895 = vmatpush1.msra.mxu0 0.0
      %4896 = vmatprep.subr.mxu0 0.0
      %4897 = vmatpush1.msra.mxu0 0.0
      %4898 = vmatprep.subr.mxu0 0.0
      %4899 = vmatpush1.msra.mxu0 0.0
      %4900 = vmatprep.subr.mxu0 0.0
      %4901 = vmatpush1.msra.mxu0 %v4870
      %4902 = vmatprep.subr.mxu0 0.0
      %4903 = vmatpush1.msra.mxu0 %v4867
      %4904 = vmatprep.subr.mxu0 0.0
      %4905 = vmatpush2.msra.mxu0 0.0
      %4906 = vmatprep.subr.mxu0 0.0
      %4907 = vmatpush2.msra.mxu0 0.0
      %4908 = vmatprep.subr.mxu0 0.0
      %4909 = vmatpush2.msra.mxu0 0.0
      %4910 = vmatprep.subr.mxu0 0.0
      %4911 = vmatpush2.msra.mxu0 0.0
      %4912 = vmatprep.subr.mxu0 0.0
      %4913 = vmatpush2.msra.mxu0 0.0
      %4914 = vmatprep.subr.mxu0 0.0
      %4915 = vmatpush2.msra.mxu0 0.0
      %4916 = vmatprep.subr.mxu0 0.0
      %4917 = vmatpush2.msra.mxu0 0.0
      %4918 = vmatprep.subr.mxu0 0.0
      %4919 = vmatpush2.msra.mxu0 0.0
      %4920 = vmatprep.subr.mxu0 0.0
      %4921 = vmatpush2.msra.mxu0 0.0
      %4922 = vmatprep.subr.mxu0 0.0
      %4923 = vmatpush2.msra.mxu0 0.0
      %4924 = vmatprep.subr.mxu0 0.0
      %4925 = vmatpush2.msra.mxu0 0.0
      %4926 = vmatprep.subr.mxu0 0.0
      %4927 = vmatpush2.msra.mxu0 0.0
      %4928 = vmatprep.subr.mxu0 0.0
      %4929 = vmatpush2.msra.mxu0 0.0
      %4930 = vmatprep.subr.mxu0 0.0
      %4931 = vmatpush2.msra.mxu0 0.0
      %4932 = vmatprep.subr.mxu0 0.0
      %4933 = vmatpush2.msra.mxu0 0.0
      %4934 = vmatprep.subr.mxu0 0.0
      %4935 = vmatpush2.msra.mxu0 0.0
      %4936 = vmatprep.mubr.f32.mxu0 0.0
      %4937 = vmatmul.mubr.f32.gmra.mxu0 %v4639
      %v4938 = vpop.f32.mrf.mxu0
      %v4939 = vadd.f32 0.0, %v4938
      %v4940 = vpop.f32.mrf.mxu0
      %4941 = vmatprep.mubr.f32.mxu0 0.0
      %4942 = vmatmul.mubr.f32.gmra.mxu0 %v4642
      %v4943 = vpop.f32.mrf.mxu0
      %v4944 = vadd.f32 0.0, %v4943
      %v4945 = vpop.f32.mrf.mxu0
      %4946 = vmatprep.mubr.f32.mxu0 0.0
      %4947 = vmatmul.mubr.f32.gmra.mxu0 %v4645
      %v4948 = vpop.f32.mrf.mxu0
      %v4949 = vadd.f32 0.0, %v4948
      %v4950 = vpop.f32.mrf.mxu0
      %4951 = vmatprep.mubr.f32.mxu0 0.0
      %4952 = vmatmul.mubr.f32.gmra.mxu0 %v4648
      %v4953 = vpop.f32.mrf.mxu0
      %v4954 = vadd.f32 0.0, %v4953
      %v4955 = vpop.f32.mrf.mxu0
      %4956 = vmatprep.mubr.f32.mxu0 0.0
      %4957 = vmatmul.mubr.f32.gmra.mxu0 %v4651
      %v4958 = vpop.f32.mrf.mxu0
      %v4959 = vadd.f32 0.0, %v4958
      %v4960 = vpop.f32.mrf.mxu0
      %4961 = vmatprep.mubr.f32.mxu0 0.0
      %4962 = vmatmul.mubr.f32.gmra.mxu0 %v4654
      %v4963 = vpop.f32.mrf.mxu0
      %v4964 = vadd.f32 0.0, %v4963
      %v4965 = vpop.f32.mrf.mxu0
      %4966 = vmatprep.mubr.f32.mxu0 0.0
      %4967 = vmatmul.mubr.f32.gmra.mxu0 %v4657
      %v4968 = vpop.f32.mrf.mxu0
      %v4969 = vadd.f32 0.0, %v4968
      %v4970 = vpop.f32.mrf.mxu0
      %4971 = vmatprep.mubr.f32.mxu0 0.0
      %4972 = vmatmul.mubr.f32.gmra.mxu0 %v4660
      %v4973 = vpop.f32.mrf.mxu0
      %v4974 = vadd.f32 0.0, %v4973
      %v4975 = vpop.f32.mrf.mxu0
      %4976 = vmatprep.mubr.f32.mxu0 0.0
      %4977 = vmatmul.mubr.f32.gmra.mxu0 %v4663
      %v4978 = vpop.f32.mrf.mxu0
      %v4979 = vadd.f32 0.0, %v4978
      %v4980 = vpop.f32.mrf.mxu0
      %4981 = vmatprep.mubr.f32.mxu0 0.0
      %4982 = vmatmul.mubr.f32.gmra.mxu0 %v4666
      %v4983 = vpop.f32.mrf.mxu0
      %v4984 = vadd.f32 0.0, %v4983
      %v4985 = vpop.f32.mrf.mxu0
      %4986 = vmatprep.mubr.f32.mxu0 0.0
      %4987 = vmatmul.mubr.f32.gmra.mxu0 %v4669
      %v4988 = vpop.f32.mrf.mxu0
      %v4989 = vadd.f32 0.0, %v4988
      %v4990 = vpop.f32.mrf.mxu0
      %4991 = vmatprep.mubr.f32.mxu0 0.0
      %4992 = vmatmul.mubr.f32.gmra.mxu0 %v4672
      %v4993 = vpop.f32.mrf.mxu0
      %v4994 = vadd.f32 0.0, %v4993
      %v4995 = vpop.f32.mrf.mxu0
      %4996 = vmatprep.mubr.f32.mxu0 0.0
      %4997 = vmatmul.mubr.f32.gmra.mxu0 %v4675
      %v4998 = vpop.f32.mrf.mxu0
      %v4999 = vadd.f32 0.0, %v4998
      %v5000 = vpop.f32.mrf.mxu0
      %5001 = vmatprep.mubr.f32.mxu0 0.0
      %5002 = vmatmul.mubr.f32.gmra.mxu0 %v4678
      %v5003 = vpop.f32.mrf.mxu0
      %v5004 = vadd.f32 0.0, %v5003
      %v5005 = vpop.f32.mrf.mxu0
      %5006 = vmatprep.mubr.f32.mxu0 0.0
      %5007 = vmatmul.mubr.f32.gmra.mxu0 %v4681
      %v5008 = vpop.f32.mrf.mxu0
      %v5009 = vadd.f32 0.0, %v5008
      %v5010 = vpop.f32.mrf.mxu0
      %5011 = vmatprep.mubr.f32.mxu0 0.0
      %5012 = vmatmul.mubr.f32.gmra.mxu0 %v4684
      %v5013 = vpop.f32.mrf.mxu0
      %v5014 = vadd.f32 0.0, %v5013
      %v5015 = vpop.f32.mrf.mxu0
      %5016 = vmatprep.mubr.f32.mxu0 0.0
      %5017 = vmatmul.mubr.f32.gmra.mxu0 %v4687
      %v5018 = vpop.f32.mrf.mxu0
      %v5019 = vadd.f32 0.0, %v5018
      %v5020 = vpop.f32.mrf.mxu0
      %5021 = vmatprep.mubr.f32.mxu0 0.0
      %5022 = vmatmul.mubr.f32.gmra.mxu0 %v4690
      %v5023 = vpop.f32.mrf.mxu0
      %v5024 = vadd.f32 0.0, %v5023
      %v5025 = vpop.f32.mrf.mxu0
      %5026 = vmatprep.mubr.f32.mxu0 0.0
      %5027 = vmatmul.mubr.f32.gmra.mxu0 %v4693
      %v5028 = vpop.f32.mrf.mxu0
      %v5029 = vadd.f32 0.0, %v5028
      %v5030 = vpop.f32.mrf.mxu0
      %5031 = vmatprep.mubr.f32.mxu0 0.0
      %5032 = vmatmul.mubr.f32.gmra.mxu0 %v4696
      %v5033 = vpop.f32.mrf.mxu0
      %v5034 = vadd.f32 0.0, %v5033
      %v5035 = vpop.f32.mrf.mxu0
      %5036 = vdwg.mxu0
      %v5037 = vmax.f32 %v4769, %v4939
      %v5038 = vmax.f32 %v4774, %v4944
      %v5039 = vmax.f32 %v4779, %v4949
      %v5040 = vmax.f32 %v4784, %v4954
      %v5041 = vmax.f32 %v4789, %v4959
      %v5042 = vmax.f32 %v4794, %v4964
      %v5043 = vmax.f32 %v4799, %v4969
      %v5044 = vmax.f32 %v4804, %v4974
      %v5045 = vmax.f32 %v4809, %v4979
      %v5046 = vmax.f32 %v4814, %v4984
      %v5047 = vmax.f32 %v4819, %v4989
      %v5048 = vmax.f32 %v4824, %v4994
      %v5049 = vmax.f32 %v4829, %v4999
      %v5050 = vmax.f32 %v4834, %v5004
      %v5051 = vmax.f32 %v4839, %v5009
      %v5052 = vmax.f32 %v4844, %v5014
      %v5053 = vmax.f32 %v4849, %v5019
      %v5054 = vmax.f32 %v4854, %v5024
      %v5055 = vmax.f32 %v4859, %v5029
      %v5056 = vmax.f32 %v4864, %v5034
      %v5057 = vld [vmem:[%s11] sm:$0xff]
      %v5058 = vld [vmem:[%s11 + $0x8] sm:$0xff]
      %v5059 = vld [vmem:[%s11 + $0x10] sm:$0xff]
      %v5060 = vld [vmem:[%s11 + $0x18] sm:$0xff]
      %v5061 = vld [vmem:[%s11 + $0x20] sm:$0xff]
      %v5062 = vld [vmem:[%s11 + $0x28] sm:$0xff]
      %v5063 = vld [vmem:[%s11 + $0x30] sm:$0xff]
      %v5064 = vld [vmem:[%s11 + $0x38] sm:$0xff]
      %v5065 = vld [vmem:[%s11 + $0x40] sm:$0xff]
      %v5066 = vld [vmem:[%s11 + $0x48] sm:$0xff]
      %v5067 = vld [vmem:[%s11 + $0x50] sm:$0xff]
      %v5068 = vld [vmem:[%s11 + $0x58] sm:$0xff]
      %v5069 = vld [vmem:[%s11 + $0x60] sm:$0xff]
      %v5070 = vld [vmem:[%s11 + $0x68] sm:$0xff]
      %v5071 = vld [vmem:[%s11 + $0x70] sm:$0xff]
      %v5072 = vld [vmem:[%s11 + $0x78] sm:$0xff]
      %v5073 = vld [vmem:[%s11 + $0x80] sm:$0xff]
      %v5074 = vld [vmem:[%s11 + $0x88] sm:$0xff]
      %v5075 = vld [vmem:[%s11 + $0x90] sm:$0xff]
      %v5076 = vld [vmem:[%s11 + $0x98] sm:$0xff]
      %v5078 = vsel %vm653, %v5058, 0
      %v5081 = vsel %vm653, %v5060, 0
      %v5084 = vsel %vm653, %v5062, 0
      %v5087 = vsel %vm653, %v5064, 0
      %v5090 = vsel %vm653, %v5066, 0
      %v5093 = vsel %vm653, %v5068, 0
      %v5096 = vsel %vm653, %v5070, 0
      %v5099 = vsel %vm653, %v5072, 0
      %v5102 = vsel %vm653, %v5074, 0
      %v5105 = vsel %vm653, %v5076, 0
      %5107 = vmatprep.subr.mxu0 0.0
      %5108 = vmatpush1.msra.mxu0 %v5052
      %5109 = vmatprep.subr.mxu0 0.0
      %5110 = vmatpush1.msra.mxu0 %v5051
      %5111 = vmatprep.subr.mxu0 0.0
      %5112 = vmatpush1.msra.mxu0 %v5050
      %5113 = vmatprep.subr.mxu0 0.0
      %5114 = vmatpush1.msra.mxu0 %v5049
      %5115 = vmatprep.subr.mxu0 0.0
      %5116 = vmatpush1.msra.mxu0 %v5048
      %5117 = vmatprep.subr.mxu0 0.0
      %5118 = vmatpush1.msra.mxu0 %v5047
      %5119 = vmatprep.subr.mxu0 0.0
      %5120 = vmatpush1.msra.mxu0 %v5046
      %5121 = vmatprep.subr.mxu0 0.0
      %5122 = vmatpush1.msra.mxu0 %v5045
      %5123 = vmatprep.subr.mxu0 0.0
      %5124 = vmatpush1.msra.mxu0 %v5044
      %5125 = vmatprep.subr.mxu0 0.0
      %5126 = vmatpush1.msra.mxu0 %v5043
      %5127 = vmatprep.subr.mxu0 0.0
      %5128 = vmatpush1.msra.mxu0 %v5042
      %5129 = vmatprep.subr.mxu0 0.0
      %5130 = vmatpush1.msra.mxu0 %v5041
      %5131 = vmatprep.subr.mxu0 0.0
      %5132 = vmatpush1.msra.mxu0 %v5040
      %5133 = vmatprep.subr.mxu0 0.0
      %5134 = vmatpush1.msra.mxu0 %v5039
      %5135 = vmatprep.subr.mxu0 0.0
      %5136 = vmatpush1.msra.mxu0 %v5038
      %5137 = vmatprep.subr.mxu0 0.0
      %5138 = vmatpush1.msra.mxu0 %v5037
      %5139 = vmatprep.subr.mxu0 0.0
      %5140 = vmatpush2.msra.mxu0 0.0
      %5141 = vmatprep.subr.mxu0 0.0
      %5142 = vmatpush2.msra.mxu0 0.0
      %5143 = vmatprep.subr.mxu0 0.0
      %5144 = vmatpush2.msra.mxu0 0.0
      %5145 = vmatprep.subr.mxu0 0.0
      %5146 = vmatpush2.msra.mxu0 0.0
      %5147 = vmatprep.subr.mxu0 0.0
      %5148 = vmatpush2.msra.mxu0 0.0
      %5149 = vmatprep.subr.mxu0 0.0
      %5150 = vmatpush2.msra.mxu0 0.0
      %5151 = vmatprep.subr.mxu0 0.0
      %5152 = vmatpush2.msra.mxu0 0.0
      %5153 = vmatprep.subr.mxu0 0.0
      %5154 = vmatpush2.msra.mxu0 0.0
      %5155 = vmatprep.subr.mxu0 0.0
      %5156 = vmatpush2.msra.mxu0 0.0
      %5157 = vmatprep.subr.mxu0 0.0
      %5158 = vmatpush2.msra.mxu0 0.0
      %5159 = vmatprep.subr.mxu0 0.0
      %5160 = vmatpush2.msra.mxu0 0.0
      %5161 = vmatprep.subr.mxu0 0.0
      %5162 = vmatpush2.msra.mxu0 0.0
      %5163 = vmatprep.subr.mxu0 0.0
      %5164 = vmatpush2.msra.mxu0 %v5056
      %5165 = vmatprep.subr.mxu0 0.0
      %5166 = vmatpush2.msra.mxu0 %v5055
      %5167 = vmatprep.subr.mxu0 0.0
      %5168 = vmatpush2.msra.mxu0 %v5054
      %5169 = vmatprep.subr.mxu0 0.0
      %5170 = vmatpush2.msra.mxu0 %v5053
      %5171 = vmatprep.mubr.f32.mxu0 %v5078
      %5172 = vmatmul.mubr.f32.gmra.mxu0 %v5057
      %v5173 = vpop.f32.mrf.mxu0
      %v5174 = vadd.f32 0.0, %v5173
      %v5175 = vpop.f32.mrf.mxu0
      %5176 = vmatprep.mubr.f32.mxu0 %v5081
      %5177 = vmatmul.mubr.f32.gmra.mxu0 %v5059
      %v5178 = vpop.f32.mrf.mxu0
      %v5179 = vadd.f32 0.0, %v5178
      %v5180 = vpop.f32.mrf.mxu0
      %5181 = vmatprep.mubr.f32.mxu0 %v5084
      %5182 = vmatmul.mubr.f32.gmra.mxu0 %v5061
      %v5183 = vpop.f32.mrf.mxu0
      %v5184 = vadd.f32 0.0, %v5183
      %v5185 = vpop.f32.mrf.mxu0
      %5186 = vmatprep.mubr.f32.mxu0 %v5087
      %5187 = vmatmul.mubr.f32.gmra.mxu0 %v5063
      %v5188 = vpop.f32.mrf.mxu0
      %v5189 = vadd.f32 0.0, %v5188
      %v5190 = vpop.f32.mrf.mxu0
      %5191 = vmatprep.mubr.f32.mxu0 %v5090
      %5192 = vmatmul.mubr.f32.gmra.mxu0 %v5065
      %v5193 = vpop.f32.mrf.mxu0
      %v5194 = vadd.f32 0.0, %v5193
      %v5195 = vpop.f32.mrf.mxu0
      %5196 = vmatprep.mubr.f32.mxu0 %v5093
      %5197 = vmatmul.mubr.f32.gmra.mxu0 %v5067
      %v5198 = vpop.f32.mrf.mxu0
      %v5199 = vadd.f32 0.0, %v5198
      %v5200 = vpop.f32.mrf.mxu0
      %5201 = vmatprep.mubr.f32.mxu0 %v5096
      %5202 = vmatmul.mubr.f32.gmra.mxu0 %v5069
      %v5203 = vpop.f32.mrf.mxu0
      %v5204 = vadd.f32 0.0, %v5203
      %v5205 = vpop.f32.mrf.mxu0
      %5206 = vmatprep.mubr.f32.mxu0 %v5099
      %5207 = vmatmul.mubr.f32.gmra.mxu0 %v5071
      %v5208 = vpop.f32.mrf.mxu0
      %v5209 = vadd.f32 0.0, %v5208
      %v5210 = vpop.f32.mrf.mxu0
      %5211 = vmatprep.mubr.f32.mxu0 %v5102
      %5212 = vmatmul.mubr.f32.gmra.mxu0 %v5073
      %v5213 = vpop.f32.mrf.mxu0
      %v5214 = vadd.f32 0.0, %v5213
      %v5215 = vpop.f32.mrf.mxu0
      %5216 = vmatprep.mubr.f32.mxu0 %v5105
      %5217 = vmatmul.mubr.f32.gmra.mxu0 %v5075
      %v5218 = vpop.f32.mrf.mxu0
      %v5219 = vadd.f32 0.0, %v5218
      %v5220 = vpop.f32.mrf.mxu0
      %5221 = vdwg.mxu0
      %v5222 = vld [vmem:[%s12] sm:$0xff]
      %v5223 = vld [vmem:[%s12 + $0x8] sm:$0xff]
      %v5224 = vld [vmem:[%s12 + $0x10] sm:$0xff]
      %v5225 = vld [vmem:[%s12 + $0x18] sm:$0xff]
      %v5226 = vld [vmem:[%s12 + $0x20] sm:$0xff]
      %v5227 = vld [vmem:[%s12 + $0x28] sm:$0xff]
      %v5228 = vld [vmem:[%s12 + $0x30] sm:$0xff]
      %v5229 = vld [vmem:[%s12 + $0x38] sm:$0xff]
      %v5230 = vld [vmem:[%s12 + $0x40] sm:$0xff]
      %v5231 = vld [vmem:[%s12 + $0x48] sm:$0xff]
      %v5232 = vld [vmem:[%s12 + $0x50] sm:$0xff]
      %v5233 = vld [vmem:[%s12 + $0x58] sm:$0xff]
      %v5234 = vld [vmem:[%s12 + $0x60] sm:$0xff]
      %v5235 = vld [vmem:[%s12 + $0x68] sm:$0xff]
      %v5236 = vld [vmem:[%s12 + $0x70] sm:$0xff]
      %v5237 = vld [vmem:[%s12 + $0x78] sm:$0xff]
      %v5238 = vld [vmem:[%s12 + $0x80] sm:$0xff]
      %v5239 = vld [vmem:[%s12 + $0x88] sm:$0xff]
      %v5240 = vld [vmem:[%s12 + $0x90] sm:$0xff]
      %v5241 = vld [vmem:[%s12 + $0x98] sm:$0xff]
      %v5243 = vsel %vm653, %v5223, 0
      %v5246 = vsel %vm653, %v5225, 0
      %v5249 = vsel %vm653, %v5227, 0
      %v5252 = vsel %vm653, %v5229, 0
      %v5255 = vsel %vm653, %v5231, 0
      %v5258 = vsel %vm653, %v5233, 0
      %v5261 = vsel %vm653, %v5235, 0
      %v5264 = vsel %vm653, %v5237, 0
      %v5267 = vsel %vm653, %v5239, 0
      %v5270 = vsel %vm653, %v5241, 0
      %5272 = vmatprep.subr.mxu0 0.0
      %5273 = vmatpush1.msra.mxu0 %v5052
      %5274 = vmatprep.subr.mxu0 0.0
      %5275 = vmatpush1.msra.mxu0 %v5051
      %5276 = vmatprep.subr.mxu0 0.0
      %5277 = vmatpush1.msra.mxu0 %v5050
      %5278 = vmatprep.subr.mxu0 0.0
      %5279 = vmatpush1.msra.mxu0 %v5049
      %5280 = vmatprep.subr.mxu0 0.0
      %5281 = vmatpush1.msra.mxu0 %v5048
      %5282 = vmatprep.subr.mxu0 0.0
      %5283 = vmatpush1.msra.mxu0 %v5047
      %5284 = vmatprep.subr.mxu0 0.0
      %5285 = vmatpush1.msra.mxu0 %v5046
      %5286 = vmatprep.subr.mxu0 0.0
      %5287 = vmatpush1.msra.mxu0 %v5045
      %5288 = vmatprep.subr.mxu0 0.0
      %5289 = vmatpush1.msra.mxu0 %v5044
      %5290 = vmatprep.subr.mxu0 0.0
      %5291 = vmatpush1.msra.mxu0 %v5043
      %5292 = vmatprep.subr.mxu0 0.0
      %5293 = vmatpush1.msra.mxu0 %v5042
      %5294 = vmatprep.subr.mxu0 0.0
      %5295 = vmatpush1.msra.mxu0 %v5041
      %5296 = vmatprep.subr.mxu0 0.0
      %5297 = vmatpush1.msra.mxu0 %v5040
      %5298 = vmatprep.subr.mxu0 0.0
      %5299 = vmatpush1.msra.mxu0 %v5039
      %5300 = vmatprep.subr.mxu0 0.0
      %5301 = vmatpush1.msra.mxu0 %v5038
      %5302 = vmatprep.subr.mxu0 0.0
      %5303 = vmatpush1.msra.mxu0 %v5037
      %5304 = vmatprep.subr.mxu0 0.0
      %5305 = vmatpush2.msra.mxu0 0.0
      %5306 = vmatprep.subr.mxu0 0.0
      %5307 = vmatpush2.msra.mxu0 0.0
      %5308 = vmatprep.subr.mxu0 0.0
      %5309 = vmatpush2.msra.mxu0 0.0
      %5310 = vmatprep.subr.mxu0 0.0
      %5311 = vmatpush2.msra.mxu0 0.0
      %5312 = vmatprep.subr.mxu0 0.0
      %5313 = vmatpush2.msra.mxu0 0.0
      %5314 = vmatprep.subr.mxu0 0.0
      %5315 = vmatpush2.msra.mxu0 0.0
      %5316 = vmatprep.subr.mxu0 0.0
      %5317 = vmatpush2.msra.mxu0 0.0
      %5318 = vmatprep.subr.mxu0 0.0
      %5319 = vmatpush2.msra.mxu0 0.0
      %5320 = vmatprep.subr.mxu0 0.0
      %5321 = vmatpush2.msra.mxu0 0.0
      %5322 = vmatprep.subr.mxu0 0.0
      %5323 = vmatpush2.msra.mxu0 0.0
      %5324 = vmatprep.subr.mxu0 0.0
      %5325 = vmatpush2.msra.mxu0 0.0
      %5326 = vmatprep.subr.mxu0 0.0
      %5327 = vmatpush2.msra.mxu0 0.0
      %5328 = vmatprep.subr.mxu0 0.0
      %5329 = vmatpush2.msra.mxu0 %v5056
      %5330 = vmatprep.subr.mxu0 0.0
      %5331 = vmatpush2.msra.mxu0 %v5055
      %5332 = vmatprep.subr.mxu0 0.0
      %5333 = vmatpush2.msra.mxu0 %v5054
      %5334 = vmatprep.subr.mxu0 0.0
      %5335 = vmatpush2.msra.mxu0 %v5053
      %5336 = vmatprep.mubr.f32.mxu0 %v5243
      %5337 = vmatmul.mubr.f32.gmra.mxu0 %v5222
      %v5338 = vpop.f32.mrf.mxu0
      %v5339 = vadd.f32 0.0, %v5338
      %v5340 = vpop.f32.mrf.mxu0
      %5341 = vmatprep.mubr.f32.mxu0 %v5246
      %5342 = vmatmul.mubr.f32.gmra.mxu0 %v5224
      %v5343 = vpop.f32.mrf.mxu0
      %v5344 = vadd.f32 0.0, %v5343
      %v5345 = vpop.f32.mrf.mxu0
      %5346 = vmatprep.mubr.f32.mxu0 %v5249
      %5347 = vmatmul.mubr.f32.gmra.mxu0 %v5226
      %v5348 = vpop.f32.mrf.mxu0
      %v5349 = vadd.f32 0.0, %v5348
      %v5350 = vpop.f32.mrf.mxu0
      %5351 = vmatprep.mubr.f32.mxu0 %v5252
      %5352 = vmatmul.mubr.f32.gmra.mxu0 %v5228
      %v5353 = vpop.f32.mrf.mxu0
      %v5354 = vadd.f32 0.0, %v5353
      %v5355 = vpop.f32.mrf.mxu0
      %5356 = vmatprep.mubr.f32.mxu0 %v5255
      %5357 = vmatmul.mubr.f32.gmra.mxu0 %v5230
      %v5358 = vpop.f32.mrf.mxu0
      %v5359 = vadd.f32 0.0, %v5358
      %v5360 = vpop.f32.mrf.mxu0
      %5361 = vmatprep.mubr.f32.mxu0 %v5258
      %5362 = vmatmul.mubr.f32.gmra.mxu0 %v5232
      %v5363 = vpop.f32.mrf.mxu0
      %v5364 = vadd.f32 0.0, %v5363
      %v5365 = vpop.f32.mrf.mxu0
      %5366 = vmatprep.mubr.f32.mxu0 %v5261
      %5367 = vmatmul.mubr.f32.gmra.mxu0 %v5234
      %v5368 = vpop.f32.mrf.mxu0
      %v5369 = vadd.f32 0.0, %v5368
      %v5370 = vpop.f32.mrf.mxu0
      %5371 = vmatprep.mubr.f32.mxu0 %v5264
      %5372 = vmatmul.mubr.f32.gmra.mxu0 %v5236
      %v5373 = vpop.f32.mrf.mxu0
      %v5374 = vadd.f32 0.0, %v5373
      %v5375 = vpop.f32.mrf.mxu0
      %5376 = vmatprep.mubr.f32.mxu0 %v5267
      %5377 = vmatmul.mubr.f32.gmra.mxu0 %v5238
      %v5378 = vpop.f32.mrf.mxu0
      %v5379 = vadd.f32 0.0, %v5378
      %v5380 = vpop.f32.mrf.mxu0
      %5381 = vmatprep.mubr.f32.mxu0 %v5270
      %5382 = vmatmul.mubr.f32.gmra.mxu0 %v5240
      %v5383 = vpop.f32.mrf.mxu0
      %v5384 = vadd.f32 0.0, %v5383
      %v5385 = vpop.f32.mrf.mxu0
      %5386 = vdwg.mxu0
      %v5387 = vmax.f32 %v5174, %v5339
      %v5388 = vmax.f32 %v5179, %v5344
      %v5389 = vmax.f32 %v5184, %v5349
      %v5390 = vmax.f32 %v5189, %v5354
      %v5391 = vmax.f32 %v5194, %v5359
      %v5392 = vmax.f32 %v5199, %v5364
      %v5393 = vmax.f32 %v5204, %v5369
      %v5394 = vmax.f32 %v5209, %v5374
      %v5395 = vmax.f32 %v5214, %v5379
      %v5396 = vmax.f32 %v5219, %v5384
      %vm5397 = vcmask 39936
      %5398 = vst.msk [vmem:[#allocation3] sm:$0xff] %vm5397, %v5387
      %5399 = vst.msk [vmem:[#allocation3 + $0x8] sm:$0xff] %vm5397, %v5388
      %5400 = vst.msk [vmem:[#allocation3 + $0x10] sm:$0xff] %vm5397, %v5389
      %5401 = vst.msk [vmem:[#allocation3 + $0x18] sm:$0xff] %vm5397, %v5390
      %5402 = vst.msk [vmem:[#allocation3 + $0x20] sm:$0xff] %vm5397, %v5391
      %5403 = vst.msk [vmem:[#allocation3 + $0x28] sm:$0xff] %vm5397, %v5392
      %5404 = vst.msk [vmem:[#allocation3 + $0x30] sm:$0xff] %vm5397, %v5393
      %5405 = vst.msk [vmem:[#allocation3 + $0x38] sm:$0xff] %vm5397, %v5394
      %5406 = vst.msk [vmem:[#allocation3 + $0x40] sm:$0xff] %vm5397, %v5395
      %5407 = vst.msk [vmem:[#allocation3 + $0x48] sm:$0xff] %vm5397, %v5396
      %v5408 = vld [vmem:[%s14] sm:$0xff]
      %v5409 = vld [vmem:[%s14 + $0x8] sm:$0xff]
      %v5410 = vld [vmem:[%s14 + $0x10] sm:$0xff]
      %v5411 = vld [vmem:[%s14 + $0x18] sm:$0xff]
      %v5412 = vld [vmem:[%s14 + $0x20] sm:$0xff]
      %v5413 = vld [vmem:[%s14 + $0x28] sm:$0xff]
      %v5414 = vld [vmem:[%s14 + $0x30] sm:$0xff]
      %v5415 = vld [vmem:[%s14 + $0x38] sm:$0xff]
      %v5416 = vld [vmem:[%s14 + $0x40] sm:$0xff]
      %v5417 = vld [vmem:[%s14 + $0x48] sm:$0xff]
      %v5418 = vld [vmem:[%s14 + $0x50] sm:$0xff]
      %v5419 = vld [vmem:[%s14 + $0x58] sm:$0xff]
      %v5420 = vld [vmem:[%s14 + $0x60] sm:$0xff]
      %v5421 = vld [vmem:[%s14 + $0x68] sm:$0xff]
      %v5422 = vld [vmem:[%s14 + $0x70] sm:$0xff]
      %v5423 = vld [vmem:[%s13] sm:$0xff]
      %v5424 = vld [vmem:[%s13 + $0x8] sm:$0xff]
      %v5425 = vld [vmem:[%s13 + $0x10] sm:$0xff]
      %v5426 = vld [vmem:[%s13 + $0x18] sm:$0xff]
      %v5427 = vld [vmem:[%s13 + $0x20] sm:$0xff]
      %v5428 = vld [vmem:[%s13 + $0x28] sm:$0xff]
      %v5429 = vld [vmem:[%s13 + $0x30] sm:$0xff]
      %v5430 = vld [vmem:[%s13 + $0x38] sm:$0xff]
      %v5431 = vld [vmem:[%s13 + $0x40] sm:$0xff]
      %v5432 = vld [vmem:[%s13 + $0x48] sm:$0xff]
      %v5433 = vld [vmem:[%s13 + $0x50] sm:$0xff]
      %v5434 = vld [vmem:[%s13 + $0x58] sm:$0xff]
      %v5435 = vld [vmem:[%s13 + $0x60] sm:$0xff]
      %v5436 = vld [vmem:[%s13 + $0x68] sm:$0xff]
      %v5437 = vld [vmem:[%s13 + $0x70] sm:$0xff]
      %v5438 = vld [vmem:[#allocation3] sm:$0xff]
      %v5439 = vld [vmem:[#allocation3 + $0x8] sm:$0xff]
      %v5440 = vld [vmem:[#allocation3 + $0x10] sm:$0xff]
      %v5441 = vld [vmem:[#allocation3 + $0x18] sm:$0xff]
      %v5442 = vld [vmem:[#allocation3 + $0x20] sm:$0xff]
      %v5443 = vld [vmem:[#allocation3 + $0x28] sm:$0xff]
      %v5444 = vld [vmem:[#allocation3 + $0x30] sm:$0xff]
      %v5445 = vld [vmem:[#allocation3 + $0x38] sm:$0xff]
      %v5446 = vld [vmem:[#allocation3 + $0x40] sm:$0xff]
      %v5447 = vld [vmem:[#allocation3 + $0x48] sm:$0xff]
      %vm5448 = vcmask 654336
      %v5450 = vsel %vm5448, %v5423, 0
      %v5453 = vsel %vm5448, %v5424, 0
      %v5456 = vsel %vm5448, %v5425, 0
      %v5459 = vsel %vm5448, %v5426, 0
      %v5462 = vsel %vm5448, %v5427, 0
      %v5465 = vsel %vm5448, %v5428, 0
      %v5468 = vsel %vm5448, %v5429, 0
      %v5471 = vsel %vm5448, %v5430, 0
      %v5474 = vsel %vm5448, %v5431, 0
      %v5477 = vsel %vm5448, %v5432, 0
      %v5480 = vsel %vm5448, %v5433, 0
      %v5483 = vsel %vm5448, %v5434, 0
      %v5486 = vsel %vm5448, %v5435, 0
      %v5489 = vsel %vm5448, %v5436, 0
      %v5492 = vsel %vm5448, %v5437, 0
      %5494 = vmatprep.subr.mxu0 0.0
      %5495 = vmatpush1.msra.mxu0 0.0
      %5496 = vmatprep.subr.mxu0 0.0
      %5497 = vmatpush1.msra.mxu0 0.0
      %5498 = vmatprep.subr.mxu0 0.0
      %5499 = vmatpush1.msra.mxu0 0.0
      %5500 = vmatprep.subr.mxu0 0.0
      %5501 = vmatpush1.msra.mxu0 0.0
      %5502 = vmatprep.subr.mxu0 0.0
      %5503 = vmatpush1.msra.mxu0 0.0
      %5504 = vmatprep.subr.mxu0 0.0
      %5505 = vmatpush1.msra.mxu0 0.0
      %5506 = vmatprep.subr.mxu0 0.0
      %5507 = vmatpush1.msra.mxu0 %v5447
      %5508 = vmatprep.subr.mxu0 0.0
      %5509 = vmatpush1.msra.mxu0 %v5446
      %5510 = vmatprep.subr.mxu0 0.0
      %5511 = vmatpush1.msra.mxu0 %v5445
      %5512 = vmatprep.subr.mxu0 0.0
      %5513 = vmatpush1.msra.mxu0 %v5444
      %5514 = vmatprep.subr.mxu0 0.0
      %5515 = vmatpush1.msra.mxu0 %v5443
      %5516 = vmatprep.subr.mxu0 0.0
      %5517 = vmatpush1.msra.mxu0 %v5442
      %5518 = vmatprep.subr.mxu0 0.0
      %5519 = vmatpush1.msra.mxu0 %v5441
      %5520 = vmatprep.subr.mxu0 0.0
      %5521 = vmatpush1.msra.mxu0 %v5440
      %5522 = vmatprep.subr.mxu0 0.0
      %5523 = vmatpush1.msra.mxu0 %v5439
      %5524 = vmatprep.subr.mxu0 0.0
      %5525 = vmatpush1.msra.mxu0 %v5438
      %5526 = vmatprep.subr.mxu0 0.0
      %5527 = vmatpush2.msra.mxu0 0.0
      %5528 = vmatprep.subr.mxu0 0.0
      %5529 = vmatpush2.msra.mxu0 0.0
      %5530 = vmatprep.subr.mxu0 0.0
      %5531 = vmatpush2.msra.mxu0 0.0
      %5532 = vmatprep.subr.mxu0 0.0
      %5533 = vmatpush2.msra.mxu0 0.0
      %5534 = vmatprep.subr.mxu0 0.0
      %5535 = vmatpush2.msra.mxu0 0.0
      %5536 = vmatprep.subr.mxu0 0.0
      %5537 = vmatpush2.msra.mxu0 0.0
      %5538 = vmatprep.subr.mxu0 0.0
      %5539 = vmatpush2.msra.mxu0 0.0
      %5540 = vmatprep.subr.mxu0 0.0
      %5541 = vmatpush2.msra.mxu0 0.0
      %5542 = vmatprep.subr.mxu0 0.0
      %5543 = vmatpush2.msra.mxu0 0.0
      %5544 = vmatprep.subr.mxu0 0.0
      %5545 = vmatpush2.msra.mxu0 0.0
      %5546 = vmatprep.subr.mxu0 0.0
      %5547 = vmatpush2.msra.mxu0 0.0
      %5548 = vmatprep.subr.mxu0 0.0
      %5549 = vmatpush2.msra.mxu0 0.0
      %5550 = vmatprep.subr.mxu0 0.0
      %5551 = vmatpush2.msra.mxu0 0.0
      %5552 = vmatprep.subr.mxu0 0.0
      %5553 = vmatpush2.msra.mxu0 0.0
      %5554 = vmatprep.subr.mxu0 0.0
      %5555 = vmatpush2.msra.mxu0 0.0
      %5556 = vmatprep.subr.mxu0 0.0
      %5557 = vmatpush2.msra.mxu0 0.0
      %5558 = vmatprep.mubr.f32.mxu0 0.0
      %5559 = vmatmul.mubr.f32.gmra.mxu0 %v5450
      %v5560 = vpop.f32.mrf.mxu0
      %v5561 = vadd.f32 0.0, %v5560
      %v5562 = vpop.f32.mrf.mxu0
      %5563 = vmatprep.mubr.f32.mxu0 0.0
      %5564 = vmatmul.mubr.f32.gmra.mxu0 %v5453
      %v5565 = vpop.f32.mrf.mxu0
      %v5566 = vadd.f32 0.0, %v5565
      %v5567 = vpop.f32.mrf.mxu0
      %5568 = vmatprep.mubr.f32.mxu0 0.0
      %5569 = vmatmul.mubr.f32.gmra.mxu0 %v5456
      %v5570 = vpop.f32.mrf.mxu0
      %v5571 = vadd.f32 0.0, %v5570
      %v5572 = vpop.f32.mrf.mxu0
      %5573 = vmatprep.mubr.f32.mxu0 0.0
      %5574 = vmatmul.mubr.f32.gmra.mxu0 %v5459
      %v5575 = vpop.f32.mrf.mxu0
      %v5576 = vadd.f32 0.0, %v5575
      %v5577 = vpop.f32.mrf.mxu0
      %5578 = vmatprep.mubr.f32.mxu0 0.0
      %5579 = vmatmul.mubr.f32.gmra.mxu0 %v5462
      %v5580 = vpop.f32.mrf.mxu0
      %v5581 = vadd.f32 0.0, %v5580
      %v5582 = vpop.f32.mrf.mxu0
      %5583 = vmatprep.mubr.f32.mxu0 0.0
      %5584 = vmatmul.mubr.f32.gmra.mxu0 %v5465
      %v5585 = vpop.f32.mrf.mxu0
      %v5586 = vadd.f32 0.0, %v5585
      %v5587 = vpop.f32.mrf.mxu0
      %5588 = vmatprep.mubr.f32.mxu0 0.0
      %5589 = vmatmul.mubr.f32.gmra.mxu0 %v5468
      %v5590 = vpop.f32.mrf.mxu0
      %v5591 = vadd.f32 0.0, %v5590
      %v5592 = vpop.f32.mrf.mxu0
      %5593 = vmatprep.mubr.f32.mxu0 0.0
      %5594 = vmatmul.mubr.f32.gmra.mxu0 %v5471
      %v5595 = vpop.f32.mrf.mxu0
      %v5596 = vadd.f32 0.0, %v5595
      %v5597 = vpop.f32.mrf.mxu0
      %5598 = vmatprep.mubr.f32.mxu0 0.0
      %5599 = vmatmul.mubr.f32.gmra.mxu0 %v5474
      %v5600 = vpop.f32.mrf.mxu0
      %v5601 = vadd.f32 0.0, %v5600
      %v5602 = vpop.f32.mrf.mxu0
      %5603 = vmatprep.mubr.f32.mxu0 0.0
      %5604 = vmatmul.mubr.f32.gmra.mxu0 %v5477
      %v5605 = vpop.f32.mrf.mxu0
      %v5606 = vadd.f32 0.0, %v5605
      %v5607 = vpop.f32.mrf.mxu0
      %5608 = vmatprep.mubr.f32.mxu0 0.0
      %5609 = vmatmul.mubr.f32.gmra.mxu0 %v5480
      %v5610 = vpop.f32.mrf.mxu0
      %v5611 = vadd.f32 0.0, %v5610
      %v5612 = vpop.f32.mrf.mxu0
      %5613 = vmatprep.mubr.f32.mxu0 0.0
      %5614 = vmatmul.mubr.f32.gmra.mxu0 %v5483
      %v5615 = vpop.f32.mrf.mxu0
      %v5616 = vadd.f32 0.0, %v5615
      %v5617 = vpop.f32.mrf.mxu0
      %5618 = vmatprep.mubr.f32.mxu0 0.0
      %5619 = vmatmul.mubr.f32.gmra.mxu0 %v5486
      %v5620 = vpop.f32.mrf.mxu0
      %v5621 = vadd.f32 0.0, %v5620
      %v5622 = vpop.f32.mrf.mxu0
      %5623 = vmatprep.mubr.f32.mxu0 0.0
      %5624 = vmatmul.mubr.f32.gmra.mxu0 %v5489
      %v5625 = vpop.f32.mrf.mxu0
      %v5626 = vadd.f32 0.0, %v5625
      %v5627 = vpop.f32.mrf.mxu0
      %5628 = vmatprep.mubr.f32.mxu0 0.0
      %5629 = vmatmul.mubr.f32.gmra.mxu0 %v5492
      %v5630 = vpop.f32.mrf.mxu0
      %v5631 = vadd.f32 0.0, %v5630
      %v5632 = vpop.f32.mrf.mxu0
      %5633 = vdwg.mxu0
      %v5634 = vadd.f32 %v5408, %v5561
      %v5635 = vadd.f32 %v5409, %v5566
      %v5636 = vadd.f32 %v5410, %v5571
      %v5637 = vadd.f32 %v5411, %v5576
      %v5638 = vadd.f32 %v5412, %v5581
      %v5639 = vadd.f32 %v5413, %v5586
      %v5640 = vadd.f32 %v5414, %v5591
      %v5641 = vadd.f32 %v5415, %v5596
      %v5642 = vadd.f32 %v5416, %v5601
      %v5643 = vadd.f32 %v5417, %v5606
      %v5644 = vadd.f32 %v5418, %v5611
      %v5645 = vadd.f32 %v5419, %v5616
      %v5646 = vadd.f32 %v5420, %v5621
      %v5647 = vadd.f32 %v5421, %v5626
      %v5648 = vadd.f32 %v5422, %v5631
      %s5649 = scalar_lea.vmem %s13, 120
      %v5650 = vld [vmem:[%s5649] sm:$0xff]
      %v5651 = vld [vmem:[%s5649 + $0x8] sm:$0xff]
      %v5652 = vld [vmem:[%s5649 + $0x10] sm:$0xff]
      %v5653 = vld [vmem:[%s5649 + $0x18] sm:$0xff]
      %v5654 = vld [vmem:[%s5649 + $0x20] sm:$0xff]
      %v5655 = vld [vmem:[%s5649 + $0x28] sm:$0xff]
      %v5656 = vld [vmem:[%s5649 + $0x30] sm:$0xff]
      %v5657 = vld [vmem:[%s5649 + $0x38] sm:$0xff]
      %v5658 = vld [vmem:[%s5649 + $0x40] sm:$0xff]
      %v5659 = vld [vmem:[%s5649 + $0x48] sm:$0xff]
      %v5660 = vld [vmem:[%s5649 + $0x50] sm:$0xff]
      %v5661 = vld [vmem:[%s5649 + $0x58] sm:$0xff]
      %v5662 = vld [vmem:[%s5649 + $0x60] sm:$0xff]
      %v5663 = vld [vmem:[%s5649 + $0x68] sm:$0xff]
      %v5664 = vld [vmem:[%s5649 + $0x70] sm:$0xff]
      %5675 = vrot.lane.b32.xlu0 %v5438, 127
      %v5676 = vpop.permute.xlu0 %5675
      %5677 = vrot.lane.b32.xlu0 %v5439, 127
      %v5678 = vpop.permute.xlu0 %5677
      %5679 = vrot.lane.b32.xlu0 %v5440, 127
      %v5680 = vpop.permute.xlu0 %5679
      %5681 = vrot.lane.b32.xlu0 %v5441, 127
      %v5682 = vpop.permute.xlu0 %5681
      %5683 = vrot.lane.b32.xlu0 %v5442, 127
      %v5684 = vpop.permute.xlu0 %5683
      %5685 = vrot.lane.b32.xlu0 %v5443, 127
      %v5686 = vpop.permute.xlu0 %5685
      %5687 = vrot.lane.b32.xlu0 %v5444, 127
      %v5688 = vpop.permute.xlu0 %5687
      %5689 = vrot.lane.b32.xlu0 %v5445, 127
      %v5690 = vpop.permute.xlu0 %5689
      %5691 = vrot.lane.b32.xlu0 %v5446, 127
      %v5692 = vpop.permute.xlu0 %5691
      %5693 = vrot.lane.b32.xlu0 %v5447, 127
      %v5694 = vpop.permute.xlu0 %5693
      %v5706 = vsel %vm5448, %v5650, 0
      %v5709 = vsel %vm5448, %v5651, 0
      %v5712 = vsel %vm5448, %v5652, 0
      %v5715 = vsel %vm5448, %v5653, 0
      %v5718 = vsel %vm5448, %v5654, 0
      %v5721 = vsel %vm5448, %v5655, 0
      %v5724 = vsel %vm5448, %v5656, 0
      %v5727 = vsel %vm5448, %v5657, 0
      %v5730 = vsel %vm5448, %v5658, 0
      %v5733 = vsel %vm5448, %v5659, 0
      %v5736 = vsel %vm5448, %v5660, 0
      %v5739 = vsel %vm5448, %v5661, 0
      %v5742 = vsel %vm5448, %v5662, 0
      %v5745 = vsel %vm5448, %v5663, 0
      %v5748 = vsel %vm5448, %v5664, 0
      %5750 = vmatprep.subr.mxu0 0.0
      %5751 = vmatpush1.msra.mxu0 0.0
      %5752 = vmatprep.subr.mxu0 0.0
      %5753 = vmatpush1.msra.mxu0 0.0
      %5754 = vmatprep.subr.mxu0 0.0
      %5755 = vmatpush1.msra.mxu0 0.0
      %5756 = vmatprep.subr.mxu0 0.0
      %5757 = vmatpush1.msra.mxu0 0.0
      %5758 = vmatprep.subr.mxu0 0.0
      %5759 = vmatpush1.msra.mxu0 0.0
      %5760 = vmatprep.subr.mxu0 0.0
      %5761 = vmatpush1.msra.mxu0 0.0
      %5762 = vmatprep.subr.mxu0 0.0
      %5763 = vmatpush1.msra.mxu0 %v5694
      %5764 = vmatprep.subr.mxu0 0.0
      %5765 = vmatpush1.msra.mxu0 %v5692
      %5766 = vmatprep.subr.mxu0 0.0
      %5767 = vmatpush1.msra.mxu0 %v5690
      %5768 = vmatprep.subr.mxu0 0.0
      %5769 = vmatpush1.msra.mxu0 %v5688
      %5770 = vmatprep.subr.mxu0 0.0
      %5771 = vmatpush1.msra.mxu0 %v5686
      %5772 = vmatprep.subr.mxu0 0.0
      %5773 = vmatpush1.msra.mxu0 %v5684
      %5774 = vmatprep.subr.mxu0 0.0
      %5775 = vmatpush1.msra.mxu0 %v5682
      %5776 = vmatprep.subr.mxu0 0.0
      %5777 = vmatpush1.msra.mxu0 %v5680
      %5778 = vmatprep.subr.mxu0 0.0
      %5779 = vmatpush1.msra.mxu0 %v5678
      %5780 = vmatprep.subr.mxu0 0.0
      %5781 = vmatpush1.msra.mxu0 %v5676
      %5782 = vmatprep.subr.mxu0 0.0
      %5783 = vmatpush2.msra.mxu0 0.0
      %5784 = vmatprep.subr.mxu0 0.0
      %5785 = vmatpush2.msra.mxu0 0.0
      %5786 = vmatprep.subr.mxu0 0.0
      %5787 = vmatpush2.msra.mxu0 0.0
      %5788 = vmatprep.subr.mxu0 0.0
      %5789 = vmatpush2.msra.mxu0 0.0
      %5790 = vmatprep.subr.mxu0 0.0
      %5791 = vmatpush2.msra.mxu0 0.0
      %5792 = vmatprep.subr.mxu0 0.0
      %5793 = vmatpush2.msra.mxu0 0.0
      %5794 = vmatprep.subr.mxu0 0.0
      %5795 = vmatpush2.msra.mxu0 0.0
      %5796 = vmatprep.subr.mxu0 0.0
      %5797 = vmatpush2.msra.mxu0 0.0
      %5798 = vmatprep.subr.mxu0 0.0
      %5799 = vmatpush2.msra.mxu0 0.0
      %5800 = vmatprep.subr.mxu0 0.0
      %5801 = vmatpush2.msra.mxu0 0.0
      %5802 = vmatprep.subr.mxu0 0.0
      %5803 = vmatpush2.msra.mxu0 0.0
      %5804 = vmatprep.subr.mxu0 0.0
      %5805 = vmatpush2.msra.mxu0 0.0
      %5806 = vmatprep.subr.mxu0 0.0
      %5807 = vmatpush2.msra.mxu0 0.0
      %5808 = vmatprep.subr.mxu0 0.0
      %5809 = vmatpush2.msra.mxu0 0.0
      %5810 = vmatprep.subr.mxu0 0.0
      %5811 = vmatpush2.msra.mxu0 0.0
      %5812 = vmatprep.subr.mxu0 0.0
      %5813 = vmatpush2.msra.mxu0 0.0
      %5814 = vmatprep.mubr.f32.mxu0 0.0
      %5815 = vmatmul.mubr.f32.gmra.mxu0 %v5706
      %v5816 = vpop.f32.mrf.mxu0
      %v5817 = vadd.f32 0.0, %v5816
      %v5818 = vpop.f32.mrf.mxu0
      %5819 = vmatprep.mubr.f32.mxu0 0.0
      %5820 = vmatmul.mubr.f32.gmra.mxu0 %v5709
      %v5821 = vpop.f32.mrf.mxu0
      %v5822 = vadd.f32 0.0, %v5821
      %v5823 = vpop.f32.mrf.mxu0
      %5824 = vmatprep.mubr.f32.mxu0 0.0
      %5825 = vmatmul.mubr.f32.gmra.mxu0 %v5712
      %v5826 = vpop.f32.mrf.mxu0
      %v5827 = vadd.f32 0.0, %v5826
      %v5828 = vpop.f32.mrf.mxu0
      %5829 = vmatprep.mubr.f32.mxu0 0.0
      %5830 = vmatmul.mubr.f32.gmra.mxu0 %v5715
      %v5831 = vpop.f32.mrf.mxu0
      %v5832 = vadd.f32 0.0, %v5831
      %v5833 = vpop.f32.mrf.mxu0
      %5834 = vmatprep.mubr.f32.mxu0 0.0
      %5835 = vmatmul.mubr.f32.gmra.mxu0 %v5718
      %v5836 = vpop.f32.mrf.mxu0
      %v5837 = vadd.f32 0.0, %v5836
      %v5838 = vpop.f32.mrf.mxu0
      %5839 = vmatprep.mubr.f32.mxu0 0.0
      %5840 = vmatmul.mubr.f32.gmra.mxu0 %v5721
      %v5841 = vpop.f32.mrf.mxu0
      %v5842 = vadd.f32 0.0, %v5841
      %v5843 = vpop.f32.mrf.mxu0
      %5844 = vmatprep.mubr.f32.mxu0 0.0
      %5845 = vmatmul.mubr.f32.gmra.mxu0 %v5724
      %v5846 = vpop.f32.mrf.mxu0
      %v5847 = vadd.f32 0.0, %v5846
      %v5848 = vpop.f32.mrf.mxu0
      %5849 = vmatprep.mubr.f32.mxu0 0.0
      %5850 = vmatmul.mubr.f32.gmra.mxu0 %v5727
      %v5851 = vpop.f32.mrf.mxu0
      %v5852 = vadd.f32 0.0, %v5851
      %v5853 = vpop.f32.mrf.mxu0
      %5854 = vmatprep.mubr.f32.mxu0 0.0
      %5855 = vmatmul.mubr.f32.gmra.mxu0 %v5730
      %v5856 = vpop.f32.mrf.mxu0
      %v5857 = vadd.f32 0.0, %v5856
      %v5858 = vpop.f32.mrf.mxu0
      %5859 = vmatprep.mubr.f32.mxu0 0.0
      %5860 = vmatmul.mubr.f32.gmra.mxu0 %v5733
      %v5861 = vpop.f32.mrf.mxu0
      %v5862 = vadd.f32 0.0, %v5861
      %v5863 = vpop.f32.mrf.mxu0
      %5864 = vmatprep.mubr.f32.mxu0 0.0
      %5865 = vmatmul.mubr.f32.gmra.mxu0 %v5736
      %v5866 = vpop.f32.mrf.mxu0
      %v5867 = vadd.f32 0.0, %v5866
      %v5868 = vpop.f32.mrf.mxu0
      %5869 = vmatprep.mubr.f32.mxu0 0.0
      %5870 = vmatmul.mubr.f32.gmra.mxu0 %v5739
      %v5871 = vpop.f32.mrf.mxu0
      %v5872 = vadd.f32 0.0, %v5871
      %v5873 = vpop.f32.mrf.mxu0
      %5874 = vmatprep.mubr.f32.mxu0 0.0
      %5875 = vmatmul.mubr.f32.gmra.mxu0 %v5742
      %v5876 = vpop.f32.mrf.mxu0
      %v5877 = vadd.f32 0.0, %v5876
      %v5878 = vpop.f32.mrf.mxu0
      %5879 = vmatprep.mubr.f32.mxu0 0.0
      %5880 = vmatmul.mubr.f32.gmra.mxu0 %v5745
      %v5881 = vpop.f32.mrf.mxu0
      %v5882 = vadd.f32 0.0, %v5881
      %v5883 = vpop.f32.mrf.mxu0
      %5884 = vmatprep.mubr.f32.mxu0 0.0
      %5885 = vmatmul.mubr.f32.gmra.mxu0 %v5748
      %v5886 = vpop.f32.mrf.mxu0
      %v5887 = vadd.f32 0.0, %v5886
      %v5888 = vpop.f32.mrf.mxu0
      %5889 = vdwg.mxu0
      %v5890 = vadd.f32 %v5634, %v5817
      %v5891 = vadd.f32 %v5635, %v5822
      %v5892 = vadd.f32 %v5636, %v5827
      %v5893 = vadd.f32 %v5637, %v5832
      %v5894 = vadd.f32 %v5638, %v5837
      %v5895 = vadd.f32 %v5639, %v5842
      %v5896 = vadd.f32 %v5640, %v5847
      %v5897 = vadd.f32 %v5641, %v5852
      %v5898 = vadd.f32 %v5642, %v5857
      %v5899 = vadd.f32 %v5643, %v5862
      %v5900 = vadd.f32 %v5644, %v5867
      %v5901 = vadd.f32 %v5645, %v5872
      %v5902 = vadd.f32 %v5646, %v5877
      %v5903 = vadd.f32 %v5647, %v5882
      %v5904 = vadd.f32 %v5648, %v5887
      %s5905 = scalar_lea.vmem %s13, 240
      %v5906 = vld [vmem:[%s5905] sm:$0xff]
      %v5907 = vld [vmem:[%s5905 + $0x8] sm:$0xff]
      %v5908 = vld [vmem:[%s5905 + $0x10] sm:$0xff]
      %v5909 = vld [vmem:[%s5905 + $0x18] sm:$0xff]
      %v5910 = vld [vmem:[%s5905 + $0x20] sm:$0xff]
      %v5911 = vld [vmem:[%s5905 + $0x28] sm:$0xff]
      %v5912 = vld [vmem:[%s5905 + $0x30] sm:$0xff]
      %v5913 = vld [vmem:[%s5905 + $0x38] sm:$0xff]
      %v5914 = vld [vmem:[%s5905 + $0x40] sm:$0xff]
      %v5915 = vld [vmem:[%s5905 + $0x48] sm:$0xff]
      %v5916 = vld [vmem:[%s5905 + $0x50] sm:$0xff]
      %v5917 = vld [vmem:[%s5905 + $0x58] sm:$0xff]
      %v5918 = vld [vmem:[%s5905 + $0x60] sm:$0xff]
      %v5919 = vld [vmem:[%s5905 + $0x68] sm:$0xff]
      %v5920 = vld [vmem:[%s5905 + $0x70] sm:$0xff]
      %5921 = vrot.lane.b32.xlu0 %v5438, 126
      %v5922 = vpop.permute.xlu0 %5921
      %5923 = vrot.lane.b32.xlu0 %v5439, 126
      %v5924 = vpop.permute.xlu0 %5923
      %5925 = vrot.lane.b32.xlu0 %v5440, 126
      %v5926 = vpop.permute.xlu0 %5925
      %5927 = vrot.lane.b32.xlu0 %v5441, 126
      %v5928 = vpop.permute.xlu0 %5927
      %5929 = vrot.lane.b32.xlu0 %v5442, 126
      %v5930 = vpop.permute.xlu0 %5929
      %5931 = vrot.lane.b32.xlu0 %v5443, 126
      %v5932 = vpop.permute.xlu0 %5931
      %5933 = vrot.lane.b32.xlu0 %v5444, 126
      %v5934 = vpop.permute.xlu0 %5933
      %5935 = vrot.lane.b32.xlu0 %v5445, 126
      %v5936 = vpop.permute.xlu0 %5935
      %5937 = vrot.lane.b32.xlu0 %v5446, 126
      %v5938 = vpop.permute.xlu0 %5937
      %5939 = vrot.lane.b32.xlu0 %v5447, 126
      %v5940 = vpop.permute.xlu0 %5939
      %v5952 = vsel %vm5448, %v5906, 0
      %v5955 = vsel %vm5448, %v5907, 0
      %v5958 = vsel %vm5448, %v5908, 0
      %v5961 = vsel %vm5448, %v5909, 0
      %v5964 = vsel %vm5448, %v5910, 0
      %v5967 = vsel %vm5448, %v5911, 0
      %v5970 = vsel %vm5448, %v5912, 0
      %v5973 = vsel %vm5448, %v5913, 0
      %v5976 = vsel %vm5448, %v5914, 0
      %v5979 = vsel %vm5448, %v5915, 0
      %v5982 = vsel %vm5448, %v5916, 0
      %v5985 = vsel %vm5448, %v5917, 0
      %v5988 = vsel %vm5448, %v5918, 0
      %v5991 = vsel %vm5448, %v5919, 0
      %v5994 = vsel %vm5448, %v5920, 0
      %5996 = vmatprep.subr.mxu0 0.0
      %5997 = vmatpush1.msra.mxu0 0.0
      %5998 = vmatprep.subr.mxu0 0.0
      %5999 = vmatpush1.msra.mxu0 0.0
      %6000 = vmatprep.subr.mxu0 0.0
      %6001 = vmatpush1.msra.mxu0 0.0
      %6002 = vmatprep.subr.mxu0 0.0
      %6003 = vmatpush1.msra.mxu0 0.0
      %6004 = vmatprep.subr.mxu0 0.0
      %6005 = vmatpush1.msra.mxu0 0.0
      %6006 = vmatprep.subr.mxu0 0.0
      %6007 = vmatpush1.msra.mxu0 0.0
      %6008 = vmatprep.subr.mxu0 0.0
      %6009 = vmatpush1.msra.mxu0 %v5940
      %6010 = vmatprep.subr.mxu0 0.0
      %6011 = vmatpush1.msra.mxu0 %v5938
      %6012 = vmatprep.subr.mxu0 0.0
      %6013 = vmatpush1.msra.mxu0 %v5936
      %6014 = vmatprep.subr.mxu0 0.0
      %6015 = vmatpush1.msra.mxu0 %v5934
      %6016 = vmatprep.subr.mxu0 0.0
      %6017 = vmatpush1.msra.mxu0 %v5932
      %6018 = vmatprep.subr.mxu0 0.0
      %6019 = vmatpush1.msra.mxu0 %v5930
      %6020 = vmatprep.subr.mxu0 0.0
      %6021 = vmatpush1.msra.mxu0 %v5928
      %6022 = vmatprep.subr.mxu0 0.0
      %6023 = vmatpush1.msra.mxu0 %v5926
      %6024 = vmatprep.subr.mxu0 0.0
      %6025 = vmatpush1.msra.mxu0 %v5924
      %6026 = vmatprep.subr.mxu0 0.0
      %6027 = vmatpush1.msra.mxu0 %v5922
      %6028 = vmatprep.subr.mxu0 0.0
      %6029 = vmatpush2.msra.mxu0 0.0
      %6030 = vmatprep.subr.mxu0 0.0
      %6031 = vmatpush2.msra.mxu0 0.0
      %6032 = vmatprep.subr.mxu0 0.0
      %6033 = vmatpush2.msra.mxu0 0.0
      %6034 = vmatprep.subr.mxu0 0.0
      %6035 = vmatpush2.msra.mxu0 0.0
      %6036 = vmatprep.subr.mxu0 0.0
      %6037 = vmatpush2.msra.mxu0 0.0
      %6038 = vmatprep.subr.mxu0 0.0
      %6039 = vmatpush2.msra.mxu0 0.0
      %6040 = vmatprep.subr.mxu0 0.0
      %6041 = vmatpush2.msra.mxu0 0.0
      %6042 = vmatprep.subr.mxu0 0.0
      %6043 = vmatpush2.msra.mxu0 0.0
      %6044 = vmatprep.subr.mxu0 0.0
      %6045 = vmatpush2.msra.mxu0 0.0
      %6046 = vmatprep.subr.mxu0 0.0
      %6047 = vmatpush2.msra.mxu0 0.0
      %6048 = vmatprep.subr.mxu0 0.0
      %6049 = vmatpush2.msra.mxu0 0.0
      %6050 = vmatprep.subr.mxu0 0.0
      %6051 = vmatpush2.msra.mxu0 0.0
      %6052 = vmatprep.subr.mxu0 0.0
      %6053 = vmatpush2.msra.mxu0 0.0
      %6054 = vmatprep.subr.mxu0 0.0
      %6055 = vmatpush2.msra.mxu0 0.0
      %6056 = vmatprep.subr.mxu0 0.0
      %6057 = vmatpush2.msra.mxu0 0.0
      %6058 = vmatprep.subr.mxu0 0.0
      %6059 = vmatpush2.msra.mxu0 0.0
      %6060 = vmatprep.mubr.f32.mxu0 0.0
      %6061 = vmatmul.mubr.f32.gmra.mxu0 %v5952
      %v6062 = vpop.f32.mrf.mxu0
      %v6063 = vadd.f32 0.0, %v6062
      %v6064 = vpop.f32.mrf.mxu0
      %6065 = vmatprep.mubr.f32.mxu0 0.0
      %6066 = vmatmul.mubr.f32.gmra.mxu0 %v5955
      %v6067 = vpop.f32.mrf.mxu0
      %v6068 = vadd.f32 0.0, %v6067
      %v6069 = vpop.f32.mrf.mxu0
      %6070 = vmatprep.mubr.f32.mxu0 0.0
      %6071 = vmatmul.mubr.f32.gmra.mxu0 %v5958
      %v6072 = vpop.f32.mrf.mxu0
      %v6073 = vadd.f32 0.0, %v6072
      %v6074 = vpop.f32.mrf.mxu0
      %6075 = vmatprep.mubr.f32.mxu0 0.0
      %6076 = vmatmul.mubr.f32.gmra.mxu0 %v5961
      %v6077 = vpop.f32.mrf.mxu0
      %v6078 = vadd.f32 0.0, %v6077
      %v6079 = vpop.f32.mrf.mxu0
      %6080 = vmatprep.mubr.f32.mxu0 0.0
      %6081 = vmatmul.mubr.f32.gmra.mxu0 %v5964
      %v6082 = vpop.f32.mrf.mxu0
      %v6083 = vadd.f32 0.0, %v6082
      %v6084 = vpop.f32.mrf.mxu0
      %6085 = vmatprep.mubr.f32.mxu0 0.0
      %6086 = vmatmul.mubr.f32.gmra.mxu0 %v5967
      %v6087 = vpop.f32.mrf.mxu0
      %v6088 = vadd.f32 0.0, %v6087
      %v6089 = vpop.f32.mrf.mxu0
      %6090 = vmatprep.mubr.f32.mxu0 0.0
      %6091 = vmatmul.mubr.f32.gmra.mxu0 %v5970
      %v6092 = vpop.f32.mrf.mxu0
      %v6093 = vadd.f32 0.0, %v6092
      %v6094 = vpop.f32.mrf.mxu0
      %6095 = vmatprep.mubr.f32.mxu0 0.0
      %6096 = vmatmul.mubr.f32.gmra.mxu0 %v5973
      %v6097 = vpop.f32.mrf.mxu0
      %v6098 = vadd.f32 0.0, %v6097
      %v6099 = vpop.f32.mrf.mxu0
      %6100 = vmatprep.mubr.f32.mxu0 0.0
      %6101 = vmatmul.mubr.f32.gmra.mxu0 %v5976
      %v6102 = vpop.f32.mrf.mxu0
      %v6103 = vadd.f32 0.0, %v6102
      %v6104 = vpop.f32.mrf.mxu0
      %6105 = vmatprep.mubr.f32.mxu0 0.0
      %6106 = vmatmul.mubr.f32.gmra.mxu0 %v5979
      %v6107 = vpop.f32.mrf.mxu0
      %v6108 = vadd.f32 0.0, %v6107
      %v6109 = vpop.f32.mrf.mxu0
      %6110 = vmatprep.mubr.f32.mxu0 0.0
      %6111 = vmatmul.mubr.f32.gmra.mxu0 %v5982
      %v6112 = vpop.f32.mrf.mxu0
      %v6113 = vadd.f32 0.0, %v6112
      %v6114 = vpop.f32.mrf.mxu0
      %6115 = vmatprep.mubr.f32.mxu0 0.0
      %6116 = vmatmul.mubr.f32.gmra.mxu0 %v5985
      %v6117 = vpop.f32.mrf.mxu0
      %v6118 = vadd.f32 0.0, %v6117
      %v6119 = vpop.f32.mrf.mxu0
      %6120 = vmatprep.mubr.f32.mxu0 0.0
      %6121 = vmatmul.mubr.f32.gmra.mxu0 %v5988
      %v6122 = vpop.f32.mrf.mxu0
      %v6123 = vadd.f32 0.0, %v6122
      %v6124 = vpop.f32.mrf.mxu0
      %6125 = vmatprep.mubr.f32.mxu0 0.0
      %6126 = vmatmul.mubr.f32.gmra.mxu0 %v5991
      %v6127 = vpop.f32.mrf.mxu0
      %v6128 = vadd.f32 0.0, %v6127
      %v6129 = vpop.f32.mrf.mxu0
      %6130 = vmatprep.mubr.f32.mxu0 0.0
      %6131 = vmatmul.mubr.f32.gmra.mxu0 %v5994
      %v6132 = vpop.f32.mrf.mxu0
      %v6133 = vadd.f32 0.0, %v6132
      %v6134 = vpop.f32.mrf.mxu0
      %6135 = vdwg.mxu0
      %v6136 = vadd.f32 %v5890, %v6063
      %v6137 = vadd.f32 %v5891, %v6068
      %v6138 = vadd.f32 %v5892, %v6073
      %v6139 = vadd.f32 %v5893, %v6078
      %v6140 = vadd.f32 %v5894, %v6083
      %v6141 = vadd.f32 %v5895, %v6088
      %v6142 = vadd.f32 %v5896, %v6093
      %v6143 = vadd.f32 %v5897, %v6098
      %v6144 = vadd.f32 %v5898, %v6103
      %v6145 = vadd.f32 %v5899, %v6108
      %v6146 = vadd.f32 %v5900, %v6113
      %v6147 = vadd.f32 %v5901, %v6118
      %v6148 = vadd.f32 %v5902, %v6123
      %v6149 = vadd.f32 %v5903, %v6128
      %v6150 = vadd.f32 %v5904, %v6133
      %s6151 = scalar_lea.vmem %s13, 360
      %v6152 = vld [vmem:[%s6151] sm:$0xff]
      %v6153 = vld [vmem:[%s6151 + $0x8] sm:$0xff]
      %v6154 = vld [vmem:[%s6151 + $0x10] sm:$0xff]
      %v6155 = vld [vmem:[%s6151 + $0x18] sm:$0xff]
      %v6156 = vld [vmem:[%s6151 + $0x20] sm:$0xff]
      %v6157 = vld [vmem:[%s6151 + $0x28] sm:$0xff]
      %v6158 = vld [vmem:[%s6151 + $0x30] sm:$0xff]
      %v6159 = vld [vmem:[%s6151 + $0x38] sm:$0xff]
      %v6160 = vld [vmem:[%s6151 + $0x40] sm:$0xff]
      %v6161 = vld [vmem:[%s6151 + $0x48] sm:$0xff]
      %v6162 = vld [vmem:[%s6151 + $0x50] sm:$0xff]
      %v6163 = vld [vmem:[%s6151 + $0x58] sm:$0xff]
      %v6164 = vld [vmem:[%s6151 + $0x60] sm:$0xff]
      %v6165 = vld [vmem:[%s6151 + $0x68] sm:$0xff]
      %v6166 = vld [vmem:[%s6151 + $0x70] sm:$0xff]
      %6167 = vrot.lane.b32.xlu0 %v5438, 125
      %v6168 = vpop.permute.xlu0 %6167
      %6169 = vrot.lane.b32.xlu0 %v5439, 125
      %v6170 = vpop.permute.xlu0 %6169
      %6171 = vrot.lane.b32.xlu0 %v5440, 125
      %v6172 = vpop.permute.xlu0 %6171
      %6173 = vrot.lane.b32.xlu0 %v5441, 125
      %v6174 = vpop.permute.xlu0 %6173
      %6175 = vrot.lane.b32.xlu0 %v5442, 125
      %v6176 = vpop.permute.xlu0 %6175
      %6177 = vrot.lane.b32.xlu0 %v5443, 125
      %v6178 = vpop.permute.xlu0 %6177
      %6179 = vrot.lane.b32.xlu0 %v5444, 125
      %v6180 = vpop.permute.xlu0 %6179
      %6181 = vrot.lane.b32.xlu0 %v5445, 125
      %v6182 = vpop.permute.xlu0 %6181
      %6183 = vrot.lane.b32.xlu0 %v5446, 125
      %v6184 = vpop.permute.xlu0 %6183
      %6185 = vrot.lane.b32.xlu0 %v5447, 125
      %v6186 = vpop.permute.xlu0 %6185
      %v6198 = vsel %vm5448, %v6152, 0
      %v6201 = vsel %vm5448, %v6153, 0
      %v6204 = vsel %vm5448, %v6154, 0
      %v6207 = vsel %vm5448, %v6155, 0
      %v6210 = vsel %vm5448, %v6156, 0
      %v6213 = vsel %vm5448, %v6157, 0
      %v6216 = vsel %vm5448, %v6158, 0
      %v6219 = vsel %vm5448, %v6159, 0
      %v6222 = vsel %vm5448, %v6160, 0
      %v6225 = vsel %vm5448, %v6161, 0
      %v6228 = vsel %vm5448, %v6162, 0
      %v6231 = vsel %vm5448, %v6163, 0
      %v6234 = vsel %vm5448, %v6164, 0
      %v6237 = vsel %vm5448, %v6165, 0
      %v6240 = vsel %vm5448, %v6166, 0
      %6242 = vmatprep.subr.mxu0 0.0
      %6243 = vmatpush1.msra.mxu0 0.0
      %6244 = vmatprep.subr.mxu0 0.0
      %6245 = vmatpush1.msra.mxu0 0.0
      %6246 = vmatprep.subr.mxu0 0.0
      %6247 = vmatpush1.msra.mxu0 0.0
      %6248 = vmatprep.subr.mxu0 0.0
      %6249 = vmatpush1.msra.mxu0 0.0
      %6250 = vmatprep.subr.mxu0 0.0
      %6251 = vmatpush1.msra.mxu0 0.0
      %6252 = vmatprep.subr.mxu0 0.0
      %6253 = vmatpush1.msra.mxu0 0.0
      %6254 = vmatprep.subr.mxu0 0.0
      %6255 = vmatpush1.msra.mxu0 %v6186
      %6256 = vmatprep.subr.mxu0 0.0
      %6257 = vmatpush1.msra.mxu0 %v6184
      %6258 = vmatprep.subr.mxu0 0.0
      %6259 = vmatpush1.msra.mxu0 %v6182
      %6260 = vmatprep.subr.mxu0 0.0
      %6261 = vmatpush1.msra.mxu0 %v6180
      %6262 = vmatprep.subr.mxu0 0.0
      %6263 = vmatpush1.msra.mxu0 %v6178
      %6264 = vmatprep.subr.mxu0 0.0
      %6265 = vmatpush1.msra.mxu0 %v6176
      %6266 = vmatprep.subr.mxu0 0.0
      %6267 = vmatpush1.msra.mxu0 %v6174
      %6268 = vmatprep.subr.mxu0 0.0
      %6269 = vmatpush1.msra.mxu0 %v6172
      %6270 = vmatprep.subr.mxu0 0.0
      %6271 = vmatpush1.msra.mxu0 %v6170
      %6272 = vmatprep.subr.mxu0 0.0
      %6273 = vmatpush1.msra.mxu0 %v6168
      %6274 = vmatprep.subr.mxu0 0.0
      %6275 = vmatpush2.msra.mxu0 0.0
      %6276 = vmatprep.subr.mxu0 0.0
      %6277 = vmatpush2.msra.mxu0 0.0
      %6278 = vmatprep.subr.mxu0 0.0
      %6279 = vmatpush2.msra.mxu0 0.0
      %6280 = vmatprep.subr.mxu0 0.0
      %6281 = vmatpush2.msra.mxu0 0.0
      %6282 = vmatprep.subr.mxu0 0.0
      %6283 = vmatpush2.msra.mxu0 0.0
      %6284 = vmatprep.subr.mxu0 0.0
      %6285 = vmatpush2.msra.mxu0 0.0
      %6286 = vmatprep.subr.mxu0 0.0
      %6287 = vmatpush2.msra.mxu0 0.0
      %6288 = vmatprep.subr.mxu0 0.0
      %6289 = vmatpush2.msra.mxu0 0.0
      %6290 = vmatprep.subr.mxu0 0.0
      %6291 = vmatpush2.msra.mxu0 0.0
      %6292 = vmatprep.subr.mxu0 0.0
      %6293 = vmatpush2.msra.mxu0 0.0
      %6294 = vmatprep.subr.mxu0 0.0
      %6295 = vmatpush2.msra.mxu0 0.0
      %6296 = vmatprep.subr.mxu0 0.0
      %6297 = vmatpush2.msra.mxu0 0.0
      %6298 = vmatprep.subr.mxu0 0.0
      %6299 = vmatpush2.msra.mxu0 0.0
      %6300 = vmatprep.subr.mxu0 0.0
      %6301 = vmatpush2.msra.mxu0 0.0
      %6302 = vmatprep.subr.mxu0 0.0
      %6303 = vmatpush2.msra.mxu0 0.0
      %6304 = vmatprep.subr.mxu0 0.0
      %6305 = vmatpush2.msra.mxu0 0.0
      %6306 = vmatprep.mubr.f32.mxu0 0.0
      %6307 = vmatmul.mubr.f32.gmra.mxu0 %v6198
      %v6308 = vpop.f32.mrf.mxu0
      %v6309 = vadd.f32 0.0, %v6308
      %v6310 = vpop.f32.mrf.mxu0
      %6311 = vmatprep.mubr.f32.mxu0 0.0
      %6312 = vmatmul.mubr.f32.gmra.mxu0 %v6201
      %v6313 = vpop.f32.mrf.mxu0
      %v6314 = vadd.f32 0.0, %v6313
      %v6315 = vpop.f32.mrf.mxu0
      %6316 = vmatprep.mubr.f32.mxu0 0.0
      %6317 = vmatmul.mubr.f32.gmra.mxu0 %v6204
      %v6318 = vpop.f32.mrf.mxu0
      %v6319 = vadd.f32 0.0, %v6318
      %v6320 = vpop.f32.mrf.mxu0
      %6321 = vmatprep.mubr.f32.mxu0 0.0
      %6322 = vmatmul.mubr.f32.gmra.mxu0 %v6207
      %v6323 = vpop.f32.mrf.mxu0
      %v6324 = vadd.f32 0.0, %v6323
      %v6325 = vpop.f32.mrf.mxu0
      %6326 = vmatprep.mubr.f32.mxu0 0.0
      %6327 = vmatmul.mubr.f32.gmra.mxu0 %v6210
      %v6328 = vpop.f32.mrf.mxu0
      %v6329 = vadd.f32 0.0, %v6328
      %v6330 = vpop.f32.mrf.mxu0
      %6331 = vmatprep.mubr.f32.mxu0 0.0
      %6332 = vmatmul.mubr.f32.gmra.mxu0 %v6213
      %v6333 = vpop.f32.mrf.mxu0
      %v6334 = vadd.f32 0.0, %v6333
      %v6335 = vpop.f32.mrf.mxu0
      %6336 = vmatprep.mubr.f32.mxu0 0.0
      %6337 = vmatmul.mubr.f32.gmra.mxu0 %v6216
      %v6338 = vpop.f32.mrf.mxu0
      %v6339 = vadd.f32 0.0, %v6338
      %v6340 = vpop.f32.mrf.mxu0
      %6341 = vmatprep.mubr.f32.mxu0 0.0
      %6342 = vmatmul.mubr.f32.gmra.mxu0 %v6219
      %v6343 = vpop.f32.mrf.mxu0
      %v6344 = vadd.f32 0.0, %v6343
      %v6345 = vpop.f32.mrf.mxu0
      %6346 = vmatprep.mubr.f32.mxu0 0.0
      %6347 = vmatmul.mubr.f32.gmra.mxu0 %v6222
      %v6348 = vpop.f32.mrf.mxu0
      %v6349 = vadd.f32 0.0, %v6348
      %v6350 = vpop.f32.mrf.mxu0
      %6351 = vmatprep.mubr.f32.mxu0 0.0
      %6352 = vmatmul.mubr.f32.gmra.mxu0 %v6225
      %v6353 = vpop.f32.mrf.mxu0
      %v6354 = vadd.f32 0.0, %v6353
      %v6355 = vpop.f32.mrf.mxu0
      %6356 = vmatprep.mubr.f32.mxu0 0.0
      %6357 = vmatmul.mubr.f32.gmra.mxu0 %v6228
      %v6358 = vpop.f32.mrf.mxu0
      %v6359 = vadd.f32 0.0, %v6358
      %v6360 = vpop.f32.mrf.mxu0
      %6361 = vmatprep.mubr.f32.mxu0 0.0
      %6362 = vmatmul.mubr.f32.gmra.mxu0 %v6231
      %v6363 = vpop.f32.mrf.mxu0
      %v6364 = vadd.f32 0.0, %v6363
      %v6365 = vpop.f32.mrf.mxu0
      %6366 = vmatprep.mubr.f32.mxu0 0.0
      %6367 = vmatmul.mubr.f32.gmra.mxu0 %v6234
      %v6368 = vpop.f32.mrf.mxu0
      %v6369 = vadd.f32 0.0, %v6368
      %v6370 = vpop.f32.mrf.mxu0
      %6371 = vmatprep.mubr.f32.mxu0 0.0
      %6372 = vmatmul.mubr.f32.gmra.mxu0 %v6237
      %v6373 = vpop.f32.mrf.mxu0
      %v6374 = vadd.f32 0.0, %v6373
      %v6375 = vpop.f32.mrf.mxu0
      %6376 = vmatprep.mubr.f32.mxu0 0.0
      %6377 = vmatmul.mubr.f32.gmra.mxu0 %v6240
      %v6378 = vpop.f32.mrf.mxu0
      %v6379 = vadd.f32 0.0, %v6378
      %v6380 = vpop.f32.mrf.mxu0
      %6381 = vdwg.mxu0
      %v6382 = vadd.f32 %v6136, %v6309
      %v6383 = vadd.f32 %v6137, %v6314
      %v6384 = vadd.f32 %v6138, %v6319
      %v6385 = vadd.f32 %v6139, %v6324
      %v6386 = vadd.f32 %v6140, %v6329
      %v6387 = vadd.f32 %v6141, %v6334
      %v6388 = vadd.f32 %v6142, %v6339
      %v6389 = vadd.f32 %v6143, %v6344
      %v6390 = vadd.f32 %v6144, %v6349
      %v6391 = vadd.f32 %v6145, %v6354
      %v6392 = vadd.f32 %v6146, %v6359
      %v6393 = vadd.f32 %v6147, %v6364
      %v6394 = vadd.f32 %v6148, %v6369
      %v6395 = vadd.f32 %v6149, %v6374
      %v6396 = vadd.f32 %v6150, %v6379
      %s6397 = scalar_lea.vmem %s13, 480
      %v6398 = vld [vmem:[%s6397] sm:$0xff]
      %v6399 = vld [vmem:[%s6397 + $0x8] sm:$0xff]
      %v6400 = vld [vmem:[%s6397 + $0x10] sm:$0xff]
      %v6401 = vld [vmem:[%s6397 + $0x18] sm:$0xff]
      %v6402 = vld [vmem:[%s6397 + $0x20] sm:$0xff]
      %v6403 = vld [vmem:[%s6397 + $0x28] sm:$0xff]
      %v6404 = vld [vmem:[%s6397 + $0x30] sm:$0xff]
      %v6405 = vld [vmem:[%s6397 + $0x38] sm:$0xff]
      %v6406 = vld [vmem:[%s6397 + $0x40] sm:$0xff]
      %v6407 = vld [vmem:[%s6397 + $0x48] sm:$0xff]
      %v6408 = vld [vmem:[%s6397 + $0x50] sm:$0xff]
      %v6409 = vld [vmem:[%s6397 + $0x58] sm:$0xff]
      %v6410 = vld [vmem:[%s6397 + $0x60] sm:$0xff]
      %v6411 = vld [vmem:[%s6397 + $0x68] sm:$0xff]
      %v6412 = vld [vmem:[%s6397 + $0x70] sm:$0xff]
      %6413 = vrot.lane.b32.xlu0 %v5438, 124
      %v6414 = vpop.permute.xlu0 %6413
      %6415 = vrot.lane.b32.xlu0 %v5439, 124
      %v6416 = vpop.permute.xlu0 %6415
      %6417 = vrot.lane.b32.xlu0 %v5440, 124
      %v6418 = vpop.permute.xlu0 %6417
      %6419 = vrot.lane.b32.xlu0 %v5441, 124
      %v6420 = vpop.permute.xlu0 %6419
      %6421 = vrot.lane.b32.xlu0 %v5442, 124
      %v6422 = vpop.permute.xlu0 %6421
      %6423 = vrot.lane.b32.xlu0 %v5443, 124
      %v6424 = vpop.permute.xlu0 %6423
      %6425 = vrot.lane.b32.xlu0 %v5444, 124
      %v6426 = vpop.permute.xlu0 %6425
      %6427 = vrot.lane.b32.xlu0 %v5445, 124
      %v6428 = vpop.permute.xlu0 %6427
      %6429 = vrot.lane.b32.xlu0 %v5446, 124
      %v6430 = vpop.permute.xlu0 %6429
      %6431 = vrot.lane.b32.xlu0 %v5447, 124
      %v6432 = vpop.permute.xlu0 %6431
      %v6444 = vsel %vm5448, %v6398, 0
      %v6447 = vsel %vm5448, %v6399, 0
      %v6450 = vsel %vm5448, %v6400, 0
      %v6453 = vsel %vm5448, %v6401, 0
      %v6456 = vsel %vm5448, %v6402, 0
      %v6459 = vsel %vm5448, %v6403, 0
      %v6462 = vsel %vm5448, %v6404, 0
      %v6465 = vsel %vm5448, %v6405, 0
      %v6468 = vsel %vm5448, %v6406, 0
      %v6471 = vsel %vm5448, %v6407, 0
      %v6474 = vsel %vm5448, %v6408, 0
      %v6477 = vsel %vm5448, %v6409, 0
      %v6480 = vsel %vm5448, %v6410, 0
      %v6483 = vsel %vm5448, %v6411, 0
      %v6486 = vsel %vm5448, %v6412, 0
      %6488 = vmatprep.subr.mxu0 0.0
      %6489 = vmatpush1.msra.mxu0 0.0
      %6490 = vmatprep.subr.mxu0 0.0
      %6491 = vmatpush1.msra.mxu0 0.0
      %6492 = vmatprep.subr.mxu0 0.0
      %6493 = vmatpush1.msra.mxu0 0.0
      %6494 = vmatprep.subr.mxu0 0.0
      %6495 = vmatpush1.msra.mxu0 0.0
      %6496 = vmatprep.subr.mxu0 0.0
      %6497 = vmatpush1.msra.mxu0 0.0
      %6498 = vmatprep.subr.mxu0 0.0
      %6499 = vmatpush1.msra.mxu0 0.0
      %6500 = vmatprep.subr.mxu0 0.0
      %6501 = vmatpush1.msra.mxu0 %v6432
      %6502 = vmatprep.subr.mxu0 0.0
      %6503 = vmatpush1.msra.mxu0 %v6430
      %6504 = vmatprep.subr.mxu0 0.0
      %6505 = vmatpush1.msra.mxu0 %v6428
      %6506 = vmatprep.subr.mxu0 0.0
      %6507 = vmatpush1.msra.mxu0 %v6426
      %6508 = vmatprep.subr.mxu0 0.0
      %6509 = vmatpush1.msra.mxu0 %v6424
      %6510 = vmatprep.subr.mxu0 0.0
      %6511 = vmatpush1.msra.mxu0 %v6422
      %6512 = vmatprep.subr.mxu0 0.0
      %6513 = vmatpush1.msra.mxu0 %v6420
      %6514 = vmatprep.subr.mxu0 0.0
      %6515 = vmatpush1.msra.mxu0 %v6418
      %6516 = vmatprep.subr.mxu0 0.0
      %6517 = vmatpush1.msra.mxu0 %v6416
      %6518 = vmatprep.subr.mxu0 0.0
      %6519 = vmatpush1.msra.mxu0 %v6414
      %6520 = vmatprep.subr.mxu0 0.0
      %6521 = vmatpush2.msra.mxu0 0.0
      %6522 = vmatprep.subr.mxu0 0.0
      %6523 = vmatpush2.msra.mxu0 0.0
      %6524 = vmatprep.subr.mxu0 0.0
      %6525 = vmatpush2.msra.mxu0 0.0
      %6526 = vmatprep.subr.mxu0 0.0
      %6527 = vmatpush2.msra.mxu0 0.0
      %6528 = vmatprep.subr.mxu0 0.0
      %6529 = vmatpush2.msra.mxu0 0.0
      %6530 = vmatprep.subr.mxu0 0.0
      %6531 = vmatpush2.msra.mxu0 0.0
      %6532 = vmatprep.subr.mxu0 0.0
      %6533 = vmatpush2.msra.mxu0 0.0
      %6534 = vmatprep.subr.mxu0 0.0
      %6535 = vmatpush2.msra.mxu0 0.0
      %6536 = vmatprep.subr.mxu0 0.0
      %6537 = vmatpush2.msra.mxu0 0.0
      %6538 = vmatprep.subr.mxu0 0.0
      %6539 = vmatpush2.msra.mxu0 0.0
      %6540 = vmatprep.subr.mxu0 0.0
      %6541 = vmatpush2.msra.mxu0 0.0
      %6542 = vmatprep.subr.mxu0 0.0
      %6543 = vmatpush2.msra.mxu0 0.0
      %6544 = vmatprep.subr.mxu0 0.0
      %6545 = vmatpush2.msra.mxu0 0.0
      %6546 = vmatprep.subr.mxu0 0.0
      %6547 = vmatpush2.msra.mxu0 0.0
      %6548 = vmatprep.subr.mxu0 0.0
      %6549 = vmatpush2.msra.mxu0 0.0
      %6550 = vmatprep.subr.mxu0 0.0
      %6551 = vmatpush2.msra.mxu0 0.0
      %6552 = vmatprep.mubr.f32.mxu0 0.0
      %6553 = vmatmul.mubr.f32.gmra.mxu0 %v6444
      %v6554 = vpop.f32.mrf.mxu0
      %v6555 = vadd.f32 0.0, %v6554
      %v6556 = vpop.f32.mrf.mxu0
      %6557 = vmatprep.mubr.f32.mxu0 0.0
      %6558 = vmatmul.mubr.f32.gmra.mxu0 %v6447
      %v6559 = vpop.f32.mrf.mxu0
      %v6560 = vadd.f32 0.0, %v6559
      %v6561 = vpop.f32.mrf.mxu0
      %6562 = vmatprep.mubr.f32.mxu0 0.0
      %6563 = vmatmul.mubr.f32.gmra.mxu0 %v6450
      %v6564 = vpop.f32.mrf.mxu0
      %v6565 = vadd.f32 0.0, %v6564
      %v6566 = vpop.f32.mrf.mxu0
      %6567 = vmatprep.mubr.f32.mxu0 0.0
      %6568 = vmatmul.mubr.f32.gmra.mxu0 %v6453
      %v6569 = vpop.f32.mrf.mxu0
      %v6570 = vadd.f32 0.0, %v6569
      %v6571 = vpop.f32.mrf.mxu0
      %6572 = vmatprep.mubr.f32.mxu0 0.0
      %6573 = vmatmul.mubr.f32.gmra.mxu0 %v6456
      %v6574 = vpop.f32.mrf.mxu0
      %v6575 = vadd.f32 0.0, %v6574
      %v6576 = vpop.f32.mrf.mxu0
      %6577 = vmatprep.mubr.f32.mxu0 0.0
      %6578 = vmatmul.mubr.f32.gmra.mxu0 %v6459
      %v6579 = vpop.f32.mrf.mxu0
      %v6580 = vadd.f32 0.0, %v6579
      %v6581 = vpop.f32.mrf.mxu0
      %6582 = vmatprep.mubr.f32.mxu0 0.0
      %6583 = vmatmul.mubr.f32.gmra.mxu0 %v6462
      %v6584 = vpop.f32.mrf.mxu0
      %v6585 = vadd.f32 0.0, %v6584
      %v6586 = vpop.f32.mrf.mxu0
      %6587 = vmatprep.mubr.f32.mxu0 0.0
      %6588 = vmatmul.mubr.f32.gmra.mxu0 %v6465
      %v6589 = vpop.f32.mrf.mxu0
      %v6590 = vadd.f32 0.0, %v6589
      %v6591 = vpop.f32.mrf.mxu0
      %6592 = vmatprep.mubr.f32.mxu0 0.0
      %6593 = vmatmul.mubr.f32.gmra.mxu0 %v6468
      %v6594 = vpop.f32.mrf.mxu0
      %v6595 = vadd.f32 0.0, %v6594
      %v6596 = vpop.f32.mrf.mxu0
      %6597 = vmatprep.mubr.f32.mxu0 0.0
      %6598 = vmatmul.mubr.f32.gmra.mxu0 %v6471
      %v6599 = vpop.f32.mrf.mxu0
      %v6600 = vadd.f32 0.0, %v6599
      %v6601 = vpop.f32.mrf.mxu0
      %6602 = vmatprep.mubr.f32.mxu0 0.0
      %6603 = vmatmul.mubr.f32.gmra.mxu0 %v6474
      %v6604 = vpop.f32.mrf.mxu0
      %v6605 = vadd.f32 0.0, %v6604
      %v6606 = vpop.f32.mrf.mxu0
      %6607 = vmatprep.mubr.f32.mxu0 0.0
      %6608 = vmatmul.mubr.f32.gmra.mxu0 %v6477
      %v6609 = vpop.f32.mrf.mxu0
      %v6610 = vadd.f32 0.0, %v6609
      %v6611 = vpop.f32.mrf.mxu0
      %6612 = vmatprep.mubr.f32.mxu0 0.0
      %6613 = vmatmul.mubr.f32.gmra.mxu0 %v6480
      %v6614 = vpop.f32.mrf.mxu0
      %v6615 = vadd.f32 0.0, %v6614
      %v6616 = vpop.f32.mrf.mxu0
      %6617 = vmatprep.mubr.f32.mxu0 0.0
      %6618 = vmatmul.mubr.f32.gmra.mxu0 %v6483
      %v6619 = vpop.f32.mrf.mxu0
      %v6620 = vadd.f32 0.0, %v6619
      %v6621 = vpop.f32.mrf.mxu0
      %6622 = vmatprep.mubr.f32.mxu0 0.0
      %6623 = vmatmul.mubr.f32.gmra.mxu0 %v6486
      %v6624 = vpop.f32.mrf.mxu0
      %v6625 = vadd.f32 0.0, %v6624
      %v6626 = vpop.f32.mrf.mxu0
      %6627 = vdwg.mxu0
      %v6628 = vadd.f32 %v6382, %v6555
      %v6629 = vadd.f32 %v6383, %v6560
      %v6630 = vadd.f32 %v6384, %v6565
      %v6631 = vadd.f32 %v6385, %v6570
      %v6632 = vadd.f32 %v6386, %v6575
      %v6633 = vadd.f32 %v6387, %v6580
      %v6634 = vadd.f32 %v6388, %v6585
      %v6635 = vadd.f32 %v6389, %v6590
      %v6636 = vadd.f32 %v6390, %v6595
      %v6637 = vadd.f32 %v6391, %v6600
      %v6638 = vadd.f32 %v6392, %v6605
      %v6639 = vadd.f32 %v6393, %v6610
      %v6640 = vadd.f32 %v6394, %v6615
      %v6641 = vadd.f32 %v6395, %v6620
      %v6642 = vadd.f32 %v6396, %v6625
      %v6643 = vmax.f32 %v6628, 0.0
      %v6644 = vmax.f32 %v6629, 0.0
      %v6645 = vmax.f32 %v6630, 0.0
      %v6646 = vmax.f32 %v6631, 0.0
      %v6647 = vmax.f32 %v6632, 0.0
      %v6648 = vmax.f32 %v6633, 0.0
      %v6649 = vmax.f32 %v6634, 0.0
      %v6650 = vmax.f32 %v6635, 0.0
      %v6651 = vmax.f32 %v6636, 0.0
      %v6652 = vmax.f32 %v6637, 0.0
      %v6653 = vmax.f32 %v6638, 0.0
      %v6654 = vmax.f32 %v6639, 0.0
      %v6655 = vmax.f32 %v6640, 0.0
      %v6656 = vmax.f32 %v6641, 0.0
      %v6657 = vmax.f32 %v6642, 0.0
      %v6658 = vld [vmem:[%s16] sm:$0xff]
      %v6659 = vld [vmem:[%s16 + $0x8] sm:$0xff]
      %v6660 = vld [vmem:[%s16 + $0x10] sm:$0xff]
      %v6661 = vld [vmem:[%s16 + $0x18] sm:$0xff]
      %v6662 = vld [vmem:[%s16 + $0x20] sm:$0xff]
      %v6663 = vld [vmem:[%s16 + $0x28] sm:$0xff]
      %v6664 = vld [vmem:[%s16 + $0x30] sm:$0xff]
      %v6665 = vld [vmem:[%s16 + $0x38] sm:$0xff]
      %v6666 = vld [vmem:[%s16 + $0x40] sm:$0xff]
      %v6667 = vld [vmem:[%s16 + $0x48] sm:$0xff]
      %v6668 = vld [vmem:[%s16 + $0x50] sm:$0xf]
      %v6669 = vld [vmem:[%s15] sm:$0xff]
      %v6670 = vld [vmem:[%s15 + $0x8] sm:$0xff]
      %v6671 = vld [vmem:[%s15 + $0x10] sm:$0xff]
      %v6672 = vld [vmem:[%s15 + $0x18] sm:$0xff]
      %v6673 = vld [vmem:[%s15 + $0x20] sm:$0xff]
      %v6674 = vld [vmem:[%s15 + $0x28] sm:$0xff]
      %v6675 = vld [vmem:[%s15 + $0x30] sm:$0xff]
      %v6676 = vld [vmem:[%s15 + $0x38] sm:$0xff]
      %v6677 = vld [vmem:[%s15 + $0x40] sm:$0xff]
      %v6678 = vld [vmem:[%s15 + $0x48] sm:$0xff]
      %v6679 = vld [vmem:[%s15 + $0x50] sm:$0xf]
      %vm6680 = vcmask 982016
      %v6682 = vsel %vm6680, %v6669, 0
      %v6685 = vsel %vm6680, %v6670, 0
      %v6688 = vsel %vm6680, %v6671, 0
      %v6691 = vsel %vm6680, %v6672, 0
      %v6694 = vsel %vm6680, %v6673, 0
      %v6697 = vsel %vm6680, %v6674, 0
      %v6700 = vsel %vm6680, %v6675, 0
      %v6703 = vsel %vm6680, %v6676, 0
      %v6706 = vsel %vm6680, %v6677, 0
      %v6709 = vsel %vm6680, %v6678, 0
      %v6712 = vsel %vm6680, %v6679, 0
      %6714 = vmatprep.subr.mxu0 0.0
      %6715 = vmatpush1.msra.mxu0 0.0
      %6716 = vmatprep.subr.mxu0 0.0
      %6717 = vmatpush1.msra.mxu0 %v6657
      %6718 = vmatprep.subr.mxu0 0.0
      %6719 = vmatpush1.msra.mxu0 %v6656
      %6720 = vmatprep.subr.mxu0 0.0
      %6721 = vmatpush1.msra.mxu0 %v6655
      %6722 = vmatprep.subr.mxu0 0.0
      %6723 = vmatpush1.msra.mxu0 %v6654
      %6724 = vmatprep.subr.mxu0 0.0
      %6725 = vmatpush1.msra.mxu0 %v6653
      %6726 = vmatprep.subr.mxu0 0.0
      %6727 = vmatpush1.msra.mxu0 %v6652
      %6728 = vmatprep.subr.mxu0 0.0
      %6729 = vmatpush1.msra.mxu0 %v6651
      %6730 = vmatprep.subr.mxu0 0.0
      %6731 = vmatpush1.msra.mxu0 %v6650
      %6732 = vmatprep.subr.mxu0 0.0
      %6733 = vmatpush1.msra.mxu0 %v6649
      %6734 = vmatprep.subr.mxu0 0.0
      %6735 = vmatpush1.msra.mxu0 %v6648
      %6736 = vmatprep.subr.mxu0 0.0
      %6737 = vmatpush1.msra.mxu0 %v6647
      %6738 = vmatprep.subr.mxu0 0.0
      %6739 = vmatpush1.msra.mxu0 %v6646
      %6740 = vmatprep.subr.mxu0 0.0
      %6741 = vmatpush1.msra.mxu0 %v6645
      %6742 = vmatprep.subr.mxu0 0.0
      %6743 = vmatpush1.msra.mxu0 %v6644
      %6744 = vmatprep.subr.mxu0 0.0
      %6745 = vmatpush1.msra.mxu0 %v6643
      %6746 = vmatprep.subr.mxu0 0.0
      %6747 = vmatpush2.msra.mxu0 0.0
      %6748 = vmatprep.subr.mxu0 0.0
      %6749 = vmatpush2.msra.mxu0 0.0
      %6750 = vmatprep.subr.mxu0 0.0
      %6751 = vmatpush2.msra.mxu0 0.0
      %6752 = vmatprep.subr.mxu0 0.0
      %6753 = vmatpush2.msra.mxu0 0.0
      %6754 = vmatprep.subr.mxu0 0.0
      %6755 = vmatpush2.msra.mxu0 0.0
      %6756 = vmatprep.subr.mxu0 0.0
      %6757 = vmatpush2.msra.mxu0 0.0
      %6758 = vmatprep.subr.mxu0 0.0
      %6759 = vmatpush2.msra.mxu0 0.0
      %6760 = vmatprep.subr.mxu0 0.0
      %6761 = vmatpush2.msra.mxu0 0.0
      %6762 = vmatprep.subr.mxu0 0.0
      %6763 = vmatpush2.msra.mxu0 0.0
      %6764 = vmatprep.subr.mxu0 0.0
      %6765 = vmatpush2.msra.mxu0 0.0
      %6766 = vmatprep.subr.mxu0 0.0
      %6767 = vmatpush2.msra.mxu0 0.0
      %6768 = vmatprep.subr.mxu0 0.0
      %6769 = vmatpush2.msra.mxu0 0.0
      %6770 = vmatprep.subr.mxu0 0.0
      %6771 = vmatpush2.msra.mxu0 0.0
      %6772 = vmatprep.subr.mxu0 0.0
      %6773 = vmatpush2.msra.mxu0 0.0
      %6774 = vmatprep.subr.mxu0 0.0
      %6775 = vmatpush2.msra.mxu0 0.0
      %6776 = vmatprep.subr.mxu0 0.0
      %6777 = vmatpush2.msra.mxu0 0.0
      %6778 = vmatprep.mubr.f32.mxu0 0.0
      %6779 = vmatmul.mubr.f32.gmra.mxu0 %v6682
      %v6780 = vpop.f32.mrf.mxu0
      %v6781 = vadd.f32 0.0, %v6780
      %v6782 = vpop.f32.mrf.mxu0
      %6783 = vmatprep.mubr.f32.mxu0 0.0
      %6784 = vmatmul.mubr.f32.gmra.mxu0 %v6685
      %v6785 = vpop.f32.mrf.mxu0
      %v6786 = vadd.f32 0.0, %v6785
      %v6787 = vpop.f32.mrf.mxu0
      %6788 = vmatprep.mubr.f32.mxu0 0.0
      %6789 = vmatmul.mubr.f32.gmra.mxu0 %v6688
      %v6790 = vpop.f32.mrf.mxu0
      %v6791 = vadd.f32 0.0, %v6790
      %v6792 = vpop.f32.mrf.mxu0
      %6793 = vmatprep.mubr.f32.mxu0 0.0
      %6794 = vmatmul.mubr.f32.gmra.mxu0 %v6691
      %v6795 = vpop.f32.mrf.mxu0
      %v6796 = vadd.f32 0.0, %v6795
      %v6797 = vpop.f32.mrf.mxu0
      %6798 = vmatprep.mubr.f32.mxu0 0.0
      %6799 = vmatmul.mubr.f32.gmra.mxu0 %v6694
      %v6800 = vpop.f32.mrf.mxu0
      %v6801 = vadd.f32 0.0, %v6800
      %v6802 = vpop.f32.mrf.mxu0
      %6803 = vmatprep.mubr.f32.mxu0 0.0
      %6804 = vmatmul.mubr.f32.gmra.mxu0 %v6697
      %v6805 = vpop.f32.mrf.mxu0
      %v6806 = vadd.f32 0.0, %v6805
      %v6807 = vpop.f32.mrf.mxu0
      %6808 = vmatprep.mubr.f32.mxu0 0.0
      %6809 = vmatmul.mubr.f32.gmra.mxu0 %v6700
      %v6810 = vpop.f32.mrf.mxu0
      %v6811 = vadd.f32 0.0, %v6810
      %v6812 = vpop.f32.mrf.mxu0
      %6813 = vmatprep.mubr.f32.mxu0 0.0
      %6814 = vmatmul.mubr.f32.gmra.mxu0 %v6703
      %v6815 = vpop.f32.mrf.mxu0
      %v6816 = vadd.f32 0.0, %v6815
      %v6817 = vpop.f32.mrf.mxu0
      %6818 = vmatprep.mubr.f32.mxu0 0.0
      %6819 = vmatmul.mubr.f32.gmra.mxu0 %v6706
      %v6820 = vpop.f32.mrf.mxu0
      %v6821 = vadd.f32 0.0, %v6820
      %v6822 = vpop.f32.mrf.mxu0
      %6823 = vmatprep.mubr.f32.mxu0 0.0
      %6824 = vmatmul.mubr.f32.gmra.mxu0 %v6709
      %v6825 = vpop.f32.mrf.mxu0
      %v6826 = vadd.f32 0.0, %v6825
      %v6827 = vpop.f32.mrf.mxu0
      %6828 = vmatprep.mubr.f32.mxu0 0.0
      %6829 = vmatmul.mubr.f32.gmra.mxu0 %v6712
      %v6830 = vpop.f32.mrf.mxu0
      %v6831 = vadd.f32 0.0, %v6830
      %v6832 = vpop.f32.mrf.mxu0
      %6833 = vdwg.mxu0
      %v6834 = vadd.f32 %v6658, %v6781
      %v6835 = vadd.f32 %v6659, %v6786
      %v6836 = vadd.f32 %v6660, %v6791
      %v6837 = vadd.f32 %v6661, %v6796
      %v6838 = vadd.f32 %v6662, %v6801
      %v6839 = vadd.f32 %v6663, %v6806
      %v6840 = vadd.f32 %v6664, %v6811
      %v6841 = vadd.f32 %v6665, %v6816
      %v6842 = vadd.f32 %v6666, %v6821
      %v6843 = vadd.f32 %v6667, %v6826
      %v6844 = vadd.f32 %v6668, %v6831
      %v6845 = vmax.f32 %v6834, 0.0
      %v6846 = vmax.f32 %v6835, 0.0
      %v6847 = vmax.f32 %v6836, 0.0
      %v6848 = vmax.f32 %v6837, 0.0
      %v6849 = vmax.f32 %v6838, 0.0
      %v6850 = vmax.f32 %v6839, 0.0
      %v6851 = vmax.f32 %v6840, 0.0
      %v6852 = vmax.f32 %v6841, 0.0
      %v6853 = vmax.f32 %v6842, 0.0
      %v6854 = vmax.f32 %v6843, 0.0
      %v6855 = vmax.f32 %v6844, 0.0
      %v6856 = vld [vmem:[%s18] sm:$0xff]
      %v6857 = vld [vmem:[%s18 + $0x8] sm:$0x3]
      %v6858 = vld [vmem:[%s17] sm:$0xff]
      %v6859 = vld [vmem:[%s17 + $0x8] sm:$0x3]
      %v6861 = vsel %vm3056, %v6858, 0
      %v6864 = vsel %vm3056, %v6859, 0
      %v6867 = vsel %vm2258, %v6855, 0
      %6869 = vmatprep.subr.mxu0 0.0
      %6870 = vmatpush1.msra.mxu0 0.0
      %6871 = vmatprep.subr.mxu0 0.0
      %6872 = vmatpush1.msra.mxu0 0.0
      %6873 = vmatprep.subr.mxu0 0.0
      %6874 = vmatpush1.msra.mxu0 0.0
      %6875 = vmatprep.subr.mxu0 0.0
      %6876 = vmatpush1.msra.mxu0 0.0
      %6877 = vmatprep.subr.mxu0 0.0
      %6878 = vmatpush1.msra.mxu0 0.0
      %6879 = vmatprep.subr.mxu0 0.0
      %6880 = vmatpush1.msra.mxu0 %v6867
      %6881 = vmatprep.subr.mxu0 0.0
      %6882 = vmatpush1.msra.mxu0 %v6854
      %6883 = vmatprep.subr.mxu0 0.0
      %6884 = vmatpush1.msra.mxu0 %v6853
      %6885 = vmatprep.subr.mxu0 0.0
      %6886 = vmatpush1.msra.mxu0 %v6852
      %6887 = vmatprep.subr.mxu0 0.0
      %6888 = vmatpush1.msra.mxu0 %v6851
      %6889 = vmatprep.subr.mxu0 0.0
      %6890 = vmatpush1.msra.mxu0 %v6850
      %6891 = vmatprep.subr.mxu0 0.0
      %6892 = vmatpush1.msra.mxu0 %v6849
      %6893 = vmatprep.subr.mxu0 0.0
      %6894 = vmatpush1.msra.mxu0 %v6848
      %6895 = vmatprep.subr.mxu0 0.0
      %6896 = vmatpush1.msra.mxu0 %v6847
      %6897 = vmatprep.subr.mxu0 0.0
      %6898 = vmatpush1.msra.mxu0 %v6846
      %6899 = vmatprep.subr.mxu0 0.0
      %6900 = vmatpush1.msra.mxu0 %v6845
      %6901 = vmatprep.subr.mxu0 0.0
      %6902 = vmatpush2.msra.mxu0 0.0
      %6903 = vmatprep.subr.mxu0 0.0
      %6904 = vmatpush2.msra.mxu0 0.0
      %6905 = vmatprep.subr.mxu0 0.0
      %6906 = vmatpush2.msra.mxu0 0.0
      %6907 = vmatprep.subr.mxu0 0.0
      %6908 = vmatpush2.msra.mxu0 0.0
      %6909 = vmatprep.subr.mxu0 0.0
      %6910 = vmatpush2.msra.mxu0 0.0
      %6911 = vmatprep.subr.mxu0 0.0
      %6912 = vmatpush2.msra.mxu0 0.0
      %6913 = vmatprep.subr.mxu0 0.0
      %6914 = vmatpush2.msra.mxu0 0.0
      %6915 = vmatprep.subr.mxu0 0.0
      %6916 = vmatpush2.msra.mxu0 0.0
      %6917 = vmatprep.subr.mxu0 0.0
      %6918 = vmatpush2.msra.mxu0 0.0
      %6919 = vmatprep.subr.mxu0 0.0
      %6920 = vmatpush2.msra.mxu0 0.0
      %6921 = vmatprep.subr.mxu0 0.0
      %6922 = vmatpush2.msra.mxu0 0.0
      %6923 = vmatprep.subr.mxu0 0.0
      %6924 = vmatpush2.msra.mxu0 0.0
      %6925 = vmatprep.subr.mxu0 0.0
      %6926 = vmatpush2.msra.mxu0 0.0
      %6927 = vmatprep.subr.mxu0 0.0
      %6928 = vmatpush2.msra.mxu0 0.0
      %6929 = vmatprep.subr.mxu0 0.0
      %6930 = vmatpush2.msra.mxu0 0.0
      %6931 = vmatprep.subr.mxu0 0.0
      %6932 = vmatpush2.msra.mxu0 0.0
      %6933 = vmatprep.mubr.f32.mxu0 0.0
      %6934 = vmatmul.mubr.f32.gmra.mxu0 %v6861
      %v6935 = vpop.f32.mrf.mxu0
      %v6936 = vadd.f32 0.0, %v6935
      %v6937 = vpop.f32.mrf.mxu0
      %6938 = vmatprep.mubr.f32.mxu0 0.0
      %6939 = vmatmul.mubr.f32.gmra.mxu0 %v6864
      %v6940 = vpop.f32.mrf.mxu0
      %v6941 = vadd.f32 0.0, %v6940
      %v6942 = vpop.f32.mrf.mxu0
      %6943 = vdwg.mxu0
      %v6944 = vadd.f32 %v6856, %v6936
      %v6945 = vadd.f32 %v6857, %v6941
      %vm6946 = vcmask 7168
      %6947 = vst.msk [vmem:[%s602] sm:$0xff] %vm6946, %v6944
      %vm6948 = vcmask 1024
      %6949 = vst.msk [vmem:[%s602 + $0x8] sm:$0x3] %vm6948, %v6945
      %p6950 = scmp.lt.s32.totalorder %s30, 1
      %s6951 = scalar_select %p6950, %s30, 1
      %s6952 = smul.addr %s6951, 2
      %s6953 = smul.addr %s6952, 8
      %s6954 = scalar_lea.vmem %s19, %s6953
      // Predicated region
      $region97: #{lenet_forward.1} parent=95 // pred_check
        %p6955 = pneg %p452
      $region98: #{lenet_forward.1} parent=95 // pred_check_branch
        %6957 = sbr.rel (%p6955) target = $region100
      $region99: #{lenet_forward.1} parent=95 // pred_region
        _
      $region100: #{lenet_forward.1} parent=95 // pred_fallthru
        _
    $region96: #{lenet_forward.1} parent=5 // pred_fallthru
      _
    %p6958 = scmp.le.s32.totalorder 2, %s25
    // Predicated region
    $region101: #{lenet_forward.1} parent=5 // pred_check
      %p6959 = pneg %p6958
    $region102: #{lenet_forward.1} parent=5 // pred_check_branch
      %6961 = sbr.rel (%p6959) target = $region104
    $region103: #{lenet_forward.1} parent=5 // pred_region
      %s6962 = ssub.s32 %s25, 2
      // Predicated region
      $region105: #{lenet_forward.1} parent=103 // pred_check
        %p6963 = pneg %p458
      $region106: #{lenet_forward.1} parent=103 // pred_check_branch
        %6965 = sbr.rel (%p6963) target = $region108
      $region107: #{lenet_forward.1} parent=103 // pred_region
        %p6966 = scmp.lt.s32.totalorder %s31, 1
        %s6967 = scalar_select %p6966, %s31, 1
        %s6968 = smul.addr %s6967, 2
        %s6969 = smul.addr %s6968, 8
        %s6970 = scalar_lea.vmem %s19, %s6969
      $region108: #{lenet_forward.1} parent=103 // pred_fallthru
        _
    $region104: #{lenet_forward.1} parent=5 // pred_fallthru
      _
  $region6: #{lenet_forward.1} parent=0 // loop_footer
    %s29 = sadd.s32 1, %s25
  $region7: #{lenet_forward.1} parent=0 // loop_footer_branch
    %24 = sbr.rel target = $region3
  $region8: #{lenet_forward.1} parent=0 // loop_exit
    _

</llo_original>
